<compile_context>
chip_gen: v5e
topology: v5e:2x2
jax: 0.10.0
libtpu: 0.0.40
codegen_flags: <defaults>
</compile_context>

<pallas_src>
import math
import functools

import jax
import jax.numpy as jnp
from jax.experimental import pallas as pl
from jax.experimental.pallas import tpu as pltpu

NUM_HEADS = 4
MXU_DTYPE = jnp.bfloat16   # bf16 MXU inputs on every TPU generation, f32 accumulate


# ----------------------------------------------------------------------------
# In-kernel helpers
# ----------------------------------------------------------------------------
def _fold_heads(t2d, *, batch, seq, groups, head_dim, dtype):
    """(B*S, G*D) -> (B*G, S, D) with out[b*G+g, s, d] = t2d[b*S+s, g*D+d].

    Only leading-dim reshapes (row regrouping) and last-two-dim transposes are
    used, which lower cleanly in Mosaic (no major<->sublane permutation).
    """
    t = t2d.reshape(batch, seq, groups * head_dim)       # (B, S, G*D)
    t = jnp.swapaxes(t, -1, -2)                          # (B, G*D, S)  minor transpose
    t = t.reshape(batch, groups, head_dim, seq)          # (B, G, D, S) row regroup
    t = jnp.swapaxes(t, -1, -2)                          # (B, G, S, D) minor transpose
    return t.reshape(batch * groups, seq, head_dim).astype(dtype)


def _unfold_heads(t3d, *, batch, seq, groups, head_dim):
    """(B*G, S, D) -> (B*S, G*D); exact inverse of _fold_heads."""
    t = t3d.reshape(batch, groups, seq, head_dim)        # (B, G, S, D)
    t = jnp.swapaxes(t, -1, -2)                          # (B, G, D, S)
    t = t.reshape(batch, groups * head_dim, seq)         # (B, G*D, S)
    t = jnp.swapaxes(t, -1, -2)                          # (B, S, G*D)
    return t.reshape(batch * seq, groups * head_dim)


def _attention_core(q_all, k_all, v_all, *, batch, seq_q, seq_kv, groups,
                    head_dim, mxu_dtype):
    """Scaled-dot-product attention for `groups` = modules*heads at once.

    q_all/k_all/v_all : (B*S, G*D) f32; q already scaled by 1/sqrt(D).
    Returns (B*Sq, G*D) f32 (per-module head-concatenated attention outputs).
    """
    qf = _fold_heads(q_all, batch=batch, seq=seq_q, groups=groups,
                     head_dim=head_dim, dtype=mxu_dtype)
    kf = _fold_heads(k_all, batch=batch, seq=seq_kv, groups=groups,
                     head_dim=head_dim, dtype=mxu_dtype)
    vf = _fold_heads(v_all, batch=batch, seq=seq_kv, groups=groups,
                     head_dim=head_dim, dtype=mxu_dtype)
    # One einsum pair for every (batch, module, head) triple.
    s = jnp.einsum("gqd,gkd->gqk", qf, kf,
                   preferred_element_type=jnp.float32)            # (B*G, Sq, Skv) f32
    s = s - jnp.max(s, axis=-1, keepdims=True)
    p = jnp.exp(s)
    p = p * pl.reciprocal(jnp.sum(p, axis=-1, keepdims=True), approx=True)
    o = jnp.einsum("gqk,gkd->gqd", p.astype(mxu_dtype), vf,
                   preferred_element_type=jnp.float32)            # (B*G, Sq, D) f32
    return _unfold_heads(o, batch=batch, seq=seq_q, groups=groups,
                         head_dim=head_dim)


# ----------------------------------------------------------------------------
# The fused Block kernel (single pallas_call, no grid)
# ----------------------------------------------------------------------------
def _block_kernel(x_ref, y_ref, z_ref,
                  w_sa_qkv_ref, b_sa_qkv_ref, w_sa_o_ref, b_sa_o_ref,
                  w_ca_qkv_ref, b_ca_qkv_ref, w_ca_o_ref, b_ca_o_ref,
                  x_out_ref, y_out_ref, z_out_ref, *,
                  batch, seq, cout, num_heads):
    mxu = w_sa_qkv_ref.dtype
    d = cout // num_heads

    # ---- Phase 1: sa1(x), sa2(y), sa3(z) via one block-diagonal QKV matmul ----
    xyz = jnp.concatenate([x_ref[...], y_ref[...], z_ref[...]],
                          axis=-1).astype(mxu)                       # (BS, 3*Cin)
    qkv = jnp.dot(xyz, w_sa_qkv_ref[...],
                  preferred_element_type=jnp.float32) + b_sa_qkv_ref[...]
    # qkv columns: [Q1|Q2|Q3 | K1|K2|K3 | V1|V2|V3], Q pre-scaled by 1/sqrt(d).
    c3 = 3 * cout
    attn_sa = _attention_core(qkv[:, :c3], qkv[:, c3:2 * c3], qkv[:, 2 * c3:],
                              batch=batch, seq_q=seq, seq_kv=seq,
                              groups=3 * num_heads, head_dim=d,
                              mxu_dtype=mxu)                         # (BS, 3*Cout)
    sa_out = jnp.dot(attn_sa.astype(mxu), w_sa_o_ref[...],
                     preferred_element_type=jnp.float32) + b_sa_o_ref[...]
    # sa_out columns: [x1 | y1 | z1]
    y_out_ref[...] = sa_out[:, cout:2 * cout].astype(y_out_ref.dtype)

    # ---- Phase 2: ca1(x1, y1, y1), ca2(z1, y1, y1) via one fused matmul ----
    # Zero weight-rows select x1 / z1 for Q and y1 for K/V -- no slicing/concat.
    ca_qkv = jnp.dot(sa_out.astype(mxu), w_ca_qkv_ref[...],
                     preferred_element_type=jnp.float32) + b_ca_qkv_ref[...]
    # ca_qkv columns: [Qc1|Qc2 | Kc1|Kc2 | Vc1|Vc2]
    c2 = 2 * cout
    attn_ca = _attention_core(ca_qkv[:, :c2], ca_qkv[:, c2:2 * c2], ca_qkv[:, 2 * c2:],
                              batch=batch, seq_q=seq, seq_kv=seq,
                              groups=2 * num_heads, head_dim=d,
                              mxu_dtype=mxu)                         # (BS, 2*Cout)
    ca_out = jnp.dot(attn_ca.astype(mxu), w_ca_o_ref[...],
                     preferred_element_type=jnp.float32) + b_ca_o_ref[...]
    # ca_out columns: [x_out | z_out]
    x_out_ref[...] = ca_out[:, :cout].astype(x_out_ref.dtype)
    z_out_ref[...] = ca_out[:, cout:].astype(z_out_ref.dtype)


# ----------------------------------------------------------------------------
# Host-side packing of the 5 modules' weights into 4 fused matmuls
# ----------------------------------------------------------------------------
def pack_block_params(params, *, num_heads=NUM_HEADS, mxu_dtype=MXU_DTYPE):
    sa = [params[k] for k in ("sa1", "sa2", "sa3")]
    ca = [params[k] for k in ("ca1", "ca2")]
    cin, cout = sa[0]["wq"].shape
    assert cin == cout, "Block's wiring (ca1(sa1(x), sa2(y), ...)) needs in==out"
    assert cout % num_heads == 0
    scale = 1.0 / math.sqrt(cout // num_heads)
    f32 = jnp.float32

    # --- SA fused QKV: [x|y|z] (BS, 3*Cin) @ W (3*Cin, 9*Cout) ---
    # Output columns: [Q1|Q2|Q3 | K1|K2|K3 | V1|V2|V3]; 1/sqrt(d) folded into Q.
    w = jnp.zeros((3 * cin, 9 * cout), f32)
    b = jnp.zeros((1, 9 * cout), f32)
    for m, p in enumerate(sa):
        r = slice(m * cin, (m + 1) * cin)
        w = w.at[r, m * cout:(m + 1) * cout].set(p["wq"] * scale)
        w = w.at[r, (3 + m) * cout:(4 + m) * cout].set(p["wk"])
        w = w.at[r, (6 + m) * cout:(7 + m) * cout].set(p["wv"])
        b = b.at[:, m * cout:(m + 1) * cout].set(p["bq"] * scale)
        b = b.at[:, (3 + m) * cout:(4 + m) * cout].set(p["bk"])
        b = b.at[:, (6 + m) * cout:(7 + m) * cout].set(p["bv"])
    w_sa_qkv, b_sa_qkv = w.astype(mxu_dtype), b

    # --- SA output projection: [attn1|attn2|attn3] @ block-diag(wo1,wo2,wo3) ---
    w = jnp.zeros((3 * cout, 3 * cout), f32)
    b = jnp.zeros((1, 3 * cout), f32)
    for m, p in enumerate(sa):
        w = w.at[m * cout:(m + 1) * cout, m * cout:(m + 1) * cout].set(p["wo"])
        b = b.at[:, m * cout:(m + 1) * cout].set(p["bo"])
    w_sa_o, b_sa_o = w.astype(mxu_dtype), b

    # --- CA fused Q|K|V: [x1|y1|z1] (BS, 3*Cout) @ W (3*Cout, 6*Cout) ---
    # Q rows pick x1 (ca1) / z1 (ca2); K/V rows pick y1 for both modules.
    w = jnp.zeros((3 * cout, 6 * cout), f32)
    b = jnp.zeros((1, 6 * cout), f32)
    q_src_rows = (slice(0, cout), slice(2 * cout, 3 * cout))   # ca1<-x1, ca2<-z1
    kv_rows = slice(cout, 2 * cout)                            # both    <-y1
    for m, p in enumerate(ca):
        w = w.at[q_src_rows[m], m * cout:(m + 1) * cout].set(p["wq"] * scale)
        w = w.at[kv_rows, (2 + m) * cout:(3 + m) * cout].set(p["wk"])
        w = w.at[kv_rows, (4 + m) * cout:(5 + m) * cout].set(p["wv"])
        b = b.at[:, m * cout:(m + 1) * cout].set(p["bq"] * scale)
        b = b.at[:, (2 + m) * cout:(3 + m) * cout].set(p["bk"])
        b = b.at[:, (4 + m) * cout:(5 + m) * cout].set(p["bv"])
    w_ca_qkv, b_ca_qkv = w.astype(mxu_dtype), b

    # --- CA output projection: [attn_c1|attn_c2] @ block-diag(wo_c1, wo_c2) ---
    w = jnp.zeros((2 * cout, 2 * cout), f32)
    b = jnp.zeros((1, 2 * cout), f32)
    for m, p in enumerate(ca):
        w = w.at[m * cout:(m + 1) * cout, m * cout:(m + 1) * cout].set(p["wo"])
        b = b.at[:, m * cout:(m + 1) * cout].set(p["bo"])
    w_ca_o, b_ca_o = w.astype(mxu_dtype), b

    return dict(w_sa_qkv=w_sa_qkv, b_sa_qkv=b_sa_qkv, w_sa_o=w_sa_o, b_sa_o=b_sa_o,
                w_ca_qkv=w_ca_qkv, b_ca_qkv=b_ca_qkv, w_ca_o=w_ca_o, b_ca_o=b_ca_o)


# ----------------------------------------------------------------------------
# Wrapper: the whole Block is ONE pallas_call; all operands VMEM-resident
# ----------------------------------------------------------------------------
def block_forward(x, y, z, packed, *, num_heads=NUM_HEADS):
    """Mirrors Block.forward: x=sa1(x); y=sa2(y); z=sa3(z); x=ca1(x,y,y); z=ca2(z,y,y)."""
    B, S, Cin = x.shape
    Cout = packed["w_ca_o"].shape[0] // 2
    BS = B * S

    kern = functools.partial(_block_kernel, batch=B, seq=S, cout=Cout,
                             num_heads=num_heads)
    vmem = pl.BlockSpec(memory_space=pltpu.MemorySpace.VMEM)   # whole array in VMEM

    x_o, y_o, z_o = pl.pallas_call(
        kern,
        out_shape=(jax.ShapeDtypeStruct((BS, Cout), x.dtype),
                   jax.ShapeDtypeStruct((BS, Cout), x.dtype),
                   jax.ShapeDtypeStruct((BS, Cout), x.dtype)),
        in_specs=[vmem] * 11,
        out_specs=(vmem, vmem, vmem),
    )(x.reshape(BS, Cin), y.reshape(BS, Cin), z.reshape(BS, Cin),
      packed["w_sa_qkv"], packed["b_sa_qkv"], packed["w_sa_o"], packed["b_sa_o"],
      packed["w_ca_qkv"], packed["b_ca_qkv"], packed["w_ca_o"], packed["b_ca_o"])

    return (x_o.reshape(B, S, Cout), y_o.reshape(B, S, Cout), z_o.reshape(B, S, Cout))


# ----------------------------------------------------------------------------
# Parameter init + pure-JAX reference (matching bf16-input / f32-accum numerics)
# ----------------------------------------------------------------------------
def init_mha_params(key, in_channels, out_channels):
    ks = jax.random.split(key, 4)
    s_in = 1.0 / math.sqrt(in_channels)
    s_out = 1.0 / math.sqrt(out_channels)
    return {
        "wq": jax.random.normal(ks[0], (in_channels, out_channels), jnp.float32) * s_in,
        "bq": jnp.zeros((1, out_channels), jnp.float32),
        "wk": jax.random.normal(ks[1], (in_channels, out_channels), jnp.float32) * s_in,
        "bk": jnp.zeros((1, out_channels), jnp.float32),
        "wv": jax.random.normal(ks[2], (in_channels, out_channels), jnp.float32) * s_in,
        "bv": jnp.zeros((1, out_channels), jnp.float32),
        "wo": jax.random.normal(ks[3], (out_channels, out_channels), jnp.float32) * s_out,
        "bo": jnp.zeros((1, out_channels), jnp.float32),
    }


def init_block_params(key, in_channels, out_channels):
    names = ["sa1", "sa2", "sa3", "ca1", "ca2"]
    keys = jax.random.split(key, len(names))
    return {n: init_mha_params(k, in_channels, out_channels) for n, k in zip(names, keys)}


def _ref_mha(xq, xkv, p, *, num_heads=NUM_HEADS, mxu_dtype=MXU_DTYPE):
    """Pure-JAX reference for one attention module (exact softmax)."""
    B, Sq, _ = xq.shape
    Skv = xkv.shape[1]
    cout = p["wq"].shape[1]
    d = cout // num_heads

    def lin(t, w, bias):
        return jnp.dot(t.astype(mxu_dtype), w.astype(mxu_dtype),
                       preferred_element_type=jnp.float32) + bias

    q = lin(xq.reshape(B * Sq, -1), p["wq"], p["bq"]).reshape(B, Sq, num_heads, d)
    k = lin(xkv.reshape(B * Skv, -1), p["wk"], p["bk"]).reshape(B, Skv, num_heads, d)
    v = lin(xkv.reshape(B * Skv, -1), p["wv"], p["bv"]).reshape(B, Skv, num_heads, d)
    s = jnp.einsum("bqhd,bkhd->bhqk", q.astype(mxu_dtype), k.astype(mxu_dtype),
                   preferred_element_type=jnp.float32) / math.sqrt(d)
    a = jax.nn.softmax(s, axis=-1)
    o = jnp.einsum("bhqk,bkhd->bqhd", a.astype(mxu_dtype), v.astype(mxu_dtype),
                   preferred_element_type=jnp.float32).reshape(B * Sq, cout)
    return lin(o, p["wo"], p["bo"]).reshape(B, Sq, cout)


def block_forward_reference(x, y, z, params, *, num_heads=NUM_HEADS):
    x1 = _ref_mha(x, x, params["sa1"], num_heads=num_heads)
    y1 = _ref_mha(y, y, params["sa2"], num_heads=num_heads)
    z1 = _ref_mha(z, z, params["sa3"], num_heads=num_heads)
    x2 = _ref_mha(x1, y1, params["ca1"], num_heads=num_heads)
    z2 = _ref_mha(z1, y1, params["ca2"], num_heads=num_heads)
    return x2, y1, z2


if __name__ == "__main__":
    B, S = 2, 8
    IN_CH = OUT_CH = 32   # Block's wiring requires in_channels == out_channels

    root = jax.random.PRNGKey(0)
    kx, ky, kz, kp = jax.random.split(root, 4)
    x = jax.random.normal(kx, (B, S, IN_CH), jnp.float32)
    y = jax.random.normal(ky, (B, S, IN_CH), jnp.float32)
    z = jax.random.normal(kz, (B, S, IN_CH), jnp.float32)

    params = init_block_params(kp, IN_CH, OUT_CH)
    packed = pack_block_params(params)

    fwd = jax.jit(block_forward)
    xo, yo, zo = fwd(x, y, z, packed)
    jax.block_until_ready((xo, yo, zo))

    assert xo.shape == (B, S, OUT_CH)
    assert yo.shape == (B, S, OUT_CH)
    assert zo.shape == (B, S, OUT_CH)
    assert all(bool(jnp.all(jnp.isfinite(t))) for t in (xo, yo, zo))

    # Correctness vs a pure-JAX reference that mirrors the kernel's
    # bf16-MXU-input / f32-accumulate numerics (exact softmax); loose tolerance
    # absorbs the approximate-reciprocal softmax and scale-folding rounding.
    xr, yr, zr = block_forward_reference(x, y, z, params)
    for got, ref in ((xo, xr), (yo, yr), (zo, zr)):
        assert bool(jnp.allclose(got, ref, rtol=5e-2, atol=5e-2)), (
            "max abs err = %f" % float(jnp.max(jnp.abs(got - ref))))

    print("KERNEL_OK")
</pallas_src>

<mosaic_0001>
module attributes {stable_mosaic.version = 11 : i64} {
  func.func @_block_kernel(%arg0: memref<16x32xf32, #tpu.memory_space<vmem>>, %arg1: memref<16x32xf32, #tpu.memory_space<vmem>>, %arg2: memref<16x32xf32, #tpu.memory_space<vmem>>, %arg3: memref<96x288xbf16, #tpu.memory_space<vmem>>, %arg4: memref<1x288xf32, #tpu.memory_space<vmem>>, %arg5: memref<96x96xbf16, #tpu.memory_space<vmem>>, %arg6: memref<1x96xf32, #tpu.memory_space<vmem>>, %arg7: memref<96x192xbf16, #tpu.memory_space<vmem>>, %arg8: memref<1x192xf32, #tpu.memory_space<vmem>>, %arg9: memref<64x64xbf16, #tpu.memory_space<vmem>>, %arg10: memref<1x64xf32, #tpu.memory_space<vmem>>, %arg11: memref<16x32xf32, #tpu.memory_space<vmem>>, %arg12: memref<16x32xf32, #tpu.memory_space<vmem>>, %arg13: memref<16x32xf32, #tpu.memory_space<vmem>>) attributes {dimension_semantics = [], scalar_prefetch = 0 : i64, scratch_operands = 0 : i64, tpu.core_type = #tpu.core_type<tc>} {
    %c0 = arith.constant 0 : index
    %c0_0 = arith.constant 0 : index
    %0 = vector.load %arg0[%c0, %c0_0] : memref<16x32xf32, #tpu.memory_space<vmem>>, vector<16x32xf32>
    %c0_1 = arith.constant 0 : index
    %c0_2 = arith.constant 0 : index
    %1 = vector.load %arg1[%c0_1, %c0_2] : memref<16x32xf32, #tpu.memory_space<vmem>>, vector<16x32xf32>
    %c0_3 = arith.constant 0 : index
    %c0_4 = arith.constant 0 : index
    %2 = vector.load %arg2[%c0_3, %c0_4] : memref<16x32xf32, #tpu.memory_space<vmem>>, vector<16x32xf32>
    %3 = tpu.concatenate %0, %1, %2 in 1 : vector<16x32xf32>, vector<16x32xf32>, vector<16x32xf32> -> vector<16x96xf32>
    %4 = arith.truncf %3 : vector<16x96xf32> to vector<16x96xbf16>
    %c0_5 = arith.constant 0 : index
    %c0_6 = arith.constant 0 : index
    %5 = vector.load %arg3[%c0_5, %c0_6] : memref<96x288xbf16, #tpu.memory_space<vmem>>, vector<96x288xbf16>
    %cst = arith.constant dense<0.000000e+00> : vector<16x288xf32>
    %6 = tpu.matmul %4, %5, %cst {dimension_numbers = #tpu.dot_dimension_numbers<[1], [0], [0], [1], [0, 0, 1, 1], [], []>} : vector<16x96xbf16>, vector<96x288xbf16>, vector<16x288xf32> -> vector<16x288xf32>
    %c0_7 = arith.constant 0 : index
    %c0_8 = arith.constant 0 : index
    %7 = vector.load %arg4[%c0_7, %c0_8] : memref<1x288xf32, #tpu.memory_space<vmem>>, vector<1x288xf32>
    %8 = vector.broadcast %7 : vector<1x288xf32> to vector<16x288xf32>
    %9 = arith.addf %6, %8 : vector<16x288xf32>
    %10 = vector.extract_strided_slice %9 {offsets = [0, 0], sizes = [16, 96], strides = [1, 1]} : vector<16x288xf32> to vector<16x96xf32>
    %11 = vector.extract_strided_slice %9 {offsets = [0, 96], sizes = [16, 96], strides = [1, 1]} : vector<16x288xf32> to vector<16x96xf32>
    %12 = vector.extract_strided_slice %9 {offsets = [0, 192], sizes = [16, 96], strides = [1, 1]} : vector<16x288xf32> to vector<16x96xf32>
    %13 = vector.shape_cast %10 : vector<16x96xf32> to vector<2x8x96xf32>
    %14 = tpu.transpose %13, [0, 2, 1] : vector<2x8x96xf32> -> vector<2x96x8xf32>
    %15 = vector.shape_cast %14 : vector<2x96x8xf32> to vector<2x12x8x8xf32>
    %16 = tpu.transpose %15, [0, 1, 3, 2] : vector<2x12x8x8xf32> -> vector<2x12x8x8xf32>
    %17 = vector.shape_cast %16 : vector<2x12x8x8xf32> to vector<24x8x8xf32>
    %18 = arith.truncf %17 : vector<24x8x8xf32> to vector<24x8x8xbf16>
    %19 = vector.shape_cast %11 : vector<16x96xf32> to vector<2x8x96xf32>
    %20 = tpu.transpose %19, [0, 2, 1] : vector<2x8x96xf32> -> vector<2x96x8xf32>
    %21 = vector.shape_cast %20 : vector<2x96x8xf32> to vector<2x12x8x8xf32>
    %22 = tpu.transpose %21, [0, 1, 3, 2] : vector<2x12x8x8xf32> -> vector<2x12x8x8xf32>
    %23 = vector.shape_cast %22 : vector<2x12x8x8xf32> to vector<24x8x8xf32>
    %24 = arith.truncf %23 : vector<24x8x8xf32> to vector<24x8x8xbf16>
    %25 = vector.shape_cast %12 : vector<16x96xf32> to vector<2x8x96xf32>
    %26 = tpu.transpose %25, [0, 2, 1] : vector<2x8x96xf32> -> vector<2x96x8xf32>
    %27 = vector.shape_cast %26 : vector<2x96x8xf32> to vector<2x12x8x8xf32>
    %28 = tpu.transpose %27, [0, 1, 3, 2] : vector<2x12x8x8xf32> -> vector<2x12x8x8xf32>
    %29 = vector.shape_cast %28 : vector<2x12x8x8xf32> to vector<24x8x8xf32>
    %30 = arith.truncf %29 : vector<24x8x8xf32> to vector<24x8x8xbf16>
    "tpu.trace_start"() <{level = 10 : i32, message = "gqd,gkd->gqk"}> : () -> ()
    %cst_9 = arith.constant dense<0.000000e+00> : vector<24x8x8xf32>
    %31 = tpu.matmul %18, %24, %cst_9 {dimension_numbers = #tpu.dot_dimension_numbers<[2], [2], [1], [1], [0, 0, 0, 1, 1, 1], [0], [0]>} : vector<24x8x8xbf16>, vector<24x8x8xbf16>, vector<24x8x8xf32> -> vector<24x8x8xf32>
    "tpu.trace_stop"() : () -> ()
    %cst_10 = arith.constant dense<0xFF800000> : vector<24x8xf32>
    %32 = vector.multi_reduction <maximumf>, %31, %cst_10 [2] : vector<24x8x8xf32> to vector<24x8xf32>
    %33 = vector.shape_cast %32 : vector<24x8xf32> to vector<24x8x1xf32>
    %34 = vector.broadcast %33 : vector<24x8x1xf32> to vector<24x8x8xf32>
    %35 = arith.subf %31, %34 : vector<24x8x8xf32>
    %36 = math.exp %35 : vector<24x8x8xf32>
    %cst_11 = arith.constant dense<0.000000e+00> : vector<24x8xf32>
    %37 = vector.multi_reduction <add>, %36, %cst_11 [2] : vector<24x8x8xf32> to vector<24x8xf32>
    %38 = vector.shape_cast %37 : vector<24x8xf32> to vector<24x8x1xf32>
    %39 = tpu.reciprocal %38 {approx = true} : vector<24x8x1xf32> -> vector<24x8x1xf32>
    %40 = vector.broadcast %39 : vector<24x8x1xf32> to vector<24x8x8xf32>
    %41 = arith.mulf %36, %40 : vector<24x8x8xf32>
    %42 = arith.truncf %41 : vector<24x8x8xf32> to vector<24x8x8xbf16>
    "tpu.trace_start"() <{level = 10 : i32, message = "gqk,gkd->gqd"}> : () -> ()
    %cst_12 = arith.constant dense<0.000000e+00> : vector<24x8x8xf32>
    %43 = tpu.matmul %42, %30, %cst_12 {dimension_numbers = #tpu.dot_dimension_numbers<[2], [1], [1], [2], [0, 0, 0, 1, 1, 2], [0], [0]>} : vector<24x8x8xbf16>, vector<24x8x8xbf16>, vector<24x8x8xf32> -> vector<24x8x8xf32>
    "tpu.trace_stop"() : () -> ()
    %44 = vector.shape_cast %43 : vector<24x8x8xf32> to vector<2x12x8x8xf32>
    %45 = tpu.transpose %44, [0, 1, 3, 2] : vector<2x12x8x8xf32> -> vector<2x12x8x8xf32>
    %46 = vector.shape_cast %45 : vector<2x12x8x8xf32> to vector<2x96x8xf32>
    %47 = tpu.transpose %46, [0, 2, 1] : vector<2x96x8xf32> -> vector<2x8x96xf32>
    %48 = vector.shape_cast %47 : vector<2x8x96xf32> to vector<16x96xf32>
    %49 = arith.truncf %48 : vector<16x96xf32> to vector<16x96xbf16>
    %c0_13 = arith.constant 0 : index
    %c0_14 = arith.constant 0 : index
    %50 = vector.load %arg5[%c0_13, %c0_14] : memref<96x96xbf16, #tpu.memory_space<vmem>>, vector<96x96xbf16>
    %cst_15 = arith.constant dense<0.000000e+00> : vector<16x96xf32>
    %51 = tpu.matmul %49, %50, %cst_15 {dimension_numbers = #tpu.dot_dimension_numbers<[1], [0], [0], [1], [0, 0, 1, 1], [], []>} : vector<16x96xbf16>, vector<96x96xbf16>, vector<16x96xf32> -> vector<16x96xf32>
    %c0_16 = arith.constant 0 : index
    %c0_17 = arith.constant 0 : index
    %52 = vector.load %arg6[%c0_16, %c0_17] : memref<1x96xf32, #tpu.memory_space<vmem>>, vector<1x96xf32>
    %53 = vector.broadcast %52 : vector<1x96xf32> to vector<16x96xf32>
    %54 = arith.addf %51, %53 : vector<16x96xf32>
    %55 = vector.extract_strided_slice %54 {offsets = [0, 32], sizes = [16, 32], strides = [1, 1]} : vector<16x96xf32> to vector<16x32xf32>
    %c0_18 = arith.constant 0 : index
    %c0_19 = arith.constant 0 : index
    %56 = vector.load %arg12[%c0_18, %c0_19] : memref<16x32xf32, #tpu.memory_space<vmem>>, vector<16x32xf32>
    tpu.vector_store %arg12[%c0_18, %c0_19], %55 {strides = array<i32>} : memref<16x32xf32, #tpu.memory_space<vmem>>, vector<16x32xf32>,
    %57 = arith.truncf %54 : vector<16x96xf32> to vector<16x96xbf16>
    %c0_20 = arith.constant 0 : index
    %c0_21 = arith.constant 0 : index
    %58 = vector.load %arg7[%c0_20, %c0_21] : memref<96x192xbf16, #tpu.memory_space<vmem>>, vector<96x192xbf16>
    %cst_22 = arith.constant dense<0.000000e+00> : vector<16x192xf32>
    %59 = tpu.matmul %57, %58, %cst_22 {dimension_numbers = #tpu.dot_dimension_numbers<[1], [0], [0], [1], [0, 0, 1, 1], [], []>} : vector<16x96xbf16>, vector<96x192xbf16>, vector<16x192xf32> -> vector<16x192xf32>
    %c0_23 = arith.constant 0 : index
    %c0_24 = arith.constant 0 : index
    %60 = vector.load %arg8[%c0_23, %c0_24] : memref<1x192xf32, #tpu.memory_space<vmem>>, vector<1x192xf32>
    %61 = vector.broadcast %60 : vector<1x192xf32> to vector<16x192xf32>
    %62 = arith.addf %59, %61 : vector<16x192xf32>
    %63 = vector.extract_strided_slice %62 {offsets = [0, 0], sizes = [16, 64], strides = [1, 1]} : vector<16x192xf32> to vector<16x64xf32>
    %64 = vector.extract_strided_slice %62 {offsets = [0, 64], sizes = [16, 64], strides = [1, 1]} : vector<16x192xf32> to vector<16x64xf32>
    %65 = vector.extract_strided_slice %62 {offsets = [0, 128], sizes = [16, 64], strides = [1, 1]} : vector<16x192xf32> to vector<16x64xf32>
    %66 = vector.shape_cast %63 : vector<16x64xf32> to vector<2x8x64xf32>
    %67 = tpu.transpose %66, [0, 2, 1] : vector<2x8x64xf32> -> vector<2x64x8xf32>
    %68 = vector.shape_cast %67 : vector<2x64x8xf32> to vector<2x8x8x8xf32>
    %69 = tpu.transpose %68, [0, 1, 3, 2] : vector<2x8x8x8xf32> -> vector<2x8x8x8xf32>
    %70 = vector.shape_cast %69 : vector<2x8x8x8xf32> to vector<16x8x8xf32>
    %71 = arith.truncf %70 : vector<16x8x8xf32> to vector<16x8x8xbf16>
    %72 = vector.shape_cast %64 : vector<16x64xf32> to vector<2x8x64xf32>
    %73 = tpu.transpose %72, [0, 2, 1] : vector<2x8x64xf32> -> vector<2x64x8xf32>
    %74 = vector.shape_cast %73 : vector<2x64x8xf32> to vector<2x8x8x8xf32>
    %75 = tpu.transpose %74, [0, 1, 3, 2] : vector<2x8x8x8xf32> -> vector<2x8x8x8xf32>
    %76 = vector.shape_cast %75 : vector<2x8x8x8xf32> to vector<16x8x8xf32>
    %77 = arith.truncf %76 : vector<16x8x8xf32> to vector<16x8x8xbf16>
    %78 = vector.shape_cast %65 : vector<16x64xf32> to vector<2x8x64xf32>
    %79 = tpu.transpose %78, [0, 2, 1] : vector<2x8x64xf32> -> vector<2x64x8xf32>
    %80 = vector.shape_cast %79 : vector<2x64x8xf32> to vector<2x8x8x8xf32>
    %81 = tpu.transpose %80, [0, 1, 3, 2] : vector<2x8x8x8xf32> -> vector<2x8x8x8xf32>
    %82 = vector.shape_cast %81 : vector<2x8x8x8xf32> to vector<16x8x8xf32>
    %83 = arith.truncf %82 : vector<16x8x8xf32> to vector<16x8x8xbf16>
    "tpu.trace_start"() <{level = 10 : i32, message = "gqd,gkd->gqk"}> : () -> ()
    %cst_25 = arith.constant dense<0.000000e+00> : vector<16x8x8xf32>
    %84 = tpu.matmul %71, %77, %cst_25 {dimension_numbers = #tpu.dot_dimension_numbers<[2], [2], [1], [1], [0, 0, 0, 1, 1, 1], [0], [0]>} : vector<16x8x8xbf16>, vector<16x8x8xbf16>, vector<16x8x8xf32> -> vector<16x8x8xf32>
    "tpu.trace_stop"() : () -> ()
    %cst_26 = arith.constant dense<0xFF800000> : vector<16x8xf32>
    %85 = vector.multi_reduction <maximumf>, %84, %cst_26 [2] : vector<16x8x8xf32> to vector<16x8xf32>
    %86 = vector.shape_cast %85 : vector<16x8xf32> to vector<16x8x1xf32>
    %87 = vector.broadcast %86 : vector<16x8x1xf32> to vector<16x8x8xf32>
    %88 = arith.subf %84, %87 : vector<16x8x8xf32>
    %89 = math.exp %88 : vector<16x8x8xf32>
    %cst_27 = arith.constant dense<0.000000e+00> : vector<16x8xf32>
    %90 = vector.multi_reduction <add>, %89, %cst_27 [2] : vector<16x8x8xf32> to vector<16x8xf32>
    %91 = vector.shape_cast %90 : vector<16x8xf32> to vector<16x8x1xf32>
    %92 = tpu.reciprocal %91 {approx = true} : vector<16x8x1xf32> -> vector<16x8x1xf32>
    %93 = vector.broadcast %92 : vector<16x8x1xf32> to vector<16x8x8xf32>
    %94 = arith.mulf %89, %93 : vector<16x8x8xf32>
    %95 = arith.truncf %94 : vector<16x8x8xf32> to vector<16x8x8xbf16>
    "tpu.trace_start"() <{level = 10 : i32, message = "gqk,gkd->gqd"}> : () -> ()
    %cst_28 = arith.constant dense<0.000000e+00> : vector<16x8x8xf32>
    %96 = tpu.matmul %95, %83, %cst_28 {dimension_numbers = #tpu.dot_dimension_numbers<[2], [1], [1], [2], [0, 0, 0, 1, 1, 2], [0], [0]>} : vector<16x8x8xbf16>, vector<16x8x8xbf16>, vector<16x8x8xf32> -> vector<16x8x8xf32>
    "tpu.trace_stop"() : () -> ()
    %97 = vector.shape_cast %96 : vector<16x8x8xf32> to vector<2x8x8x8xf32>
    %98 = tpu.transpose %97, [0, 1, 3, 2] : vector<2x8x8x8xf32> -> vector<2x8x8x8xf32>
    %99 = vector.shape_cast %98 : vector<2x8x8x8xf32> to vector<2x64x8xf32>
    %100 = tpu.transpose %99, [0, 2, 1] : vector<2x64x8xf32> -> vector<2x8x64xf32>
    %101 = vector.shape_cast %100 : vector<2x8x64xf32> to vector<16x64xf32>
    %102 = arith.truncf %101 : vector<16x64xf32> to vector<16x64xbf16>
    %c0_29 = arith.constant 0 : index
    %c0_30 = arith.constant 0 : index
    %103 = vector.load %arg9[%c0_29, %c0_30] : memref<64x64xbf16, #tpu.memory_space<vmem>>, vector<64x64xbf16>
    %cst_31 = arith.constant dense<0.000000e+00> : vector<16x64xf32>
    %104 = tpu.matmul %102, %103, %cst_31 {dimension_numbers = #tpu.dot_dimension_numbers<[1], [0], [0], [1], [0, 0, 1, 1], [], []>} : vector<16x64xbf16>, vector<64x64xbf16>, vector<16x64xf32> -> vector<16x64xf32>
    %c0_32 = arith.constant 0 : index
    %c0_33 = arith.constant 0 : index
    %105 = vector.load %arg10[%c0_32, %c0_33] : memref<1x64xf32, #tpu.memory_space<vmem>>, vector<1x64xf32>
    %106 = vector.broadcast %105 : vector<1x64xf32> to vector<16x64xf32>
    %107 = arith.addf %104, %106 : vector<16x64xf32>
    %108 = vector.extract_strided_slice %107 {offsets = [0, 0], sizes = [16, 32], strides = [1, 1]} : vector<16x64xf32> to vector<16x32xf32>
    %c0_34 = arith.constant 0 : index
    %c0_35 = arith.constant 0 : index
    %109 = vector.load %arg11[%c0_34, %c0_35] : memref<16x32xf32, #tpu.memory_space<vmem>>, vector<16x32xf32>
    tpu.vector_store %arg11[%c0_34, %c0_35], %108 {strides = array<i32>} : memref<16x32xf32, #tpu.memory_space<vmem>>, vector<16x32xf32>,
    %110 = vector.extract_strided_slice %107 {offsets = [0, 32], sizes = [16, 32], strides = [1, 1]} : vector<16x64xf32> to vector<16x32xf32>
    %c0_36 = arith.constant 0 : index
    %c0_37 = arith.constant 0 : index
    %111 = vector.load %arg13[%c0_36, %c0_37] : memref<16x32xf32, #tpu.memory_space<vmem>>, vector<16x32xf32>
    tpu.vector_store %arg13[%c0_36, %c0_37], %110 {strides = array<i32>} : memref<16x32xf32, #tpu.memory_space<vmem>>, vector<16x32xf32>,
    return
  }
}

</mosaic_0001>

<llo_original>
// kernel: block_forward.1
$region0: #{block_forward.1}
  #allocation0 [shape = 'u32[]', space=smem, size = 0x4, offset = 0x4, fixed_abs, tag = 'smem constant byte address 0x4 - core index']
  #allocation1 [shape = 'u32[72,128]{1,0:T(1,128)}', space=vmem, size = 0x9000, scoped, tag = 'internal scratch']
  %s0 = inlined_call_operand.hbm [shape: f32[16,32], index: 0, kind: input, shape index: {}]
  %s1 = inlined_call_operand.hbm [shape: f32[16,32], index: 1, kind: input, shape index: {}]
  %s2 = inlined_call_operand.hbm [shape: f32[16,32], index: 2, kind: input, shape index: {}]
  %s3 = inlined_call_operand.hbm [shape: bf16[96,288], index: 3, kind: input, shape index: {}]
  %s4 = inlined_call_operand.vmem [shape: f32[1,288], index: 4, kind: input, shape index: {}]
  %s5 = inlined_call_operand.hbm [shape: bf16[96,96], index: 5, kind: input, shape index: {}]
  %s6 = inlined_call_operand.vmem [shape: f32[1,96], index: 6, kind: input, shape index: {}]
  %s7 = inlined_call_operand.hbm [shape: bf16[96,192], index: 7, kind: input, shape index: {}]
  %s8 = inlined_call_operand.vmem [shape: f32[1,192], index: 8, kind: input, shape index: {}]
  %s9 = inlined_call_operand.hbm [shape: bf16[64,64], index: 9, kind: input, shape index: {}]
  %s10 = inlined_call_operand.hbm [shape: f32[1,64], index: 10, kind: input, shape index: {}]
  %s11 = inlined_call_operand.hbm [shape: f32[16,32], index: 11, kind: output, shape index: {0}]
  %s12 = inlined_call_operand.hbm [shape: f32[16,32], index: 12, kind: output, shape index: {1}]
  %s13 = inlined_call_operand.hbm [shape: f32[16,32], index: 13, kind: output, shape index: {2}]
  %14 = xla_tuple %s11, %s12, %s13
  %s15 = sld [smem:[#allocation0]]
  $region102: #{block_forward.1} parent=0
    _
  %s17 = ssub.s32 1, %s15
  %s18 = scalar_select 0, %s17, %s15
  $region1: #{block_forward.1} parent=0
    #allocation2 [shape = 'u8[8192]{0}', space=vmem, size = 0x2000, scoped, tag = 'input window, operand 0, single buffered']
    #allocation3 [shape = 's32[1]{0}', space=sflag, size = 0x4, scoped, tag = 'scoped memory for block_forward.1']
    #allocation4 [shape = 's32[1]{0}', space=sflag, size = 0x4, scoped, tag = 'scoped memory for block_forward.1']
    #allocation5 [shape = 'u8[8192]{0}', space=vmem, size = 0x2000, scoped, tag = 'input window, operand 1, single buffered']
    #allocation6 [shape = 's32[1]{0}', space=sflag, size = 0x4, scoped, tag = 'scoped memory for block_forward.1']
    #allocation7 [shape = 'u8[8192]{0}', space=vmem, size = 0x2000, scoped, tag = 'input window, operand 2, single buffered']
    #allocation8 [shape = 'u8[73728]{0}', space=vmem, size = 0x12000, scoped, tag = 'input window, operand 3, single buffered']
    #allocation9 [shape = 's32[1]{0}', space=sflag, size = 0x4, scoped, tag = 'scoped memory for block_forward.1']
    #allocation10 [shape = 'u8[24576]{0}', space=vmem, size = 0x6000, scoped, tag = 'input window, operand 5, single buffered']
    #allocation11 [shape = 'u8[49152]{0}', space=vmem, size = 0xc000, scoped, tag = 'input window, operand 7, single buffered']
    #allocation12 [shape = 's32[1]{0}', space=sflag, size = 0x4, scoped, tag = 'scoped memory for block_forward.1']
    #allocation13 [shape = 'u8[16384]{0}', space=vmem, size = 0x4000, scoped, tag = 'input window, operand 9, single buffered']
    #allocation14 [shape = 'u8[512]{0}', space=vmem, size = 0x400, scoped, tag = 'input window, operand 10, single buffered']
    #allocation15 [shape = 's32[1]{0}', space=sflag, size = 0x4, scoped, tag = 'scoped memory for block_forward.1']
    #allocation16 [shape = 'u8[8192]{0}', space=vmem, size = 0x2000, scoped, tag = 'output window, operand 0, single buffered']
    #allocation17 [shape = 'u8[8192]{0}', space=vmem, size = 0x2000, scoped, tag = 'output window, operand 1, single buffered']
    #allocation18 [shape = 's32[1]{0}', space=sflag, size = 0x4, scoped, tag = 'scoped memory for block_forward.1']
    #allocation19 [shape = 'u8[8192]{0}', space=vmem, size = 0x2000, scoped, tag = 'output window, operand 2, single buffered']
    %19 = vsyncpa [#allocation3], 0
    %20 = vsyncpa [#allocation6], 0
    %21 = vsyncpa [#allocation9], 0
    %22 = vsyncpa [#allocation12], 0
    %23 = vsyncpa [#allocation15], 0
    %24 = vsyncpa [#allocation4], 0
    %25 = vsyncpa [#allocation18], 0
    // Predicated region
    $region2: #{block_forward.1} parent=1 // pred_check
      _
    $region3: #{block_forward.1} parent=1 // pred_check_branch
      %27 = sbr.rel (0) target = $region5
    $region4: #{block_forward.1} parent=1 // pred_region
      %29 = vsyncadd [#allocation3], 0
      %s30 = sshll.u32 %s0, 4
      %s31 = int_to_ptr.hbm [resolvable:$true] %s30
      %s32 = sshll.u32 [#allocation2], 4
      %s33 = int_to_ptr.vmem [resolvable:$true] %s32
      %38 = dma.hbm_to_vmem [thread:$0]  %s31, 256, %s33, [#allocation3], 128, 128, 8
    $region5: #{block_forward.1} parent=1 // pred_fallthru
      _
    // Predicated region
    $region6: #{block_forward.1} parent=1 // pred_check
      _
    $region7: #{block_forward.1} parent=1 // pred_check_branch
      %40 = sbr.rel (0) target = $region9
    $region8: #{block_forward.1} parent=1 // pred_region
      %42 = vsyncadd [#allocation6], 0
      %s43 = sshll.u32 %s1, 4
      %s44 = int_to_ptr.hbm [resolvable:$true] %s43
      %s45 = sshll.u32 [#allocation5], 4
      %s46 = int_to_ptr.vmem [resolvable:$true] %s45
      %51 = dma.hbm_to_vmem [thread:$0]  %s44, 256, %s46, [#allocation6], 128, 128, 8
    $region9: #{block_forward.1} parent=1 // pred_fallthru
      _
    // Predicated region
    $region10: #{block_forward.1} parent=1 // pred_check
      _
    $region11: #{block_forward.1} parent=1 // pred_check_branch
      %53 = sbr.rel (0) target = $region13
    $region12: #{block_forward.1} parent=1 // pred_region
      %55 = vsyncadd [#allocation6], 0
      %s56 = sshll.u32 %s2, 4
      %s57 = int_to_ptr.hbm [resolvable:$true] %s56
      %s58 = sshll.u32 [#allocation7], 4
      %s59 = int_to_ptr.vmem [resolvable:$true] %s58
      %64 = dma.hbm_to_vmem [thread:$0]  %s57, 256, %s59, [#allocation6], 128, 128, 8
    $region13: #{block_forward.1} parent=1 // pred_fallthru
      _
    // Predicated region
    $region14: #{block_forward.1} parent=1 // pred_check
      _
    $region15: #{block_forward.1} parent=1 // pred_check_branch
      %66 = sbr.rel (0) target = $region17
    $region16: #{block_forward.1} parent=1 // pred_region
      %68 = vsyncadd [#allocation9], 0
      %s69 = sshll.u32 %s3, 4
      %s70 = int_to_ptr.hbm [resolvable:$true] %s69
      %s71 = sshll.u32 [#allocation8], 4
      %s72 = int_to_ptr.vmem [resolvable:$true] %s71
      %77 = dma.hbm_to_vmem [thread:$0]  %s70, 2304, %s72, [#allocation9], 192, 192, 12
    $region17: #{block_forward.1} parent=1 // pred_fallthru
      _
    // Predicated region
    $region18: #{block_forward.1} parent=1 // pred_check
      _
    $region19: #{block_forward.1} parent=1 // pred_check_branch
      %79 = sbr.rel (0) target = $region21
    $region20: #{block_forward.1} parent=1 // pred_region
      _
    $region21: #{block_forward.1} parent=1 // pred_fallthru
      _
    // Predicated region
    $region22: #{block_forward.1} parent=1 // pred_check
      _
    $region23: #{block_forward.1} parent=1 // pred_check_branch
      %81 = sbr.rel (0) target = $region25
    $region24: #{block_forward.1} parent=1 // pred_region
      %83 = vsyncadd [#allocation9], 0
      %s84 = sshll.u32 %s5, 4
      %s85 = int_to_ptr.hbm [resolvable:$true] %s84
      %s86 = sshll.u32 [#allocation10], 4
      %s87 = int_to_ptr.vmem [resolvable:$true] %s86
      %92 = dma.hbm_to_vmem [thread:$0]  %s85, 768, %s87, [#allocation9], 64, 64, 4
    $region25: #{block_forward.1} parent=1 // pred_fallthru
      _
    // Predicated region
    $region26: #{block_forward.1} parent=1 // pred_check
      _
    $region27: #{block_forward.1} parent=1 // pred_check_branch
      %94 = sbr.rel (0) target = $region29
    $region28: #{block_forward.1} parent=1 // pred_region
      _
    $region29: #{block_forward.1} parent=1 // pred_fallthru
      _
    // Predicated region
    $region30: #{block_forward.1} parent=1 // pred_check
      _
    $region31: #{block_forward.1} parent=1 // pred_check_branch
      %96 = sbr.rel (0) target = $region33
    $region32: #{block_forward.1} parent=1 // pred_region
      %98 = vsyncadd [#allocation12], 0
      %s99 = sshll.u32 %s7, 4
      %s100 = int_to_ptr.hbm [resolvable:$true] %s99
      %s101 = sshll.u32 [#allocation11], 4
      %s102 = int_to_ptr.vmem [resolvable:$true] %s101
      %107 = dma.hbm_to_vmem [thread:$0]  %s100, 1536, %s102, [#allocation12], 128, 128, 8
    $region33: #{block_forward.1} parent=1 // pred_fallthru
      _
    // Predicated region
    $region34: #{block_forward.1} parent=1 // pred_check
      _
    $region35: #{block_forward.1} parent=1 // pred_check_branch
      %109 = sbr.rel (0) target = $region37
    $region36: #{block_forward.1} parent=1 // pred_region
      _
    $region37: #{block_forward.1} parent=1 // pred_fallthru
      _
    // Predicated region
    $region38: #{block_forward.1} parent=1 // pred_check
      _
    $region39: #{block_forward.1} parent=1 // pred_check_branch
      %111 = sbr.rel (0) target = $region41
    $region40: #{block_forward.1} parent=1 // pred_region
      %113 = vsyncadd [#allocation12], 0
      %s114 = sshll.u32 %s9, 4
      %s115 = int_to_ptr.hbm [resolvable:$true] %s114
      %s116 = sshll.u32 [#allocation13], 4
      %s117 = int_to_ptr.vmem [resolvable:$true] %s116
      %122 = dma.hbm_to_vmem [thread:$0]  %s115, 512, %s117, [#allocation12], 64, 64, 4
    $region41: #{block_forward.1} parent=1 // pred_fallthru
      _
    // Predicated region
    $region42: #{block_forward.1} parent=1 // pred_check
      _
    $region43: #{block_forward.1} parent=1 // pred_check_branch
      %124 = sbr.rel (0) target = $region45
    $region44: #{block_forward.1} parent=1 // pred_region
      %126 = vsyncadd [#allocation15], 0
      %s128 = sshll.u32 %s10, 4
      %s129 = int_to_ptr.hbm [resolvable:$true] %s128
      %s130 = sshll.u32 [#allocation14], 4
      %s131 = int_to_ptr.vmem [resolvable:$true] %s130
      %133 = dma.hbm_to_vmem [thread:$0]  %s129, 16, %s131, [#allocation15]
    $region45: #{block_forward.1} parent=1 // pred_fallthru
      _
    // Predicated region
    $region46: #{block_forward.1} parent=1 // pred_check
      _
    $region47: #{block_forward.1} parent=1 // pred_check_branch
      %135 = sbr.rel (0) target = $region49
    $region48: #{block_forward.1} parent=1 // pred_region
      %137 = dma.done [#allocation3], 256
    $region49: #{block_forward.1} parent=1 // pred_fallthru
      _
    // Predicated region
    $region50: #{block_forward.1} parent=1 // pred_check
      _
    $region51: #{block_forward.1} parent=1 // pred_check_branch
      %139 = sbr.rel (0) target = $region53
    $region52: #{block_forward.1} parent=1 // pred_region
      %141 = dma.done [#allocation6], 256
    $region53: #{block_forward.1} parent=1 // pred_fallthru
      _
    // Predicated region
    $region54: #{block_forward.1} parent=1 // pred_check
      _
    $region55: #{block_forward.1} parent=1 // pred_check_branch
      %143 = sbr.rel (0) target = $region57
    $region56: #{block_forward.1} parent=1 // pred_region
      %145 = dma.done [#allocation6], 256
    $region57: #{block_forward.1} parent=1 // pred_fallthru
      _
    // Predicated region
    $region58: #{block_forward.1} parent=1 // pred_check
      _
    $region59: #{block_forward.1} parent=1 // pred_check_branch
      %147 = sbr.rel (0) target = $region61
    $region60: #{block_forward.1} parent=1 // pred_region
      %149 = dma.done [#allocation9], 2304
    $region61: #{block_forward.1} parent=1 // pred_fallthru
      _
    // Predicated region
    $region62: #{block_forward.1} parent=1 // pred_check
      _
    $region63: #{block_forward.1} parent=1 // pred_check_branch
      %151 = sbr.rel (0) target = $region65
    $region64: #{block_forward.1} parent=1 // pred_region
      %153 = dma.done [#allocation9], 768
    $region65: #{block_forward.1} parent=1 // pred_fallthru
      _
    // Predicated region
    $region66: #{block_forward.1} parent=1 // pred_check
      _
    $region67: #{block_forward.1} parent=1 // pred_check_branch
      %155 = sbr.rel (0) target = $region69
    $region68: #{block_forward.1} parent=1 // pred_region
      %157 = dma.done [#allocation12], 1536
    $region69: #{block_forward.1} parent=1 // pred_fallthru
      _
    // Predicated region
    $region70: #{block_forward.1} parent=1 // pred_check
      _
    $region71: #{block_forward.1} parent=1 // pred_check_branch
      %159 = sbr.rel (0) target = $region73
    $region72: #{block_forward.1} parent=1 // pred_region
      %161 = dma.done [#allocation12], 512
    $region73: #{block_forward.1} parent=1 // pred_fallthru
      _
    // Predicated region
    $region74: #{block_forward.1} parent=1 // pred_check
      _
    $region75: #{block_forward.1} parent=1 // pred_check_branch
      %163 = sbr.rel (0) target = $region77
    $region76: #{block_forward.1} parent=1 // pred_region
      %165 = dma.done [#allocation15], 16
    $region77: #{block_forward.1} parent=1 // pred_fallthru
      _
    %v167 = vld [vmem:[#allocation2] sm:$0xff]
    %v168 = vld [vmem:[#allocation2 + $0x8] sm:$0xff]
    %v169 = vld [vmem:[#allocation5] sm:$0xff]
    %v170 = vld [vmem:[#allocation5 + $0x8] sm:$0xff]
    %v171 = vld [vmem:[#allocation7] sm:$0xff]
    %v172 = vld [vmem:[#allocation7 + $0x8] sm:$0xff]
    %175 = vrot.lane.b32.xlu0 %v169, 32
    %v176 = vpop.permute.xlu0 %175
    %177 = vrot.lane.b32.xlu0 %v170, 32
    %v178 = vpop.permute.xlu0 %177
    %183 = vrot.lane.b32.xlu0 %v171, 64
    %v184 = vpop.permute.xlu0 %183
    %185 = vrot.lane.b32.xlu0 %v172, 64
    %v186 = vpop.permute.xlu0 %185
    %vm189 = vcmask 261120
    %v190 = vsel %vm189, %v167, %v176
    %v191 = vsel %vm189, %v168, %v178
    %vm192 = vcmask 523264
    %v193 = vsel %vm192, %v190, %v184
    %v194 = vsel %vm192, %v191, %v186
    %v195 = vpack.c.bf16 %v194, %v193
    %v196 = vld [vmem:[#allocation8] sm:$0xff]
    %v197 = vld [vmem:[#allocation8 + $0x8] sm:$0xf]
    %v198 = vld [vmem:[#allocation8 + $0xc] sm:$0xff]
    %v199 = vld [vmem:[#allocation8 + $0x14] sm:$0xf]
    %v200 = vld [vmem:[#allocation8 + $0x18] sm:$0xff]
    %v201 = vld [vmem:[#allocation8 + $0x20] sm:$0xf]
    %v202 = vld [vmem:[#allocation8 + $0x24] sm:$0xff]
    %v203 = vld [vmem:[#allocation8 + $0x2c] sm:$0xf]
    %v204 = vld [vmem:[#allocation8 + $0x30] sm:$0xff]
    %v205 = vld [vmem:[#allocation8 + $0x38] sm:$0xf]
    %v206 = vld [vmem:[#allocation8 + $0x3c] sm:$0xff]
    %v207 = vld [vmem:[#allocation8 + $0x44] sm:$0xf]
    %v208 = vld [vmem:[#allocation8 + $0x48] sm:$0xff]
    %v209 = vld [vmem:[#allocation8 + $0x50] sm:$0xf]
    %v210 = vld [vmem:[#allocation8 + $0x54] sm:$0xff]
    %v211 = vld [vmem:[#allocation8 + $0x5c] sm:$0xf]
    %v212 = vld [vmem:[#allocation8 + $0x60] sm:$0xff]
    %v213 = vld [vmem:[#allocation8 + $0x68] sm:$0xf]
    %v214 = vld [vmem:[#allocation8 + $0x6c] sm:$0xff]
    %v215 = vld [vmem:[#allocation8 + $0x74] sm:$0xf]
    %v216 = vld [vmem:[#allocation8 + $0x78] sm:$0xff]
    %v217 = vld [vmem:[#allocation8 + $0x80] sm:$0xf]
    %v218 = vld [vmem:[#allocation8 + $0x84] sm:$0xff]
    %v219 = vld [vmem:[#allocation8 + $0x8c] sm:$0xf]
    %v220 = vld [vmem:[%s4] sm:$0x7]
    %v222 = vperm.slane %v220, 0
    %v223 = vperm.slane %v220, 1
    %v224 = vperm.slane %v220, 2
    %v252 = vunpack.c.l.b16 %v196
    %v253 = vunpack.c.h.b16 %v196
    %v254 = vunpack.c.l.b16 %v197
    %v255 = vunpack.c.l.b16 %v198
    %v256 = vunpack.c.h.b16 %v198
    %v257 = vunpack.c.l.b16 %v199
    %v258 = vunpack.c.l.b16 %v200
    %v259 = vunpack.c.h.b16 %v200
    %v260 = vunpack.c.l.b16 %v201
    %v261 = vunpack.c.l.b16 %v202
    %v262 = vunpack.c.h.b16 %v202
    %v263 = vunpack.c.l.b16 %v203
    %v264 = vunpack.c.l.b16 %v204
    %v265 = vunpack.c.h.b16 %v204
    %v266 = vunpack.c.l.b16 %v205
    %v267 = vunpack.c.l.b16 %v206
    %v268 = vunpack.c.h.b16 %v206
    %v269 = vunpack.c.l.b16 %v207
    %v270 = vunpack.c.l.b16 %v208
    %v271 = vunpack.c.h.b16 %v208
    %v272 = vunpack.c.l.b16 %v209
    %v273 = vunpack.c.l.b16 %v210
    %v274 = vunpack.c.h.b16 %v210
    %v275 = vunpack.c.l.b16 %v211
    %v276 = vunpack.c.l.b16 %v212
    %v277 = vunpack.c.h.b16 %v212
    %v278 = vunpack.c.l.b16 %v213
    %v279 = vunpack.c.l.b16 %v214
    %v280 = vunpack.c.h.b16 %v214
    %v281 = vunpack.c.l.b16 %v215
    %v282 = vunpack.c.l.b16 %v216
    %v283 = vunpack.c.h.b16 %v216
    %v284 = vunpack.c.l.b16 %v217
    %v285 = vunpack.c.l.b16 %v218
    %v286 = vunpack.c.h.b16 %v218
    %v287 = vunpack.c.l.b16 %v219
    %v288 = vpack.c.b16 %v255, %v252
    %v289 = vpack.c.b16 %v256, %v253
    %v290 = vpack.c.b16 %v257, %v254
    %v291 = vpack.c.b16 %v261, %v258
    %v292 = vpack.c.b16 %v262, %v259
    %v293 = vpack.c.b16 %v263, %v260
    %v294 = vpack.c.b16 %v267, %v264
    %v295 = vpack.c.b16 %v268, %v265
    %v296 = vpack.c.b16 %v269, %v266
    %v297 = vpack.c.b16 %v273, %v270
    %v298 = vpack.c.b16 %v274, %v271
    %v299 = vpack.c.b16 %v275, %v272
    %v300 = vpack.c.b16 %v279, %v276
    %v301 = vpack.c.b16 %v280, %v277
    %v302 = vpack.c.b16 %v281, %v278
    %v303 = vpack.c.b16 %v285, %v282
    %v304 = vpack.c.b16 %v286, %v283
    %v305 = vpack.c.b16 %v287, %v284
    %vm324 = vcmask 785408
    %v326 = vsel %vm324, %v195, 0
    %328 = vmatpush.bf16.msra.mxu0 0
    %329 = vmatpush.bf16.msra.mxu0 0
    %330 = vmatpush.bf16.msra.mxu0 %v303
    %331 = vmatpush.bf16.msra.mxu0 %v300
    %332 = vmatpush.bf16.msra.mxu0 %v297
    %333 = vmatpush.bf16.msra.mxu0 %v294
    %334 = vmatpush.bf16.msra.mxu0 %v291
    %335 = vmatpush.bf16.msra.mxu0 %v288
    %336 = vmatmul.bf16.gmra.mxu0 %v326
    %v337 = vpop.f32.mrf.mxu0
    %v338 = vadd.f32 %v222, %v337
    %v339 = vpop.f32.mrf.mxu0
    %v340 = vadd.f32 %v222, %v339
    %341 = vdwg.mxu0
    %342 = vmatpush.bf16.msra.mxu0 0
    %343 = vmatpush.bf16.msra.mxu0 0
    %344 = vmatpush.bf16.msra.mxu0 %v304
    %345 = vmatpush.bf16.msra.mxu0 %v301
    %346 = vmatpush.bf16.msra.mxu0 %v298
    %347 = vmatpush.bf16.msra.mxu0 %v295
    %348 = vmatpush.bf16.msra.mxu0 %v292
    %349 = vmatpush.bf16.msra.mxu0 %v289
    %350 = vmatmul.bf16.gmra.mxu0 %v326
    %v351 = vpop.f32.mrf.mxu0
    %v352 = vadd.f32 %v223, %v351
    %v353 = vpop.f32.mrf.mxu0
    %v354 = vadd.f32 %v223, %v353
    %355 = vdwg.mxu0
    %356 = vmatpush.bf16.msra.mxu0 0
    %357 = vmatpush.bf16.msra.mxu0 0
    %358 = vmatpush.bf16.msra.mxu0 %v305
    %359 = vmatpush.bf16.msra.mxu0 %v302
    %360 = vmatpush.bf16.msra.mxu0 %v299
    %361 = vmatpush.bf16.msra.mxu0 %v296
    %362 = vmatpush.bf16.msra.mxu0 %v293
    %363 = vmatpush.bf16.msra.mxu0 %v290
    %364 = vmatmul.bf16.gmra.mxu0 %v326
    %v365 = vpop.f32.mrf.mxu0
    %v366 = vadd.f32 %v224, %v365
    %v367 = vpop.f32.mrf.mxu0
    %v368 = vadd.f32 %v224, %v367
    %369 = vdwg.mxu0
    %370 = vxpose.xlu0.b32.start [1/16] %v338, 128
    %371 = vxpose.xlu0.b32.cont [2/16] 0.0, 128
    %372 = vxpose.xlu0.b32.cont [3/16] 0.0, 128
    %373 = vxpose.xlu0.b32.cont [4/16] 0.0, 128
    %374 = vxpose.xlu0.b32.cont [5/16] 0.0, 128
    %375 = vxpose.xlu0.b32.cont [6/16] 0.0, 128
    %376 = vxpose.xlu0.b32.cont [7/16] 0.0, 128
    %377 = vxpose.xlu0.b32.cont [8/16] 0.0, 128
    %378 = vxpose.xlu0.b32.cont [9/16] 0.0, 128
    %379 = vxpose.xlu0.b32.cont [10/16] 0.0, 128
    %380 = vxpose.xlu0.b32.cont [11/16] 0.0, 128
    %381 = vxpose.xlu0.b32.cont [12/16] 0.0, 128
    %382 = vxpose.xlu0.b32.cont [13/16] 0.0, 128
    %383 = vxpose.xlu0.b32.cont [14/16] 0.0, 128
    %384 = vxpose.xlu0.b32.cont [15/16] 0.0, 128
    %385 = vxpose.xlu0.b32.end [16/16] 0.0, 128
    %v386 = vpop.trf.xlu0
    %v387 = vpop.trf.xlu0
    %v388 = vpop.trf.xlu0
    %v389 = vpop.trf.xlu0
    %v390 = vpop.trf.xlu0
    %v391 = vpop.trf.xlu0
    %v392 = vpop.trf.xlu0
    %v393 = vpop.trf.xlu0
    %v394 = vpop.trf.xlu0
    %v395 = vpop.trf.xlu0
    %v396 = vpop.trf.xlu0
    %v397 = vpop.trf.xlu0
    %v398 = vpop.trf.xlu0
    %v399 = vpop.trf.xlu0
    %v400 = vpop.trf.xlu0
    %v401 = vpop.trf.xlu0
    %402 = vxpose.xlu0.b32.start [1/16] %v340, 128
    %403 = vxpose.xlu0.b32.cont [2/16] 0.0, 128
    %404 = vxpose.xlu0.b32.cont [3/16] 0.0, 128
    %405 = vxpose.xlu0.b32.cont [4/16] 0.0, 128
    %406 = vxpose.xlu0.b32.cont [5/16] 0.0, 128
    %407 = vxpose.xlu0.b32.cont [6/16] 0.0, 128
    %408 = vxpose.xlu0.b32.cont [7/16] 0.0, 128
    %409 = vxpose.xlu0.b32.cont [8/16] 0.0, 128
    %410 = vxpose.xlu0.b32.cont [9/16] 0.0, 128
    %411 = vxpose.xlu0.b32.cont [10/16] 0.0, 128
    %412 = vxpose.xlu0.b32.cont [11/16] 0.0, 128
    %413 = vxpose.xlu0.b32.cont [12/16] 0.0, 128
    %414 = vxpose.xlu0.b32.cont [13/16] 0.0, 128
    %415 = vxpose.xlu0.b32.cont [14/16] 0.0, 128
    %416 = vxpose.xlu0.b32.cont [15/16] 0.0, 128
    %417 = vxpose.xlu0.b32.end [16/16] 0.0, 128
    %v418 = vpop.trf.xlu0
    %v419 = vpop.trf.xlu0
    %v420 = vpop.trf.xlu0
    %v421 = vpop.trf.xlu0
    %v422 = vpop.trf.xlu0
    %v423 = vpop.trf.xlu0
    %v424 = vpop.trf.xlu0
    %v425 = vpop.trf.xlu0
    %v426 = vpop.trf.xlu0
    %v427 = vpop.trf.xlu0
    %v428 = vpop.trf.xlu0
    %v429 = vpop.trf.xlu0
    %v430 = vpop.trf.xlu0
    %v431 = vpop.trf.xlu0
    %v432 = vpop.trf.xlu0
    %v433 = vpop.trf.xlu0
    %434 = vxpose.xlu0.b32.start [1/16] %v386, 128
    %435 = vxpose.xlu0.b32.cont [2/16] 0.0, 128
    %436 = vxpose.xlu0.b32.cont [3/16] 0.0, 128
    %437 = vxpose.xlu0.b32.cont [4/16] 0.0, 128
    %438 = vxpose.xlu0.b32.cont [5/16] 0.0, 128
    %439 = vxpose.xlu0.b32.cont [6/16] 0.0, 128
    %440 = vxpose.xlu0.b32.cont [7/16] 0.0, 128
    %441 = vxpose.xlu0.b32.cont [8/16] 0.0, 128
    %442 = vxpose.xlu0.b32.cont [9/16] 0.0, 128
    %443 = vxpose.xlu0.b32.cont [10/16] 0.0, 128
    %444 = vxpose.xlu0.b32.cont [11/16] 0.0, 128
    %445 = vxpose.xlu0.b32.cont [12/16] 0.0, 128
    %446 = vxpose.xlu0.b32.cont [13/16] 0.0, 128
    %447 = vxpose.xlu0.b32.cont [14/16] 0.0, 128
    %448 = vxpose.xlu0.b32.cont [15/16] 0.0, 128
    %449 = vxpose.xlu0.b32.end [16/16] 0.0, 128
    %v450 = vpop.trf.xlu0
    %v451 = vpop.trf.xlu0
    %v452 = vpop.trf.xlu0
    %v453 = vpop.trf.xlu0
    %v454 = vpop.trf.xlu0
    %v455 = vpop.trf.xlu0
    %v456 = vpop.trf.xlu0
    %v457 = vpop.trf.xlu0
    %v458 = vpop.trf.xlu0
    %v459 = vpop.trf.xlu0
    %v460 = vpop.trf.xlu0
    %v461 = vpop.trf.xlu0
    %v462 = vpop.trf.xlu0
    %v463 = vpop.trf.xlu0
    %v464 = vpop.trf.xlu0
    %v465 = vpop.trf.xlu0
    %466 = vxpose.xlu0.b32.start [1/16] %v387, 128
    %467 = vxpose.xlu0.b32.cont [2/16] 0.0, 128
    %468 = vxpose.xlu0.b32.cont [3/16] 0.0, 128
    %469 = vxpose.xlu0.b32.cont [4/16] 0.0, 128
    %470 = vxpose.xlu0.b32.cont [5/16] 0.0, 128
    %471 = vxpose.xlu0.b32.cont [6/16] 0.0, 128
    %472 = vxpose.xlu0.b32.cont [7/16] 0.0, 128
    %473 = vxpose.xlu0.b32.cont [8/16] 0.0, 128
    %474 = vxpose.xlu0.b32.cont [9/16] 0.0, 128
    %475 = vxpose.xlu0.b32.cont [10/16] 0.0, 128
    %476 = vxpose.xlu0.b32.cont [11/16] 0.0, 128
    %477 = vxpose.xlu0.b32.cont [12/16] 0.0, 128
    %478 = vxpose.xlu0.b32.cont [13/16] 0.0, 128
    %479 = vxpose.xlu0.b32.cont [14/16] 0.0, 128
    %480 = vxpose.xlu0.b32.cont [15/16] 0.0, 128
    %481 = vxpose.xlu0.b32.end [16/16] 0.0, 128
    %v482 = vpop.trf.xlu0
    %v483 = vpop.trf.xlu0
    %v484 = vpop.trf.xlu0
    %v485 = vpop.trf.xlu0
    %v486 = vpop.trf.xlu0
    %v487 = vpop.trf.xlu0
    %v488 = vpop.trf.xlu0
    %v489 = vpop.trf.xlu0
    %v490 = vpop.trf.xlu0
    %v491 = vpop.trf.xlu0
    %v492 = vpop.trf.xlu0
    %v493 = vpop.trf.xlu0
    %v494 = vpop.trf.xlu0
    %v495 = vpop.trf.xlu0
    %v496 = vpop.trf.xlu0
    %v497 = vpop.trf.xlu0
    %498 = vxpose.xlu0.b32.start [1/16] %v388, 128
    %499 = vxpose.xlu0.b32.cont [2/16] 0.0, 128
    %500 = vxpose.xlu0.b32.cont [3/16] 0.0, 128
    %501 = vxpose.xlu0.b32.cont [4/16] 0.0, 128
    %502 = vxpose.xlu0.b32.cont [5/16] 0.0, 128
    %503 = vxpose.xlu0.b32.cont [6/16] 0.0, 128
    %504 = vxpose.xlu0.b32.cont [7/16] 0.0, 128
    %505 = vxpose.xlu0.b32.cont [8/16] 0.0, 128
    %506 = vxpose.xlu0.b32.cont [9/16] 0.0, 128
    %507 = vxpose.xlu0.b32.cont [10/16] 0.0, 128
    %508 = vxpose.xlu0.b32.cont [11/16] 0.0, 128
    %509 = vxpose.xlu0.b32.cont [12/16] 0.0, 128
    %510 = vxpose.xlu0.b32.cont [13/16] 0.0, 128
    %511 = vxpose.xlu0.b32.cont [14/16] 0.0, 128
    %512 = vxpose.xlu0.b32.cont [15/16] 0.0, 128
    %513 = vxpose.xlu0.b32.end [16/16] 0.0, 128
    %v514 = vpop.trf.xlu0
    %v515 = vpop.trf.xlu0
    %v516 = vpop.trf.xlu0
    %v517 = vpop.trf.xlu0
    %v518 = vpop.trf.xlu0
    %v519 = vpop.trf.xlu0
    %v520 = vpop.trf.xlu0
    %v521 = vpop.trf.xlu0
    %v522 = vpop.trf.xlu0
    %v523 = vpop.trf.xlu0
    %v524 = vpop.trf.xlu0
    %v525 = vpop.trf.xlu0
    %v526 = vpop.trf.xlu0
    %v527 = vpop.trf.xlu0
    %v528 = vpop.trf.xlu0
    %v529 = vpop.trf.xlu0
    %530 = vxpose.xlu0.b32.start [1/16] %v389, 128
    %531 = vxpose.xlu0.b32.cont [2/16] 0.0, 128
    %532 = vxpose.xlu0.b32.cont [3/16] 0.0, 128
    %533 = vxpose.xlu0.b32.cont [4/16] 0.0, 128
    %534 = vxpose.xlu0.b32.cont [5/16] 0.0, 128
    %535 = vxpose.xlu0.b32.cont [6/16] 0.0, 128
    %536 = vxpose.xlu0.b32.cont [7/16] 0.0, 128
    %537 = vxpose.xlu0.b32.cont [8/16] 0.0, 128
    %538 = vxpose.xlu0.b32.cont [9/16] 0.0, 128
    %539 = vxpose.xlu0.b32.cont [10/16] 0.0, 128
    %540 = vxpose.xlu0.b32.cont [11/16] 0.0, 128
    %541 = vxpose.xlu0.b32.cont [12/16] 0.0, 128
    %542 = vxpose.xlu0.b32.cont [13/16] 0.0, 128
    %543 = vxpose.xlu0.b32.cont [14/16] 0.0, 128
    %544 = vxpose.xlu0.b32.cont [15/16] 0.0, 128
    %545 = vxpose.xlu0.b32.end [16/16] 0.0, 128
    %v546 = vpop.trf.xlu0
    %v547 = vpop.trf.xlu0
    %v548 = vpop.trf.xlu0
    %v549 = vpop.trf.xlu0
    %v550 = vpop.trf.xlu0
    %v551 = vpop.trf.xlu0
    %v552 = vpop.trf.xlu0
    %v553 = vpop.trf.xlu0
    %v554 = vpop.trf.xlu0
    %v555 = vpop.trf.xlu0
    %v556 = vpop.trf.xlu0
    %v557 = vpop.trf.xlu0
    %v558 = vpop.trf.xlu0
    %v559 = vpop.trf.xlu0
    %v560 = vpop.trf.xlu0
    %v561 = vpop.trf.xlu0
    %562 = vxpose.xlu0.b32.start [1/16] %v390, 128
    %563 = vxpose.xlu0.b32.cont [2/16] 0.0, 128
    %564 = vxpose.xlu0.b32.cont [3/16] 0.0, 128
    %565 = vxpose.xlu0.b32.cont [4/16] 0.0, 128
    %566 = vxpose.xlu0.b32.cont [5/16] 0.0, 128
    %567 = vxpose.xlu0.b32.cont [6/16] 0.0, 128
    %568 = vxpose.xlu0.b32.cont [7/16] 0.0, 128
    %569 = vxpose.xlu0.b32.cont [8/16] 0.0, 128
    %570 = vxpose.xlu0.b32.cont [9/16] 0.0, 128
    %571 = vxpose.xlu0.b32.cont [10/16] 0.0, 128
    %572 = vxpose.xlu0.b32.cont [11/16] 0.0, 128
    %573 = vxpose.xlu0.b32.cont [12/16] 0.0, 128
    %574 = vxpose.xlu0.b32.cont [13/16] 0.0, 128
    %575 = vxpose.xlu0.b32.cont [14/16] 0.0, 128
    %576 = vxpose.xlu0.b32.cont [15/16] 0.0, 128
    %577 = vxpose.xlu0.b32.end [16/16] 0.0, 128
    %v578 = vpop.trf.xlu0
    %v579 = vpop.trf.xlu0
    %v580 = vpop.trf.xlu0
    %v581 = vpop.trf.xlu0
    %v582 = vpop.trf.xlu0
    %v583 = vpop.trf.xlu0
    %v584 = vpop.trf.xlu0
    %v585 = vpop.trf.xlu0
    %v586 = vpop.trf.xlu0
    %v587 = vpop.trf.xlu0
    %v588 = vpop.trf.xlu0
    %v589 = vpop.trf.xlu0
    %v590 = vpop.trf.xlu0
    %v591 = vpop.trf.xlu0
    %v592 = vpop.trf.xlu0
    %v593 = vpop.trf.xlu0
    %594 = vxpose.xlu0.b32.start [1/16] %v391, 128
    %595 = vxpose.xlu0.b32.cont [2/16] 0.0, 128
    %596 = vxpose.xlu0.b32.cont [3/16] 0.0, 128
    %597 = vxpose.xlu0.b32.cont [4/16] 0.0, 128
    %598 = vxpose.xlu0.b32.cont [5/16] 0.0, 128
    %599 = vxpose.xlu0.b32.cont [6/16] 0.0, 128
    %600 = vxpose.xlu0.b32.cont [7/16] 0.0, 128
    %601 = vxpose.xlu0.b32.cont [8/16] 0.0, 128
    %602 = vxpose.xlu0.b32.cont [9/16] 0.0, 128
    %603 = vxpose.xlu0.b32.cont [10/16] 0.0, 128
    %604 = vxpose.xlu0.b32.cont [11/16] 0.0, 128
    %605 = vxpose.xlu0.b32.cont [12/16] 0.0, 128
    %606 = vxpose.xlu0.b32.cont [13/16] 0.0, 128
    %607 = vxpose.xlu0.b32.cont [14/16] 0.0, 128
    %608 = vxpose.xlu0.b32.cont [15/16] 0.0, 128
    %609 = vxpose.xlu0.b32.end [16/16] 0.0, 128
    %v610 = vpop.trf.xlu0
    %v611 = vpop.trf.xlu0
    %v612 = vpop.trf.xlu0
    %v613 = vpop.trf.xlu0
    %v614 = vpop.trf.xlu0
    %v615 = vpop.trf.xlu0
    %v616 = vpop.trf.xlu0
    %v617 = vpop.trf.xlu0
    %v618 = vpop.trf.xlu0
    %v619 = vpop.trf.xlu0
    %v620 = vpop.trf.xlu0
    %v621 = vpop.trf.xlu0
    %v622 = vpop.trf.xlu0
    %v623 = vpop.trf.xlu0
    %v624 = vpop.trf.xlu0
    %v625 = vpop.trf.xlu0
    %626 = vxpose.xlu0.b32.start [1/16] %v392, 128
    %627 = vxpose.xlu0.b32.cont [2/16] 0.0, 128
    %628 = vxpose.xlu0.b32.cont [3/16] 0.0, 128
    %629 = vxpose.xlu0.b32.cont [4/16] 0.0, 128
    %630 = vxpose.xlu0.b32.cont [5/16] 0.0, 128
    %631 = vxpose.xlu0.b32.cont [6/16] 0.0, 128
    %632 = vxpose.xlu0.b32.cont [7/16] 0.0, 128
    %633 = vxpose.xlu0.b32.cont [8/16] 0.0, 128
    %634 = vxpose.xlu0.b32.cont [9/16] 0.0, 128
    %635 = vxpose.xlu0.b32.cont [10/16] 0.0, 128
    %636 = vxpose.xlu0.b32.cont [11/16] 0.0, 128
    %637 = vxpose.xlu0.b32.cont [12/16] 0.0, 128
    %638 = vxpose.xlu0.b32.cont [13/16] 0.0, 128
    %639 = vxpose.xlu0.b32.cont [14/16] 0.0, 128
    %640 = vxpose.xlu0.b32.cont [15/16] 0.0, 128
    %641 = vxpose.xlu0.b32.end [16/16] 0.0, 128
    %v642 = vpop.trf.xlu0
    %v643 = vpop.trf.xlu0
    %v644 = vpop.trf.xlu0
    %v645 = vpop.trf.xlu0
    %v646 = vpop.trf.xlu0
    %v647 = vpop.trf.xlu0
    %v648 = vpop.trf.xlu0
    %v649 = vpop.trf.xlu0
    %v650 = vpop.trf.xlu0
    %v651 = vpop.trf.xlu0
    %v652 = vpop.trf.xlu0
    %v653 = vpop.trf.xlu0
    %v654 = vpop.trf.xlu0
    %v655 = vpop.trf.xlu0
    %v656 = vpop.trf.xlu0
    %v657 = vpop.trf.xlu0
    %658 = vxpose.xlu0.b32.start [1/16] %v393, 128
    %659 = vxpose.xlu0.b32.cont [2/16] 0.0, 128
    %660 = vxpose.xlu0.b32.cont [3/16] 0.0, 128
    %661 = vxpose.xlu0.b32.cont [4/16] 0.0, 128
    %662 = vxpose.xlu0.b32.cont [5/16] 0.0, 128
    %663 = vxpose.xlu0.b32.cont [6/16] 0.0, 128
    %664 = vxpose.xlu0.b32.cont [7/16] 0.0, 128
    %665 = vxpose.xlu0.b32.cont [8/16] 0.0, 128
    %666 = vxpose.xlu0.b32.cont [9/16] 0.0, 128
    %667 = vxpose.xlu0.b32.cont [10/16] 0.0, 128
    %668 = vxpose.xlu0.b32.cont [11/16] 0.0, 128
    %669 = vxpose.xlu0.b32.cont [12/16] 0.0, 128
    %670 = vxpose.xlu0.b32.cont [13/16] 0.0, 128
    %671 = vxpose.xlu0.b32.cont [14/16] 0.0, 128
    %672 = vxpose.xlu0.b32.cont [15/16] 0.0, 128
    %673 = vxpose.xlu0.b32.end [16/16] 0.0, 128
    %v674 = vpop.trf.xlu0
    %v675 = vpop.trf.xlu0
    %v676 = vpop.trf.xlu0
    %v677 = vpop.trf.xlu0
    %v678 = vpop.trf.xlu0
    %v679 = vpop.trf.xlu0
    %v680 = vpop.trf.xlu0
    %v681 = vpop.trf.xlu0
    %v682 = vpop.trf.xlu0
    %v683 = vpop.trf.xlu0
    %v684 = vpop.trf.xlu0
    %v685 = vpop.trf.xlu0
    %v686 = vpop.trf.xlu0
    %v687 = vpop.trf.xlu0
    %v688 = vpop.trf.xlu0
    %v689 = vpop.trf.xlu0
    %690 = vxpose.xlu0.b32.start [1/16] %v394, 128
    %691 = vxpose.xlu0.b32.cont [2/16] 0.0, 128
    %692 = vxpose.xlu0.b32.cont [3/16] 0.0, 128
    %693 = vxpose.xlu0.b32.cont [4/16] 0.0, 128
    %694 = vxpose.xlu0.b32.cont [5/16] 0.0, 128
    %695 = vxpose.xlu0.b32.cont [6/16] 0.0, 128
    %696 = vxpose.xlu0.b32.cont [7/16] 0.0, 128
    %697 = vxpose.xlu0.b32.cont [8/16] 0.0, 128
    %698 = vxpose.xlu0.b32.cont [9/16] 0.0, 128
    %699 = vxpose.xlu0.b32.cont [10/16] 0.0, 128
    %700 = vxpose.xlu0.b32.cont [11/16] 0.0, 128
    %701 = vxpose.xlu0.b32.cont [12/16] 0.0, 128
    %702 = vxpose.xlu0.b32.cont [13/16] 0.0, 128
    %703 = vxpose.xlu0.b32.cont [14/16] 0.0, 128
    %704 = vxpose.xlu0.b32.cont [15/16] 0.0, 128
    %705 = vxpose.xlu0.b32.end [16/16] 0.0, 128
    %v706 = vpop.trf.xlu0
    %v707 = vpop.trf.xlu0
    %v708 = vpop.trf.xlu0
    %v709 = vpop.trf.xlu0
    %v710 = vpop.trf.xlu0
    %v711 = vpop.trf.xlu0
    %v712 = vpop.trf.xlu0
    %v713 = vpop.trf.xlu0
    %v714 = vpop.trf.xlu0
    %v715 = vpop.trf.xlu0
    %v716 = vpop.trf.xlu0
    %v717 = vpop.trf.xlu0
    %v718 = vpop.trf.xlu0
    %v719 = vpop.trf.xlu0
    %v720 = vpop.trf.xlu0
    %v721 = vpop.trf.xlu0
    %722 = vxpose.xlu0.b32.start [1/16] %v395, 128
    %723 = vxpose.xlu0.b32.cont [2/16] 0.0, 128
    %724 = vxpose.xlu0.b32.cont [3/16] 0.0, 128
    %725 = vxpose.xlu0.b32.cont [4/16] 0.0, 128
    %726 = vxpose.xlu0.b32.cont [5/16] 0.0, 128
    %727 = vxpose.xlu0.b32.cont [6/16] 0.0, 128
    %728 = vxpose.xlu0.b32.cont [7/16] 0.0, 128
    %729 = vxpose.xlu0.b32.cont [8/16] 0.0, 128
    %730 = vxpose.xlu0.b32.cont [9/16] 0.0, 128
    %731 = vxpose.xlu0.b32.cont [10/16] 0.0, 128
    %732 = vxpose.xlu0.b32.cont [11/16] 0.0, 128
    %733 = vxpose.xlu0.b32.cont [12/16] 0.0, 128
    %734 = vxpose.xlu0.b32.cont [13/16] 0.0, 128
    %735 = vxpose.xlu0.b32.cont [14/16] 0.0, 128
    %736 = vxpose.xlu0.b32.cont [15/16] 0.0, 128
    %737 = vxpose.xlu0.b32.end [16/16] 0.0, 128
    %v738 = vpop.trf.xlu0
    %v739 = vpop.trf.xlu0
    %v740 = vpop.trf.xlu0
    %v741 = vpop.trf.xlu0
    %v742 = vpop.trf.xlu0
    %v743 = vpop.trf.xlu0
    %v744 = vpop.trf.xlu0
    %v745 = vpop.trf.xlu0
    %v746 = vpop.trf.xlu0
    %v747 = vpop.trf.xlu0
    %v748 = vpop.trf.xlu0
    %v749 = vpop.trf.xlu0
    %v750 = vpop.trf.xlu0
    %v751 = vpop.trf.xlu0
    %v752 = vpop.trf.xlu0
    %v753 = vpop.trf.xlu0
    %754 = vxpose.xlu0.b32.start [1/16] %v396, 128
    %755 = vxpose.xlu0.b32.cont [2/16] 0.0, 128
    %756 = vxpose.xlu0.b32.cont [3/16] 0.0, 128
    %757 = vxpose.xlu0.b32.cont [4/16] 0.0, 128
    %758 = vxpose.xlu0.b32.cont [5/16] 0.0, 128
    %759 = vxpose.xlu0.b32.cont [6/16] 0.0, 128
    %760 = vxpose.xlu0.b32.cont [7/16] 0.0, 128
    %761 = vxpose.xlu0.b32.cont [8/16] 0.0, 128
    %762 = vxpose.xlu0.b32.cont [9/16] 0.0, 128
    %763 = vxpose.xlu0.b32.cont [10/16] 0.0, 128
    %764 = vxpose.xlu0.b32.cont [11/16] 0.0, 128
    %765 = vxpose.xlu0.b32.cont [12/16] 0.0, 128
    %766 = vxpose.xlu0.b32.cont [13/16] 0.0, 128
    %767 = vxpose.xlu0.b32.cont [14/16] 0.0, 128
    %768 = vxpose.xlu0.b32.cont [15/16] 0.0, 128
    %769 = vxpose.xlu0.b32.end [16/16] 0.0, 128
    %v770 = vpop.trf.xlu0
    %v771 = vpop.trf.xlu0
    %v772 = vpop.trf.xlu0
    %v773 = vpop.trf.xlu0
    %v774 = vpop.trf.xlu0
    %v775 = vpop.trf.xlu0
    %v776 = vpop.trf.xlu0
    %v777 = vpop.trf.xlu0
    %v778 = vpop.trf.xlu0
    %v779 = vpop.trf.xlu0
    %v780 = vpop.trf.xlu0
    %v781 = vpop.trf.xlu0
    %v782 = vpop.trf.xlu0
    %v783 = vpop.trf.xlu0
    %v784 = vpop.trf.xlu0
    %v785 = vpop.trf.xlu0
    %786 = vxpose.xlu0.b32.start [1/16] %v397, 128
    %787 = vxpose.xlu0.b32.cont [2/16] 0.0, 128
    %788 = vxpose.xlu0.b32.cont [3/16] 0.0, 128
    %789 = vxpose.xlu0.b32.cont [4/16] 0.0, 128
    %790 = vxpose.xlu0.b32.cont [5/16] 0.0, 128
    %791 = vxpose.xlu0.b32.cont [6/16] 0.0, 128
    %792 = vxpose.xlu0.b32.cont [7/16] 0.0, 128
    %793 = vxpose.xlu0.b32.cont [8/16] 0.0, 128
    %794 = vxpose.xlu0.b32.cont [9/16] 0.0, 128
    %795 = vxpose.xlu0.b32.cont [10/16] 0.0, 128
    %796 = vxpose.xlu0.b32.cont [11/16] 0.0, 128
    %797 = vxpose.xlu0.b32.cont [12/16] 0.0, 128
    %798 = vxpose.xlu0.b32.cont [13/16] 0.0, 128
    %799 = vxpose.xlu0.b32.cont [14/16] 0.0, 128
    %800 = vxpose.xlu0.b32.cont [15/16] 0.0, 128
    %801 = vxpose.xlu0.b32.end [16/16] 0.0, 128
    %v802 = vpop.trf.xlu0
    %v803 = vpop.trf.xlu0
    %v804 = vpop.trf.xlu0
    %v805 = vpop.trf.xlu0
    %v806 = vpop.trf.xlu0
    %v807 = vpop.trf.xlu0
    %v808 = vpop.trf.xlu0
    %v809 = vpop.trf.xlu0
    %v810 = vpop.trf.xlu0
    %v811 = vpop.trf.xlu0
    %v812 = vpop.trf.xlu0
    %v813 = vpop.trf.xlu0
    %v814 = vpop.trf.xlu0
    %v815 = vpop.trf.xlu0
    %v816 = vpop.trf.xlu0
    %v817 = vpop.trf.xlu0
    %818 = vxpose.xlu0.b32.start [1/16] %v418, 128
    %819 = vxpose.xlu0.b32.cont [2/16] 0.0, 128
    %820 = vxpose.xlu0.b32.cont [3/16] 0.0, 128
    %821 = vxpose.xlu0.b32.cont [4/16] 0.0, 128
    %822 = vxpose.xlu0.b32.cont [5/16] 0.0, 128
    %823 = vxpose.xlu0.b32.cont [6/16] 0.0, 128
    %824 = vxpose.xlu0.b32.cont [7/16] 0.0, 128
    %825 = vxpose.xlu0.b32.cont [8/16] 0.0, 128
    %826 = vxpose.xlu0.b32.cont [9/16] 0.0, 128
    %827 = vxpose.xlu0.b32.cont [10/16] 0.0, 128
    %828 = vxpose.xlu0.b32.cont [11/16] 0.0, 128
    %829 = vxpose.xlu0.b32.cont [12/16] 0.0, 128
    %830 = vxpose.xlu0.b32.cont [13/16] 0.0, 128
    %831 = vxpose.xlu0.b32.cont [14/16] 0.0, 128
    %832 = vxpose.xlu0.b32.cont [15/16] 0.0, 128
    %833 = vxpose.xlu0.b32.end [16/16] 0.0, 128
    %v834 = vpop.trf.xlu0
    %v835 = vpop.trf.xlu0
    %v836 = vpop.trf.xlu0
    %v837 = vpop.trf.xlu0
    %v838 = vpop.trf.xlu0
    %v839 = vpop.trf.xlu0
    %v840 = vpop.trf.xlu0
    %v841 = vpop.trf.xlu0
    %v842 = vpop.trf.xlu0
    %v843 = vpop.trf.xlu0
    %v844 = vpop.trf.xlu0
    %v845 = vpop.trf.xlu0
    %v846 = vpop.trf.xlu0
    %v847 = vpop.trf.xlu0
    %v848 = vpop.trf.xlu0
    %v849 = vpop.trf.xlu0
    %850 = vxpose.xlu0.b32.start [1/16] %v419, 128
    %851 = vxpose.xlu0.b32.cont [2/16] 0.0, 128
    %852 = vxpose.xlu0.b32.cont [3/16] 0.0, 128
    %853 = vxpose.xlu0.b32.cont [4/16] 0.0, 128
    %854 = vxpose.xlu0.b32.cont [5/16] 0.0, 128
    %855 = vxpose.xlu0.b32.cont [6/16] 0.0, 128
    %856 = vxpose.xlu0.b32.cont [7/16] 0.0, 128
    %857 = vxpose.xlu0.b32.cont [8/16] 0.0, 128
    %858 = vxpose.xlu0.b32.cont [9/16] 0.0, 128
    %859 = vxpose.xlu0.b32.cont [10/16] 0.0, 128
    %860 = vxpose.xlu0.b32.cont [11/16] 0.0, 128
    %861 = vxpose.xlu0.b32.cont [12/16] 0.0, 128
    %862 = vxpose.xlu0.b32.cont [13/16] 0.0, 128
    %863 = vxpose.xlu0.b32.cont [14/16] 0.0, 128
    %864 = vxpose.xlu0.b32.cont [15/16] 0.0, 128
    %865 = vxpose.xlu0.b32.end [16/16] 0.0, 128
    %v866 = vpop.trf.xlu0
    %v867 = vpop.trf.xlu0
    %v868 = vpop.trf.xlu0
    %v869 = vpop.trf.xlu0
    %v870 = vpop.trf.xlu0
    %v871 = vpop.trf.xlu0
    %v872 = vpop.trf.xlu0
    %v873 = vpop.trf.xlu0
    %v874 = vpop.trf.xlu0
    %v875 = vpop.trf.xlu0
    %v876 = vpop.trf.xlu0
    %v877 = vpop.trf.xlu0
    %v878 = vpop.trf.xlu0
    %v879 = vpop.trf.xlu0
    %v880 = vpop.trf.xlu0
    %v881 = vpop.trf.xlu0
    %882 = vxpose.xlu0.b32.start [1/16] %v420, 128
    %883 = vxpose.xlu0.b32.cont [2/16] 0.0, 128
    %884 = vxpose.xlu0.b32.cont [3/16] 0.0, 128
    %885 = vxpose.xlu0.b32.cont [4/16] 0.0, 128
    %886 = vxpose.xlu0.b32.cont [5/16] 0.0, 128
    %887 = vxpose.xlu0.b32.cont [6/16] 0.0, 128
    %888 = vxpose.xlu0.b32.cont [7/16] 0.0, 128
    %889 = vxpose.xlu0.b32.cont [8/16] 0.0, 128
    %890 = vxpose.xlu0.b32.cont [9/16] 0.0, 128
    %891 = vxpose.xlu0.b32.cont [10/16] 0.0, 128
    %892 = vxpose.xlu0.b32.cont [11/16] 0.0, 128
    %893 = vxpose.xlu0.b32.cont [12/16] 0.0, 128
    %894 = vxpose.xlu0.b32.cont [13/16] 0.0, 128
    %895 = vxpose.xlu0.b32.cont [14/16] 0.0, 128
    %896 = vxpose.xlu0.b32.cont [15/16] 0.0, 128
    %897 = vxpose.xlu0.b32.end [16/16] 0.0, 128
    %v898 = vpop.trf.xlu0
    %v899 = vpop.trf.xlu0
    %v900 = vpop.trf.xlu0
    %v901 = vpop.trf.xlu0
    %v902 = vpop.trf.xlu0
    %v903 = vpop.trf.xlu0
    %v904 = vpop.trf.xlu0
    %v905 = vpop.trf.xlu0
    %v906 = vpop.trf.xlu0
    %v907 = vpop.trf.xlu0
    %v908 = vpop.trf.xlu0
    %v909 = vpop.trf.xlu0
    %v910 = vpop.trf.xlu0
    %v911 = vpop.trf.xlu0
    %v912 = vpop.trf.xlu0
    %v913 = vpop.trf.xlu0
    %914 = vxpose.xlu0.b32.start [1/16] %v421, 128
    %915 = vxpose.xlu0.b32.cont [2/16] 0.0, 128
    %916 = vxpose.xlu0.b32.cont [3/16] 0.0, 128
    %917 = vxpose.xlu0.b32.cont [4/16] 0.0, 128
    %918 = vxpose.xlu0.b32.cont [5/16] 0.0, 128
    %919 = vxpose.xlu0.b32.cont [6/16] 0.0, 128
    %920 = vxpose.xlu0.b32.cont [7/16] 0.0, 128
    %921 = vxpose.xlu0.b32.cont [8/16] 0.0, 128
    %922 = vxpose.xlu0.b32.cont [9/16] 0.0, 128
    %923 = vxpose.xlu0.b32.cont [10/16] 0.0, 128
    %924 = vxpose.xlu0.b32.cont [11/16] 0.0, 128
    %925 = vxpose.xlu0.b32.cont [12/16] 0.0, 128
    %926 = vxpose.xlu0.b32.cont [13/16] 0.0, 128
    %927 = vxpose.xlu0.b32.cont [14/16] 0.0, 128
    %928 = vxpose.xlu0.b32.cont [15/16] 0.0, 128
    %929 = vxpose.xlu0.b32.end [16/16] 0.0, 128
    %v930 = vpop.trf.xlu0
    %v931 = vpop.trf.xlu0
    %v932 = vpop.trf.xlu0
    %v933 = vpop.trf.xlu0
    %v934 = vpop.trf.xlu0
    %v935 = vpop.trf.xlu0
    %v936 = vpop.trf.xlu0
    %v937 = vpop.trf.xlu0
    %v938 = vpop.trf.xlu0
    %v939 = vpop.trf.xlu0
    %v940 = vpop.trf.xlu0
    %v941 = vpop.trf.xlu0
    %v942 = vpop.trf.xlu0
    %v943 = vpop.trf.xlu0
    %v944 = vpop.trf.xlu0
    %v945 = vpop.trf.xlu0
    %946 = vxpose.xlu0.b32.start [1/16] %v422, 128
    %947 = vxpose.xlu0.b32.cont [2/16] 0.0, 128
    %948 = vxpose.xlu0.b32.cont [3/16] 0.0, 128
    %949 = vxpose.xlu0.b32.cont [4/16] 0.0, 128
    %950 = vxpose.xlu0.b32.cont [5/16] 0.0, 128
    %951 = vxpose.xlu0.b32.cont [6/16] 0.0, 128
    %952 = vxpose.xlu0.b32.cont [7/16] 0.0, 128
    %953 = vxpose.xlu0.b32.cont [8/16] 0.0, 128
    %954 = vxpose.xlu0.b32.cont [9/16] 0.0, 128
    %955 = vxpose.xlu0.b32.cont [10/16] 0.0, 128
    %956 = vxpose.xlu0.b32.cont [11/16] 0.0, 128
    %957 = vxpose.xlu0.b32.cont [12/16] 0.0, 128
    %958 = vxpose.xlu0.b32.cont [13/16] 0.0, 128
    %959 = vxpose.xlu0.b32.cont [14/16] 0.0, 128
    %960 = vxpose.xlu0.b32.cont [15/16] 0.0, 128
    %961 = vxpose.xlu0.b32.end [16/16] 0.0, 128
    %v962 = vpop.trf.xlu0
    %v963 = vpop.trf.xlu0
    %v964 = vpop.trf.xlu0
    %v965 = vpop.trf.xlu0
    %v966 = vpop.trf.xlu0
    %v967 = vpop.trf.xlu0
    %v968 = vpop.trf.xlu0
    %v969 = vpop.trf.xlu0
    %v970 = vpop.trf.xlu0
    %v971 = vpop.trf.xlu0
    %v972 = vpop.trf.xlu0
    %v973 = vpop.trf.xlu0
    %v974 = vpop.trf.xlu0
    %v975 = vpop.trf.xlu0
    %v976 = vpop.trf.xlu0
    %v977 = vpop.trf.xlu0
    %978 = vxpose.xlu0.b32.start [1/16] %v423, 128
    %979 = vxpose.xlu0.b32.cont [2/16] 0.0, 128
    %980 = vxpose.xlu0.b32.cont [3/16] 0.0, 128
    %981 = vxpose.xlu0.b32.cont [4/16] 0.0, 128
    %982 = vxpose.xlu0.b32.cont [5/16] 0.0, 128
    %983 = vxpose.xlu0.b32.cont [6/16] 0.0, 128
    %984 = vxpose.xlu0.b32.cont [7/16] 0.0, 128
    %985 = vxpose.xlu0.b32.cont [8/16] 0.0, 128
    %986 = vxpose.xlu0.b32.cont [9/16] 0.0, 128
    %987 = vxpose.xlu0.b32.cont [10/16] 0.0, 128
    %988 = vxpose.xlu0.b32.cont [11/16] 0.0, 128
    %989 = vxpose.xlu0.b32.cont [12/16] 0.0, 128
    %990 = vxpose.xlu0.b32.cont [13/16] 0.0, 128
    %991 = vxpose.xlu0.b32.cont [14/16] 0.0, 128
    %992 = vxpose.xlu0.b32.cont [15/16] 0.0, 128
    %993 = vxpose.xlu0.b32.end [16/16] 0.0, 128
    %v994 = vpop.trf.xlu0
    %v995 = vpop.trf.xlu0
    %v996 = vpop.trf.xlu0
    %v997 = vpop.trf.xlu0
    %v998 = vpop.trf.xlu0
    %v999 = vpop.trf.xlu0
    %v1000 = vpop.trf.xlu0
    %v1001 = vpop.trf.xlu0
    %v1002 = vpop.trf.xlu0
    %v1003 = vpop.trf.xlu0
    %v1004 = vpop.trf.xlu0
    %v1005 = vpop.trf.xlu0
    %v1006 = vpop.trf.xlu0
    %v1007 = vpop.trf.xlu0
    %v1008 = vpop.trf.xlu0
    %v1009 = vpop.trf.xlu0
    %1010 = vxpose.xlu0.b32.start [1/16] %v424, 128
    %1011 = vxpose.xlu0.b32.cont [2/16] 0.0, 128
    %1012 = vxpose.xlu0.b32.cont [3/16] 0.0, 128
    %1013 = vxpose.xlu0.b32.cont [4/16] 0.0, 128
    %1014 = vxpose.xlu0.b32.cont [5/16] 0.0, 128
    %1015 = vxpose.xlu0.b32.cont [6/16] 0.0, 128
    %1016 = vxpose.xlu0.b32.cont [7/16] 0.0, 128
    %1017 = vxpose.xlu0.b32.cont [8/16] 0.0, 128
    %1018 = vxpose.xlu0.b32.cont [9/16] 0.0, 128
    %1019 = vxpose.xlu0.b32.cont [10/16] 0.0, 128
    %1020 = vxpose.xlu0.b32.cont [11/16] 0.0, 128
    %1021 = vxpose.xlu0.b32.cont [12/16] 0.0, 128
    %1022 = vxpose.xlu0.b32.cont [13/16] 0.0, 128
    %1023 = vxpose.xlu0.b32.cont [14/16] 0.0, 128
    %1024 = vxpose.xlu0.b32.cont [15/16] 0.0, 128
    %1025 = vxpose.xlu0.b32.end [16/16] 0.0, 128
    %v1026 = vpop.trf.xlu0
    %v1027 = vpop.trf.xlu0
    %v1028 = vpop.trf.xlu0
    %v1029 = vpop.trf.xlu0
    %v1030 = vpop.trf.xlu0
    %v1031 = vpop.trf.xlu0
    %v1032 = vpop.trf.xlu0
    %v1033 = vpop.trf.xlu0
    %v1034 = vpop.trf.xlu0
    %v1035 = vpop.trf.xlu0
    %v1036 = vpop.trf.xlu0
    %v1037 = vpop.trf.xlu0
    %v1038 = vpop.trf.xlu0
    %v1039 = vpop.trf.xlu0
    %v1040 = vpop.trf.xlu0
    %v1041 = vpop.trf.xlu0
    %1042 = vxpose.xlu0.b32.start [1/16] %v425, 128
    %1043 = vxpose.xlu0.b32.cont [2/16] 0.0, 128
    %1044 = vxpose.xlu0.b32.cont [3/16] 0.0, 128
    %1045 = vxpose.xlu0.b32.cont [4/16] 0.0, 128
    %1046 = vxpose.xlu0.b32.cont [5/16] 0.0, 128
    %1047 = vxpose.xlu0.b32.cont [6/16] 0.0, 128
    %1048 = vxpose.xlu0.b32.cont [7/16] 0.0, 128
    %1049 = vxpose.xlu0.b32.cont [8/16] 0.0, 128
    %1050 = vxpose.xlu0.b32.cont [9/16] 0.0, 128
    %1051 = vxpose.xlu0.b32.cont [10/16] 0.0, 128
    %1052 = vxpose.xlu0.b32.cont [11/16] 0.0, 128
    %1053 = vxpose.xlu0.b32.cont [12/16] 0.0, 128
    %1054 = vxpose.xlu0.b32.cont [13/16] 0.0, 128
    %1055 = vxpose.xlu0.b32.cont [14/16] 0.0, 128
    %1056 = vxpose.xlu0.b32.cont [15/16] 0.0, 128
    %1057 = vxpose.xlu0.b32.end [16/16] 0.0, 128
    %v1058 = vpop.trf.xlu0
    %v1059 = vpop.trf.xlu0
    %v1060 = vpop.trf.xlu0
    %v1061 = vpop.trf.xlu0
    %v1062 = vpop.trf.xlu0
    %v1063 = vpop.trf.xlu0
    %v1064 = vpop.trf.xlu0
    %v1065 = vpop.trf.xlu0
    %v1066 = vpop.trf.xlu0
    %v1067 = vpop.trf.xlu0
    %v1068 = vpop.trf.xlu0
    %v1069 = vpop.trf.xlu0
    %v1070 = vpop.trf.xlu0
    %v1071 = vpop.trf.xlu0
    %v1072 = vpop.trf.xlu0
    %v1073 = vpop.trf.xlu0
    %1074 = vxpose.xlu0.b32.start [1/16] %v426, 128
    %1075 = vxpose.xlu0.b32.cont [2/16] 0.0, 128
    %1076 = vxpose.xlu0.b32.cont [3/16] 0.0, 128
    %1077 = vxpose.xlu0.b32.cont [4/16] 0.0, 128
    %1078 = vxpose.xlu0.b32.cont [5/16] 0.0, 128
    %1079 = vxpose.xlu0.b32.cont [6/16] 0.0, 128
    %1080 = vxpose.xlu0.b32.cont [7/16] 0.0, 128
    %1081 = vxpose.xlu0.b32.cont [8/16] 0.0, 128
    %1082 = vxpose.xlu0.b32.cont [9/16] 0.0, 128
    %1083 = vxpose.xlu0.b32.cont [10/16] 0.0, 128
    %1084 = vxpose.xlu0.b32.cont [11/16] 0.0, 128
    %1085 = vxpose.xlu0.b32.cont [12/16] 0.0, 128
    %1086 = vxpose.xlu0.b32.cont [13/16] 0.0, 128
    %1087 = vxpose.xlu0.b32.cont [14/16] 0.0, 128
    %1088 = vxpose.xlu0.b32.cont [15/16] 0.0, 128
    %1089 = vxpose.xlu0.b32.end [16/16] 0.0, 128
    %v1090 = vpop.trf.xlu0
    %v1091 = vpop.trf.xlu0
    %v1092 = vpop.trf.xlu0
    %v1093 = vpop.trf.xlu0
    %v1094 = vpop.trf.xlu0
    %v1095 = vpop.trf.xlu0
    %v1096 = vpop.trf.xlu0
    %v1097 = vpop.trf.xlu0
    %v1098 = vpop.trf.xlu0
    %v1099 = vpop.trf.xlu0
    %v1100 = vpop.trf.xlu0
    %v1101 = vpop.trf.xlu0
    %v1102 = vpop.trf.xlu0
    %v1103 = vpop.trf.xlu0
    %v1104 = vpop.trf.xlu0
    %v1105 = vpop.trf.xlu0
    %1106 = vxpose.xlu0.b32.start [1/16] %v427, 128
    %1107 = vxpose.xlu0.b32.cont [2/16] 0.0, 128
    %1108 = vxpose.xlu0.b32.cont [3/16] 0.0, 128
    %1109 = vxpose.xlu0.b32.cont [4/16] 0.0, 128
    %1110 = vxpose.xlu0.b32.cont [5/16] 0.0, 128
    %1111 = vxpose.xlu0.b32.cont [6/16] 0.0, 128
    %1112 = vxpose.xlu0.b32.cont [7/16] 0.0, 128
    %1113 = vxpose.xlu0.b32.cont [8/16] 0.0, 128
    %1114 = vxpose.xlu0.b32.cont [9/16] 0.0, 128
    %1115 = vxpose.xlu0.b32.cont [10/16] 0.0, 128
    %1116 = vxpose.xlu0.b32.cont [11/16] 0.0, 128
    %1117 = vxpose.xlu0.b32.cont [12/16] 0.0, 128
    %1118 = vxpose.xlu0.b32.cont [13/16] 0.0, 128
    %1119 = vxpose.xlu0.b32.cont [14/16] 0.0, 128
    %1120 = vxpose.xlu0.b32.cont [15/16] 0.0, 128
    %1121 = vxpose.xlu0.b32.end [16/16] 0.0, 128
    %v1122 = vpop.trf.xlu0
    %v1123 = vpop.trf.xlu0
    %v1124 = vpop.trf.xlu0
    %v1125 = vpop.trf.xlu0
    %v1126 = vpop.trf.xlu0
    %v1127 = vpop.trf.xlu0
    %v1128 = vpop.trf.xlu0
    %v1129 = vpop.trf.xlu0
    %v1130 = vpop.trf.xlu0
    %v1131 = vpop.trf.xlu0
    %v1132 = vpop.trf.xlu0
    %v1133 = vpop.trf.xlu0
    %v1134 = vpop.trf.xlu0
    %v1135 = vpop.trf.xlu0
    %v1136 = vpop.trf.xlu0
    %v1137 = vpop.trf.xlu0
    %1138 = vxpose.xlu0.b32.start [1/16] %v428, 128
    %1139 = vxpose.xlu0.b32.cont [2/16] 0.0, 128
    %1140 = vxpose.xlu0.b32.cont [3/16] 0.0, 128
    %1141 = vxpose.xlu0.b32.cont [4/16] 0.0, 128
    %1142 = vxpose.xlu0.b32.cont [5/16] 0.0, 128
    %1143 = vxpose.xlu0.b32.cont [6/16] 0.0, 128
    %1144 = vxpose.xlu0.b32.cont [7/16] 0.0, 128
    %1145 = vxpose.xlu0.b32.cont [8/16] 0.0, 128
    %1146 = vxpose.xlu0.b32.cont [9/16] 0.0, 128
    %1147 = vxpose.xlu0.b32.cont [10/16] 0.0, 128
    %1148 = vxpose.xlu0.b32.cont [11/16] 0.0, 128
    %1149 = vxpose.xlu0.b32.cont [12/16] 0.0, 128
    %1150 = vxpose.xlu0.b32.cont [13/16] 0.0, 128
    %1151 = vxpose.xlu0.b32.cont [14/16] 0.0, 128
    %1152 = vxpose.xlu0.b32.cont [15/16] 0.0, 128
    %1153 = vxpose.xlu0.b32.end [16/16] 0.0, 128
    %v1154 = vpop.trf.xlu0
    %v1155 = vpop.trf.xlu0
    %v1156 = vpop.trf.xlu0
    %v1157 = vpop.trf.xlu0
    %v1158 = vpop.trf.xlu0
    %v1159 = vpop.trf.xlu0
    %v1160 = vpop.trf.xlu0
    %v1161 = vpop.trf.xlu0
    %v1162 = vpop.trf.xlu0
    %v1163 = vpop.trf.xlu0
    %v1164 = vpop.trf.xlu0
    %v1165 = vpop.trf.xlu0
    %v1166 = vpop.trf.xlu0
    %v1167 = vpop.trf.xlu0
    %v1168 = vpop.trf.xlu0
    %v1169 = vpop.trf.xlu0
    %1170 = vxpose.xlu0.b32.start [1/16] %v429, 128
    %1171 = vxpose.xlu0.b32.cont [2/16] 0.0, 128
    %1172 = vxpose.xlu0.b32.cont [3/16] 0.0, 128
    %1173 = vxpose.xlu0.b32.cont [4/16] 0.0, 128
    %1174 = vxpose.xlu0.b32.cont [5/16] 0.0, 128
    %1175 = vxpose.xlu0.b32.cont [6/16] 0.0, 128
    %1176 = vxpose.xlu0.b32.cont [7/16] 0.0, 128
    %1177 = vxpose.xlu0.b32.cont [8/16] 0.0, 128
    %1178 = vxpose.xlu0.b32.cont [9/16] 0.0, 128
    %1179 = vxpose.xlu0.b32.cont [10/16] 0.0, 128
    %1180 = vxpose.xlu0.b32.cont [11/16] 0.0, 128
    %1181 = vxpose.xlu0.b32.cont [12/16] 0.0, 128
    %1182 = vxpose.xlu0.b32.cont [13/16] 0.0, 128
    %1183 = vxpose.xlu0.b32.cont [14/16] 0.0, 128
    %1184 = vxpose.xlu0.b32.cont [15/16] 0.0, 128
    %1185 = vxpose.xlu0.b32.end [16/16] 0.0, 128
    %v1186 = vpop.trf.xlu0
    %v1187 = vpop.trf.xlu0
    %v1188 = vpop.trf.xlu0
    %v1189 = vpop.trf.xlu0
    %v1190 = vpop.trf.xlu0
    %v1191 = vpop.trf.xlu0
    %v1192 = vpop.trf.xlu0
    %v1193 = vpop.trf.xlu0
    %v1194 = vpop.trf.xlu0
    %v1195 = vpop.trf.xlu0
    %v1196 = vpop.trf.xlu0
    %v1197 = vpop.trf.xlu0
    %v1198 = vpop.trf.xlu0
    %v1199 = vpop.trf.xlu0
    %v1200 = vpop.trf.xlu0
    %v1201 = vpop.trf.xlu0
    %v1202 = vpack.c.bf16 %v450, %v450
    %v1203 = vpack.c.bf16 %v482, %v482
    %v1204 = vpack.c.bf16 %v514, %v514
    %v1205 = vpack.c.bf16 %v546, %v546
    %v1206 = vpack.c.bf16 %v578, %v578
    %v1207 = vpack.c.bf16 %v610, %v610
    %v1208 = vpack.c.bf16 %v642, %v642
    %v1209 = vpack.c.bf16 %v674, %v674
    %v1210 = vpack.c.bf16 %v706, %v706
    %v1211 = vpack.c.bf16 %v738, %v738
    %v1212 = vpack.c.bf16 %v770, %v770
    %v1213 = vpack.c.bf16 %v802, %v802
    %v1214 = vpack.c.bf16 %v834, %v834
    %v1215 = vpack.c.bf16 %v866, %v866
    %v1216 = vpack.c.bf16 %v898, %v898
    %v1217 = vpack.c.bf16 %v930, %v930
    %v1218 = vpack.c.bf16 %v962, %v962
    %v1219 = vpack.c.bf16 %v994, %v994
    %v1220 = vpack.c.bf16 %v1026, %v1026
    %v1221 = vpack.c.bf16 %v1058, %v1058
    %v1222 = vpack.c.bf16 %v1090, %v1090
    %v1223 = vpack.c.bf16 %v1122, %v1122
    %v1224 = vpack.c.bf16 %v1154, %v1154
    %v1225 = vpack.c.bf16 %v1186, %v1186
    %1230 = vrot.lane.b32.xlu0 %v338, 32
    %v1231 = vpop.permute.xlu0 %1230
    %1232 = vrot.lane.b32.xlu0 %v352, 32
    %v1233 = vpop.permute.xlu0 %1232
    %1234 = vrot.lane.b32.xlu0 %v340, 32
    %v1235 = vpop.permute.xlu0 %1234
    %1236 = vrot.lane.b32.xlu0 %v354, 32
    %v1237 = vpop.permute.xlu0 %1236
    %v1238 = vsel %vm189, %v1231, %v1233
    %v1239 = vsel %vm189, %v1235, %v1237
    %1242 = vxpose.xlu0.b32.start [1/16] %v1238, 128
    %1243 = vxpose.xlu0.b32.cont [2/16] 0.0, 128
    %1244 = vxpose.xlu0.b32.cont [3/16] 0.0, 128
    %1245 = vxpose.xlu0.b32.cont [4/16] 0.0, 128
    %1246 = vxpose.xlu0.b32.cont [5/16] 0.0, 128
    %1247 = vxpose.xlu0.b32.cont [6/16] 0.0, 128
    %1248 = vxpose.xlu0.b32.cont [7/16] 0.0, 128
    %1249 = vxpose.xlu0.b32.cont [8/16] 0.0, 128
    %1250 = vxpose.xlu0.b32.cont [9/16] 0.0, 128
    %1251 = vxpose.xlu0.b32.cont [10/16] 0.0, 128
    %1252 = vxpose.xlu0.b32.cont [11/16] 0.0, 128
    %1253 = vxpose.xlu0.b32.cont [12/16] 0.0, 128
    %1254 = vxpose.xlu0.b32.cont [13/16] 0.0, 128
    %1255 = vxpose.xlu0.b32.cont [14/16] 0.0, 128
    %1256 = vxpose.xlu0.b32.cont [15/16] 0.0, 128
    %1257 = vxpose.xlu0.b32.end [16/16] 0.0, 128
    %v1258 = vpop.trf.xlu0
    %v1259 = vpop.trf.xlu0
    %v1260 = vpop.trf.xlu0
    %v1261 = vpop.trf.xlu0
    %v1262 = vpop.trf.xlu0
    %v1263 = vpop.trf.xlu0
    %v1264 = vpop.trf.xlu0
    %v1265 = vpop.trf.xlu0
    %v1266 = vpop.trf.xlu0
    %v1267 = vpop.trf.xlu0
    %v1268 = vpop.trf.xlu0
    %v1269 = vpop.trf.xlu0
    %v1270 = vpop.trf.xlu0
    %v1271 = vpop.trf.xlu0
    %v1272 = vpop.trf.xlu0
    %v1273 = vpop.trf.xlu0
    %1274 = vxpose.xlu0.b32.start [1/16] %v1239, 128
    %1275 = vxpose.xlu0.b32.cont [2/16] 0.0, 128
    %1276 = vxpose.xlu0.b32.cont [3/16] 0.0, 128
    %1277 = vxpose.xlu0.b32.cont [4/16] 0.0, 128
    %1278 = vxpose.xlu0.b32.cont [5/16] 0.0, 128
    %1279 = vxpose.xlu0.b32.cont [6/16] 0.0, 128
    %1280 = vxpose.xlu0.b32.cont [7/16] 0.0, 128
    %1281 = vxpose.xlu0.b32.cont [8/16] 0.0, 128
    %1282 = vxpose.xlu0.b32.cont [9/16] 0.0, 128
    %1283 = vxpose.xlu0.b32.cont [10/16] 0.0, 128
    %1284 = vxpose.xlu0.b32.cont [11/16] 0.0, 128
    %1285 = vxpose.xlu0.b32.cont [12/16] 0.0, 128
    %1286 = vxpose.xlu0.b32.cont [13/16] 0.0, 128
    %1287 = vxpose.xlu0.b32.cont [14/16] 0.0, 128
    %1288 = vxpose.xlu0.b32.cont [15/16] 0.0, 128
    %1289 = vxpose.xlu0.b32.end [16/16] 0.0, 128
    %v1290 = vpop.trf.xlu0
    %v1291 = vpop.trf.xlu0
    %v1292 = vpop.trf.xlu0
    %v1293 = vpop.trf.xlu0
    %v1294 = vpop.trf.xlu0
    %v1295 = vpop.trf.xlu0
    %v1296 = vpop.trf.xlu0
    %v1297 = vpop.trf.xlu0
    %v1298 = vpop.trf.xlu0
    %v1299 = vpop.trf.xlu0
    %v1300 = vpop.trf.xlu0
    %v1301 = vpop.trf.xlu0
    %v1302 = vpop.trf.xlu0
    %v1303 = vpop.trf.xlu0
    %v1304 = vpop.trf.xlu0
    %v1305 = vpop.trf.xlu0
    %1306 = vxpose.xlu0.b32.start [1/16] %v1258, 128
    %1307 = vxpose.xlu0.b32.cont [2/16] 0.0, 128
    %1308 = vxpose.xlu0.b32.cont [3/16] 0.0, 128
    %1309 = vxpose.xlu0.b32.cont [4/16] 0.0, 128
    %1310 = vxpose.xlu0.b32.cont [5/16] 0.0, 128
    %1311 = vxpose.xlu0.b32.cont [6/16] 0.0, 128
    %1312 = vxpose.xlu0.b32.cont [7/16] 0.0, 128
    %1313 = vxpose.xlu0.b32.cont [8/16] 0.0, 128
    %1314 = vxpose.xlu0.b32.cont [9/16] 0.0, 128
    %1315 = vxpose.xlu0.b32.cont [10/16] 0.0, 128
    %1316 = vxpose.xlu0.b32.cont [11/16] 0.0, 128
    %1317 = vxpose.xlu0.b32.cont [12/16] 0.0, 128
    %1318 = vxpose.xlu0.b32.cont [13/16] 0.0, 128
    %1319 = vxpose.xlu0.b32.cont [14/16] 0.0, 128
    %1320 = vxpose.xlu0.b32.cont [15/16] 0.0, 128
    %1321 = vxpose.xlu0.b32.end [16/16] 0.0, 128
    %v1322 = vpop.trf.xlu0
    %v1323 = vpop.trf.xlu0
    %v1324 = vpop.trf.xlu0
    %v1325 = vpop.trf.xlu0
    %v1326 = vpop.trf.xlu0
    %v1327 = vpop.trf.xlu0
    %v1328 = vpop.trf.xlu0
    %v1329 = vpop.trf.xlu0
    %v1330 = vpop.trf.xlu0
    %v1331 = vpop.trf.xlu0
    %v1332 = vpop.trf.xlu0
    %v1333 = vpop.trf.xlu0
    %v1334 = vpop.trf.xlu0
    %v1335 = vpop.trf.xlu0
    %v1336 = vpop.trf.xlu0
    %v1337 = vpop.trf.xlu0
    %1338 = vxpose.xlu0.b32.start [1/16] %v1259, 128
    %1339 = vxpose.xlu0.b32.cont [2/16] 0.0, 128
    %1340 = vxpose.xlu0.b32.cont [3/16] 0.0, 128
    %1341 = vxpose.xlu0.b32.cont [4/16] 0.0, 128
    %1342 = vxpose.xlu0.b32.cont [5/16] 0.0, 128
    %1343 = vxpose.xlu0.b32.cont [6/16] 0.0, 128
    %1344 = vxpose.xlu0.b32.cont [7/16] 0.0, 128
    %1345 = vxpose.xlu0.b32.cont [8/16] 0.0, 128
    %1346 = vxpose.xlu0.b32.cont [9/16] 0.0, 128
    %1347 = vxpose.xlu0.b32.cont [10/16] 0.0, 128
    %1348 = vxpose.xlu0.b32.cont [11/16] 0.0, 128
    %1349 = vxpose.xlu0.b32.cont [12/16] 0.0, 128
    %1350 = vxpose.xlu0.b32.cont [13/16] 0.0, 128
    %1351 = vxpose.xlu0.b32.cont [14/16] 0.0, 128
    %1352 = vxpose.xlu0.b32.cont [15/16] 0.0, 128
    %1353 = vxpose.xlu0.b32.end [16/16] 0.0, 128
    %v1354 = vpop.trf.xlu0
    %v1355 = vpop.trf.xlu0
    %v1356 = vpop.trf.xlu0
    %v1357 = vpop.trf.xlu0
    %v1358 = vpop.trf.xlu0
    %v1359 = vpop.trf.xlu0
    %v1360 = vpop.trf.xlu0
    %v1361 = vpop.trf.xlu0
    %v1362 = vpop.trf.xlu0
    %v1363 = vpop.trf.xlu0
    %v1364 = vpop.trf.xlu0
    %v1365 = vpop.trf.xlu0
    %v1366 = vpop.trf.xlu0
    %v1367 = vpop.trf.xlu0
    %v1368 = vpop.trf.xlu0
    %v1369 = vpop.trf.xlu0
    %1370 = vxpose.xlu0.b32.start [1/16] %v1260, 128
    %1371 = vxpose.xlu0.b32.cont [2/16] 0.0, 128
    %1372 = vxpose.xlu0.b32.cont [3/16] 0.0, 128
    %1373 = vxpose.xlu0.b32.cont [4/16] 0.0, 128
    %1374 = vxpose.xlu0.b32.cont [5/16] 0.0, 128
    %1375 = vxpose.xlu0.b32.cont [6/16] 0.0, 128
    %1376 = vxpose.xlu0.b32.cont [7/16] 0.0, 128
    %1377 = vxpose.xlu0.b32.cont [8/16] 0.0, 128
    %1378 = vxpose.xlu0.b32.cont [9/16] 0.0, 128
    %1379 = vxpose.xlu0.b32.cont [10/16] 0.0, 128
    %1380 = vxpose.xlu0.b32.cont [11/16] 0.0, 128
    %1381 = vxpose.xlu0.b32.cont [12/16] 0.0, 128
    %1382 = vxpose.xlu0.b32.cont [13/16] 0.0, 128
    %1383 = vxpose.xlu0.b32.cont [14/16] 0.0, 128
    %1384 = vxpose.xlu0.b32.cont [15/16] 0.0, 128
    %1385 = vxpose.xlu0.b32.end [16/16] 0.0, 128
    %v1386 = vpop.trf.xlu0
    %v1387 = vpop.trf.xlu0
    %v1388 = vpop.trf.xlu0
    %v1389 = vpop.trf.xlu0
    %v1390 = vpop.trf.xlu0
    %v1391 = vpop.trf.xlu0
    %v1392 = vpop.trf.xlu0
    %v1393 = vpop.trf.xlu0
    %v1394 = vpop.trf.xlu0
    %v1395 = vpop.trf.xlu0
    %v1396 = vpop.trf.xlu0
    %v1397 = vpop.trf.xlu0
    %v1398 = vpop.trf.xlu0
    %v1399 = vpop.trf.xlu0
    %v1400 = vpop.trf.xlu0
    %v1401 = vpop.trf.xlu0
    %1402 = vxpose.xlu0.b32.start [1/16] %v1261, 128
    %1403 = vxpose.xlu0.b32.cont [2/16] 0.0, 128
    %1404 = vxpose.xlu0.b32.cont [3/16] 0.0, 128
    %1405 = vxpose.xlu0.b32.cont [4/16] 0.0, 128
    %1406 = vxpose.xlu0.b32.cont [5/16] 0.0, 128
    %1407 = vxpose.xlu0.b32.cont [6/16] 0.0, 128
    %1408 = vxpose.xlu0.b32.cont [7/16] 0.0, 128
    %1409 = vxpose.xlu0.b32.cont [8/16] 0.0, 128
    %1410 = vxpose.xlu0.b32.cont [9/16] 0.0, 128
    %1411 = vxpose.xlu0.b32.cont [10/16] 0.0, 128
    %1412 = vxpose.xlu0.b32.cont [11/16] 0.0, 128
    %1413 = vxpose.xlu0.b32.cont [12/16] 0.0, 128
    %1414 = vxpose.xlu0.b32.cont [13/16] 0.0, 128
    %1415 = vxpose.xlu0.b32.cont [14/16] 0.0, 128
    %1416 = vxpose.xlu0.b32.cont [15/16] 0.0, 128
    %1417 = vxpose.xlu0.b32.end [16/16] 0.0, 128
    %v1418 = vpop.trf.xlu0
    %v1419 = vpop.trf.xlu0
    %v1420 = vpop.trf.xlu0
    %v1421 = vpop.trf.xlu0
    %v1422 = vpop.trf.xlu0
    %v1423 = vpop.trf.xlu0
    %v1424 = vpop.trf.xlu0
    %v1425 = vpop.trf.xlu0
    %v1426 = vpop.trf.xlu0
    %v1427 = vpop.trf.xlu0
    %v1428 = vpop.trf.xlu0
    %v1429 = vpop.trf.xlu0
    %v1430 = vpop.trf.xlu0
    %v1431 = vpop.trf.xlu0
    %v1432 = vpop.trf.xlu0
    %v1433 = vpop.trf.xlu0
    %1434 = vxpose.xlu0.b32.start [1/16] %v1262, 128
    %1435 = vxpose.xlu0.b32.cont [2/16] 0.0, 128
    %1436 = vxpose.xlu0.b32.cont [3/16] 0.0, 128
    %1437 = vxpose.xlu0.b32.cont [4/16] 0.0, 128
    %1438 = vxpose.xlu0.b32.cont [5/16] 0.0, 128
    %1439 = vxpose.xlu0.b32.cont [6/16] 0.0, 128
    %1440 = vxpose.xlu0.b32.cont [7/16] 0.0, 128
    %1441 = vxpose.xlu0.b32.cont [8/16] 0.0, 128
    %1442 = vxpose.xlu0.b32.cont [9/16] 0.0, 128
    %1443 = vxpose.xlu0.b32.cont [10/16] 0.0, 128
    %1444 = vxpose.xlu0.b32.cont [11/16] 0.0, 128
    %1445 = vxpose.xlu0.b32.cont [12/16] 0.0, 128
    %1446 = vxpose.xlu0.b32.cont [13/16] 0.0, 128
    %1447 = vxpose.xlu0.b32.cont [14/16] 0.0, 128
    %1448 = vxpose.xlu0.b32.cont [15/16] 0.0, 128
    %1449 = vxpose.xlu0.b32.end [16/16] 0.0, 128
    %v1450 = vpop.trf.xlu0
    %v1451 = vpop.trf.xlu0
    %v1452 = vpop.trf.xlu0
    %v1453 = vpop.trf.xlu0
    %v1454 = vpop.trf.xlu0
    %v1455 = vpop.trf.xlu0
    %v1456 = vpop.trf.xlu0
    %v1457 = vpop.trf.xlu0
    %v1458 = vpop.trf.xlu0
    %v1459 = vpop.trf.xlu0
    %v1460 = vpop.trf.xlu0
    %v1461 = vpop.trf.xlu0
    %v1462 = vpop.trf.xlu0
    %v1463 = vpop.trf.xlu0
    %v1464 = vpop.trf.xlu0
    %v1465 = vpop.trf.xlu0
    %1466 = vxpose.xlu0.b32.start [1/16] %v1263, 128
    %1467 = vxpose.xlu0.b32.cont [2/16] 0.0, 128
    %1468 = vxpose.xlu0.b32.cont [3/16] 0.0, 128
    %1469 = vxpose.xlu0.b32.cont [4/16] 0.0, 128
    %1470 = vxpose.xlu0.b32.cont [5/16] 0.0, 128
    %1471 = vxpose.xlu0.b32.cont [6/16] 0.0, 128
    %1472 = vxpose.xlu0.b32.cont [7/16] 0.0, 128
    %1473 = vxpose.xlu0.b32.cont [8/16] 0.0, 128
    %1474 = vxpose.xlu0.b32.cont [9/16] 0.0, 128
    %1475 = vxpose.xlu0.b32.cont [10/16] 0.0, 128
    %1476 = vxpose.xlu0.b32.cont [11/16] 0.0, 128
    %1477 = vxpose.xlu0.b32.cont [12/16] 0.0, 128
    %1478 = vxpose.xlu0.b32.cont [13/16] 0.0, 128
    %1479 = vxpose.xlu0.b32.cont [14/16] 0.0, 128
    %1480 = vxpose.xlu0.b32.cont [15/16] 0.0, 128
    %1481 = vxpose.xlu0.b32.end [16/16] 0.0, 128
    %v1482 = vpop.trf.xlu0
    %v1483 = vpop.trf.xlu0
    %v1484 = vpop.trf.xlu0
    %v1485 = vpop.trf.xlu0
    %v1486 = vpop.trf.xlu0
    %v1487 = vpop.trf.xlu0
    %v1488 = vpop.trf.xlu0
    %v1489 = vpop.trf.xlu0
    %v1490 = vpop.trf.xlu0
    %v1491 = vpop.trf.xlu0
    %v1492 = vpop.trf.xlu0
    %v1493 = vpop.trf.xlu0
    %v1494 = vpop.trf.xlu0
    %v1495 = vpop.trf.xlu0
    %v1496 = vpop.trf.xlu0
    %v1497 = vpop.trf.xlu0
    %1498 = vxpose.xlu0.b32.start [1/16] %v1264, 128
    %1499 = vxpose.xlu0.b32.cont [2/16] 0.0, 128
    %1500 = vxpose.xlu0.b32.cont [3/16] 0.0, 128
    %1501 = vxpose.xlu0.b32.cont [4/16] 0.0, 128
    %1502 = vxpose.xlu0.b32.cont [5/16] 0.0, 128
    %1503 = vxpose.xlu0.b32.cont [6/16] 0.0, 128
    %1504 = vxpose.xlu0.b32.cont [7/16] 0.0, 128
    %1505 = vxpose.xlu0.b32.cont [8/16] 0.0, 128
    %1506 = vxpose.xlu0.b32.cont [9/16] 0.0, 128
    %1507 = vxpose.xlu0.b32.cont [10/16] 0.0, 128
    %1508 = vxpose.xlu0.b32.cont [11/16] 0.0, 128
    %1509 = vxpose.xlu0.b32.cont [12/16] 0.0, 128
    %1510 = vxpose.xlu0.b32.cont [13/16] 0.0, 128
    %1511 = vxpose.xlu0.b32.cont [14/16] 0.0, 128
    %1512 = vxpose.xlu0.b32.cont [15/16] 0.0, 128
    %1513 = vxpose.xlu0.b32.end [16/16] 0.0, 128
    %v1514 = vpop.trf.xlu0
    %v1515 = vpop.trf.xlu0
    %v1516 = vpop.trf.xlu0
    %v1517 = vpop.trf.xlu0
    %v1518 = vpop.trf.xlu0
    %v1519 = vpop.trf.xlu0
    %v1520 = vpop.trf.xlu0
    %v1521 = vpop.trf.xlu0
    %v1522 = vpop.trf.xlu0
    %v1523 = vpop.trf.xlu0
    %v1524 = vpop.trf.xlu0
    %v1525 = vpop.trf.xlu0
    %v1526 = vpop.trf.xlu0
    %v1527 = vpop.trf.xlu0
    %v1528 = vpop.trf.xlu0
    %v1529 = vpop.trf.xlu0
    %1530 = vxpose.xlu0.b32.start [1/16] %v1265, 128
    %1531 = vxpose.xlu0.b32.cont [2/16] 0.0, 128
    %1532 = vxpose.xlu0.b32.cont [3/16] 0.0, 128
    %1533 = vxpose.xlu0.b32.cont [4/16] 0.0, 128
    %1534 = vxpose.xlu0.b32.cont [5/16] 0.0, 128
    %1535 = vxpose.xlu0.b32.cont [6/16] 0.0, 128
    %1536 = vxpose.xlu0.b32.cont [7/16] 0.0, 128
    %1537 = vxpose.xlu0.b32.cont [8/16] 0.0, 128
    %1538 = vxpose.xlu0.b32.cont [9/16] 0.0, 128
    %1539 = vxpose.xlu0.b32.cont [10/16] 0.0, 128
    %1540 = vxpose.xlu0.b32.cont [11/16] 0.0, 128
    %1541 = vxpose.xlu0.b32.cont [12/16] 0.0, 128
    %1542 = vxpose.xlu0.b32.cont [13/16] 0.0, 128
    %1543 = vxpose.xlu0.b32.cont [14/16] 0.0, 128
    %1544 = vxpose.xlu0.b32.cont [15/16] 0.0, 128
    %1545 = vxpose.xlu0.b32.end [16/16] 0.0, 128
    %v1546 = vpop.trf.xlu0
    %v1547 = vpop.trf.xlu0
    %v1548 = vpop.trf.xlu0
    %v1549 = vpop.trf.xlu0
    %v1550 = vpop.trf.xlu0
    %v1551 = vpop.trf.xlu0
    %v1552 = vpop.trf.xlu0
    %v1553 = vpop.trf.xlu0
    %v1554 = vpop.trf.xlu0
    %v1555 = vpop.trf.xlu0
    %v1556 = vpop.trf.xlu0
    %v1557 = vpop.trf.xlu0
    %v1558 = vpop.trf.xlu0
    %v1559 = vpop.trf.xlu0
    %v1560 = vpop.trf.xlu0
    %v1561 = vpop.trf.xlu0
    %1562 = vxpose.xlu0.b32.start [1/16] %v1266, 128
    %1563 = vxpose.xlu0.b32.cont [2/16] 0.0, 128
    %1564 = vxpose.xlu0.b32.cont [3/16] 0.0, 128
    %1565 = vxpose.xlu0.b32.cont [4/16] 0.0, 128
    %1566 = vxpose.xlu0.b32.cont [5/16] 0.0, 128
    %1567 = vxpose.xlu0.b32.cont [6/16] 0.0, 128
    %1568 = vxpose.xlu0.b32.cont [7/16] 0.0, 128
    %1569 = vxpose.xlu0.b32.cont [8/16] 0.0, 128
    %1570 = vxpose.xlu0.b32.cont [9/16] 0.0, 128
    %1571 = vxpose.xlu0.b32.cont [10/16] 0.0, 128
    %1572 = vxpose.xlu0.b32.cont [11/16] 0.0, 128
    %1573 = vxpose.xlu0.b32.cont [12/16] 0.0, 128
    %1574 = vxpose.xlu0.b32.cont [13/16] 0.0, 128
    %1575 = vxpose.xlu0.b32.cont [14/16] 0.0, 128
    %1576 = vxpose.xlu0.b32.cont [15/16] 0.0, 128
    %1577 = vxpose.xlu0.b32.end [16/16] 0.0, 128
    %v1578 = vpop.trf.xlu0
    %v1579 = vpop.trf.xlu0
    %v1580 = vpop.trf.xlu0
    %v1581 = vpop.trf.xlu0
    %v1582 = vpop.trf.xlu0
    %v1583 = vpop.trf.xlu0
    %v1584 = vpop.trf.xlu0
    %v1585 = vpop.trf.xlu0
    %v1586 = vpop.trf.xlu0
    %v1587 = vpop.trf.xlu0
    %v1588 = vpop.trf.xlu0
    %v1589 = vpop.trf.xlu0
    %v1590 = vpop.trf.xlu0
    %v1591 = vpop.trf.xlu0
    %v1592 = vpop.trf.xlu0
    %v1593 = vpop.trf.xlu0
    %1594 = vxpose.xlu0.b32.start [1/16] %v1267, 128
    %1595 = vxpose.xlu0.b32.cont [2/16] 0.0, 128
    %1596 = vxpose.xlu0.b32.cont [3/16] 0.0, 128
    %1597 = vxpose.xlu0.b32.cont [4/16] 0.0, 128
    %1598 = vxpose.xlu0.b32.cont [5/16] 0.0, 128
    %1599 = vxpose.xlu0.b32.cont [6/16] 0.0, 128
    %1600 = vxpose.xlu0.b32.cont [7/16] 0.0, 128
    %1601 = vxpose.xlu0.b32.cont [8/16] 0.0, 128
    %1602 = vxpose.xlu0.b32.cont [9/16] 0.0, 128
    %1603 = vxpose.xlu0.b32.cont [10/16] 0.0, 128
    %1604 = vxpose.xlu0.b32.cont [11/16] 0.0, 128
    %1605 = vxpose.xlu0.b32.cont [12/16] 0.0, 128
    %1606 = vxpose.xlu0.b32.cont [13/16] 0.0, 128
    %1607 = vxpose.xlu0.b32.cont [14/16] 0.0, 128
    %1608 = vxpose.xlu0.b32.cont [15/16] 0.0, 128
    %1609 = vxpose.xlu0.b32.end [16/16] 0.0, 128
    %v1610 = vpop.trf.xlu0
    %v1611 = vpop.trf.xlu0
    %v1612 = vpop.trf.xlu0
    %v1613 = vpop.trf.xlu0
    %v1614 = vpop.trf.xlu0
    %v1615 = vpop.trf.xlu0
    %v1616 = vpop.trf.xlu0
    %v1617 = vpop.trf.xlu0
    %v1618 = vpop.trf.xlu0
    %v1619 = vpop.trf.xlu0
    %v1620 = vpop.trf.xlu0
    %v1621 = vpop.trf.xlu0
    %v1622 = vpop.trf.xlu0
    %v1623 = vpop.trf.xlu0
    %v1624 = vpop.trf.xlu0
    %v1625 = vpop.trf.xlu0
    %1626 = vxpose.xlu0.b32.start [1/16] %v1268, 128
    %1627 = vxpose.xlu0.b32.cont [2/16] 0.0, 128
    %1628 = vxpose.xlu0.b32.cont [3/16] 0.0, 128
    %1629 = vxpose.xlu0.b32.cont [4/16] 0.0, 128
    %1630 = vxpose.xlu0.b32.cont [5/16] 0.0, 128
    %1631 = vxpose.xlu0.b32.cont [6/16] 0.0, 128
    %1632 = vxpose.xlu0.b32.cont [7/16] 0.0, 128
    %1633 = vxpose.xlu0.b32.cont [8/16] 0.0, 128
    %1634 = vxpose.xlu0.b32.cont [9/16] 0.0, 128
    %1635 = vxpose.xlu0.b32.cont [10/16] 0.0, 128
    %1636 = vxpose.xlu0.b32.cont [11/16] 0.0, 128
    %1637 = vxpose.xlu0.b32.cont [12/16] 0.0, 128
    %1638 = vxpose.xlu0.b32.cont [13/16] 0.0, 128
    %1639 = vxpose.xlu0.b32.cont [14/16] 0.0, 128
    %1640 = vxpose.xlu0.b32.cont [15/16] 0.0, 128
    %1641 = vxpose.xlu0.b32.end [16/16] 0.0, 128
    %v1642 = vpop.trf.xlu0
    %v1643 = vpop.trf.xlu0
    %v1644 = vpop.trf.xlu0
    %v1645 = vpop.trf.xlu0
    %v1646 = vpop.trf.xlu0
    %v1647 = vpop.trf.xlu0
    %v1648 = vpop.trf.xlu0
    %v1649 = vpop.trf.xlu0
    %v1650 = vpop.trf.xlu0
    %v1651 = vpop.trf.xlu0
    %v1652 = vpop.trf.xlu0
    %v1653 = vpop.trf.xlu0
    %v1654 = vpop.trf.xlu0
    %v1655 = vpop.trf.xlu0
    %v1656 = vpop.trf.xlu0
    %v1657 = vpop.trf.xlu0
    %1658 = vxpose.xlu0.b32.start [1/16] %v1269, 128
    %1659 = vxpose.xlu0.b32.cont [2/16] 0.0, 128
    %1660 = vxpose.xlu0.b32.cont [3/16] 0.0, 128
    %1661 = vxpose.xlu0.b32.cont [4/16] 0.0, 128
    %1662 = vxpose.xlu0.b32.cont [5/16] 0.0, 128
    %1663 = vxpose.xlu0.b32.cont [6/16] 0.0, 128
    %1664 = vxpose.xlu0.b32.cont [7/16] 0.0, 128
    %1665 = vxpose.xlu0.b32.cont [8/16] 0.0, 128
    %1666 = vxpose.xlu0.b32.cont [9/16] 0.0, 128
    %1667 = vxpose.xlu0.b32.cont [10/16] 0.0, 128
    %1668 = vxpose.xlu0.b32.cont [11/16] 0.0, 128
    %1669 = vxpose.xlu0.b32.cont [12/16] 0.0, 128
    %1670 = vxpose.xlu0.b32.cont [13/16] 0.0, 128
    %1671 = vxpose.xlu0.b32.cont [14/16] 0.0, 128
    %1672 = vxpose.xlu0.b32.cont [15/16] 0.0, 128
    %1673 = vxpose.xlu0.b32.end [16/16] 0.0, 128
    %v1674 = vpop.trf.xlu0
    %v1675 = vpop.trf.xlu0
    %v1676 = vpop.trf.xlu0
    %v1677 = vpop.trf.xlu0
    %v1678 = vpop.trf.xlu0
    %v1679 = vpop.trf.xlu0
    %v1680 = vpop.trf.xlu0
    %v1681 = vpop.trf.xlu0
    %v1682 = vpop.trf.xlu0
    %v1683 = vpop.trf.xlu0
    %v1684 = vpop.trf.xlu0
    %v1685 = vpop.trf.xlu0
    %v1686 = vpop.trf.xlu0
    %v1687 = vpop.trf.xlu0
    %v1688 = vpop.trf.xlu0
    %v1689 = vpop.trf.xlu0
    %1690 = vxpose.xlu0.b32.start [1/16] %v1290, 128
    %1691 = vxpose.xlu0.b32.cont [2/16] 0.0, 128
    %1692 = vxpose.xlu0.b32.cont [3/16] 0.0, 128
    %1693 = vxpose.xlu0.b32.cont [4/16] 0.0, 128
    %1694 = vxpose.xlu0.b32.cont [5/16] 0.0, 128
    %1695 = vxpose.xlu0.b32.cont [6/16] 0.0, 128
    %1696 = vxpose.xlu0.b32.cont [7/16] 0.0, 128
    %1697 = vxpose.xlu0.b32.cont [8/16] 0.0, 128
    %1698 = vxpose.xlu0.b32.cont [9/16] 0.0, 128
    %1699 = vxpose.xlu0.b32.cont [10/16] 0.0, 128
    %1700 = vxpose.xlu0.b32.cont [11/16] 0.0, 128
    %1701 = vxpose.xlu0.b32.cont [12/16] 0.0, 128
    %1702 = vxpose.xlu0.b32.cont [13/16] 0.0, 128
    %1703 = vxpose.xlu0.b32.cont [14/16] 0.0, 128
    %1704 = vxpose.xlu0.b32.cont [15/16] 0.0, 128
    %1705 = vxpose.xlu0.b32.end [16/16] 0.0, 128
    %v1706 = vpop.trf.xlu0
    %v1707 = vpop.trf.xlu0
    %v1708 = vpop.trf.xlu0
    %v1709 = vpop.trf.xlu0
    %v1710 = vpop.trf.xlu0
    %v1711 = vpop.trf.xlu0
    %v1712 = vpop.trf.xlu0
    %v1713 = vpop.trf.xlu0
    %v1714 = vpop.trf.xlu0
    %v1715 = vpop.trf.xlu0
    %v1716 = vpop.trf.xlu0
    %v1717 = vpop.trf.xlu0
    %v1718 = vpop.trf.xlu0
    %v1719 = vpop.trf.xlu0
    %v1720 = vpop.trf.xlu0
    %v1721 = vpop.trf.xlu0
    %1722 = vxpose.xlu0.b32.start [1/16] %v1291, 128
    %1723 = vxpose.xlu0.b32.cont [2/16] 0.0, 128
    %1724 = vxpose.xlu0.b32.cont [3/16] 0.0, 128
    %1725 = vxpose.xlu0.b32.cont [4/16] 0.0, 128
    %1726 = vxpose.xlu0.b32.cont [5/16] 0.0, 128
    %1727 = vxpose.xlu0.b32.cont [6/16] 0.0, 128
    %1728 = vxpose.xlu0.b32.cont [7/16] 0.0, 128
    %1729 = vxpose.xlu0.b32.cont [8/16] 0.0, 128
    %1730 = vxpose.xlu0.b32.cont [9/16] 0.0, 128
    %1731 = vxpose.xlu0.b32.cont [10/16] 0.0, 128
    %1732 = vxpose.xlu0.b32.cont [11/16] 0.0, 128
    %1733 = vxpose.xlu0.b32.cont [12/16] 0.0, 128
    %1734 = vxpose.xlu0.b32.cont [13/16] 0.0, 128
    %1735 = vxpose.xlu0.b32.cont [14/16] 0.0, 128
    %1736 = vxpose.xlu0.b32.cont [15/16] 0.0, 128
    %1737 = vxpose.xlu0.b32.end [16/16] 0.0, 128
    %v1738 = vpop.trf.xlu0
    %v1739 = vpop.trf.xlu0
    %v1740 = vpop.trf.xlu0
    %v1741 = vpop.trf.xlu0
    %v1742 = vpop.trf.xlu0
    %v1743 = vpop.trf.xlu0
    %v1744 = vpop.trf.xlu0
    %v1745 = vpop.trf.xlu0
    %v1746 = vpop.trf.xlu0
    %v1747 = vpop.trf.xlu0
    %v1748 = vpop.trf.xlu0
    %v1749 = vpop.trf.xlu0
    %v1750 = vpop.trf.xlu0
    %v1751 = vpop.trf.xlu0
    %v1752 = vpop.trf.xlu0
    %v1753 = vpop.trf.xlu0
    %1754 = vxpose.xlu0.b32.start [1/16] %v1292, 128
    %1755 = vxpose.xlu0.b32.cont [2/16] 0.0, 128
    %1756 = vxpose.xlu0.b32.cont [3/16] 0.0, 128
    %1757 = vxpose.xlu0.b32.cont [4/16] 0.0, 128
    %1758 = vxpose.xlu0.b32.cont [5/16] 0.0, 128
    %1759 = vxpose.xlu0.b32.cont [6/16] 0.0, 128
    %1760 = vxpose.xlu0.b32.cont [7/16] 0.0, 128
    %1761 = vxpose.xlu0.b32.cont [8/16] 0.0, 128
    %1762 = vxpose.xlu0.b32.cont [9/16] 0.0, 128
    %1763 = vxpose.xlu0.b32.cont [10/16] 0.0, 128
    %1764 = vxpose.xlu0.b32.cont [11/16] 0.0, 128
    %1765 = vxpose.xlu0.b32.cont [12/16] 0.0, 128
    %1766 = vxpose.xlu0.b32.cont [13/16] 0.0, 128
    %1767 = vxpose.xlu0.b32.cont [14/16] 0.0, 128
    %1768 = vxpose.xlu0.b32.cont [15/16] 0.0, 128
    %1769 = vxpose.xlu0.b32.end [16/16] 0.0, 128
    %v1770 = vpop.trf.xlu0
    %v1771 = vpop.trf.xlu0
    %v1772 = vpop.trf.xlu0
    %v1773 = vpop.trf.xlu0
    %v1774 = vpop.trf.xlu0
    %v1775 = vpop.trf.xlu0
    %v1776 = vpop.trf.xlu0
    %v1777 = vpop.trf.xlu0
    %v1778 = vpop.trf.xlu0
    %v1779 = vpop.trf.xlu0
    %v1780 = vpop.trf.xlu0
    %v1781 = vpop.trf.xlu0
    %v1782 = vpop.trf.xlu0
    %v1783 = vpop.trf.xlu0
    %v1784 = vpop.trf.xlu0
    %v1785 = vpop.trf.xlu0
    %1786 = vxpose.xlu0.b32.start [1/16] %v1293, 128
    %1787 = vxpose.xlu0.b32.cont [2/16] 0.0, 128
    %1788 = vxpose.xlu0.b32.cont [3/16] 0.0, 128
    %1789 = vxpose.xlu0.b32.cont [4/16] 0.0, 128
    %1790 = vxpose.xlu0.b32.cont [5/16] 0.0, 128
    %1791 = vxpose.xlu0.b32.cont [6/16] 0.0, 128
    %1792 = vxpose.xlu0.b32.cont [7/16] 0.0, 128
    %1793 = vxpose.xlu0.b32.cont [8/16] 0.0, 128
    %1794 = vxpose.xlu0.b32.cont [9/16] 0.0, 128
    %1795 = vxpose.xlu0.b32.cont [10/16] 0.0, 128
    %1796 = vxpose.xlu0.b32.cont [11/16] 0.0, 128
    %1797 = vxpose.xlu0.b32.cont [12/16] 0.0, 128
    %1798 = vxpose.xlu0.b32.cont [13/16] 0.0, 128
    %1799 = vxpose.xlu0.b32.cont [14/16] 0.0, 128
    %1800 = vxpose.xlu0.b32.cont [15/16] 0.0, 128
    %1801 = vxpose.xlu0.b32.end [16/16] 0.0, 128
    %v1802 = vpop.trf.xlu0
    %v1803 = vpop.trf.xlu0
    %v1804 = vpop.trf.xlu0
    %v1805 = vpop.trf.xlu0
    %v1806 = vpop.trf.xlu0
    %v1807 = vpop.trf.xlu0
    %v1808 = vpop.trf.xlu0
    %v1809 = vpop.trf.xlu0
    %v1810 = vpop.trf.xlu0
    %v1811 = vpop.trf.xlu0
    %v1812 = vpop.trf.xlu0
    %v1813 = vpop.trf.xlu0
    %v1814 = vpop.trf.xlu0
    %v1815 = vpop.trf.xlu0
    %v1816 = vpop.trf.xlu0
    %v1817 = vpop.trf.xlu0
    %1818 = vxpose.xlu0.b32.start [1/16] %v1294, 128
    %1819 = vxpose.xlu0.b32.cont [2/16] 0.0, 128
    %1820 = vxpose.xlu0.b32.cont [3/16] 0.0, 128
    %1821 = vxpose.xlu0.b32.cont [4/16] 0.0, 128
    %1822 = vxpose.xlu0.b32.cont [5/16] 0.0, 128
    %1823 = vxpose.xlu0.b32.cont [6/16] 0.0, 128
    %1824 = vxpose.xlu0.b32.cont [7/16] 0.0, 128
    %1825 = vxpose.xlu0.b32.cont [8/16] 0.0, 128
    %1826 = vxpose.xlu0.b32.cont [9/16] 0.0, 128
    %1827 = vxpose.xlu0.b32.cont [10/16] 0.0, 128
    %1828 = vxpose.xlu0.b32.cont [11/16] 0.0, 128
    %1829 = vxpose.xlu0.b32.cont [12/16] 0.0, 128
    %1830 = vxpose.xlu0.b32.cont [13/16] 0.0, 128
    %1831 = vxpose.xlu0.b32.cont [14/16] 0.0, 128
    %1832 = vxpose.xlu0.b32.cont [15/16] 0.0, 128
    %1833 = vxpose.xlu0.b32.end [16/16] 0.0, 128
    %v1834 = vpop.trf.xlu0
    %v1835 = vpop.trf.xlu0
    %v1836 = vpop.trf.xlu0
    %v1837 = vpop.trf.xlu0
    %v1838 = vpop.trf.xlu0
    %v1839 = vpop.trf.xlu0
    %v1840 = vpop.trf.xlu0
    %v1841 = vpop.trf.xlu0
    %v1842 = vpop.trf.xlu0
    %v1843 = vpop.trf.xlu0
    %v1844 = vpop.trf.xlu0
    %v1845 = vpop.trf.xlu0
    %v1846 = vpop.trf.xlu0
    %v1847 = vpop.trf.xlu0
    %v1848 = vpop.trf.xlu0
    %v1849 = vpop.trf.xlu0
    %1850 = vxpose.xlu0.b32.start [1/16] %v1295, 128
    %1851 = vxpose.xlu0.b32.cont [2/16] 0.0, 128
    %1852 = vxpose.xlu0.b32.cont [3/16] 0.0, 128
    %1853 = vxpose.xlu0.b32.cont [4/16] 0.0, 128
    %1854 = vxpose.xlu0.b32.cont [5/16] 0.0, 128
    %1855 = vxpose.xlu0.b32.cont [6/16] 0.0, 128
    %1856 = vxpose.xlu0.b32.cont [7/16] 0.0, 128
    %1857 = vxpose.xlu0.b32.cont [8/16] 0.0, 128
    %1858 = vxpose.xlu0.b32.cont [9/16] 0.0, 128
    %1859 = vxpose.xlu0.b32.cont [10/16] 0.0, 128
    %1860 = vxpose.xlu0.b32.cont [11/16] 0.0, 128
    %1861 = vxpose.xlu0.b32.cont [12/16] 0.0, 128
    %1862 = vxpose.xlu0.b32.cont [13/16] 0.0, 128
    %1863 = vxpose.xlu0.b32.cont [14/16] 0.0, 128
    %1864 = vxpose.xlu0.b32.cont [15/16] 0.0, 128
    %1865 = vxpose.xlu0.b32.end [16/16] 0.0, 128
    %v1866 = vpop.trf.xlu0
    %v1867 = vpop.trf.xlu0
    %v1868 = vpop.trf.xlu0
    %v1869 = vpop.trf.xlu0
    %v1870 = vpop.trf.xlu0
    %v1871 = vpop.trf.xlu0
    %v1872 = vpop.trf.xlu0
    %v1873 = vpop.trf.xlu0
    %v1874 = vpop.trf.xlu0
    %v1875 = vpop.trf.xlu0
    %v1876 = vpop.trf.xlu0
    %v1877 = vpop.trf.xlu0
    %v1878 = vpop.trf.xlu0
    %v1879 = vpop.trf.xlu0
    %v1880 = vpop.trf.xlu0
    %v1881 = vpop.trf.xlu0
    %1882 = vxpose.xlu0.b32.start [1/16] %v1296, 128
    %1883 = vxpose.xlu0.b32.cont [2/16] 0.0, 128
    %1884 = vxpose.xlu0.b32.cont [3/16] 0.0, 128
    %1885 = vxpose.xlu0.b32.cont [4/16] 0.0, 128
    %1886 = vxpose.xlu0.b32.cont [5/16] 0.0, 128
    %1887 = vxpose.xlu0.b32.cont [6/16] 0.0, 128
    %1888 = vxpose.xlu0.b32.cont [7/16] 0.0, 128
    %1889 = vxpose.xlu0.b32.cont [8/16] 0.0, 128
    %1890 = vxpose.xlu0.b32.cont [9/16] 0.0, 128
    %1891 = vxpose.xlu0.b32.cont [10/16] 0.0, 128
    %1892 = vxpose.xlu0.b32.cont [11/16] 0.0, 128
    %1893 = vxpose.xlu0.b32.cont [12/16] 0.0, 128
    %1894 = vxpose.xlu0.b32.cont [13/16] 0.0, 128
    %1895 = vxpose.xlu0.b32.cont [14/16] 0.0, 128
    %1896 = vxpose.xlu0.b32.cont [15/16] 0.0, 128
    %1897 = vxpose.xlu0.b32.end [16/16] 0.0, 128
    %v1898 = vpop.trf.xlu0
    %v1899 = vpop.trf.xlu0
    %v1900 = vpop.trf.xlu0
    %v1901 = vpop.trf.xlu0
    %v1902 = vpop.trf.xlu0
    %v1903 = vpop.trf.xlu0
    %v1904 = vpop.trf.xlu0
    %v1905 = vpop.trf.xlu0
    %v1906 = vpop.trf.xlu0
    %v1907 = vpop.trf.xlu0
    %v1908 = vpop.trf.xlu0
    %v1909 = vpop.trf.xlu0
    %v1910 = vpop.trf.xlu0
    %v1911 = vpop.trf.xlu0
    %v1912 = vpop.trf.xlu0
    %v1913 = vpop.trf.xlu0
    %1914 = vxpose.xlu0.b32.start [1/16] %v1297, 128
    %1915 = vxpose.xlu0.b32.cont [2/16] 0.0, 128
    %1916 = vxpose.xlu0.b32.cont [3/16] 0.0, 128
    %1917 = vxpose.xlu0.b32.cont [4/16] 0.0, 128
    %1918 = vxpose.xlu0.b32.cont [5/16] 0.0, 128
    %1919 = vxpose.xlu0.b32.cont [6/16] 0.0, 128
    %1920 = vxpose.xlu0.b32.cont [7/16] 0.0, 128
    %1921 = vxpose.xlu0.b32.cont [8/16] 0.0, 128
    %1922 = vxpose.xlu0.b32.cont [9/16] 0.0, 128
    %1923 = vxpose.xlu0.b32.cont [10/16] 0.0, 128
    %1924 = vxpose.xlu0.b32.cont [11/16] 0.0, 128
    %1925 = vxpose.xlu0.b32.cont [12/16] 0.0, 128
    %1926 = vxpose.xlu0.b32.cont [13/16] 0.0, 128
    %1927 = vxpose.xlu0.b32.cont [14/16] 0.0, 128
    %1928 = vxpose.xlu0.b32.cont [15/16] 0.0, 128
    %1929 = vxpose.xlu0.b32.end [16/16] 0.0, 128
    %v1930 = vpop.trf.xlu0
    %v1931 = vpop.trf.xlu0
    %v1932 = vpop.trf.xlu0
    %v1933 = vpop.trf.xlu0
    %v1934 = vpop.trf.xlu0
    %v1935 = vpop.trf.xlu0
    %v1936 = vpop.trf.xlu0
    %v1937 = vpop.trf.xlu0
    %v1938 = vpop.trf.xlu0
    %v1939 = vpop.trf.xlu0
    %v1940 = vpop.trf.xlu0
    %v1941 = vpop.trf.xlu0
    %v1942 = vpop.trf.xlu0
    %v1943 = vpop.trf.xlu0
    %v1944 = vpop.trf.xlu0
    %v1945 = vpop.trf.xlu0
    %1946 = vxpose.xlu0.b32.start [1/16] %v1298, 128
    %1947 = vxpose.xlu0.b32.cont [2/16] 0.0, 128
    %1948 = vxpose.xlu0.b32.cont [3/16] 0.0, 128
    %1949 = vxpose.xlu0.b32.cont [4/16] 0.0, 128
    %1950 = vxpose.xlu0.b32.cont [5/16] 0.0, 128
    %1951 = vxpose.xlu0.b32.cont [6/16] 0.0, 128
    %1952 = vxpose.xlu0.b32.cont [7/16] 0.0, 128
    %1953 = vxpose.xlu0.b32.cont [8/16] 0.0, 128
    %1954 = vxpose.xlu0.b32.cont [9/16] 0.0, 128
    %1955 = vxpose.xlu0.b32.cont [10/16] 0.0, 128
    %1956 = vxpose.xlu0.b32.cont [11/16] 0.0, 128
    %1957 = vxpose.xlu0.b32.cont [12/16] 0.0, 128
    %1958 = vxpose.xlu0.b32.cont [13/16] 0.0, 128
    %1959 = vxpose.xlu0.b32.cont [14/16] 0.0, 128
    %1960 = vxpose.xlu0.b32.cont [15/16] 0.0, 128
    %1961 = vxpose.xlu0.b32.end [16/16] 0.0, 128
    %v1962 = vpop.trf.xlu0
    %v1963 = vpop.trf.xlu0
    %v1964 = vpop.trf.xlu0
    %v1965 = vpop.trf.xlu0
    %v1966 = vpop.trf.xlu0
    %v1967 = vpop.trf.xlu0
    %v1968 = vpop.trf.xlu0
    %v1969 = vpop.trf.xlu0
    %v1970 = vpop.trf.xlu0
    %v1971 = vpop.trf.xlu0
    %v1972 = vpop.trf.xlu0
    %v1973 = vpop.trf.xlu0
    %v1974 = vpop.trf.xlu0
    %v1975 = vpop.trf.xlu0
    %v1976 = vpop.trf.xlu0
    %v1977 = vpop.trf.xlu0
    %1978 = vxpose.xlu0.b32.start [1/16] %v1299, 128
    %1979 = vxpose.xlu0.b32.cont [2/16] 0.0, 128
    %1980 = vxpose.xlu0.b32.cont [3/16] 0.0, 128
    %1981 = vxpose.xlu0.b32.cont [4/16] 0.0, 128
    %1982 = vxpose.xlu0.b32.cont [5/16] 0.0, 128
    %1983 = vxpose.xlu0.b32.cont [6/16] 0.0, 128
    %1984 = vxpose.xlu0.b32.cont [7/16] 0.0, 128
    %1985 = vxpose.xlu0.b32.cont [8/16] 0.0, 128
    %1986 = vxpose.xlu0.b32.cont [9/16] 0.0, 128
    %1987 = vxpose.xlu0.b32.cont [10/16] 0.0, 128
    %1988 = vxpose.xlu0.b32.cont [11/16] 0.0, 128
    %1989 = vxpose.xlu0.b32.cont [12/16] 0.0, 128
    %1990 = vxpose.xlu0.b32.cont [13/16] 0.0, 128
    %1991 = vxpose.xlu0.b32.cont [14/16] 0.0, 128
    %1992 = vxpose.xlu0.b32.cont [15/16] 0.0, 128
    %1993 = vxpose.xlu0.b32.end [16/16] 0.0, 128
    %v1994 = vpop.trf.xlu0
    %v1995 = vpop.trf.xlu0
    %v1996 = vpop.trf.xlu0
    %v1997 = vpop.trf.xlu0
    %v1998 = vpop.trf.xlu0
    %v1999 = vpop.trf.xlu0
    %v2000 = vpop.trf.xlu0
    %v2001 = vpop.trf.xlu0
    %v2002 = vpop.trf.xlu0
    %v2003 = vpop.trf.xlu0
    %v2004 = vpop.trf.xlu0
    %v2005 = vpop.trf.xlu0
    %v2006 = vpop.trf.xlu0
    %v2007 = vpop.trf.xlu0
    %v2008 = vpop.trf.xlu0
    %v2009 = vpop.trf.xlu0
    %2010 = vxpose.xlu0.b32.start [1/16] %v1300, 128
    %2011 = vxpose.xlu0.b32.cont [2/16] 0.0, 128
    %2012 = vxpose.xlu0.b32.cont [3/16] 0.0, 128
    %2013 = vxpose.xlu0.b32.cont [4/16] 0.0, 128
    %2014 = vxpose.xlu0.b32.cont [5/16] 0.0, 128
    %2015 = vxpose.xlu0.b32.cont [6/16] 0.0, 128
    %2016 = vxpose.xlu0.b32.cont [7/16] 0.0, 128
    %2017 = vxpose.xlu0.b32.cont [8/16] 0.0, 128
    %2018 = vxpose.xlu0.b32.cont [9/16] 0.0, 128
    %2019 = vxpose.xlu0.b32.cont [10/16] 0.0, 128
    %2020 = vxpose.xlu0.b32.cont [11/16] 0.0, 128
    %2021 = vxpose.xlu0.b32.cont [12/16] 0.0, 128
    %2022 = vxpose.xlu0.b32.cont [13/16] 0.0, 128
    %2023 = vxpose.xlu0.b32.cont [14/16] 0.0, 128
    %2024 = vxpose.xlu0.b32.cont [15/16] 0.0, 128
    %2025 = vxpose.xlu0.b32.end [16/16] 0.0, 128
    %v2026 = vpop.trf.xlu0
    %v2027 = vpop.trf.xlu0
    %v2028 = vpop.trf.xlu0
    %v2029 = vpop.trf.xlu0
    %v2030 = vpop.trf.xlu0
    %v2031 = vpop.trf.xlu0
    %v2032 = vpop.trf.xlu0
    %v2033 = vpop.trf.xlu0
    %v2034 = vpop.trf.xlu0
    %v2035 = vpop.trf.xlu0
    %v2036 = vpop.trf.xlu0
    %v2037 = vpop.trf.xlu0
    %v2038 = vpop.trf.xlu0
    %v2039 = vpop.trf.xlu0
    %v2040 = vpop.trf.xlu0
    %v2041 = vpop.trf.xlu0
    %2042 = vxpose.xlu0.b32.start [1/16] %v1301, 128
    %2043 = vxpose.xlu0.b32.cont [2/16] 0.0, 128
    %2044 = vxpose.xlu0.b32.cont [3/16] 0.0, 128
    %2045 = vxpose.xlu0.b32.cont [4/16] 0.0, 128
    %2046 = vxpose.xlu0.b32.cont [5/16] 0.0, 128
    %2047 = vxpose.xlu0.b32.cont [6/16] 0.0, 128
    %2048 = vxpose.xlu0.b32.cont [7/16] 0.0, 128
    %2049 = vxpose.xlu0.b32.cont [8/16] 0.0, 128
    %2050 = vxpose.xlu0.b32.cont [9/16] 0.0, 128
    %2051 = vxpose.xlu0.b32.cont [10/16] 0.0, 128
    %2052 = vxpose.xlu0.b32.cont [11/16] 0.0, 128
    %2053 = vxpose.xlu0.b32.cont [12/16] 0.0, 128
    %2054 = vxpose.xlu0.b32.cont [13/16] 0.0, 128
    %2055 = vxpose.xlu0.b32.cont [14/16] 0.0, 128
    %2056 = vxpose.xlu0.b32.cont [15/16] 0.0, 128
    %2057 = vxpose.xlu0.b32.end [16/16] 0.0, 128
    %v2058 = vpop.trf.xlu0
    %v2059 = vpop.trf.xlu0
    %v2060 = vpop.trf.xlu0
    %v2061 = vpop.trf.xlu0
    %v2062 = vpop.trf.xlu0
    %v2063 = vpop.trf.xlu0
    %v2064 = vpop.trf.xlu0
    %v2065 = vpop.trf.xlu0
    %v2066 = vpop.trf.xlu0
    %v2067 = vpop.trf.xlu0
    %v2068 = vpop.trf.xlu0
    %v2069 = vpop.trf.xlu0
    %v2070 = vpop.trf.xlu0
    %v2071 = vpop.trf.xlu0
    %v2072 = vpop.trf.xlu0
    %v2073 = vpop.trf.xlu0
    %v2074 = vpack.c.bf16 %v1322, %v1322
    %v2075 = vpack.c.bf16 %v1354, %v1354
    %v2076 = vpack.c.bf16 %v1386, %v1386
    %v2077 = vpack.c.bf16 %v1418, %v1418
    %v2078 = vpack.c.bf16 %v1450, %v1450
    %v2079 = vpack.c.bf16 %v1482, %v1482
    %v2080 = vpack.c.bf16 %v1514, %v1514
    %v2081 = vpack.c.bf16 %v1546, %v1546
    %v2082 = vpack.c.bf16 %v1578, %v1578
    %v2083 = vpack.c.bf16 %v1610, %v1610
    %v2084 = vpack.c.bf16 %v1642, %v1642
    %v2085 = vpack.c.bf16 %v1674, %v1674
    %v2086 = vpack.c.bf16 %v1706, %v1706
    %v2087 = vpack.c.bf16 %v1738, %v1738
    %v2088 = vpack.c.bf16 %v1770, %v1770
    %v2089 = vpack.c.bf16 %v1802, %v1802
    %v2090 = vpack.c.bf16 %v1834, %v1834
    %v2091 = vpack.c.bf16 %v1866, %v1866
    %v2092 = vpack.c.bf16 %v1898, %v1898
    %v2093 = vpack.c.bf16 %v1930, %v1930
    %v2094 = vpack.c.bf16 %v1962, %v1962
    %v2095 = vpack.c.bf16 %v1994, %v1994
    %v2096 = vpack.c.bf16 %v2026, %v2026
    %v2097 = vpack.c.bf16 %v2058, %v2058
    %2100 = vrot.lane.b32.xlu0 %v352, 64
    %v2101 = vpop.permute.xlu0 %2100
    %2102 = vrot.lane.b32.xlu0 %v366, 64
    %v2103 = vpop.permute.xlu0 %2102
    %2104 = vrot.lane.b32.xlu0 %v354, 64
    %v2105 = vpop.permute.xlu0 %2104
    %2106 = vrot.lane.b32.xlu0 %v368, 64
    %v2107 = vpop.permute.xlu0 %2106
    %v2108 = vsel %vm192, %v2101, %v2103
    %v2109 = vsel %vm192, %v2105, %v2107
    %2112 = vxpose.xlu0.b32.start [1/16] %v2108, 128
    %2113 = vxpose.xlu0.b32.cont [2/16] 0.0, 128
    %2114 = vxpose.xlu0.b32.cont [3/16] 0.0, 128
    %2115 = vxpose.xlu0.b32.cont [4/16] 0.0, 128
    %2116 = vxpose.xlu0.b32.cont [5/16] 0.0, 128
    %2117 = vxpose.xlu0.b32.cont [6/16] 0.0, 128
    %2118 = vxpose.xlu0.b32.cont [7/16] 0.0, 128
    %2119 = vxpose.xlu0.b32.cont [8/16] 0.0, 128
    %2120 = vxpose.xlu0.b32.cont [9/16] 0.0, 128
    %2121 = vxpose.xlu0.b32.cont [10/16] 0.0, 128
    %2122 = vxpose.xlu0.b32.cont [11/16] 0.0, 128
    %2123 = vxpose.xlu0.b32.cont [12/16] 0.0, 128
    %2124 = vxpose.xlu0.b32.cont [13/16] 0.0, 128
    %2125 = vxpose.xlu0.b32.cont [14/16] 0.0, 128
    %2126 = vxpose.xlu0.b32.cont [15/16] 0.0, 128
    %2127 = vxpose.xlu0.b32.end [16/16] 0.0, 128
    %v2128 = vpop.trf.xlu0
    %v2129 = vpop.trf.xlu0
    %v2130 = vpop.trf.xlu0
    %v2131 = vpop.trf.xlu0
    %v2132 = vpop.trf.xlu0
    %v2133 = vpop.trf.xlu0
    %v2134 = vpop.trf.xlu0
    %v2135 = vpop.trf.xlu0
    %v2136 = vpop.trf.xlu0
    %v2137 = vpop.trf.xlu0
    %v2138 = vpop.trf.xlu0
    %v2139 = vpop.trf.xlu0
    %v2140 = vpop.trf.xlu0
    %v2141 = vpop.trf.xlu0
    %v2142 = vpop.trf.xlu0
    %v2143 = vpop.trf.xlu0
    %2144 = vxpose.xlu0.b32.start [1/16] %v2109, 128
    %2145 = vxpose.xlu0.b32.cont [2/16] 0.0, 128
    %2146 = vxpose.xlu0.b32.cont [3/16] 0.0, 128
    %2147 = vxpose.xlu0.b32.cont [4/16] 0.0, 128
    %2148 = vxpose.xlu0.b32.cont [5/16] 0.0, 128
    %2149 = vxpose.xlu0.b32.cont [6/16] 0.0, 128
    %2150 = vxpose.xlu0.b32.cont [7/16] 0.0, 128
    %2151 = vxpose.xlu0.b32.cont [8/16] 0.0, 128
    %2152 = vxpose.xlu0.b32.cont [9/16] 0.0, 128
    %2153 = vxpose.xlu0.b32.cont [10/16] 0.0, 128
    %2154 = vxpose.xlu0.b32.cont [11/16] 0.0, 128
    %2155 = vxpose.xlu0.b32.cont [12/16] 0.0, 128
    %2156 = vxpose.xlu0.b32.cont [13/16] 0.0, 128
    %2157 = vxpose.xlu0.b32.cont [14/16] 0.0, 128
    %2158 = vxpose.xlu0.b32.cont [15/16] 0.0, 128
    %2159 = vxpose.xlu0.b32.end [16/16] 0.0, 128
    %v2160 = vpop.trf.xlu0
    %v2161 = vpop.trf.xlu0
    %v2162 = vpop.trf.xlu0
    %v2163 = vpop.trf.xlu0
    %v2164 = vpop.trf.xlu0
    %v2165 = vpop.trf.xlu0
    %v2166 = vpop.trf.xlu0
    %v2167 = vpop.trf.xlu0
    %v2168 = vpop.trf.xlu0
    %v2169 = vpop.trf.xlu0
    %v2170 = vpop.trf.xlu0
    %v2171 = vpop.trf.xlu0
    %v2172 = vpop.trf.xlu0
    %v2173 = vpop.trf.xlu0
    %v2174 = vpop.trf.xlu0
    %v2175 = vpop.trf.xlu0
    %2176 = vxpose.xlu0.b32.start [1/16] %v2128, 128
    %2177 = vxpose.xlu0.b32.cont [2/16] 0.0, 128
    %2178 = vxpose.xlu0.b32.cont [3/16] 0.0, 128
    %2179 = vxpose.xlu0.b32.cont [4/16] 0.0, 128
    %2180 = vxpose.xlu0.b32.cont [5/16] 0.0, 128
    %2181 = vxpose.xlu0.b32.cont [6/16] 0.0, 128
    %2182 = vxpose.xlu0.b32.cont [7/16] 0.0, 128
    %2183 = vxpose.xlu0.b32.cont [8/16] 0.0, 128
    %2184 = vxpose.xlu0.b32.cont [9/16] 0.0, 128
    %2185 = vxpose.xlu0.b32.cont [10/16] 0.0, 128
    %2186 = vxpose.xlu0.b32.cont [11/16] 0.0, 128
    %2187 = vxpose.xlu0.b32.cont [12/16] 0.0, 128
    %2188 = vxpose.xlu0.b32.cont [13/16] 0.0, 128
    %2189 = vxpose.xlu0.b32.cont [14/16] 0.0, 128
    %2190 = vxpose.xlu0.b32.cont [15/16] 0.0, 128
    %2191 = vxpose.xlu0.b32.end [16/16] 0.0, 128
    %v2192 = vpop.trf.xlu0
    %v2193 = vpop.trf.xlu0
    %v2194 = vpop.trf.xlu0
    %v2195 = vpop.trf.xlu0
    %v2196 = vpop.trf.xlu0
    %v2197 = vpop.trf.xlu0
    %v2198 = vpop.trf.xlu0
    %v2199 = vpop.trf.xlu0
    %v2200 = vpop.trf.xlu0
    %v2201 = vpop.trf.xlu0
    %v2202 = vpop.trf.xlu0
    %v2203 = vpop.trf.xlu0
    %v2204 = vpop.trf.xlu0
    %v2205 = vpop.trf.xlu0
    %v2206 = vpop.trf.xlu0
    %v2207 = vpop.trf.xlu0
    %2208 = vxpose.xlu0.b32.start [1/16] %v2129, 128
    %2209 = vxpose.xlu0.b32.cont [2/16] 0.0, 128
    %2210 = vxpose.xlu0.b32.cont [3/16] 0.0, 128
    %2211 = vxpose.xlu0.b32.cont [4/16] 0.0, 128
    %2212 = vxpose.xlu0.b32.cont [5/16] 0.0, 128
    %2213 = vxpose.xlu0.b32.cont [6/16] 0.0, 128
    %2214 = vxpose.xlu0.b32.cont [7/16] 0.0, 128
    %2215 = vxpose.xlu0.b32.cont [8/16] 0.0, 128
    %2216 = vxpose.xlu0.b32.cont [9/16] 0.0, 128
    %2217 = vxpose.xlu0.b32.cont [10/16] 0.0, 128
    %2218 = vxpose.xlu0.b32.cont [11/16] 0.0, 128
    %2219 = vxpose.xlu0.b32.cont [12/16] 0.0, 128
    %2220 = vxpose.xlu0.b32.cont [13/16] 0.0, 128
    %2221 = vxpose.xlu0.b32.cont [14/16] 0.0, 128
    %2222 = vxpose.xlu0.b32.cont [15/16] 0.0, 128
    %2223 = vxpose.xlu0.b32.end [16/16] 0.0, 128
    %v2224 = vpop.trf.xlu0
    %v2225 = vpop.trf.xlu0
    %v2226 = vpop.trf.xlu0
    %v2227 = vpop.trf.xlu0
    %v2228 = vpop.trf.xlu0
    %v2229 = vpop.trf.xlu0
    %v2230 = vpop.trf.xlu0
    %v2231 = vpop.trf.xlu0
    %v2232 = vpop.trf.xlu0
    %v2233 = vpop.trf.xlu0
    %v2234 = vpop.trf.xlu0
    %v2235 = vpop.trf.xlu0
    %v2236 = vpop.trf.xlu0
    %v2237 = vpop.trf.xlu0
    %v2238 = vpop.trf.xlu0
    %v2239 = vpop.trf.xlu0
    %2240 = vxpose.xlu0.b32.start [1/16] %v2130, 128
    %2241 = vxpose.xlu0.b32.cont [2/16] 0.0, 128
    %2242 = vxpose.xlu0.b32.cont [3/16] 0.0, 128
    %2243 = vxpose.xlu0.b32.cont [4/16] 0.0, 128
    %2244 = vxpose.xlu0.b32.cont [5/16] 0.0, 128
    %2245 = vxpose.xlu0.b32.cont [6/16] 0.0, 128
    %2246 = vxpose.xlu0.b32.cont [7/16] 0.0, 128
    %2247 = vxpose.xlu0.b32.cont [8/16] 0.0, 128
    %2248 = vxpose.xlu0.b32.cont [9/16] 0.0, 128
    %2249 = vxpose.xlu0.b32.cont [10/16] 0.0, 128
    %2250 = vxpose.xlu0.b32.cont [11/16] 0.0, 128
    %2251 = vxpose.xlu0.b32.cont [12/16] 0.0, 128
    %2252 = vxpose.xlu0.b32.cont [13/16] 0.0, 128
    %2253 = vxpose.xlu0.b32.cont [14/16] 0.0, 128
    %2254 = vxpose.xlu0.b32.cont [15/16] 0.0, 128
    %2255 = vxpose.xlu0.b32.end [16/16] 0.0, 128
    %v2256 = vpop.trf.xlu0
    %v2257 = vpop.trf.xlu0
    %v2258 = vpop.trf.xlu0
    %v2259 = vpop.trf.xlu0
    %v2260 = vpop.trf.xlu0
    %v2261 = vpop.trf.xlu0
    %v2262 = vpop.trf.xlu0
    %v2263 = vpop.trf.xlu0
    %v2264 = vpop.trf.xlu0
    %v2265 = vpop.trf.xlu0
    %v2266 = vpop.trf.xlu0
    %v2267 = vpop.trf.xlu0
    %v2268 = vpop.trf.xlu0
    %v2269 = vpop.trf.xlu0
    %v2270 = vpop.trf.xlu0
    %v2271 = vpop.trf.xlu0
    %2272 = vxpose.xlu0.b32.start [1/16] %v2131, 128
    %2273 = vxpose.xlu0.b32.cont [2/16] 0.0, 128
    %2274 = vxpose.xlu0.b32.cont [3/16] 0.0, 128
    %2275 = vxpose.xlu0.b32.cont [4/16] 0.0, 128
    %2276 = vxpose.xlu0.b32.cont [5/16] 0.0, 128
    %2277 = vxpose.xlu0.b32.cont [6/16] 0.0, 128
    %2278 = vxpose.xlu0.b32.cont [7/16] 0.0, 128
    %2279 = vxpose.xlu0.b32.cont [8/16] 0.0, 128
    %2280 = vxpose.xlu0.b32.cont [9/16] 0.0, 128
    %2281 = vxpose.xlu0.b32.cont [10/16] 0.0, 128
    %2282 = vxpose.xlu0.b32.cont [11/16] 0.0, 128
    %2283 = vxpose.xlu0.b32.cont [12/16] 0.0, 128
    %2284 = vxpose.xlu0.b32.cont [13/16] 0.0, 128
    %2285 = vxpose.xlu0.b32.cont [14/16] 0.0, 128
    %2286 = vxpose.xlu0.b32.cont [15/16] 0.0, 128
    %2287 = vxpose.xlu0.b32.end [16/16] 0.0, 128
    %v2288 = vpop.trf.xlu0
    %v2289 = vpop.trf.xlu0
    %v2290 = vpop.trf.xlu0
    %v2291 = vpop.trf.xlu0
    %v2292 = vpop.trf.xlu0
    %v2293 = vpop.trf.xlu0
    %v2294 = vpop.trf.xlu0
    %v2295 = vpop.trf.xlu0
    %v2296 = vpop.trf.xlu0
    %v2297 = vpop.trf.xlu0
    %v2298 = vpop.trf.xlu0
    %v2299 = vpop.trf.xlu0
    %v2300 = vpop.trf.xlu0
    %v2301 = vpop.trf.xlu0
    %v2302 = vpop.trf.xlu0
    %v2303 = vpop.trf.xlu0
    %2304 = vxpose.xlu0.b32.start [1/16] %v2132, 128
    %2305 = vxpose.xlu0.b32.cont [2/16] 0.0, 128
    %2306 = vxpose.xlu0.b32.cont [3/16] 0.0, 128
    %2307 = vxpose.xlu0.b32.cont [4/16] 0.0, 128
    %2308 = vxpose.xlu0.b32.cont [5/16] 0.0, 128
    %2309 = vxpose.xlu0.b32.cont [6/16] 0.0, 128
    %2310 = vxpose.xlu0.b32.cont [7/16] 0.0, 128
    %2311 = vxpose.xlu0.b32.cont [8/16] 0.0, 128
    %2312 = vxpose.xlu0.b32.cont [9/16] 0.0, 128
    %2313 = vxpose.xlu0.b32.cont [10/16] 0.0, 128
    %2314 = vxpose.xlu0.b32.cont [11/16] 0.0, 128
    %2315 = vxpose.xlu0.b32.cont [12/16] 0.0, 128
    %2316 = vxpose.xlu0.b32.cont [13/16] 0.0, 128
    %2317 = vxpose.xlu0.b32.cont [14/16] 0.0, 128
    %2318 = vxpose.xlu0.b32.cont [15/16] 0.0, 128
    %2319 = vxpose.xlu0.b32.end [16/16] 0.0, 128
    %v2320 = vpop.trf.xlu0
    %v2321 = vpop.trf.xlu0
    %v2322 = vpop.trf.xlu0
    %v2323 = vpop.trf.xlu0
    %v2324 = vpop.trf.xlu0
    %v2325 = vpop.trf.xlu0
    %v2326 = vpop.trf.xlu0
    %v2327 = vpop.trf.xlu0
    %v2328 = vpop.trf.xlu0
    %v2329 = vpop.trf.xlu0
    %v2330 = vpop.trf.xlu0
    %v2331 = vpop.trf.xlu0
    %v2332 = vpop.trf.xlu0
    %v2333 = vpop.trf.xlu0
    %v2334 = vpop.trf.xlu0
    %v2335 = vpop.trf.xlu0
    %2336 = vxpose.xlu0.b32.start [1/16] %v2133, 128
    %2337 = vxpose.xlu0.b32.cont [2/16] 0.0, 128
    %2338 = vxpose.xlu0.b32.cont [3/16] 0.0, 128
    %2339 = vxpose.xlu0.b32.cont [4/16] 0.0, 128
    %2340 = vxpose.xlu0.b32.cont [5/16] 0.0, 128
    %2341 = vxpose.xlu0.b32.cont [6/16] 0.0, 128
    %2342 = vxpose.xlu0.b32.cont [7/16] 0.0, 128
    %2343 = vxpose.xlu0.b32.cont [8/16] 0.0, 128
    %2344 = vxpose.xlu0.b32.cont [9/16] 0.0, 128
    %2345 = vxpose.xlu0.b32.cont [10/16] 0.0, 128
    %2346 = vxpose.xlu0.b32.cont [11/16] 0.0, 128
    %2347 = vxpose.xlu0.b32.cont [12/16] 0.0, 128
    %2348 = vxpose.xlu0.b32.cont [13/16] 0.0, 128
    %2349 = vxpose.xlu0.b32.cont [14/16] 0.0, 128
    %2350 = vxpose.xlu0.b32.cont [15/16] 0.0, 128
    %2351 = vxpose.xlu0.b32.end [16/16] 0.0, 128
    %v2352 = vpop.trf.xlu0
    %v2353 = vpop.trf.xlu0
    %v2354 = vpop.trf.xlu0
    %v2355 = vpop.trf.xlu0
    %v2356 = vpop.trf.xlu0
    %v2357 = vpop.trf.xlu0
    %v2358 = vpop.trf.xlu0
    %v2359 = vpop.trf.xlu0
    %v2360 = vpop.trf.xlu0
    %v2361 = vpop.trf.xlu0
    %v2362 = vpop.trf.xlu0
    %v2363 = vpop.trf.xlu0
    %v2364 = vpop.trf.xlu0
    %v2365 = vpop.trf.xlu0
    %v2366 = vpop.trf.xlu0
    %v2367 = vpop.trf.xlu0
    %2368 = vxpose.xlu0.b32.start [1/16] %v2134, 128
    %2369 = vxpose.xlu0.b32.cont [2/16] 0.0, 128
    %2370 = vxpose.xlu0.b32.cont [3/16] 0.0, 128
    %2371 = vxpose.xlu0.b32.cont [4/16] 0.0, 128
    %2372 = vxpose.xlu0.b32.cont [5/16] 0.0, 128
    %2373 = vxpose.xlu0.b32.cont [6/16] 0.0, 128
    %2374 = vxpose.xlu0.b32.cont [7/16] 0.0, 128
    %2375 = vxpose.xlu0.b32.cont [8/16] 0.0, 128
    %2376 = vxpose.xlu0.b32.cont [9/16] 0.0, 128
    %2377 = vxpose.xlu0.b32.cont [10/16] 0.0, 128
    %2378 = vxpose.xlu0.b32.cont [11/16] 0.0, 128
    %2379 = vxpose.xlu0.b32.cont [12/16] 0.0, 128
    %2380 = vxpose.xlu0.b32.cont [13/16] 0.0, 128
    %2381 = vxpose.xlu0.b32.cont [14/16] 0.0, 128
    %2382 = vxpose.xlu0.b32.cont [15/16] 0.0, 128
    %2383 = vxpose.xlu0.b32.end [16/16] 0.0, 128
    %v2384 = vpop.trf.xlu0
    %v2385 = vpop.trf.xlu0
    %v2386 = vpop.trf.xlu0
    %v2387 = vpop.trf.xlu0
    %v2388 = vpop.trf.xlu0
    %v2389 = vpop.trf.xlu0
    %v2390 = vpop.trf.xlu0
    %v2391 = vpop.trf.xlu0
    %v2392 = vpop.trf.xlu0
    %v2393 = vpop.trf.xlu0
    %v2394 = vpop.trf.xlu0
    %v2395 = vpop.trf.xlu0
    %v2396 = vpop.trf.xlu0
    %v2397 = vpop.trf.xlu0
    %v2398 = vpop.trf.xlu0
    %v2399 = vpop.trf.xlu0
    %2400 = vxpose.xlu0.b32.start [1/16] %v2135, 128
    %2401 = vxpose.xlu0.b32.cont [2/16] 0.0, 128
    %2402 = vxpose.xlu0.b32.cont [3/16] 0.0, 128
    %2403 = vxpose.xlu0.b32.cont [4/16] 0.0, 128
    %2404 = vxpose.xlu0.b32.cont [5/16] 0.0, 128
    %2405 = vxpose.xlu0.b32.cont [6/16] 0.0, 128
    %2406 = vxpose.xlu0.b32.cont [7/16] 0.0, 128
    %2407 = vxpose.xlu0.b32.cont [8/16] 0.0, 128
    %2408 = vxpose.xlu0.b32.cont [9/16] 0.0, 128
    %2409 = vxpose.xlu0.b32.cont [10/16] 0.0, 128
    %2410 = vxpose.xlu0.b32.cont [11/16] 0.0, 128
    %2411 = vxpose.xlu0.b32.cont [12/16] 0.0, 128
    %2412 = vxpose.xlu0.b32.cont [13/16] 0.0, 128
    %2413 = vxpose.xlu0.b32.cont [14/16] 0.0, 128
    %2414 = vxpose.xlu0.b32.cont [15/16] 0.0, 128
    %2415 = vxpose.xlu0.b32.end [16/16] 0.0, 128
    %v2416 = vpop.trf.xlu0
    %v2417 = vpop.trf.xlu0
    %v2418 = vpop.trf.xlu0
    %v2419 = vpop.trf.xlu0
    %v2420 = vpop.trf.xlu0
    %v2421 = vpop.trf.xlu0
    %v2422 = vpop.trf.xlu0
    %v2423 = vpop.trf.xlu0
    %v2424 = vpop.trf.xlu0
    %v2425 = vpop.trf.xlu0
    %v2426 = vpop.trf.xlu0
    %v2427 = vpop.trf.xlu0
    %v2428 = vpop.trf.xlu0
    %v2429 = vpop.trf.xlu0
    %v2430 = vpop.trf.xlu0
    %v2431 = vpop.trf.xlu0
    %2432 = vxpose.xlu0.b32.start [1/16] %v2136, 128
    %2433 = vxpose.xlu0.b32.cont [2/16] 0.0, 128
    %2434 = vxpose.xlu0.b32.cont [3/16] 0.0, 128
    %2435 = vxpose.xlu0.b32.cont [4/16] 0.0, 128
    %2436 = vxpose.xlu0.b32.cont [5/16] 0.0, 128
    %2437 = vxpose.xlu0.b32.cont [6/16] 0.0, 128
    %2438 = vxpose.xlu0.b32.cont [7/16] 0.0, 128
    %2439 = vxpose.xlu0.b32.cont [8/16] 0.0, 128
    %2440 = vxpose.xlu0.b32.cont [9/16] 0.0, 128
    %2441 = vxpose.xlu0.b32.cont [10/16] 0.0, 128
    %2442 = vxpose.xlu0.b32.cont [11/16] 0.0, 128
    %2443 = vxpose.xlu0.b32.cont [12/16] 0.0, 128
    %2444 = vxpose.xlu0.b32.cont [13/16] 0.0, 128
    %2445 = vxpose.xlu0.b32.cont [14/16] 0.0, 128
    %2446 = vxpose.xlu0.b32.cont [15/16] 0.0, 128
    %2447 = vxpose.xlu0.b32.end [16/16] 0.0, 128
    %v2448 = vpop.trf.xlu0
    %v2449 = vpop.trf.xlu0
    %v2450 = vpop.trf.xlu0
    %v2451 = vpop.trf.xlu0
    %v2452 = vpop.trf.xlu0
    %v2453 = vpop.trf.xlu0
    %v2454 = vpop.trf.xlu0
    %v2455 = vpop.trf.xlu0
    %v2456 = vpop.trf.xlu0
    %v2457 = vpop.trf.xlu0
    %v2458 = vpop.trf.xlu0
    %v2459 = vpop.trf.xlu0
    %v2460 = vpop.trf.xlu0
    %v2461 = vpop.trf.xlu0
    %v2462 = vpop.trf.xlu0
    %v2463 = vpop.trf.xlu0
    %2464 = vxpose.xlu0.b32.start [1/16] %v2137, 128
    %2465 = vxpose.xlu0.b32.cont [2/16] 0.0, 128
    %2466 = vxpose.xlu0.b32.cont [3/16] 0.0, 128
    %2467 = vxpose.xlu0.b32.cont [4/16] 0.0, 128
    %2468 = vxpose.xlu0.b32.cont [5/16] 0.0, 128
    %2469 = vxpose.xlu0.b32.cont [6/16] 0.0, 128
    %2470 = vxpose.xlu0.b32.cont [7/16] 0.0, 128
    %2471 = vxpose.xlu0.b32.cont [8/16] 0.0, 128
    %2472 = vxpose.xlu0.b32.cont [9/16] 0.0, 128
    %2473 = vxpose.xlu0.b32.cont [10/16] 0.0, 128
    %2474 = vxpose.xlu0.b32.cont [11/16] 0.0, 128
    %2475 = vxpose.xlu0.b32.cont [12/16] 0.0, 128
    %2476 = vxpose.xlu0.b32.cont [13/16] 0.0, 128
    %2477 = vxpose.xlu0.b32.cont [14/16] 0.0, 128
    %2478 = vxpose.xlu0.b32.cont [15/16] 0.0, 128
    %2479 = vxpose.xlu0.b32.end [16/16] 0.0, 128
    %v2480 = vpop.trf.xlu0
    %v2481 = vpop.trf.xlu0
    %v2482 = vpop.trf.xlu0
    %v2483 = vpop.trf.xlu0
    %v2484 = vpop.trf.xlu0
    %v2485 = vpop.trf.xlu0
    %v2486 = vpop.trf.xlu0
    %v2487 = vpop.trf.xlu0
    %v2488 = vpop.trf.xlu0
    %v2489 = vpop.trf.xlu0
    %v2490 = vpop.trf.xlu0
    %v2491 = vpop.trf.xlu0
    %v2492 = vpop.trf.xlu0
    %v2493 = vpop.trf.xlu0
    %v2494 = vpop.trf.xlu0
    %v2495 = vpop.trf.xlu0
    %2496 = vxpose.xlu0.b32.start [1/16] %v2138, 128
    %2497 = vxpose.xlu0.b32.cont [2/16] 0.0, 128
    %2498 = vxpose.xlu0.b32.cont [3/16] 0.0, 128
    %2499 = vxpose.xlu0.b32.cont [4/16] 0.0, 128
    %2500 = vxpose.xlu0.b32.cont [5/16] 0.0, 128
    %2501 = vxpose.xlu0.b32.cont [6/16] 0.0, 128
    %2502 = vxpose.xlu0.b32.cont [7/16] 0.0, 128
    %2503 = vxpose.xlu0.b32.cont [8/16] 0.0, 128
    %2504 = vxpose.xlu0.b32.cont [9/16] 0.0, 128
    %2505 = vxpose.xlu0.b32.cont [10/16] 0.0, 128
    %2506 = vxpose.xlu0.b32.cont [11/16] 0.0, 128
    %2507 = vxpose.xlu0.b32.cont [12/16] 0.0, 128
    %2508 = vxpose.xlu0.b32.cont [13/16] 0.0, 128
    %2509 = vxpose.xlu0.b32.cont [14/16] 0.0, 128
    %2510 = vxpose.xlu0.b32.cont [15/16] 0.0, 128
    %2511 = vxpose.xlu0.b32.end [16/16] 0.0, 128
    %v2512 = vpop.trf.xlu0
    %v2513 = vpop.trf.xlu0
    %v2514 = vpop.trf.xlu0
    %v2515 = vpop.trf.xlu0
    %v2516 = vpop.trf.xlu0
    %v2517 = vpop.trf.xlu0
    %v2518 = vpop.trf.xlu0
    %v2519 = vpop.trf.xlu0
    %v2520 = vpop.trf.xlu0
    %v2521 = vpop.trf.xlu0
    %v2522 = vpop.trf.xlu0
    %v2523 = vpop.trf.xlu0
    %v2524 = vpop.trf.xlu0
    %v2525 = vpop.trf.xlu0
    %v2526 = vpop.trf.xlu0
    %v2527 = vpop.trf.xlu0
    %2528 = vxpose.xlu0.b32.start [1/16] %v2139, 128
    %2529 = vxpose.xlu0.b32.cont [2/16] 0.0, 128
    %2530 = vxpose.xlu0.b32.cont [3/16] 0.0, 128
    %2531 = vxpose.xlu0.b32.cont [4/16] 0.0, 128
    %2532 = vxpose.xlu0.b32.cont [5/16] 0.0, 128
    %2533 = vxpose.xlu0.b32.cont [6/16] 0.0, 128
    %2534 = vxpose.xlu0.b32.cont [7/16] 0.0, 128
    %2535 = vxpose.xlu0.b32.cont [8/16] 0.0, 128
    %2536 = vxpose.xlu0.b32.cont [9/16] 0.0, 128
    %2537 = vxpose.xlu0.b32.cont [10/16] 0.0, 128
    %2538 = vxpose.xlu0.b32.cont [11/16] 0.0, 128
    %2539 = vxpose.xlu0.b32.cont [12/16] 0.0, 128
    %2540 = vxpose.xlu0.b32.cont [13/16] 0.0, 128
    %2541 = vxpose.xlu0.b32.cont [14/16] 0.0, 128
    %2542 = vxpose.xlu0.b32.cont [15/16] 0.0, 128
    %2543 = vxpose.xlu0.b32.end [16/16] 0.0, 128
    %v2544 = vpop.trf.xlu0
    %v2545 = vpop.trf.xlu0
    %v2546 = vpop.trf.xlu0
    %v2547 = vpop.trf.xlu0
    %v2548 = vpop.trf.xlu0
    %v2549 = vpop.trf.xlu0
    %v2550 = vpop.trf.xlu0
    %v2551 = vpop.trf.xlu0
    %v2552 = vpop.trf.xlu0
    %v2553 = vpop.trf.xlu0
    %v2554 = vpop.trf.xlu0
    %v2555 = vpop.trf.xlu0
    %v2556 = vpop.trf.xlu0
    %v2557 = vpop.trf.xlu0
    %v2558 = vpop.trf.xlu0
    %v2559 = vpop.trf.xlu0
    %2560 = vxpose.xlu0.b32.start [1/16] %v2160, 128
    %2561 = vxpose.xlu0.b32.cont [2/16] 0.0, 128
    %2562 = vxpose.xlu0.b32.cont [3/16] 0.0, 128
    %2563 = vxpose.xlu0.b32.cont [4/16] 0.0, 128
    %2564 = vxpose.xlu0.b32.cont [5/16] 0.0, 128
    %2565 = vxpose.xlu0.b32.cont [6/16] 0.0, 128
    %2566 = vxpose.xlu0.b32.cont [7/16] 0.0, 128
    %2567 = vxpose.xlu0.b32.cont [8/16] 0.0, 128
    %2568 = vxpose.xlu0.b32.cont [9/16] 0.0, 128
    %2569 = vxpose.xlu0.b32.cont [10/16] 0.0, 128
    %2570 = vxpose.xlu0.b32.cont [11/16] 0.0, 128
    %2571 = vxpose.xlu0.b32.cont [12/16] 0.0, 128
    %2572 = vxpose.xlu0.b32.cont [13/16] 0.0, 128
    %2573 = vxpose.xlu0.b32.cont [14/16] 0.0, 128
    %2574 = vxpose.xlu0.b32.cont [15/16] 0.0, 128
    %2575 = vxpose.xlu0.b32.end [16/16] 0.0, 128
    %v2576 = vpop.trf.xlu0
    %v2577 = vpop.trf.xlu0
    %v2578 = vpop.trf.xlu0
    %v2579 = vpop.trf.xlu0
    %v2580 = vpop.trf.xlu0
    %v2581 = vpop.trf.xlu0
    %v2582 = vpop.trf.xlu0
    %v2583 = vpop.trf.xlu0
    %v2584 = vpop.trf.xlu0
    %v2585 = vpop.trf.xlu0
    %v2586 = vpop.trf.xlu0
    %v2587 = vpop.trf.xlu0
    %v2588 = vpop.trf.xlu0
    %v2589 = vpop.trf.xlu0
    %v2590 = vpop.trf.xlu0
    %v2591 = vpop.trf.xlu0
    %2592 = vxpose.xlu0.b32.start [1/16] %v2161, 128
    %2593 = vxpose.xlu0.b32.cont [2/16] 0.0, 128
    %2594 = vxpose.xlu0.b32.cont [3/16] 0.0, 128
    %2595 = vxpose.xlu0.b32.cont [4/16] 0.0, 128
    %2596 = vxpose.xlu0.b32.cont [5/16] 0.0, 128
    %2597 = vxpose.xlu0.b32.cont [6/16] 0.0, 128
    %2598 = vxpose.xlu0.b32.cont [7/16] 0.0, 128
    %2599 = vxpose.xlu0.b32.cont [8/16] 0.0, 128
    %2600 = vxpose.xlu0.b32.cont [9/16] 0.0, 128
    %2601 = vxpose.xlu0.b32.cont [10/16] 0.0, 128
    %2602 = vxpose.xlu0.b32.cont [11/16] 0.0, 128
    %2603 = vxpose.xlu0.b32.cont [12/16] 0.0, 128
    %2604 = vxpose.xlu0.b32.cont [13/16] 0.0, 128
    %2605 = vxpose.xlu0.b32.cont [14/16] 0.0, 128
    %2606 = vxpose.xlu0.b32.cont [15/16] 0.0, 128
    %2607 = vxpose.xlu0.b32.end [16/16] 0.0, 128
    %v2608 = vpop.trf.xlu0
    %v2609 = vpop.trf.xlu0
    %v2610 = vpop.trf.xlu0
    %v2611 = vpop.trf.xlu0
    %v2612 = vpop.trf.xlu0
    %v2613 = vpop.trf.xlu0
    %v2614 = vpop.trf.xlu0
    %v2615 = vpop.trf.xlu0
    %v2616 = vpop.trf.xlu0
    %v2617 = vpop.trf.xlu0
    %v2618 = vpop.trf.xlu0
    %v2619 = vpop.trf.xlu0
    %v2620 = vpop.trf.xlu0
    %v2621 = vpop.trf.xlu0
    %v2622 = vpop.trf.xlu0
    %v2623 = vpop.trf.xlu0
    %2624 = vxpose.xlu0.b32.start [1/16] %v2162, 128
    %2625 = vxpose.xlu0.b32.cont [2/16] 0.0, 128
    %2626 = vxpose.xlu0.b32.cont [3/16] 0.0, 128
    %2627 = vxpose.xlu0.b32.cont [4/16] 0.0, 128
    %2628 = vxpose.xlu0.b32.cont [5/16] 0.0, 128
    %2629 = vxpose.xlu0.b32.cont [6/16] 0.0, 128
    %2630 = vxpose.xlu0.b32.cont [7/16] 0.0, 128
    %2631 = vxpose.xlu0.b32.cont [8/16] 0.0, 128
    %2632 = vxpose.xlu0.b32.cont [9/16] 0.0, 128
    %2633 = vxpose.xlu0.b32.cont [10/16] 0.0, 128
    %2634 = vxpose.xlu0.b32.cont [11/16] 0.0, 128
    %2635 = vxpose.xlu0.b32.cont [12/16] 0.0, 128
    %2636 = vxpose.xlu0.b32.cont [13/16] 0.0, 128
    %2637 = vxpose.xlu0.b32.cont [14/16] 0.0, 128
    %2638 = vxpose.xlu0.b32.cont [15/16] 0.0, 128
    %2639 = vxpose.xlu0.b32.end [16/16] 0.0, 128
    %v2640 = vpop.trf.xlu0
    %v2641 = vpop.trf.xlu0
    %v2642 = vpop.trf.xlu0
    %v2643 = vpop.trf.xlu0
    %v2644 = vpop.trf.xlu0
    %v2645 = vpop.trf.xlu0
    %v2646 = vpop.trf.xlu0
    %v2647 = vpop.trf.xlu0
    %v2648 = vpop.trf.xlu0
    %v2649 = vpop.trf.xlu0
    %v2650 = vpop.trf.xlu0
    %v2651 = vpop.trf.xlu0
    %v2652 = vpop.trf.xlu0
    %v2653 = vpop.trf.xlu0
    %v2654 = vpop.trf.xlu0
    %v2655 = vpop.trf.xlu0
    %2656 = vxpose.xlu0.b32.start [1/16] %v2163, 128
    %2657 = vxpose.xlu0.b32.cont [2/16] 0.0, 128
    %2658 = vxpose.xlu0.b32.cont [3/16] 0.0, 128
    %2659 = vxpose.xlu0.b32.cont [4/16] 0.0, 128
    %2660 = vxpose.xlu0.b32.cont [5/16] 0.0, 128
    %2661 = vxpose.xlu0.b32.cont [6/16] 0.0, 128
    %2662 = vxpose.xlu0.b32.cont [7/16] 0.0, 128
    %2663 = vxpose.xlu0.b32.cont [8/16] 0.0, 128
    %2664 = vxpose.xlu0.b32.cont [9/16] 0.0, 128
    %2665 = vxpose.xlu0.b32.cont [10/16] 0.0, 128
    %2666 = vxpose.xlu0.b32.cont [11/16] 0.0, 128
    %2667 = vxpose.xlu0.b32.cont [12/16] 0.0, 128
    %2668 = vxpose.xlu0.b32.cont [13/16] 0.0, 128
    %2669 = vxpose.xlu0.b32.cont [14/16] 0.0, 128
    %2670 = vxpose.xlu0.b32.cont [15/16] 0.0, 128
    %2671 = vxpose.xlu0.b32.end [16/16] 0.0, 128
    %v2672 = vpop.trf.xlu0
    %v2673 = vpop.trf.xlu0
    %v2674 = vpop.trf.xlu0
    %v2675 = vpop.trf.xlu0
    %v2676 = vpop.trf.xlu0
    %v2677 = vpop.trf.xlu0
    %v2678 = vpop.trf.xlu0
    %v2679 = vpop.trf.xlu0
    %v2680 = vpop.trf.xlu0
    %v2681 = vpop.trf.xlu0
    %v2682 = vpop.trf.xlu0
    %v2683 = vpop.trf.xlu0
    %v2684 = vpop.trf.xlu0
    %v2685 = vpop.trf.xlu0
    %v2686 = vpop.trf.xlu0
    %v2687 = vpop.trf.xlu0
    %2688 = vxpose.xlu0.b32.start [1/16] %v2164, 128
    %2689 = vxpose.xlu0.b32.cont [2/16] 0.0, 128
    %2690 = vxpose.xlu0.b32.cont [3/16] 0.0, 128
    %2691 = vxpose.xlu0.b32.cont [4/16] 0.0, 128
    %2692 = vxpose.xlu0.b32.cont [5/16] 0.0, 128
    %2693 = vxpose.xlu0.b32.cont [6/16] 0.0, 128
    %2694 = vxpose.xlu0.b32.cont [7/16] 0.0, 128
    %2695 = vxpose.xlu0.b32.cont [8/16] 0.0, 128
    %2696 = vxpose.xlu0.b32.cont [9/16] 0.0, 128
    %2697 = vxpose.xlu0.b32.cont [10/16] 0.0, 128
    %2698 = vxpose.xlu0.b32.cont [11/16] 0.0, 128
    %2699 = vxpose.xlu0.b32.cont [12/16] 0.0, 128
    %2700 = vxpose.xlu0.b32.cont [13/16] 0.0, 128
    %2701 = vxpose.xlu0.b32.cont [14/16] 0.0, 128
    %2702 = vxpose.xlu0.b32.cont [15/16] 0.0, 128
    %2703 = vxpose.xlu0.b32.end [16/16] 0.0, 128
    %v2704 = vpop.trf.xlu0
    %v2705 = vpop.trf.xlu0
    %v2706 = vpop.trf.xlu0
    %v2707 = vpop.trf.xlu0
    %v2708 = vpop.trf.xlu0
    %v2709 = vpop.trf.xlu0
    %v2710 = vpop.trf.xlu0
    %v2711 = vpop.trf.xlu0
    %v2712 = vpop.trf.xlu0
    %v2713 = vpop.trf.xlu0
    %v2714 = vpop.trf.xlu0
    %v2715 = vpop.trf.xlu0
    %v2716 = vpop.trf.xlu0
    %v2717 = vpop.trf.xlu0
    %v2718 = vpop.trf.xlu0
    %v2719 = vpop.trf.xlu0
    %2720 = vxpose.xlu0.b32.start [1/16] %v2165, 128
    %2721 = vxpose.xlu0.b32.cont [2/16] 0.0, 128
    %2722 = vxpose.xlu0.b32.cont [3/16] 0.0, 128
    %2723 = vxpose.xlu0.b32.cont [4/16] 0.0, 128
    %2724 = vxpose.xlu0.b32.cont [5/16] 0.0, 128
    %2725 = vxpose.xlu0.b32.cont [6/16] 0.0, 128
    %2726 = vxpose.xlu0.b32.cont [7/16] 0.0, 128
    %2727 = vxpose.xlu0.b32.cont [8/16] 0.0, 128
    %2728 = vxpose.xlu0.b32.cont [9/16] 0.0, 128
    %2729 = vxpose.xlu0.b32.cont [10/16] 0.0, 128
    %2730 = vxpose.xlu0.b32.cont [11/16] 0.0, 128
    %2731 = vxpose.xlu0.b32.cont [12/16] 0.0, 128
    %2732 = vxpose.xlu0.b32.cont [13/16] 0.0, 128
    %2733 = vxpose.xlu0.b32.cont [14/16] 0.0, 128
    %2734 = vxpose.xlu0.b32.cont [15/16] 0.0, 128
    %2735 = vxpose.xlu0.b32.end [16/16] 0.0, 128
    %v2736 = vpop.trf.xlu0
    %v2737 = vpop.trf.xlu0
    %v2738 = vpop.trf.xlu0
    %v2739 = vpop.trf.xlu0
    %v2740 = vpop.trf.xlu0
    %v2741 = vpop.trf.xlu0
    %v2742 = vpop.trf.xlu0
    %v2743 = vpop.trf.xlu0
    %v2744 = vpop.trf.xlu0
    %v2745 = vpop.trf.xlu0
    %v2746 = vpop.trf.xlu0
    %v2747 = vpop.trf.xlu0
    %v2748 = vpop.trf.xlu0
    %v2749 = vpop.trf.xlu0
    %v2750 = vpop.trf.xlu0
    %v2751 = vpop.trf.xlu0
    %2752 = vxpose.xlu0.b32.start [1/16] %v2166, 128
    %2753 = vxpose.xlu0.b32.cont [2/16] 0.0, 128
    %2754 = vxpose.xlu0.b32.cont [3/16] 0.0, 128
    %2755 = vxpose.xlu0.b32.cont [4/16] 0.0, 128
    %2756 = vxpose.xlu0.b32.cont [5/16] 0.0, 128
    %2757 = vxpose.xlu0.b32.cont [6/16] 0.0, 128
    %2758 = vxpose.xlu0.b32.cont [7/16] 0.0, 128
    %2759 = vxpose.xlu0.b32.cont [8/16] 0.0, 128
    %2760 = vxpose.xlu0.b32.cont [9/16] 0.0, 128
    %2761 = vxpose.xlu0.b32.cont [10/16] 0.0, 128
    %2762 = vxpose.xlu0.b32.cont [11/16] 0.0, 128
    %2763 = vxpose.xlu0.b32.cont [12/16] 0.0, 128
    %2764 = vxpose.xlu0.b32.cont [13/16] 0.0, 128
    %2765 = vxpose.xlu0.b32.cont [14/16] 0.0, 128
    %2766 = vxpose.xlu0.b32.cont [15/16] 0.0, 128
    %2767 = vxpose.xlu0.b32.end [16/16] 0.0, 128
    %v2768 = vpop.trf.xlu0
    %v2769 = vpop.trf.xlu0
    %v2770 = vpop.trf.xlu0
    %v2771 = vpop.trf.xlu0
    %v2772 = vpop.trf.xlu0
    %v2773 = vpop.trf.xlu0
    %v2774 = vpop.trf.xlu0
    %v2775 = vpop.trf.xlu0
    %v2776 = vpop.trf.xlu0
    %v2777 = vpop.trf.xlu0
    %v2778 = vpop.trf.xlu0
    %v2779 = vpop.trf.xlu0
    %v2780 = vpop.trf.xlu0
    %v2781 = vpop.trf.xlu0
    %v2782 = vpop.trf.xlu0
    %v2783 = vpop.trf.xlu0
    %2784 = vxpose.xlu0.b32.start [1/16] %v2167, 128
    %2785 = vxpose.xlu0.b32.cont [2/16] 0.0, 128
    %2786 = vxpose.xlu0.b32.cont [3/16] 0.0, 128
    %2787 = vxpose.xlu0.b32.cont [4/16] 0.0, 128
    %2788 = vxpose.xlu0.b32.cont [5/16] 0.0, 128
    %2789 = vxpose.xlu0.b32.cont [6/16] 0.0, 128
    %2790 = vxpose.xlu0.b32.cont [7/16] 0.0, 128
    %2791 = vxpose.xlu0.b32.cont [8/16] 0.0, 128
    %2792 = vxpose.xlu0.b32.cont [9/16] 0.0, 128
    %2793 = vxpose.xlu0.b32.cont [10/16] 0.0, 128
    %2794 = vxpose.xlu0.b32.cont [11/16] 0.0, 128
    %2795 = vxpose.xlu0.b32.cont [12/16] 0.0, 128
    %2796 = vxpose.xlu0.b32.cont [13/16] 0.0, 128
    %2797 = vxpose.xlu0.b32.cont [14/16] 0.0, 128
    %2798 = vxpose.xlu0.b32.cont [15/16] 0.0, 128
    %2799 = vxpose.xlu0.b32.end [16/16] 0.0, 128
    %v2800 = vpop.trf.xlu0
    %v2801 = vpop.trf.xlu0
    %v2802 = vpop.trf.xlu0
    %v2803 = vpop.trf.xlu0
    %v2804 = vpop.trf.xlu0
    %v2805 = vpop.trf.xlu0
    %v2806 = vpop.trf.xlu0
    %v2807 = vpop.trf.xlu0
    %v2808 = vpop.trf.xlu0
    %v2809 = vpop.trf.xlu0
    %v2810 = vpop.trf.xlu0
    %v2811 = vpop.trf.xlu0
    %v2812 = vpop.trf.xlu0
    %v2813 = vpop.trf.xlu0
    %v2814 = vpop.trf.xlu0
    %v2815 = vpop.trf.xlu0
    %2816 = vxpose.xlu0.b32.start [1/16] %v2168, 128
    %2817 = vxpose.xlu0.b32.cont [2/16] 0.0, 128
    %2818 = vxpose.xlu0.b32.cont [3/16] 0.0, 128
    %2819 = vxpose.xlu0.b32.cont [4/16] 0.0, 128
    %2820 = vxpose.xlu0.b32.cont [5/16] 0.0, 128
    %2821 = vxpose.xlu0.b32.cont [6/16] 0.0, 128
    %2822 = vxpose.xlu0.b32.cont [7/16] 0.0, 128
    %2823 = vxpose.xlu0.b32.cont [8/16] 0.0, 128
    %2824 = vxpose.xlu0.b32.cont [9/16] 0.0, 128
    %2825 = vxpose.xlu0.b32.cont [10/16] 0.0, 128
    %2826 = vxpose.xlu0.b32.cont [11/16] 0.0, 128
    %2827 = vxpose.xlu0.b32.cont [12/16] 0.0, 128
    %2828 = vxpose.xlu0.b32.cont [13/16] 0.0, 128
    %2829 = vxpose.xlu0.b32.cont [14/16] 0.0, 128
    %2830 = vxpose.xlu0.b32.cont [15/16] 0.0, 128
    %2831 = vxpose.xlu0.b32.end [16/16] 0.0, 128
    %v2832 = vpop.trf.xlu0
    %v2833 = vpop.trf.xlu0
    %v2834 = vpop.trf.xlu0
    %v2835 = vpop.trf.xlu0
    %v2836 = vpop.trf.xlu0
    %v2837 = vpop.trf.xlu0
    %v2838 = vpop.trf.xlu0
    %v2839 = vpop.trf.xlu0
    %v2840 = vpop.trf.xlu0
    %v2841 = vpop.trf.xlu0
    %v2842 = vpop.trf.xlu0
    %v2843 = vpop.trf.xlu0
    %v2844 = vpop.trf.xlu0
    %v2845 = vpop.trf.xlu0
    %v2846 = vpop.trf.xlu0
    %v2847 = vpop.trf.xlu0
    %2848 = vxpose.xlu0.b32.start [1/16] %v2169, 128
    %2849 = vxpose.xlu0.b32.cont [2/16] 0.0, 128
    %2850 = vxpose.xlu0.b32.cont [3/16] 0.0, 128
    %2851 = vxpose.xlu0.b32.cont [4/16] 0.0, 128
    %2852 = vxpose.xlu0.b32.cont [5/16] 0.0, 128
    %2853 = vxpose.xlu0.b32.cont [6/16] 0.0, 128
    %2854 = vxpose.xlu0.b32.cont [7/16] 0.0, 128
    %2855 = vxpose.xlu0.b32.cont [8/16] 0.0, 128
    %2856 = vxpose.xlu0.b32.cont [9/16] 0.0, 128
    %2857 = vxpose.xlu0.b32.cont [10/16] 0.0, 128
    %2858 = vxpose.xlu0.b32.cont [11/16] 0.0, 128
    %2859 = vxpose.xlu0.b32.cont [12/16] 0.0, 128
    %2860 = vxpose.xlu0.b32.cont [13/16] 0.0, 128
    %2861 = vxpose.xlu0.b32.cont [14/16] 0.0, 128
    %2862 = vxpose.xlu0.b32.cont [15/16] 0.0, 128
    %2863 = vxpose.xlu0.b32.end [16/16] 0.0, 128
    %v2864 = vpop.trf.xlu0
    %v2865 = vpop.trf.xlu0
    %v2866 = vpop.trf.xlu0
    %v2867 = vpop.trf.xlu0
    %v2868 = vpop.trf.xlu0
    %v2869 = vpop.trf.xlu0
    %v2870 = vpop.trf.xlu0
    %v2871 = vpop.trf.xlu0
    %v2872 = vpop.trf.xlu0
    %v2873 = vpop.trf.xlu0
    %v2874 = vpop.trf.xlu0
    %v2875 = vpop.trf.xlu0
    %v2876 = vpop.trf.xlu0
    %v2877 = vpop.trf.xlu0
    %v2878 = vpop.trf.xlu0
    %v2879 = vpop.trf.xlu0
    %2880 = vxpose.xlu0.b32.start [1/16] %v2170, 128
    %2881 = vxpose.xlu0.b32.cont [2/16] 0.0, 128
    %2882 = vxpose.xlu0.b32.cont [3/16] 0.0, 128
    %2883 = vxpose.xlu0.b32.cont [4/16] 0.0, 128
    %2884 = vxpose.xlu0.b32.cont [5/16] 0.0, 128
    %2885 = vxpose.xlu0.b32.cont [6/16] 0.0, 128
    %2886 = vxpose.xlu0.b32.cont [7/16] 0.0, 128
    %2887 = vxpose.xlu0.b32.cont [8/16] 0.0, 128
    %2888 = vxpose.xlu0.b32.cont [9/16] 0.0, 128
    %2889 = vxpose.xlu0.b32.cont [10/16] 0.0, 128
    %2890 = vxpose.xlu0.b32.cont [11/16] 0.0, 128
    %2891 = vxpose.xlu0.b32.cont [12/16] 0.0, 128
    %2892 = vxpose.xlu0.b32.cont [13/16] 0.0, 128
    %2893 = vxpose.xlu0.b32.cont [14/16] 0.0, 128
    %2894 = vxpose.xlu0.b32.cont [15/16] 0.0, 128
    %2895 = vxpose.xlu0.b32.end [16/16] 0.0, 128
    %v2896 = vpop.trf.xlu0
    %v2897 = vpop.trf.xlu0
    %v2898 = vpop.trf.xlu0
    %v2899 = vpop.trf.xlu0
    %v2900 = vpop.trf.xlu0
    %v2901 = vpop.trf.xlu0
    %v2902 = vpop.trf.xlu0
    %v2903 = vpop.trf.xlu0
    %v2904 = vpop.trf.xlu0
    %v2905 = vpop.trf.xlu0
    %v2906 = vpop.trf.xlu0
    %v2907 = vpop.trf.xlu0
    %v2908 = vpop.trf.xlu0
    %v2909 = vpop.trf.xlu0
    %v2910 = vpop.trf.xlu0
    %v2911 = vpop.trf.xlu0
    %2912 = vxpose.xlu0.b32.start [1/16] %v2171, 128
    %2913 = vxpose.xlu0.b32.cont [2/16] 0.0, 128
    %2914 = vxpose.xlu0.b32.cont [3/16] 0.0, 128
    %2915 = vxpose.xlu0.b32.cont [4/16] 0.0, 128
    %2916 = vxpose.xlu0.b32.cont [5/16] 0.0, 128
    %2917 = vxpose.xlu0.b32.cont [6/16] 0.0, 128
    %2918 = vxpose.xlu0.b32.cont [7/16] 0.0, 128
    %2919 = vxpose.xlu0.b32.cont [8/16] 0.0, 128
    %2920 = vxpose.xlu0.b32.cont [9/16] 0.0, 128
    %2921 = vxpose.xlu0.b32.cont [10/16] 0.0, 128
    %2922 = vxpose.xlu0.b32.cont [11/16] 0.0, 128
    %2923 = vxpose.xlu0.b32.cont [12/16] 0.0, 128
    %2924 = vxpose.xlu0.b32.cont [13/16] 0.0, 128
    %2925 = vxpose.xlu0.b32.cont [14/16] 0.0, 128
    %2926 = vxpose.xlu0.b32.cont [15/16] 0.0, 128
    %2927 = vxpose.xlu0.b32.end [16/16] 0.0, 128
    %v2928 = vpop.trf.xlu0
    %v2929 = vpop.trf.xlu0
    %v2930 = vpop.trf.xlu0
    %v2931 = vpop.trf.xlu0
    %v2932 = vpop.trf.xlu0
    %v2933 = vpop.trf.xlu0
    %v2934 = vpop.trf.xlu0
    %v2935 = vpop.trf.xlu0
    %v2936 = vpop.trf.xlu0
    %v2937 = vpop.trf.xlu0
    %v2938 = vpop.trf.xlu0
    %v2939 = vpop.trf.xlu0
    %v2940 = vpop.trf.xlu0
    %v2941 = vpop.trf.xlu0
    %v2942 = vpop.trf.xlu0
    %v2943 = vpop.trf.xlu0
    %v2944 = vpack.c.bf16 %v2192, %v2192
    %v2945 = vpack.c.bf16 %v2224, %v2224
    %v2946 = vpack.c.bf16 %v2256, %v2256
    %v2947 = vpack.c.bf16 %v2288, %v2288
    %v2948 = vpack.c.bf16 %v2320, %v2320
    %v2949 = vpack.c.bf16 %v2352, %v2352
    %v2950 = vpack.c.bf16 %v2384, %v2384
    %v2951 = vpack.c.bf16 %v2416, %v2416
    %v2952 = vpack.c.bf16 %v2448, %v2448
    %v2953 = vpack.c.bf16 %v2480, %v2480
    %v2954 = vpack.c.bf16 %v2512, %v2512
    %v2955 = vpack.c.bf16 %v2544, %v2544
    %v2956 = vpack.c.bf16 %v2576, %v2576
    %v2957 = vpack.c.bf16 %v2608, %v2608
    %v2958 = vpack.c.bf16 %v2640, %v2640
    %v2959 = vpack.c.bf16 %v2672, %v2672
    %v2960 = vpack.c.bf16 %v2704, %v2704
    %v2961 = vpack.c.bf16 %v2736, %v2736
    %v2962 = vpack.c.bf16 %v2768, %v2768
    %v2963 = vpack.c.bf16 %v2800, %v2800
    %v2964 = vpack.c.bf16 %v2832, %v2832
    %v2965 = vpack.c.bf16 %v2864, %v2864
    %v2966 = vpack.c.bf16 %v2896, %v2896
    %v2967 = vpack.c.bf16 %v2928, %v2928
    %vm2968 = vcmask 64512
    %v2970 = vsel %vm2968, %v1202, 0
    %v2973 = vsel %vm2968, %v2074, 0
    %2975 = vmatpush.bf16.xpose.msra.mxu0 0
    %2976 = vmatpush.bf16.xpose.msra.mxu0 0
    %2977 = vmatpush.bf16.xpose.msra.mxu0 0
    %2978 = vmatpush.bf16.xpose.msra.mxu0 0
    %2979 = vmatpush.bf16.xpose.msra.mxu0 0
    %2980 = vmatpush.bf16.xpose.msra.mxu0 0
    %2981 = vmatpush.bf16.xpose.msra.mxu0 0
    %2982 = vmatpush.bf16.xpose.msra.mxu0 %v2973
    %2983 = vmatmul.bf16.gmra.mxu0 %v2970
    %v2984 = vpop.f32.mrf.mxu0
    %v2985 = vadd.f32 0.0, %v2984
    %v2986 = vpop.f32.mrf.mxu0
    %2987 = vdwg.mxu0
    %v2989 = vsel %vm2968, %v1203, 0
    %v2992 = vsel %vm2968, %v2075, 0
    %2994 = vmatpush.bf16.xpose.msra.mxu0 0
    %2995 = vmatpush.bf16.xpose.msra.mxu0 0
    %2996 = vmatpush.bf16.xpose.msra.mxu0 0
    %2997 = vmatpush.bf16.xpose.msra.mxu0 0
    %2998 = vmatpush.bf16.xpose.msra.mxu0 0
    %2999 = vmatpush.bf16.xpose.msra.mxu0 0
    %3000 = vmatpush.bf16.xpose.msra.mxu0 0
    %3001 = vmatpush.bf16.xpose.msra.mxu0 %v2992
    %3002 = vmatmul.bf16.gmra.mxu0 %v2989
    %v3003 = vpop.f32.mrf.mxu0
    %v3004 = vadd.f32 0.0, %v3003
    %v3005 = vpop.f32.mrf.mxu0
    %3006 = vdwg.mxu0
    %v3008 = vsel %vm2968, %v1204, 0
    %v3011 = vsel %vm2968, %v2076, 0
    %3013 = vmatpush.bf16.xpose.msra.mxu0 0
    %3014 = vmatpush.bf16.xpose.msra.mxu0 0
    %3015 = vmatpush.bf16.xpose.msra.mxu0 0
    %3016 = vmatpush.bf16.xpose.msra.mxu0 0
    %3017 = vmatpush.bf16.xpose.msra.mxu0 0
    %3018 = vmatpush.bf16.xpose.msra.mxu0 0
    %3019 = vmatpush.bf16.xpose.msra.mxu0 0
    %3020 = vmatpush.bf16.xpose.msra.mxu0 %v3011
    %3021 = vmatmul.bf16.gmra.mxu0 %v3008
    %v3022 = vpop.f32.mrf.mxu0
    %v3023 = vadd.f32 0.0, %v3022
    %v3024 = vpop.f32.mrf.mxu0
    %3025 = vdwg.mxu0
    %v3027 = vsel %vm2968, %v1205, 0
    %v3030 = vsel %vm2968, %v2077, 0
    %3032 = vmatpush.bf16.xpose.msra.mxu0 0
    %3033 = vmatpush.bf16.xpose.msra.mxu0 0
    %3034 = vmatpush.bf16.xpose.msra.mxu0 0
    %3035 = vmatpush.bf16.xpose.msra.mxu0 0
    %3036 = vmatpush.bf16.xpose.msra.mxu0 0
    %3037 = vmatpush.bf16.xpose.msra.mxu0 0
    %3038 = vmatpush.bf16.xpose.msra.mxu0 0
    %3039 = vmatpush.bf16.xpose.msra.mxu0 %v3030
    %3040 = vmatmul.bf16.gmra.mxu0 %v3027
    %v3041 = vpop.f32.mrf.mxu0
    %v3042 = vadd.f32 0.0, %v3041
    %v3043 = vpop.f32.mrf.mxu0
    %3044 = vdwg.mxu0
    %v3046 = vsel %vm2968, %v1206, 0
    %v3049 = vsel %vm2968, %v2078, 0
    %3051 = vmatpush.bf16.xpose.msra.mxu0 0
    %3052 = vmatpush.bf16.xpose.msra.mxu0 0
    %3053 = vmatpush.bf16.xpose.msra.mxu0 0
    %3054 = vmatpush.bf16.xpose.msra.mxu0 0
    %3055 = vmatpush.bf16.xpose.msra.mxu0 0
    %3056 = vmatpush.bf16.xpose.msra.mxu0 0
    %3057 = vmatpush.bf16.xpose.msra.mxu0 0
    %3058 = vmatpush.bf16.xpose.msra.mxu0 %v3049
    %3059 = vmatmul.bf16.gmra.mxu0 %v3046
    %v3060 = vpop.f32.mrf.mxu0
    %v3061 = vadd.f32 0.0, %v3060
    %v3062 = vpop.f32.mrf.mxu0
    %3063 = vdwg.mxu0
    %v3065 = vsel %vm2968, %v1207, 0
    %v3068 = vsel %vm2968, %v2079, 0
    %3070 = vmatpush.bf16.xpose.msra.mxu0 0
    %3071 = vmatpush.bf16.xpose.msra.mxu0 0
    %3072 = vmatpush.bf16.xpose.msra.mxu0 0
    %3073 = vmatpush.bf16.xpose.msra.mxu0 0
    %3074 = vmatpush.bf16.xpose.msra.mxu0 0
    %3075 = vmatpush.bf16.xpose.msra.mxu0 0
    %3076 = vmatpush.bf16.xpose.msra.mxu0 0
    %3077 = vmatpush.bf16.xpose.msra.mxu0 %v3068
    %3078 = vmatmul.bf16.gmra.mxu0 %v3065
    %v3079 = vpop.f32.mrf.mxu0
    %v3080 = vadd.f32 0.0, %v3079
    %v3081 = vpop.f32.mrf.mxu0
    %3082 = vdwg.mxu0
    %v3084 = vsel %vm2968, %v1208, 0
    %v3087 = vsel %vm2968, %v2080, 0
    %3089 = vmatpush.bf16.xpose.msra.mxu0 0
    %3090 = vmatpush.bf16.xpose.msra.mxu0 0
    %3091 = vmatpush.bf16.xpose.msra.mxu0 0
    %3092 = vmatpush.bf16.xpose.msra.mxu0 0
    %3093 = vmatpush.bf16.xpose.msra.mxu0 0
    %3094 = vmatpush.bf16.xpose.msra.mxu0 0
    %3095 = vmatpush.bf16.xpose.msra.mxu0 0
    %3096 = vmatpush.bf16.xpose.msra.mxu0 %v3087
    %3097 = vmatmul.bf16.gmra.mxu0 %v3084
    %v3098 = vpop.f32.mrf.mxu0
    %v3099 = vadd.f32 0.0, %v3098
    %v3100 = vpop.f32.mrf.mxu0
    %3101 = vdwg.mxu0
    %v3103 = vsel %vm2968, %v1209, 0
    %v3106 = vsel %vm2968, %v2081, 0
    %3108 = vmatpush.bf16.xpose.msra.mxu0 0
    %3109 = vmatpush.bf16.xpose.msra.mxu0 0
    %3110 = vmatpush.bf16.xpose.msra.mxu0 0
    %3111 = vmatpush.bf16.xpose.msra.mxu0 0
    %3112 = vmatpush.bf16.xpose.msra.mxu0 0
    %3113 = vmatpush.bf16.xpose.msra.mxu0 0
    %3114 = vmatpush.bf16.xpose.msra.mxu0 0
    %3115 = vmatpush.bf16.xpose.msra.mxu0 %v3106
    %3116 = vmatmul.bf16.gmra.mxu0 %v3103
    %v3117 = vpop.f32.mrf.mxu0
    %v3118 = vadd.f32 0.0, %v3117
    %v3119 = vpop.f32.mrf.mxu0
    %3120 = vdwg.mxu0
    %v3122 = vsel %vm2968, %v1210, 0
    %v3125 = vsel %vm2968, %v2082, 0
    %3127 = vmatpush.bf16.xpose.msra.mxu0 0
    %3128 = vmatpush.bf16.xpose.msra.mxu0 0
    %3129 = vmatpush.bf16.xpose.msra.mxu0 0
    %3130 = vmatpush.bf16.xpose.msra.mxu0 0
    %3131 = vmatpush.bf16.xpose.msra.mxu0 0
    %3132 = vmatpush.bf16.xpose.msra.mxu0 0
    %3133 = vmatpush.bf16.xpose.msra.mxu0 0
    %3134 = vmatpush.bf16.xpose.msra.mxu0 %v3125
    %3135 = vmatmul.bf16.gmra.mxu0 %v3122
    %v3136 = vpop.f32.mrf.mxu0
    %v3137 = vadd.f32 0.0, %v3136
    %v3138 = vpop.f32.mrf.mxu0
    %3139 = vdwg.mxu0
    %v3141 = vsel %vm2968, %v1211, 0
    %v3144 = vsel %vm2968, %v2083, 0
    %3146 = vmatpush.bf16.xpose.msra.mxu0 0
    %3147 = vmatpush.bf16.xpose.msra.mxu0 0
    %3148 = vmatpush.bf16.xpose.msra.mxu0 0
    %3149 = vmatpush.bf16.xpose.msra.mxu0 0
    %3150 = vmatpush.bf16.xpose.msra.mxu0 0
    %3151 = vmatpush.bf16.xpose.msra.mxu0 0
    %3152 = vmatpush.bf16.xpose.msra.mxu0 0
    %3153 = vmatpush.bf16.xpose.msra.mxu0 %v3144
    %3154 = vmatmul.bf16.gmra.mxu0 %v3141
    %v3155 = vpop.f32.mrf.mxu0
    %v3156 = vadd.f32 0.0, %v3155
    %v3157 = vpop.f32.mrf.mxu0
    %3158 = vdwg.mxu0
    %v3160 = vsel %vm2968, %v1212, 0
    %v3163 = vsel %vm2968, %v2084, 0
    %3165 = vmatpush.bf16.xpose.msra.mxu0 0
    %3166 = vmatpush.bf16.xpose.msra.mxu0 0
    %3167 = vmatpush.bf16.xpose.msra.mxu0 0
    %3168 = vmatpush.bf16.xpose.msra.mxu0 0
    %3169 = vmatpush.bf16.xpose.msra.mxu0 0
    %3170 = vmatpush.bf16.xpose.msra.mxu0 0
    %3171 = vmatpush.bf16.xpose.msra.mxu0 0
    %3172 = vmatpush.bf16.xpose.msra.mxu0 %v3163
    %3173 = vmatmul.bf16.gmra.mxu0 %v3160
    %v3174 = vpop.f32.mrf.mxu0
    %v3175 = vadd.f32 0.0, %v3174
    %v3176 = vpop.f32.mrf.mxu0
    %3177 = vdwg.mxu0
    %v3179 = vsel %vm2968, %v1213, 0
    %v3182 = vsel %vm2968, %v2085, 0
    %3184 = vmatpush.bf16.xpose.msra.mxu0 0
    %3185 = vmatpush.bf16.xpose.msra.mxu0 0
    %3186 = vmatpush.bf16.xpose.msra.mxu0 0
    %3187 = vmatpush.bf16.xpose.msra.mxu0 0
    %3188 = vmatpush.bf16.xpose.msra.mxu0 0
    %3189 = vmatpush.bf16.xpose.msra.mxu0 0
    %3190 = vmatpush.bf16.xpose.msra.mxu0 0
    %3191 = vmatpush.bf16.xpose.msra.mxu0 %v3182
    %3192 = vmatmul.bf16.gmra.mxu0 %v3179
    %v3193 = vpop.f32.mrf.mxu0
    %v3194 = vadd.f32 0.0, %v3193
    %v3195 = vpop.f32.mrf.mxu0
    %3196 = vdwg.mxu0
    %v3198 = vsel %vm2968, %v1214, 0
    %v3201 = vsel %vm2968, %v2086, 0
    %3203 = vmatpush.bf16.xpose.msra.mxu0 0
    %3204 = vmatpush.bf16.xpose.msra.mxu0 0
    %3205 = vmatpush.bf16.xpose.msra.mxu0 0
    %3206 = vmatpush.bf16.xpose.msra.mxu0 0
    %3207 = vmatpush.bf16.xpose.msra.mxu0 0
    %3208 = vmatpush.bf16.xpose.msra.mxu0 0
    %3209 = vmatpush.bf16.xpose.msra.mxu0 0
    %3210 = vmatpush.bf16.xpose.msra.mxu0 %v3201
    %3211 = vmatmul.bf16.gmra.mxu0 %v3198
    %v3212 = vpop.f32.mrf.mxu0
    %v3213 = vadd.f32 0.0, %v3212
    %v3214 = vpop.f32.mrf.mxu0
    %3215 = vdwg.mxu0
    %v3217 = vsel %vm2968, %v1215, 0
    %v3220 = vsel %vm2968, %v2087, 0
    %3222 = vmatpush.bf16.xpose.msra.mxu0 0
    %3223 = vmatpush.bf16.xpose.msra.mxu0 0
    %3224 = vmatpush.bf16.xpose.msra.mxu0 0
    %3225 = vmatpush.bf16.xpose.msra.mxu0 0
    %3226 = vmatpush.bf16.xpose.msra.mxu0 0
    %3227 = vmatpush.bf16.xpose.msra.mxu0 0
    %3228 = vmatpush.bf16.xpose.msra.mxu0 0
    %3229 = vmatpush.bf16.xpose.msra.mxu0 %v3220
    %3230 = vmatmul.bf16.gmra.mxu0 %v3217
    %v3231 = vpop.f32.mrf.mxu0
    %v3232 = vadd.f32 0.0, %v3231
    %v3233 = vpop.f32.mrf.mxu0
    %3234 = vdwg.mxu0
    %v3236 = vsel %vm2968, %v1216, 0
    %v3239 = vsel %vm2968, %v2088, 0
    %3241 = vmatpush.bf16.xpose.msra.mxu0 0
    %3242 = vmatpush.bf16.xpose.msra.mxu0 0
    %3243 = vmatpush.bf16.xpose.msra.mxu0 0
    %3244 = vmatpush.bf16.xpose.msra.mxu0 0
    %3245 = vmatpush.bf16.xpose.msra.mxu0 0
    %3246 = vmatpush.bf16.xpose.msra.mxu0 0
    %3247 = vmatpush.bf16.xpose.msra.mxu0 0
    %3248 = vmatpush.bf16.xpose.msra.mxu0 %v3239
    %3249 = vmatmul.bf16.gmra.mxu0 %v3236
    %v3250 = vpop.f32.mrf.mxu0
    %v3251 = vadd.f32 0.0, %v3250
    %v3252 = vpop.f32.mrf.mxu0
    %3253 = vdwg.mxu0
    %v3255 = vsel %vm2968, %v1217, 0
    %v3258 = vsel %vm2968, %v2089, 0
    %3260 = vmatpush.bf16.xpose.msra.mxu0 0
    %3261 = vmatpush.bf16.xpose.msra.mxu0 0
    %3262 = vmatpush.bf16.xpose.msra.mxu0 0
    %3263 = vmatpush.bf16.xpose.msra.mxu0 0
    %3264 = vmatpush.bf16.xpose.msra.mxu0 0
    %3265 = vmatpush.bf16.xpose.msra.mxu0 0
    %3266 = vmatpush.bf16.xpose.msra.mxu0 0
    %3267 = vmatpush.bf16.xpose.msra.mxu0 %v3258
    %3268 = vmatmul.bf16.gmra.mxu0 %v3255
    %v3269 = vpop.f32.mrf.mxu0
    %v3270 = vadd.f32 0.0, %v3269
    %v3271 = vpop.f32.mrf.mxu0
    %3272 = vdwg.mxu0
    %v3274 = vsel %vm2968, %v1218, 0
    %v3277 = vsel %vm2968, %v2090, 0
    %3279 = vmatpush.bf16.xpose.msra.mxu0 0
    %3280 = vmatpush.bf16.xpose.msra.mxu0 0
    %3281 = vmatpush.bf16.xpose.msra.mxu0 0
    %3282 = vmatpush.bf16.xpose.msra.mxu0 0
    %3283 = vmatpush.bf16.xpose.msra.mxu0 0
    %3284 = vmatpush.bf16.xpose.msra.mxu0 0
    %3285 = vmatpush.bf16.xpose.msra.mxu0 0
    %3286 = vmatpush.bf16.xpose.msra.mxu0 %v3277
    %3287 = vmatmul.bf16.gmra.mxu0 %v3274
    %v3288 = vpop.f32.mrf.mxu0
    %v3289 = vadd.f32 0.0, %v3288
    %v3290 = vpop.f32.mrf.mxu0
    %3291 = vdwg.mxu0
    %v3293 = vsel %vm2968, %v1219, 0
    %v3296 = vsel %vm2968, %v2091, 0
    %3298 = vmatpush.bf16.xpose.msra.mxu0 0
    %3299 = vmatpush.bf16.xpose.msra.mxu0 0
    %3300 = vmatpush.bf16.xpose.msra.mxu0 0
    %3301 = vmatpush.bf16.xpose.msra.mxu0 0
    %3302 = vmatpush.bf16.xpose.msra.mxu0 0
    %3303 = vmatpush.bf16.xpose.msra.mxu0 0
    %3304 = vmatpush.bf16.xpose.msra.mxu0 0
    %3305 = vmatpush.bf16.xpose.msra.mxu0 %v3296
    %3306 = vmatmul.bf16.gmra.mxu0 %v3293
    %v3307 = vpop.f32.mrf.mxu0
    %v3308 = vadd.f32 0.0, %v3307
    %v3309 = vpop.f32.mrf.mxu0
    %3310 = vdwg.mxu0
    %v3312 = vsel %vm2968, %v1220, 0
    %v3315 = vsel %vm2968, %v2092, 0
    %3317 = vmatpush.bf16.xpose.msra.mxu0 0
    %3318 = vmatpush.bf16.xpose.msra.mxu0 0
    %3319 = vmatpush.bf16.xpose.msra.mxu0 0
    %3320 = vmatpush.bf16.xpose.msra.mxu0 0
    %3321 = vmatpush.bf16.xpose.msra.mxu0 0
    %3322 = vmatpush.bf16.xpose.msra.mxu0 0
    %3323 = vmatpush.bf16.xpose.msra.mxu0 0
    %3324 = vmatpush.bf16.xpose.msra.mxu0 %v3315
    %3325 = vmatmul.bf16.gmra.mxu0 %v3312
    %v3326 = vpop.f32.mrf.mxu0
    %v3327 = vadd.f32 0.0, %v3326
    %v3328 = vpop.f32.mrf.mxu0
    %3329 = vdwg.mxu0
    %v3331 = vsel %vm2968, %v1221, 0
    %v3334 = vsel %vm2968, %v2093, 0
    %3336 = vmatpush.bf16.xpose.msra.mxu0 0
    %3337 = vmatpush.bf16.xpose.msra.mxu0 0
    %3338 = vmatpush.bf16.xpose.msra.mxu0 0
    %3339 = vmatpush.bf16.xpose.msra.mxu0 0
    %3340 = vmatpush.bf16.xpose.msra.mxu0 0
    %3341 = vmatpush.bf16.xpose.msra.mxu0 0
    %3342 = vmatpush.bf16.xpose.msra.mxu0 0
    %3343 = vmatpush.bf16.xpose.msra.mxu0 %v3334
    %3344 = vmatmul.bf16.gmra.mxu0 %v3331
    %v3345 = vpop.f32.mrf.mxu0
    %v3346 = vadd.f32 0.0, %v3345
    %v3347 = vpop.f32.mrf.mxu0
    %3348 = vdwg.mxu0
    %v3350 = vsel %vm2968, %v1222, 0
    %v3353 = vsel %vm2968, %v2094, 0
    %3355 = vmatpush.bf16.xpose.msra.mxu0 0
    %3356 = vmatpush.bf16.xpose.msra.mxu0 0
    %3357 = vmatpush.bf16.xpose.msra.mxu0 0
    %3358 = vmatpush.bf16.xpose.msra.mxu0 0
    %3359 = vmatpush.bf16.xpose.msra.mxu0 0
    %3360 = vmatpush.bf16.xpose.msra.mxu0 0
    %3361 = vmatpush.bf16.xpose.msra.mxu0 0
    %3362 = vmatpush.bf16.xpose.msra.mxu0 %v3353
    %3363 = vmatmul.bf16.gmra.mxu0 %v3350
    %v3364 = vpop.f32.mrf.mxu0
    %v3365 = vadd.f32 0.0, %v3364
    %v3366 = vpop.f32.mrf.mxu0
    %3367 = vdwg.mxu0
    %v3369 = vsel %vm2968, %v1223, 0
    %v3372 = vsel %vm2968, %v2095, 0
    %3374 = vmatpush.bf16.xpose.msra.mxu0 0
    %3375 = vmatpush.bf16.xpose.msra.mxu0 0
    %3376 = vmatpush.bf16.xpose.msra.mxu0 0
    %3377 = vmatpush.bf16.xpose.msra.mxu0 0
    %3378 = vmatpush.bf16.xpose.msra.mxu0 0
    %3379 = vmatpush.bf16.xpose.msra.mxu0 0
    %3380 = vmatpush.bf16.xpose.msra.mxu0 0
    %3381 = vmatpush.bf16.xpose.msra.mxu0 %v3372
    %3382 = vmatmul.bf16.gmra.mxu0 %v3369
    %v3383 = vpop.f32.mrf.mxu0
    %v3384 = vadd.f32 0.0, %v3383
    %v3385 = vpop.f32.mrf.mxu0
    %3386 = vdwg.mxu0
    %v3388 = vsel %vm2968, %v1224, 0
    %v3391 = vsel %vm2968, %v2096, 0
    %3393 = vmatpush.bf16.xpose.msra.mxu0 0
    %3394 = vmatpush.bf16.xpose.msra.mxu0 0
    %3395 = vmatpush.bf16.xpose.msra.mxu0 0
    %3396 = vmatpush.bf16.xpose.msra.mxu0 0
    %3397 = vmatpush.bf16.xpose.msra.mxu0 0
    %3398 = vmatpush.bf16.xpose.msra.mxu0 0
    %3399 = vmatpush.bf16.xpose.msra.mxu0 0
    %3400 = vmatpush.bf16.xpose.msra.mxu0 %v3391
    %3401 = vmatmul.bf16.gmra.mxu0 %v3388
    %v3402 = vpop.f32.mrf.mxu0
    %v3403 = vadd.f32 0.0, %v3402
    %v3404 = vpop.f32.mrf.mxu0
    %3405 = vdwg.mxu0
    %v3407 = vsel %vm2968, %v1225, 0
    %v3410 = vsel %vm2968, %v2097, 0
    %3412 = vmatpush.bf16.xpose.msra.mxu0 0
    %3413 = vmatpush.bf16.xpose.msra.mxu0 0
    %3414 = vmatpush.bf16.xpose.msra.mxu0 0
    %3415 = vmatpush.bf16.xpose.msra.mxu0 0
    %3416 = vmatpush.bf16.xpose.msra.mxu0 0
    %3417 = vmatpush.bf16.xpose.msra.mxu0 0
    %3418 = vmatpush.bf16.xpose.msra.mxu0 0
    %3419 = vmatpush.bf16.xpose.msra.mxu0 %v3410
    %3420 = vmatmul.bf16.gmra.mxu0 %v3407
    %v3421 = vpop.f32.mrf.mxu0
    %v3422 = vadd.f32 0.0, %v3421
    %v3423 = vpop.f32.mrf.mxu0
    %3424 = vdwg.mxu0
    %v3425 = vsel %vm2968, %v2985, -inf
    %3426 = vmax.xlane.f32.xlu0 %v3425
    %v3427 = vpop.xlane.xlu0 %3426
    %v3428 = vsel %vm2968, %v3004, -inf
    %3429 = vmax.xlane.f32.xlu0 %v3428
    %v3430 = vpop.xlane.xlu0 %3429
    %v3431 = vsel %vm2968, %v3023, -inf
    %3432 = vmax.xlane.f32.xlu0 %v3431
    %v3433 = vpop.xlane.xlu0 %3432
    %v3434 = vsel %vm2968, %v3042, -inf
    %3435 = vmax.xlane.f32.xlu0 %v3434
    %v3436 = vpop.xlane.xlu0 %3435
    %v3437 = vsel %vm2968, %v3061, -inf
    %3438 = vmax.xlane.f32.xlu0 %v3437
    %v3439 = vpop.xlane.xlu0 %3438
    %v3440 = vsel %vm2968, %v3080, -inf
    %3441 = vmax.xlane.f32.xlu0 %v3440
    %v3442 = vpop.xlane.xlu0 %3441
    %v3443 = vsel %vm2968, %v3099, -inf
    %3444 = vmax.xlane.f32.xlu0 %v3443
    %v3445 = vpop.xlane.xlu0 %3444
    %v3446 = vsel %vm2968, %v3118, -inf
    %3447 = vmax.xlane.f32.xlu0 %v3446
    %v3448 = vpop.xlane.xlu0 %3447
    %v3449 = vsel %vm2968, %v3137, -inf
    %3450 = vmax.xlane.f32.xlu0 %v3449
    %v3451 = vpop.xlane.xlu0 %3450
    %v3452 = vsel %vm2968, %v3156, -inf
    %3453 = vmax.xlane.f32.xlu0 %v3452
    %v3454 = vpop.xlane.xlu0 %3453
    %v3455 = vsel %vm2968, %v3175, -inf
    %3456 = vmax.xlane.f32.xlu0 %v3455
    %v3457 = vpop.xlane.xlu0 %3456
    %v3458 = vsel %vm2968, %v3194, -inf
    %3459 = vmax.xlane.f32.xlu0 %v3458
    %v3460 = vpop.xlane.xlu0 %3459
    %v3461 = vsel %vm2968, %v3213, -inf
    %3462 = vmax.xlane.f32.xlu0 %v3461
    %v3463 = vpop.xlane.xlu0 %3462
    %v3464 = vsel %vm2968, %v3232, -inf
    %3465 = vmax.xlane.f32.xlu0 %v3464
    %v3466 = vpop.xlane.xlu0 %3465
    %v3467 = vsel %vm2968, %v3251, -inf
    %3468 = vmax.xlane.f32.xlu0 %v3467
    %v3469 = vpop.xlane.xlu0 %3468
    %v3470 = vsel %vm2968, %v3270, -inf
    %3471 = vmax.xlane.f32.xlu0 %v3470
    %v3472 = vpop.xlane.xlu0 %3471
    %v3473 = vsel %vm2968, %v3289, -inf
    %3474 = vmax.xlane.f32.xlu0 %v3473
    %v3475 = vpop.xlane.xlu0 %3474
    %v3476 = vsel %vm2968, %v3308, -inf
    %3477 = vmax.xlane.f32.xlu0 %v3476
    %v3478 = vpop.xlane.xlu0 %3477
    %v3479 = vsel %vm2968, %v3327, -inf
    %3480 = vmax.xlane.f32.xlu0 %v3479
    %v3481 = vpop.xlane.xlu0 %3480
    %v3482 = vsel %vm2968, %v3346, -inf
    %3483 = vmax.xlane.f32.xlu0 %v3482
    %v3484 = vpop.xlane.xlu0 %3483
    %v3485 = vsel %vm2968, %v3365, -inf
    %3486 = vmax.xlane.f32.xlu0 %v3485
    %v3487 = vpop.xlane.xlu0 %3486
    %v3488 = vsel %vm2968, %v3384, -inf
    %3489 = vmax.xlane.f32.xlu0 %v3488
    %v3490 = vpop.xlane.xlu0 %3489
    %v3491 = vsel %vm2968, %v3403, -inf
    %3492 = vmax.xlane.f32.xlu0 %v3491
    %v3493 = vpop.xlane.xlu0 %3492
    %v3494 = vsel %vm2968, %v3422, -inf
    %3495 = vmax.xlane.f32.xlu0 %v3494
    %v3496 = vpop.xlane.xlu0 %3495
    %v3497 = vsub.f32 %v2985, %v3427
    %v3498 = vsub.f32 %v3004, %v3430
    %v3499 = vsub.f32 %v3023, %v3433
    %v3500 = vsub.f32 %v3042, %v3436
    %v3501 = vsub.f32 %v3061, %v3439
    %v3502 = vsub.f32 %v3080, %v3442
    %v3503 = vsub.f32 %v3099, %v3445
    %v3504 = vsub.f32 %v3118, %v3448
    %v3505 = vsub.f32 %v3137, %v3451
    %v3506 = vsub.f32 %v3156, %v3454
    %v3507 = vsub.f32 %v3175, %v3457
    %v3508 = vsub.f32 %v3194, %v3460
    %v3509 = vsub.f32 %v3213, %v3463
    %v3510 = vsub.f32 %v3232, %v3466
    %v3511 = vsub.f32 %v3251, %v3469
    %v3512 = vsub.f32 %v3270, %v3472
    %v3513 = vsub.f32 %v3289, %v3475
    %v3514 = vsub.f32 %v3308, %v3478
    %v3515 = vsub.f32 %v3327, %v3481
    %v3516 = vsub.f32 %v3346, %v3484
    %v3517 = vsub.f32 %v3365, %v3487
    %v3518 = vsub.f32 %v3384, %v3490
    %v3519 = vsub.f32 %v3403, %v3493
    %v3520 = vsub.f32 %v3422, %v3496
    %v3521 = vmul.f32 %v3497, 1.442695
    %v3522 = vpow.pop %v3521
    %v3523 = vmul.f32 %v3498, 1.442695
    %v3524 = vpow.pop %v3523
    %v3525 = vmul.f32 %v3499, 1.442695
    %v3526 = vpow.pop %v3525
    %v3527 = vmul.f32 %v3500, 1.442695
    %v3528 = vpow.pop %v3527
    %v3529 = vmul.f32 %v3501, 1.442695
    %v3530 = vpow.pop %v3529
    %v3531 = vmul.f32 %v3502, 1.442695
    %v3532 = vpow.pop %v3531
    %v3533 = vmul.f32 %v3503, 1.442695
    %v3534 = vpow.pop %v3533
    %v3535 = vmul.f32 %v3504, 1.442695
    %v3536 = vpow.pop %v3535
    %v3537 = vmul.f32 %v3505, 1.442695
    %v3538 = vpow.pop %v3537
    %v3539 = vmul.f32 %v3506, 1.442695
    %v3540 = vpow.pop %v3539
    %v3541 = vmul.f32 %v3507, 1.442695
    %v3542 = vpow.pop %v3541
    %v3543 = vmul.f32 %v3508, 1.442695
    %v3544 = vpow.pop %v3543
    %v3545 = vmul.f32 %v3509, 1.442695
    %v3546 = vpow.pop %v3545
    %v3547 = vmul.f32 %v3510, 1.442695
    %v3548 = vpow.pop %v3547
    %v3549 = vmul.f32 %v3511, 1.442695
    %v3550 = vpow.pop %v3549
    %v3551 = vmul.f32 %v3512, 1.442695
    %v3552 = vpow.pop %v3551
    %v3553 = vmul.f32 %v3513, 1.442695
    %v3554 = vpow.pop %v3553
    %v3555 = vmul.f32 %v3514, 1.442695
    %v3556 = vpow.pop %v3555
    %v3557 = vmul.f32 %v3515, 1.442695
    %v3558 = vpow.pop %v3557
    %v3559 = vmul.f32 %v3516, 1.442695
    %v3560 = vpow.pop %v3559
    %v3561 = vmul.f32 %v3517, 1.442695
    %v3562 = vpow.pop %v3561
    %v3563 = vmul.f32 %v3518, 1.442695
    %v3564 = vpow.pop %v3563
    %v3565 = vmul.f32 %v3519, 1.442695
    %v3566 = vpow.pop %v3565
    %v3567 = vmul.f32 %v3520, 1.442695
    %v3568 = vpow.pop %v3567
    %v3569 = vsel %vm2968, %v3522, 0.0
    %3570 = vadd.xlane.f32.xlu0 %v3569
    %v3571 = vpop.xlane.xlu0 %3570
    %v3572 = vsel %vm2968, %v3524, 0.0
    %3573 = vadd.xlane.f32.xlu0 %v3572
    %v3574 = vpop.xlane.xlu0 %3573
    %v3575 = vsel %vm2968, %v3526, 0.0
    %3576 = vadd.xlane.f32.xlu0 %v3575
    %v3577 = vpop.xlane.xlu0 %3576
    %v3578 = vsel %vm2968, %v3528, 0.0
    %3579 = vadd.xlane.f32.xlu0 %v3578
    %v3580 = vpop.xlane.xlu0 %3579
    %v3581 = vsel %vm2968, %v3530, 0.0
    %3582 = vadd.xlane.f32.xlu0 %v3581
    %v3583 = vpop.xlane.xlu0 %3582
    %v3584 = vsel %vm2968, %v3532, 0.0
    %3585 = vadd.xlane.f32.xlu0 %v3584
    %v3586 = vpop.xlane.xlu0 %3585
    %v3587 = vsel %vm2968, %v3534, 0.0
    %3588 = vadd.xlane.f32.xlu0 %v3587
    %v3589 = vpop.xlane.xlu0 %3588
    %v3590 = vsel %vm2968, %v3536, 0.0
    %3591 = vadd.xlane.f32.xlu0 %v3590
    %v3592 = vpop.xlane.xlu0 %3591
    %v3593 = vsel %vm2968, %v3538, 0.0
    %3594 = vadd.xlane.f32.xlu0 %v3593
    %v3595 = vpop.xlane.xlu0 %3594
    %v3596 = vsel %vm2968, %v3540, 0.0
    %3597 = vadd.xlane.f32.xlu0 %v3596
    %v3598 = vpop.xlane.xlu0 %3597
    %v3599 = vsel %vm2968, %v3542, 0.0
    %3600 = vadd.xlane.f32.xlu0 %v3599
    %v3601 = vpop.xlane.xlu0 %3600
    %v3602 = vsel %vm2968, %v3544, 0.0
    %3603 = vadd.xlane.f32.xlu0 %v3602
    %v3604 = vpop.xlane.xlu0 %3603
    %v3605 = vsel %vm2968, %v3546, 0.0
    %3606 = vadd.xlane.f32.xlu0 %v3605
    %v3607 = vpop.xlane.xlu0 %3606
    %v3608 = vsel %vm2968, %v3548, 0.0
    %3609 = vadd.xlane.f32.xlu0 %v3608
    %v3610 = vpop.xlane.xlu0 %3609
    %v3611 = vsel %vm2968, %v3550, 0.0
    %3612 = vadd.xlane.f32.xlu0 %v3611
    %v3613 = vpop.xlane.xlu0 %3612
    %v3614 = vsel %vm2968, %v3552, 0.0
    %3615 = vadd.xlane.f32.xlu0 %v3614
    %v3616 = vpop.xlane.xlu0 %3615
    %v3617 = vsel %vm2968, %v3554, 0.0
    %3618 = vadd.xlane.f32.xlu0 %v3617
    %v3619 = vpop.xlane.xlu0 %3618
    %v3620 = vsel %vm2968, %v3556, 0.0
    %3621 = vadd.xlane.f32.xlu0 %v3620
    %v3622 = vpop.xlane.xlu0 %3621
    %v3623 = vsel %vm2968, %v3558, 0.0
    %3624 = vadd.xlane.f32.xlu0 %v3623
    %v3625 = vpop.xlane.xlu0 %3624
    %v3626 = vsel %vm2968, %v3560, 0.0
    %3627 = vadd.xlane.f32.xlu0 %v3626
    %v3628 = vpop.xlane.xlu0 %3627
    %v3629 = vsel %vm2968, %v3562, 0.0
    %3630 = vadd.xlane.f32.xlu0 %v3629
    %v3631 = vpop.xlane.xlu0 %3630
    %v3632 = vsel %vm2968, %v3564, 0.0
    %3633 = vadd.xlane.f32.xlu0 %v3632
    %v3634 = vpop.xlane.xlu0 %3633
    %v3635 = vsel %vm2968, %v3566, 0.0
    %3636 = vadd.xlane.f32.xlu0 %v3635
    %v3637 = vpop.xlane.xlu0 %3636
    %v3638 = vsel %vm2968, %v3568, 0.0
    %3639 = vadd.xlane.f32.xlu0 %v3638
    %v3640 = vpop.xlane.xlu0 %3639
    %v3641 = vrcp.pop %v3571
    %v3642 = vrcp.pop %v3574
    %v3643 = vrcp.pop %v3577
    %v3644 = vrcp.pop %v3580
    %v3645 = vrcp.pop %v3583
    %v3646 = vrcp.pop %v3586
    %v3647 = vrcp.pop %v3589
    %v3648 = vrcp.pop %v3592
    %v3649 = vrcp.pop %v3595
    %v3650 = vrcp.pop %v3598
    %v3651 = vrcp.pop %v3601
    %v3652 = vrcp.pop %v3604
    %v3653 = vrcp.pop %v3607
    %v3654 = vrcp.pop %v3610
    %v3655 = vrcp.pop %v3613
    %v3656 = vrcp.pop %v3616
    %v3657 = vrcp.pop %v3619
    %v3658 = vrcp.pop %v3622
    %v3659 = vrcp.pop %v3625
    %v3660 = vrcp.pop %v3628
    %v3661 = vrcp.pop %v3631
    %v3662 = vrcp.pop %v3634
    %v3663 = vrcp.pop %v3637
    %v3664 = vrcp.pop %v3640
    %v3665 = vmul.f32 %v3522, %v3641
    %v3666 = vmul.f32 %v3524, %v3642
    %v3667 = vmul.f32 %v3526, %v3643
    %v3668 = vmul.f32 %v3528, %v3644
    %v3669 = vmul.f32 %v3530, %v3645
    %v3670 = vmul.f32 %v3532, %v3646
    %v3671 = vmul.f32 %v3534, %v3647
    %v3672 = vmul.f32 %v3536, %v3648
    %v3673 = vmul.f32 %v3538, %v3649
    %v3674 = vmul.f32 %v3540, %v3650
    %v3675 = vmul.f32 %v3542, %v3651
    %v3676 = vmul.f32 %v3544, %v3652
    %v3677 = vmul.f32 %v3546, %v3653
    %v3678 = vmul.f32 %v3548, %v3654
    %v3679 = vmul.f32 %v3550, %v3655
    %v3680 = vmul.f32 %v3552, %v3656
    %v3681 = vmul.f32 %v3554, %v3657
    %v3682 = vmul.f32 %v3556, %v3658
    %v3683 = vmul.f32 %v3558, %v3659
    %v3684 = vmul.f32 %v3560, %v3660
    %v3685 = vmul.f32 %v3562, %v3661
    %v3686 = vmul.f32 %v3564, %v3662
    %v3687 = vmul.f32 %v3566, %v3663
    %v3688 = vmul.f32 %v3568, %v3664
    %v3689 = vpack.c.bf16 %v3665, %v3665
    %v3690 = vpack.c.bf16 %v3666, %v3666
    %v3691 = vpack.c.bf16 %v3667, %v3667
    %v3692 = vpack.c.bf16 %v3668, %v3668
    %v3693 = vpack.c.bf16 %v3669, %v3669
    %v3694 = vpack.c.bf16 %v3670, %v3670
    %v3695 = vpack.c.bf16 %v3671, %v3671
    %v3696 = vpack.c.bf16 %v3672, %v3672
    %v3697 = vpack.c.bf16 %v3673, %v3673
    %v3698 = vpack.c.bf16 %v3674, %v3674
    %v3699 = vpack.c.bf16 %v3675, %v3675
    %v3700 = vpack.c.bf16 %v3676, %v3676
    %v3701 = vpack.c.bf16 %v3677, %v3677
    %v3702 = vpack.c.bf16 %v3678, %v3678
    %v3703 = vpack.c.bf16 %v3679, %v3679
    %v3704 = vpack.c.bf16 %v3680, %v3680
    %v3705 = vpack.c.bf16 %v3681, %v3681
    %v3706 = vpack.c.bf16 %v3682, %v3682
    %v3707 = vpack.c.bf16 %v3683, %v3683
    %v3708 = vpack.c.bf16 %v3684, %v3684
    %v3709 = vpack.c.bf16 %v3685, %v3685
    %v3710 = vpack.c.bf16 %v3686, %v3686
    %v3711 = vpack.c.bf16 %v3687, %v3687
    %v3712 = vpack.c.bf16 %v3688, %v3688
    %v3714 = vsel %vm2968, %v3689, 0
    %vm3716 = vcmask 1043456
    %v3718 = vsel %vm3716, %v2944, 0
    %3720 = vmatpush.bf16.msra.mxu0 0
    %3721 = vmatpush.bf16.msra.mxu0 0
    %3722 = vmatpush.bf16.msra.mxu0 0
    %3723 = vmatpush.bf16.msra.mxu0 0
    %3724 = vmatpush.bf16.msra.mxu0 0
    %3725 = vmatpush.bf16.msra.mxu0 0
    %3726 = vmatpush.bf16.msra.mxu0 0
    %3727 = vmatpush.bf16.msra.mxu0 %v3718
    %3728 = vmatmul.bf16.gmra.mxu0 %v3714
    %v3729 = vpop.f32.mrf.mxu0
    %v3730 = vadd.f32 0.0, %v3729
    %v3731 = vpop.f32.mrf.mxu0
    %3732 = vdwg.mxu0
    %v3734 = vsel %vm2968, %v3690, 0
    %v3737 = vsel %vm3716, %v2945, 0
    %3739 = vmatpush.bf16.msra.mxu0 0
    %3740 = vmatpush.bf16.msra.mxu0 0
    %3741 = vmatpush.bf16.msra.mxu0 0
    %3742 = vmatpush.bf16.msra.mxu0 0
    %3743 = vmatpush.bf16.msra.mxu0 0
    %3744 = vmatpush.bf16.msra.mxu0 0
    %3745 = vmatpush.bf16.msra.mxu0 0
    %3746 = vmatpush.bf16.msra.mxu0 %v3737
    %3747 = vmatmul.bf16.gmra.mxu0 %v3734
    %v3748 = vpop.f32.mrf.mxu0
    %v3749 = vadd.f32 0.0, %v3748
    %v3750 = vpop.f32.mrf.mxu0
    %3751 = vdwg.mxu0
    %v3753 = vsel %vm2968, %v3691, 0
    %v3756 = vsel %vm3716, %v2946, 0
    %3758 = vmatpush.bf16.msra.mxu0 0
    %3759 = vmatpush.bf16.msra.mxu0 0
    %3760 = vmatpush.bf16.msra.mxu0 0
    %3761 = vmatpush.bf16.msra.mxu0 0
    %3762 = vmatpush.bf16.msra.mxu0 0
    %3763 = vmatpush.bf16.msra.mxu0 0
    %3764 = vmatpush.bf16.msra.mxu0 0
    %3765 = vmatpush.bf16.msra.mxu0 %v3756
    %3766 = vmatmul.bf16.gmra.mxu0 %v3753
    %v3767 = vpop.f32.mrf.mxu0
    %v3768 = vadd.f32 0.0, %v3767
    %v3769 = vpop.f32.mrf.mxu0
    %3770 = vdwg.mxu0
    %v3772 = vsel %vm2968, %v3692, 0
    %v3775 = vsel %vm3716, %v2947, 0
    %3777 = vmatpush.bf16.msra.mxu0 0
    %3778 = vmatpush.bf16.msra.mxu0 0
    %3779 = vmatpush.bf16.msra.mxu0 0
    %3780 = vmatpush.bf16.msra.mxu0 0
    %3781 = vmatpush.bf16.msra.mxu0 0
    %3782 = vmatpush.bf16.msra.mxu0 0
    %3783 = vmatpush.bf16.msra.mxu0 0
    %3784 = vmatpush.bf16.msra.mxu0 %v3775
    %3785 = vmatmul.bf16.gmra.mxu0 %v3772
    %v3786 = vpop.f32.mrf.mxu0
    %v3787 = vadd.f32 0.0, %v3786
    %v3788 = vpop.f32.mrf.mxu0
    %3789 = vdwg.mxu0
    %v3791 = vsel %vm2968, %v3693, 0
    %v3794 = vsel %vm3716, %v2948, 0
    %3796 = vmatpush.bf16.msra.mxu0 0
    %3797 = vmatpush.bf16.msra.mxu0 0
    %3798 = vmatpush.bf16.msra.mxu0 0
    %3799 = vmatpush.bf16.msra.mxu0 0
    %3800 = vmatpush.bf16.msra.mxu0 0
    %3801 = vmatpush.bf16.msra.mxu0 0
    %3802 = vmatpush.bf16.msra.mxu0 0
    %3803 = vmatpush.bf16.msra.mxu0 %v3794
    %3804 = vmatmul.bf16.gmra.mxu0 %v3791
    %v3805 = vpop.f32.mrf.mxu0
    %v3806 = vadd.f32 0.0, %v3805
    %v3807 = vpop.f32.mrf.mxu0
    %3808 = vdwg.mxu0
    %v3810 = vsel %vm2968, %v3694, 0
    %v3813 = vsel %vm3716, %v2949, 0
    %3815 = vmatpush.bf16.msra.mxu0 0
    %3816 = vmatpush.bf16.msra.mxu0 0
    %3817 = vmatpush.bf16.msra.mxu0 0
    %3818 = vmatpush.bf16.msra.mxu0 0
    %3819 = vmatpush.bf16.msra.mxu0 0
    %3820 = vmatpush.bf16.msra.mxu0 0
    %3821 = vmatpush.bf16.msra.mxu0 0
    %3822 = vmatpush.bf16.msra.mxu0 %v3813
    %3823 = vmatmul.bf16.gmra.mxu0 %v3810
    %v3824 = vpop.f32.mrf.mxu0
    %v3825 = vadd.f32 0.0, %v3824
    %v3826 = vpop.f32.mrf.mxu0
    %3827 = vdwg.mxu0
    %v3829 = vsel %vm2968, %v3695, 0
    %v3832 = vsel %vm3716, %v2950, 0
    %3834 = vmatpush.bf16.msra.mxu0 0
    %3835 = vmatpush.bf16.msra.mxu0 0
    %3836 = vmatpush.bf16.msra.mxu0 0
    %3837 = vmatpush.bf16.msra.mxu0 0
    %3838 = vmatpush.bf16.msra.mxu0 0
    %3839 = vmatpush.bf16.msra.mxu0 0
    %3840 = vmatpush.bf16.msra.mxu0 0
    %3841 = vmatpush.bf16.msra.mxu0 %v3832
    %3842 = vmatmul.bf16.gmra.mxu0 %v3829
    %v3843 = vpop.f32.mrf.mxu0
    %v3844 = vadd.f32 0.0, %v3843
    %v3845 = vpop.f32.mrf.mxu0
    %3846 = vdwg.mxu0
    %v3848 = vsel %vm2968, %v3696, 0
    %v3851 = vsel %vm3716, %v2951, 0
    %3853 = vmatpush.bf16.msra.mxu0 0
    %3854 = vmatpush.bf16.msra.mxu0 0
    %3855 = vmatpush.bf16.msra.mxu0 0
    %3856 = vmatpush.bf16.msra.mxu0 0
    %3857 = vmatpush.bf16.msra.mxu0 0
    %3858 = vmatpush.bf16.msra.mxu0 0
    %3859 = vmatpush.bf16.msra.mxu0 0
    %3860 = vmatpush.bf16.msra.mxu0 %v3851
    %3861 = vmatmul.bf16.gmra.mxu0 %v3848
    %v3862 = vpop.f32.mrf.mxu0
    %v3863 = vadd.f32 0.0, %v3862
    %v3864 = vpop.f32.mrf.mxu0
    %3865 = vdwg.mxu0
    %v3867 = vsel %vm2968, %v3697, 0
    %v3870 = vsel %vm3716, %v2952, 0
    %3872 = vmatpush.bf16.msra.mxu0 0
    %3873 = vmatpush.bf16.msra.mxu0 0
    %3874 = vmatpush.bf16.msra.mxu0 0
    %3875 = vmatpush.bf16.msra.mxu0 0
    %3876 = vmatpush.bf16.msra.mxu0 0
    %3877 = vmatpush.bf16.msra.mxu0 0
    %3878 = vmatpush.bf16.msra.mxu0 0
    %3879 = vmatpush.bf16.msra.mxu0 %v3870
    %3880 = vmatmul.bf16.gmra.mxu0 %v3867
    %v3881 = vpop.f32.mrf.mxu0
    %v3882 = vadd.f32 0.0, %v3881
    %v3883 = vpop.f32.mrf.mxu0
    %3884 = vdwg.mxu0
    %v3886 = vsel %vm2968, %v3698, 0
    %v3889 = vsel %vm3716, %v2953, 0
    %3891 = vmatpush.bf16.msra.mxu0 0
    %3892 = vmatpush.bf16.msra.mxu0 0
    %3893 = vmatpush.bf16.msra.mxu0 0
    %3894 = vmatpush.bf16.msra.mxu0 0
    %3895 = vmatpush.bf16.msra.mxu0 0
    %3896 = vmatpush.bf16.msra.mxu0 0
    %3897 = vmatpush.bf16.msra.mxu0 0
    %3898 = vmatpush.bf16.msra.mxu0 %v3889
    %3899 = vmatmul.bf16.gmra.mxu0 %v3886
    %v3900 = vpop.f32.mrf.mxu0
    %v3901 = vadd.f32 0.0, %v3900
    %v3902 = vpop.f32.mrf.mxu0
    %3903 = vdwg.mxu0
    %v3905 = vsel %vm2968, %v3699, 0
    %v3908 = vsel %vm3716, %v2954, 0
    %3910 = vmatpush.bf16.msra.mxu0 0
    %3911 = vmatpush.bf16.msra.mxu0 0
    %3912 = vmatpush.bf16.msra.mxu0 0
    %3913 = vmatpush.bf16.msra.mxu0 0
    %3914 = vmatpush.bf16.msra.mxu0 0
    %3915 = vmatpush.bf16.msra.mxu0 0
    %3916 = vmatpush.bf16.msra.mxu0 0
    %3917 = vmatpush.bf16.msra.mxu0 %v3908
    %3918 = vmatmul.bf16.gmra.mxu0 %v3905
    %v3919 = vpop.f32.mrf.mxu0
    %v3920 = vadd.f32 0.0, %v3919
    %v3921 = vpop.f32.mrf.mxu0
    %3922 = vdwg.mxu0
    %v3924 = vsel %vm2968, %v3700, 0
    %v3927 = vsel %vm3716, %v2955, 0
    %3929 = vmatpush.bf16.msra.mxu0 0
    %3930 = vmatpush.bf16.msra.mxu0 0
    %3931 = vmatpush.bf16.msra.mxu0 0
    %3932 = vmatpush.bf16.msra.mxu0 0
    %3933 = vmatpush.bf16.msra.mxu0 0
    %3934 = vmatpush.bf16.msra.mxu0 0
    %3935 = vmatpush.bf16.msra.mxu0 0
    %3936 = vmatpush.bf16.msra.mxu0 %v3927
    %3937 = vmatmul.bf16.gmra.mxu0 %v3924
    %v3938 = vpop.f32.mrf.mxu0
    %v3939 = vadd.f32 0.0, %v3938
    %v3940 = vpop.f32.mrf.mxu0
    %3941 = vdwg.mxu0
    %v3943 = vsel %vm2968, %v3701, 0
    %v3946 = vsel %vm3716, %v2956, 0
    %3948 = vmatpush.bf16.msra.mxu0 0
    %3949 = vmatpush.bf16.msra.mxu0 0
    %3950 = vmatpush.bf16.msra.mxu0 0
    %3951 = vmatpush.bf16.msra.mxu0 0
    %3952 = vmatpush.bf16.msra.mxu0 0
    %3953 = vmatpush.bf16.msra.mxu0 0
    %3954 = vmatpush.bf16.msra.mxu0 0
    %3955 = vmatpush.bf16.msra.mxu0 %v3946
    %3956 = vmatmul.bf16.gmra.mxu0 %v3943
    %v3957 = vpop.f32.mrf.mxu0
    %v3958 = vadd.f32 0.0, %v3957
    %v3959 = vpop.f32.mrf.mxu0
    %3960 = vdwg.mxu0
    %v3962 = vsel %vm2968, %v3702, 0
    %v3965 = vsel %vm3716, %v2957, 0
    %3967 = vmatpush.bf16.msra.mxu0 0
    %3968 = vmatpush.bf16.msra.mxu0 0
    %3969 = vmatpush.bf16.msra.mxu0 0
    %3970 = vmatpush.bf16.msra.mxu0 0
    %3971 = vmatpush.bf16.msra.mxu0 0
    %3972 = vmatpush.bf16.msra.mxu0 0
    %3973 = vmatpush.bf16.msra.mxu0 0
    %3974 = vmatpush.bf16.msra.mxu0 %v3965
    %3975 = vmatmul.bf16.gmra.mxu0 %v3962
    %v3976 = vpop.f32.mrf.mxu0
    %v3977 = vadd.f32 0.0, %v3976
    %v3978 = vpop.f32.mrf.mxu0
    %3979 = vdwg.mxu0
    %v3981 = vsel %vm2968, %v3703, 0
    %v3984 = vsel %vm3716, %v2958, 0
    %3986 = vmatpush.bf16.msra.mxu0 0
    %3987 = vmatpush.bf16.msra.mxu0 0
    %3988 = vmatpush.bf16.msra.mxu0 0
    %3989 = vmatpush.bf16.msra.mxu0 0
    %3990 = vmatpush.bf16.msra.mxu0 0
    %3991 = vmatpush.bf16.msra.mxu0 0
    %3992 = vmatpush.bf16.msra.mxu0 0
    %3993 = vmatpush.bf16.msra.mxu0 %v3984
    %3994 = vmatmul.bf16.gmra.mxu0 %v3981
    %v3995 = vpop.f32.mrf.mxu0
    %v3996 = vadd.f32 0.0, %v3995
    %v3997 = vpop.f32.mrf.mxu0
    %3998 = vdwg.mxu0
    %v4000 = vsel %vm2968, %v3704, 0
    %v4003 = vsel %vm3716, %v2959, 0
    %4005 = vmatpush.bf16.msra.mxu0 0
    %4006 = vmatpush.bf16.msra.mxu0 0
    %4007 = vmatpush.bf16.msra.mxu0 0
    %4008 = vmatpush.bf16.msra.mxu0 0
    %4009 = vmatpush.bf16.msra.mxu0 0
    %4010 = vmatpush.bf16.msra.mxu0 0
    %4011 = vmatpush.bf16.msra.mxu0 0
    %4012 = vmatpush.bf16.msra.mxu0 %v4003
    %4013 = vmatmul.bf16.gmra.mxu0 %v4000
    %v4014 = vpop.f32.mrf.mxu0
    %v4015 = vadd.f32 0.0, %v4014
    %v4016 = vpop.f32.mrf.mxu0
    %4017 = vdwg.mxu0
    %v4019 = vsel %vm2968, %v3705, 0
    %v4022 = vsel %vm3716, %v2960, 0
    %4024 = vmatpush.bf16.msra.mxu0 0
    %4025 = vmatpush.bf16.msra.mxu0 0
    %4026 = vmatpush.bf16.msra.mxu0 0
    %4027 = vmatpush.bf16.msra.mxu0 0
    %4028 = vmatpush.bf16.msra.mxu0 0
    %4029 = vmatpush.bf16.msra.mxu0 0
    %4030 = vmatpush.bf16.msra.mxu0 0
    %4031 = vmatpush.bf16.msra.mxu0 %v4022
    %4032 = vmatmul.bf16.gmra.mxu0 %v4019
    %v4033 = vpop.f32.mrf.mxu0
    %v4034 = vadd.f32 0.0, %v4033
    %v4035 = vpop.f32.mrf.mxu0
    %4036 = vdwg.mxu0
    %v4038 = vsel %vm2968, %v3706, 0
    %v4041 = vsel %vm3716, %v2961, 0
    %4043 = vmatpush.bf16.msra.mxu0 0
    %4044 = vmatpush.bf16.msra.mxu0 0
    %4045 = vmatpush.bf16.msra.mxu0 0
    %4046 = vmatpush.bf16.msra.mxu0 0
    %4047 = vmatpush.bf16.msra.mxu0 0
    %4048 = vmatpush.bf16.msra.mxu0 0
    %4049 = vmatpush.bf16.msra.mxu0 0
    %4050 = vmatpush.bf16.msra.mxu0 %v4041
    %4051 = vmatmul.bf16.gmra.mxu0 %v4038
    %v4052 = vpop.f32.mrf.mxu0
    %v4053 = vadd.f32 0.0, %v4052
    %v4054 = vpop.f32.mrf.mxu0
    %4055 = vdwg.mxu0
    %v4057 = vsel %vm2968, %v3707, 0
    %v4060 = vsel %vm3716, %v2962, 0
    %4062 = vmatpush.bf16.msra.mxu0 0
    %4063 = vmatpush.bf16.msra.mxu0 0
    %4064 = vmatpush.bf16.msra.mxu0 0
    %4065 = vmatpush.bf16.msra.mxu0 0
    %4066 = vmatpush.bf16.msra.mxu0 0
    %4067 = vmatpush.bf16.msra.mxu0 0
    %4068 = vmatpush.bf16.msra.mxu0 0
    %4069 = vmatpush.bf16.msra.mxu0 %v4060
    %4070 = vmatmul.bf16.gmra.mxu0 %v4057
    %v4071 = vpop.f32.mrf.mxu0
    %v4072 = vadd.f32 0.0, %v4071
    %v4073 = vpop.f32.mrf.mxu0
    %4074 = vdwg.mxu0
    %v4076 = vsel %vm2968, %v3708, 0
    %v4079 = vsel %vm3716, %v2963, 0
    %4081 = vmatpush.bf16.msra.mxu0 0
    %4082 = vmatpush.bf16.msra.mxu0 0
    %4083 = vmatpush.bf16.msra.mxu0 0
    %4084 = vmatpush.bf16.msra.mxu0 0
    %4085 = vmatpush.bf16.msra.mxu0 0
    %4086 = vmatpush.bf16.msra.mxu0 0
    %4087 = vmatpush.bf16.msra.mxu0 0
    %4088 = vmatpush.bf16.msra.mxu0 %v4079
    %4089 = vmatmul.bf16.gmra.mxu0 %v4076
    %v4090 = vpop.f32.mrf.mxu0
    %v4091 = vadd.f32 0.0, %v4090
    %v4092 = vpop.f32.mrf.mxu0
    %4093 = vdwg.mxu0
    %v4095 = vsel %vm2968, %v3709, 0
    %v4098 = vsel %vm3716, %v2964, 0
    %4100 = vmatpush.bf16.msra.mxu0 0
    %4101 = vmatpush.bf16.msra.mxu0 0
    %4102 = vmatpush.bf16.msra.mxu0 0
    %4103 = vmatpush.bf16.msra.mxu0 0
    %4104 = vmatpush.bf16.msra.mxu0 0
    %4105 = vmatpush.bf16.msra.mxu0 0
    %4106 = vmatpush.bf16.msra.mxu0 0
    %4107 = vmatpush.bf16.msra.mxu0 %v4098
    %4108 = vmatmul.bf16.gmra.mxu0 %v4095
    %v4109 = vpop.f32.mrf.mxu0
    %v4110 = vadd.f32 0.0, %v4109
    %v4111 = vpop.f32.mrf.mxu0
    %4112 = vdwg.mxu0
    %v4114 = vsel %vm2968, %v3710, 0
    %v4117 = vsel %vm3716, %v2965, 0
    %4119 = vmatpush.bf16.msra.mxu0 0
    %4120 = vmatpush.bf16.msra.mxu0 0
    %4121 = vmatpush.bf16.msra.mxu0 0
    %4122 = vmatpush.bf16.msra.mxu0 0
    %4123 = vmatpush.bf16.msra.mxu0 0
    %4124 = vmatpush.bf16.msra.mxu0 0
    %4125 = vmatpush.bf16.msra.mxu0 0
    %4126 = vmatpush.bf16.msra.mxu0 %v4117
    %4127 = vmatmul.bf16.gmra.mxu0 %v4114
    %v4128 = vpop.f32.mrf.mxu0
    %v4129 = vadd.f32 0.0, %v4128
    %v4130 = vpop.f32.mrf.mxu0
    %4131 = vdwg.mxu0
    %v4133 = vsel %vm2968, %v3711, 0
    %v4136 = vsel %vm3716, %v2966, 0
    %4138 = vmatpush.bf16.msra.mxu0 0
    %4139 = vmatpush.bf16.msra.mxu0 0
    %4140 = vmatpush.bf16.msra.mxu0 0
    %4141 = vmatpush.bf16.msra.mxu0 0
    %4142 = vmatpush.bf16.msra.mxu0 0
    %4143 = vmatpush.bf16.msra.mxu0 0
    %4144 = vmatpush.bf16.msra.mxu0 0
    %4145 = vmatpush.bf16.msra.mxu0 %v4136
    %4146 = vmatmul.bf16.gmra.mxu0 %v4133
    %v4147 = vpop.f32.mrf.mxu0
    %v4148 = vadd.f32 0.0, %v4147
    %v4149 = vpop.f32.mrf.mxu0
    %4150 = vdwg.mxu0
    %v4152 = vsel %vm2968, %v3712, 0
    %v4155 = vsel %vm3716, %v2967, 0
    %4157 = vmatpush.bf16.msra.mxu0 0
    %4158 = vmatpush.bf16.msra.mxu0 0
    %4159 = vmatpush.bf16.msra.mxu0 0
    %4160 = vmatpush.bf16.msra.mxu0 0
    %4161 = vmatpush.bf16.msra.mxu0 0
    %4162 = vmatpush.bf16.msra.mxu0 0
    %4163 = vmatpush.bf16.msra.mxu0 0
    %4164 = vmatpush.bf16.msra.mxu0 %v4155
    %4165 = vmatmul.bf16.gmra.mxu0 %v4152
    %v4166 = vpop.f32.mrf.mxu0
    %v4167 = vadd.f32 0.0, %v4166
    %v4168 = vpop.f32.mrf.mxu0
    %4169 = vdwg.mxu0
    %4170 = vxpose.xlu0.b32.start [1/16] %v3730, 128
    %4171 = vxpose.xlu0.b32.cont [2/16] 0.0, 128
    %4172 = vxpose.xlu0.b32.cont [3/16] 0.0, 128
    %4173 = vxpose.xlu0.b32.cont [4/16] 0.0, 128
    %4174 = vxpose.xlu0.b32.cont [5/16] 0.0, 128
    %4175 = vxpose.xlu0.b32.cont [6/16] 0.0, 128
    %4176 = vxpose.xlu0.b32.cont [7/16] 0.0, 128
    %4177 = vxpose.xlu0.b32.cont [8/16] 0.0, 128
    %4178 = vxpose.xlu0.b32.cont [9/16] 0.0, 128
    %4179 = vxpose.xlu0.b32.cont [10/16] 0.0, 128
    %4180 = vxpose.xlu0.b32.cont [11/16] 0.0, 128
    %4181 = vxpose.xlu0.b32.cont [12/16] 0.0, 128
    %4182 = vxpose.xlu0.b32.cont [13/16] 0.0, 128
    %4183 = vxpose.xlu0.b32.cont [14/16] 0.0, 128
    %4184 = vxpose.xlu0.b32.cont [15/16] 0.0, 128
    %4185 = vxpose.xlu0.b32.end [16/16] 0.0, 128
    %v4186 = vpop.trf.xlu0
    %v4187 = vpop.trf.xlu0
    %v4188 = vpop.trf.xlu0
    %v4189 = vpop.trf.xlu0
    %v4190 = vpop.trf.xlu0
    %v4191 = vpop.trf.xlu0
    %v4192 = vpop.trf.xlu0
    %v4193 = vpop.trf.xlu0
    %v4194 = vpop.trf.xlu0
    %v4195 = vpop.trf.xlu0
    %v4196 = vpop.trf.xlu0
    %v4197 = vpop.trf.xlu0
    %v4198 = vpop.trf.xlu0
    %v4199 = vpop.trf.xlu0
    %v4200 = vpop.trf.xlu0
    %v4201 = vpop.trf.xlu0
    %4202 = vxpose.xlu0.b32.start [1/16] %v3749, 128
    %4203 = vxpose.xlu0.b32.cont [2/16] 0.0, 128
    %4204 = vxpose.xlu0.b32.cont [3/16] 0.0, 128
    %4205 = vxpose.xlu0.b32.cont [4/16] 0.0, 128
    %4206 = vxpose.xlu0.b32.cont [5/16] 0.0, 128
    %4207 = vxpose.xlu0.b32.cont [6/16] 0.0, 128
    %4208 = vxpose.xlu0.b32.cont [7/16] 0.0, 128
    %4209 = vxpose.xlu0.b32.cont [8/16] 0.0, 128
    %4210 = vxpose.xlu0.b32.cont [9/16] 0.0, 128
    %4211 = vxpose.xlu0.b32.cont [10/16] 0.0, 128
    %4212 = vxpose.xlu0.b32.cont [11/16] 0.0, 128
    %4213 = vxpose.xlu0.b32.cont [12/16] 0.0, 128
    %4214 = vxpose.xlu0.b32.cont [13/16] 0.0, 128
    %4215 = vxpose.xlu0.b32.cont [14/16] 0.0, 128
    %4216 = vxpose.xlu0.b32.cont [15/16] 0.0, 128
    %4217 = vxpose.xlu0.b32.end [16/16] 0.0, 128
    %v4218 = vpop.trf.xlu0
    %v4219 = vpop.trf.xlu0
    %v4220 = vpop.trf.xlu0
    %v4221 = vpop.trf.xlu0
    %v4222 = vpop.trf.xlu0
    %v4223 = vpop.trf.xlu0
    %v4224 = vpop.trf.xlu0
    %v4225 = vpop.trf.xlu0
    %v4226 = vpop.trf.xlu0
    %v4227 = vpop.trf.xlu0
    %v4228 = vpop.trf.xlu0
    %v4229 = vpop.trf.xlu0
    %v4230 = vpop.trf.xlu0
    %v4231 = vpop.trf.xlu0
    %v4232 = vpop.trf.xlu0
    %v4233 = vpop.trf.xlu0
    %4234 = vxpose.xlu0.b32.start [1/16] %v3768, 128
    %4235 = vxpose.xlu0.b32.cont [2/16] 0.0, 128
    %4236 = vxpose.xlu0.b32.cont [3/16] 0.0, 128
    %4237 = vxpose.xlu0.b32.cont [4/16] 0.0, 128
    %4238 = vxpose.xlu0.b32.cont [5/16] 0.0, 128
    %4239 = vxpose.xlu0.b32.cont [6/16] 0.0, 128
    %4240 = vxpose.xlu0.b32.cont [7/16] 0.0, 128
    %4241 = vxpose.xlu0.b32.cont [8/16] 0.0, 128
    %4242 = vxpose.xlu0.b32.cont [9/16] 0.0, 128
    %4243 = vxpose.xlu0.b32.cont [10/16] 0.0, 128
    %4244 = vxpose.xlu0.b32.cont [11/16] 0.0, 128
    %4245 = vxpose.xlu0.b32.cont [12/16] 0.0, 128
    %4246 = vxpose.xlu0.b32.cont [13/16] 0.0, 128
    %4247 = vxpose.xlu0.b32.cont [14/16] 0.0, 128
    %4248 = vxpose.xlu0.b32.cont [15/16] 0.0, 128
    %4249 = vxpose.xlu0.b32.end [16/16] 0.0, 128
    %v4250 = vpop.trf.xlu0
    %v4251 = vpop.trf.xlu0
    %v4252 = vpop.trf.xlu0
    %v4253 = vpop.trf.xlu0
    %v4254 = vpop.trf.xlu0
    %v4255 = vpop.trf.xlu0
    %v4256 = vpop.trf.xlu0
    %v4257 = vpop.trf.xlu0
    %v4258 = vpop.trf.xlu0
    %v4259 = vpop.trf.xlu0
    %v4260 = vpop.trf.xlu0
    %v4261 = vpop.trf.xlu0
    %v4262 = vpop.trf.xlu0
    %v4263 = vpop.trf.xlu0
    %v4264 = vpop.trf.xlu0
    %v4265 = vpop.trf.xlu0
    %4266 = vxpose.xlu0.b32.start [1/16] %v3787, 128
    %4267 = vxpose.xlu0.b32.cont [2/16] 0.0, 128
    %4268 = vxpose.xlu0.b32.cont [3/16] 0.0, 128
    %4269 = vxpose.xlu0.b32.cont [4/16] 0.0, 128
    %4270 = vxpose.xlu0.b32.cont [5/16] 0.0, 128
    %4271 = vxpose.xlu0.b32.cont [6/16] 0.0, 128
    %4272 = vxpose.xlu0.b32.cont [7/16] 0.0, 128
    %4273 = vxpose.xlu0.b32.cont [8/16] 0.0, 128
    %4274 = vxpose.xlu0.b32.cont [9/16] 0.0, 128
    %4275 = vxpose.xlu0.b32.cont [10/16] 0.0, 128
    %4276 = vxpose.xlu0.b32.cont [11/16] 0.0, 128
    %4277 = vxpose.xlu0.b32.cont [12/16] 0.0, 128
    %4278 = vxpose.xlu0.b32.cont [13/16] 0.0, 128
    %4279 = vxpose.xlu0.b32.cont [14/16] 0.0, 128
    %4280 = vxpose.xlu0.b32.cont [15/16] 0.0, 128
    %4281 = vxpose.xlu0.b32.end [16/16] 0.0, 128
    %v4282 = vpop.trf.xlu0
    %v4283 = vpop.trf.xlu0
    %v4284 = vpop.trf.xlu0
    %v4285 = vpop.trf.xlu0
    %v4286 = vpop.trf.xlu0
    %v4287 = vpop.trf.xlu0
    %v4288 = vpop.trf.xlu0
    %v4289 = vpop.trf.xlu0
    %v4290 = vpop.trf.xlu0
    %v4291 = vpop.trf.xlu0
    %v4292 = vpop.trf.xlu0
    %v4293 = vpop.trf.xlu0
    %v4294 = vpop.trf.xlu0
    %v4295 = vpop.trf.xlu0
    %v4296 = vpop.trf.xlu0
    %v4297 = vpop.trf.xlu0
    %4298 = vxpose.xlu0.b32.start [1/16] %v3806, 128
    %4299 = vxpose.xlu0.b32.cont [2/16] 0.0, 128
    %4300 = vxpose.xlu0.b32.cont [3/16] 0.0, 128
    %4301 = vxpose.xlu0.b32.cont [4/16] 0.0, 128
    %4302 = vxpose.xlu0.b32.cont [5/16] 0.0, 128
    %4303 = vxpose.xlu0.b32.cont [6/16] 0.0, 128
    %4304 = vxpose.xlu0.b32.cont [7/16] 0.0, 128
    %4305 = vxpose.xlu0.b32.cont [8/16] 0.0, 128
    %4306 = vxpose.xlu0.b32.cont [9/16] 0.0, 128
    %4307 = vxpose.xlu0.b32.cont [10/16] 0.0, 128
    %4308 = vxpose.xlu0.b32.cont [11/16] 0.0, 128
    %4309 = vxpose.xlu0.b32.cont [12/16] 0.0, 128
    %4310 = vxpose.xlu0.b32.cont [13/16] 0.0, 128
    %4311 = vxpose.xlu0.b32.cont [14/16] 0.0, 128
    %4312 = vxpose.xlu0.b32.cont [15/16] 0.0, 128
    %4313 = vxpose.xlu0.b32.end [16/16] 0.0, 128
    %v4314 = vpop.trf.xlu0
    %v4315 = vpop.trf.xlu0
    %v4316 = vpop.trf.xlu0
    %v4317 = vpop.trf.xlu0
    %v4318 = vpop.trf.xlu0
    %v4319 = vpop.trf.xlu0
    %v4320 = vpop.trf.xlu0
    %v4321 = vpop.trf.xlu0
    %v4322 = vpop.trf.xlu0
    %v4323 = vpop.trf.xlu0
    %v4324 = vpop.trf.xlu0
    %v4325 = vpop.trf.xlu0
    %v4326 = vpop.trf.xlu0
    %v4327 = vpop.trf.xlu0
    %v4328 = vpop.trf.xlu0
    %v4329 = vpop.trf.xlu0
    %4330 = vxpose.xlu0.b32.start [1/16] %v3825, 128
    %4331 = vxpose.xlu0.b32.cont [2/16] 0.0, 128
    %4332 = vxpose.xlu0.b32.cont [3/16] 0.0, 128
    %4333 = vxpose.xlu0.b32.cont [4/16] 0.0, 128
    %4334 = vxpose.xlu0.b32.cont [5/16] 0.0, 128
    %4335 = vxpose.xlu0.b32.cont [6/16] 0.0, 128
    %4336 = vxpose.xlu0.b32.cont [7/16] 0.0, 128
    %4337 = vxpose.xlu0.b32.cont [8/16] 0.0, 128
    %4338 = vxpose.xlu0.b32.cont [9/16] 0.0, 128
    %4339 = vxpose.xlu0.b32.cont [10/16] 0.0, 128
    %4340 = vxpose.xlu0.b32.cont [11/16] 0.0, 128
    %4341 = vxpose.xlu0.b32.cont [12/16] 0.0, 128
    %4342 = vxpose.xlu0.b32.cont [13/16] 0.0, 128
    %4343 = vxpose.xlu0.b32.cont [14/16] 0.0, 128
    %4344 = vxpose.xlu0.b32.cont [15/16] 0.0, 128
    %4345 = vxpose.xlu0.b32.end [16/16] 0.0, 128
    %v4346 = vpop.trf.xlu0
    %v4347 = vpop.trf.xlu0
    %v4348 = vpop.trf.xlu0
    %v4349 = vpop.trf.xlu0
    %v4350 = vpop.trf.xlu0
    %v4351 = vpop.trf.xlu0
    %v4352 = vpop.trf.xlu0
    %v4353 = vpop.trf.xlu0
    %v4354 = vpop.trf.xlu0
    %v4355 = vpop.trf.xlu0
    %v4356 = vpop.trf.xlu0
    %v4357 = vpop.trf.xlu0
    %v4358 = vpop.trf.xlu0
    %v4359 = vpop.trf.xlu0
    %v4360 = vpop.trf.xlu0
    %v4361 = vpop.trf.xlu0
    %4362 = vxpose.xlu0.b32.start [1/16] %v3844, 128
    %4363 = vxpose.xlu0.b32.cont [2/16] 0.0, 128
    %4364 = vxpose.xlu0.b32.cont [3/16] 0.0, 128
    %4365 = vxpose.xlu0.b32.cont [4/16] 0.0, 128
    %4366 = vxpose.xlu0.b32.cont [5/16] 0.0, 128
    %4367 = vxpose.xlu0.b32.cont [6/16] 0.0, 128
    %4368 = vxpose.xlu0.b32.cont [7/16] 0.0, 128
    %4369 = vxpose.xlu0.b32.cont [8/16] 0.0, 128
    %4370 = vxpose.xlu0.b32.cont [9/16] 0.0, 128
    %4371 = vxpose.xlu0.b32.cont [10/16] 0.0, 128
    %4372 = vxpose.xlu0.b32.cont [11/16] 0.0, 128
    %4373 = vxpose.xlu0.b32.cont [12/16] 0.0, 128
    %4374 = vxpose.xlu0.b32.cont [13/16] 0.0, 128
    %4375 = vxpose.xlu0.b32.cont [14/16] 0.0, 128
    %4376 = vxpose.xlu0.b32.cont [15/16] 0.0, 128
    %4377 = vxpose.xlu0.b32.end [16/16] 0.0, 128
    %v4378 = vpop.trf.xlu0
    %v4379 = vpop.trf.xlu0
    %v4380 = vpop.trf.xlu0
    %v4381 = vpop.trf.xlu0
    %v4382 = vpop.trf.xlu0
    %v4383 = vpop.trf.xlu0
    %v4384 = vpop.trf.xlu0
    %v4385 = vpop.trf.xlu0
    %v4386 = vpop.trf.xlu0
    %v4387 = vpop.trf.xlu0
    %v4388 = vpop.trf.xlu0
    %v4389 = vpop.trf.xlu0
    %v4390 = vpop.trf.xlu0
    %v4391 = vpop.trf.xlu0
    %v4392 = vpop.trf.xlu0
    %v4393 = vpop.trf.xlu0
    %4394 = vxpose.xlu0.b32.start [1/16] %v3863, 128
    %4395 = vxpose.xlu0.b32.cont [2/16] 0.0, 128
    %4396 = vxpose.xlu0.b32.cont [3/16] 0.0, 128
    %4397 = vxpose.xlu0.b32.cont [4/16] 0.0, 128
    %4398 = vxpose.xlu0.b32.cont [5/16] 0.0, 128
    %4399 = vxpose.xlu0.b32.cont [6/16] 0.0, 128
    %4400 = vxpose.xlu0.b32.cont [7/16] 0.0, 128
    %4401 = vxpose.xlu0.b32.cont [8/16] 0.0, 128
    %4402 = vxpose.xlu0.b32.cont [9/16] 0.0, 128
    %4403 = vxpose.xlu0.b32.cont [10/16] 0.0, 128
    %4404 = vxpose.xlu0.b32.cont [11/16] 0.0, 128
    %4405 = vxpose.xlu0.b32.cont [12/16] 0.0, 128
    %4406 = vxpose.xlu0.b32.cont [13/16] 0.0, 128
    %4407 = vxpose.xlu0.b32.cont [14/16] 0.0, 128
    %4408 = vxpose.xlu0.b32.cont [15/16] 0.0, 128
    %4409 = vxpose.xlu0.b32.end [16/16] 0.0, 128
    %v4410 = vpop.trf.xlu0
    %v4411 = vpop.trf.xlu0
    %v4412 = vpop.trf.xlu0
    %v4413 = vpop.trf.xlu0
    %v4414 = vpop.trf.xlu0
    %v4415 = vpop.trf.xlu0
    %v4416 = vpop.trf.xlu0
    %v4417 = vpop.trf.xlu0
    %v4418 = vpop.trf.xlu0
    %v4419 = vpop.trf.xlu0
    %v4420 = vpop.trf.xlu0
    %v4421 = vpop.trf.xlu0
    %v4422 = vpop.trf.xlu0
    %v4423 = vpop.trf.xlu0
    %v4424 = vpop.trf.xlu0
    %v4425 = vpop.trf.xlu0
    %4426 = vxpose.xlu0.b32.start [1/16] %v3882, 128
    %4427 = vxpose.xlu0.b32.cont [2/16] 0.0, 128
    %4428 = vxpose.xlu0.b32.cont [3/16] 0.0, 128
    %4429 = vxpose.xlu0.b32.cont [4/16] 0.0, 128
    %4430 = vxpose.xlu0.b32.cont [5/16] 0.0, 128
    %4431 = vxpose.xlu0.b32.cont [6/16] 0.0, 128
    %4432 = vxpose.xlu0.b32.cont [7/16] 0.0, 128
    %4433 = vxpose.xlu0.b32.cont [8/16] 0.0, 128
    %4434 = vxpose.xlu0.b32.cont [9/16] 0.0, 128
    %4435 = vxpose.xlu0.b32.cont [10/16] 0.0, 128
    %4436 = vxpose.xlu0.b32.cont [11/16] 0.0, 128
    %4437 = vxpose.xlu0.b32.cont [12/16] 0.0, 128
    %4438 = vxpose.xlu0.b32.cont [13/16] 0.0, 128
    %4439 = vxpose.xlu0.b32.cont [14/16] 0.0, 128
    %4440 = vxpose.xlu0.b32.cont [15/16] 0.0, 128
    %4441 = vxpose.xlu0.b32.end [16/16] 0.0, 128
    %v4442 = vpop.trf.xlu0
    %v4443 = vpop.trf.xlu0
    %v4444 = vpop.trf.xlu0
    %v4445 = vpop.trf.xlu0
    %v4446 = vpop.trf.xlu0
    %v4447 = vpop.trf.xlu0
    %v4448 = vpop.trf.xlu0
    %v4449 = vpop.trf.xlu0
    %v4450 = vpop.trf.xlu0
    %v4451 = vpop.trf.xlu0
    %v4452 = vpop.trf.xlu0
    %v4453 = vpop.trf.xlu0
    %v4454 = vpop.trf.xlu0
    %v4455 = vpop.trf.xlu0
    %v4456 = vpop.trf.xlu0
    %v4457 = vpop.trf.xlu0
    %4458 = vxpose.xlu0.b32.start [1/16] %v3901, 128
    %4459 = vxpose.xlu0.b32.cont [2/16] 0.0, 128
    %4460 = vxpose.xlu0.b32.cont [3/16] 0.0, 128
    %4461 = vxpose.xlu0.b32.cont [4/16] 0.0, 128
    %4462 = vxpose.xlu0.b32.cont [5/16] 0.0, 128
    %4463 = vxpose.xlu0.b32.cont [6/16] 0.0, 128
    %4464 = vxpose.xlu0.b32.cont [7/16] 0.0, 128
    %4465 = vxpose.xlu0.b32.cont [8/16] 0.0, 128
    %4466 = vxpose.xlu0.b32.cont [9/16] 0.0, 128
    %4467 = vxpose.xlu0.b32.cont [10/16] 0.0, 128
    %4468 = vxpose.xlu0.b32.cont [11/16] 0.0, 128
    %4469 = vxpose.xlu0.b32.cont [12/16] 0.0, 128
    %4470 = vxpose.xlu0.b32.cont [13/16] 0.0, 128
    %4471 = vxpose.xlu0.b32.cont [14/16] 0.0, 128
    %4472 = vxpose.xlu0.b32.cont [15/16] 0.0, 128
    %4473 = vxpose.xlu0.b32.end [16/16] 0.0, 128
    %v4474 = vpop.trf.xlu0
    %v4475 = vpop.trf.xlu0
    %v4476 = vpop.trf.xlu0
    %v4477 = vpop.trf.xlu0
    %v4478 = vpop.trf.xlu0
    %v4479 = vpop.trf.xlu0
    %v4480 = vpop.trf.xlu0
    %v4481 = vpop.trf.xlu0
    %v4482 = vpop.trf.xlu0
    %v4483 = vpop.trf.xlu0
    %v4484 = vpop.trf.xlu0
    %v4485 = vpop.trf.xlu0
    %v4486 = vpop.trf.xlu0
    %v4487 = vpop.trf.xlu0
    %v4488 = vpop.trf.xlu0
    %v4489 = vpop.trf.xlu0
    %4490 = vxpose.xlu0.b32.start [1/16] %v3920, 128
    %4491 = vxpose.xlu0.b32.cont [2/16] 0.0, 128
    %4492 = vxpose.xlu0.b32.cont [3/16] 0.0, 128
    %4493 = vxpose.xlu0.b32.cont [4/16] 0.0, 128
    %4494 = vxpose.xlu0.b32.cont [5/16] 0.0, 128
    %4495 = vxpose.xlu0.b32.cont [6/16] 0.0, 128
    %4496 = vxpose.xlu0.b32.cont [7/16] 0.0, 128
    %4497 = vxpose.xlu0.b32.cont [8/16] 0.0, 128
    %4498 = vxpose.xlu0.b32.cont [9/16] 0.0, 128
    %4499 = vxpose.xlu0.b32.cont [10/16] 0.0, 128
    %4500 = vxpose.xlu0.b32.cont [11/16] 0.0, 128
    %4501 = vxpose.xlu0.b32.cont [12/16] 0.0, 128
    %4502 = vxpose.xlu0.b32.cont [13/16] 0.0, 128
    %4503 = vxpose.xlu0.b32.cont [14/16] 0.0, 128
    %4504 = vxpose.xlu0.b32.cont [15/16] 0.0, 128
    %4505 = vxpose.xlu0.b32.end [16/16] 0.0, 128
    %v4506 = vpop.trf.xlu0
    %v4507 = vpop.trf.xlu0
    %v4508 = vpop.trf.xlu0
    %v4509 = vpop.trf.xlu0
    %v4510 = vpop.trf.xlu0
    %v4511 = vpop.trf.xlu0
    %v4512 = vpop.trf.xlu0
    %v4513 = vpop.trf.xlu0
    %v4514 = vpop.trf.xlu0
    %v4515 = vpop.trf.xlu0
    %v4516 = vpop.trf.xlu0
    %v4517 = vpop.trf.xlu0
    %v4518 = vpop.trf.xlu0
    %v4519 = vpop.trf.xlu0
    %v4520 = vpop.trf.xlu0
    %v4521 = vpop.trf.xlu0
    %4522 = vxpose.xlu0.b32.start [1/16] %v3939, 128
    %4523 = vxpose.xlu0.b32.cont [2/16] 0.0, 128
    %4524 = vxpose.xlu0.b32.cont [3/16] 0.0, 128
    %4525 = vxpose.xlu0.b32.cont [4/16] 0.0, 128
    %4526 = vxpose.xlu0.b32.cont [5/16] 0.0, 128
    %4527 = vxpose.xlu0.b32.cont [6/16] 0.0, 128
    %4528 = vxpose.xlu0.b32.cont [7/16] 0.0, 128
    %4529 = vxpose.xlu0.b32.cont [8/16] 0.0, 128
    %4530 = vxpose.xlu0.b32.cont [9/16] 0.0, 128
    %4531 = vxpose.xlu0.b32.cont [10/16] 0.0, 128
    %4532 = vxpose.xlu0.b32.cont [11/16] 0.0, 128
    %4533 = vxpose.xlu0.b32.cont [12/16] 0.0, 128
    %4534 = vxpose.xlu0.b32.cont [13/16] 0.0, 128
    %4535 = vxpose.xlu0.b32.cont [14/16] 0.0, 128
    %4536 = vxpose.xlu0.b32.cont [15/16] 0.0, 128
    %4537 = vxpose.xlu0.b32.end [16/16] 0.0, 128
    %v4538 = vpop.trf.xlu0
    %v4539 = vpop.trf.xlu0
    %v4540 = vpop.trf.xlu0
    %v4541 = vpop.trf.xlu0
    %v4542 = vpop.trf.xlu0
    %v4543 = vpop.trf.xlu0
    %v4544 = vpop.trf.xlu0
    %v4545 = vpop.trf.xlu0
    %v4546 = vpop.trf.xlu0
    %v4547 = vpop.trf.xlu0
    %v4548 = vpop.trf.xlu0
    %v4549 = vpop.trf.xlu0
    %v4550 = vpop.trf.xlu0
    %v4551 = vpop.trf.xlu0
    %v4552 = vpop.trf.xlu0
    %v4553 = vpop.trf.xlu0
    %4554 = vxpose.xlu0.b32.start [1/16] %v3958, 128
    %4555 = vxpose.xlu0.b32.cont [2/16] 0.0, 128
    %4556 = vxpose.xlu0.b32.cont [3/16] 0.0, 128
    %4557 = vxpose.xlu0.b32.cont [4/16] 0.0, 128
    %4558 = vxpose.xlu0.b32.cont [5/16] 0.0, 128
    %4559 = vxpose.xlu0.b32.cont [6/16] 0.0, 128
    %4560 = vxpose.xlu0.b32.cont [7/16] 0.0, 128
    %4561 = vxpose.xlu0.b32.cont [8/16] 0.0, 128
    %4562 = vxpose.xlu0.b32.cont [9/16] 0.0, 128
    %4563 = vxpose.xlu0.b32.cont [10/16] 0.0, 128
    %4564 = vxpose.xlu0.b32.cont [11/16] 0.0, 128
    %4565 = vxpose.xlu0.b32.cont [12/16] 0.0, 128
    %4566 = vxpose.xlu0.b32.cont [13/16] 0.0, 128
    %4567 = vxpose.xlu0.b32.cont [14/16] 0.0, 128
    %4568 = vxpose.xlu0.b32.cont [15/16] 0.0, 128
    %4569 = vxpose.xlu0.b32.end [16/16] 0.0, 128
    %v4570 = vpop.trf.xlu0
    %v4571 = vpop.trf.xlu0
    %v4572 = vpop.trf.xlu0
    %v4573 = vpop.trf.xlu0
    %v4574 = vpop.trf.xlu0
    %v4575 = vpop.trf.xlu0
    %v4576 = vpop.trf.xlu0
    %v4577 = vpop.trf.xlu0
    %v4578 = vpop.trf.xlu0
    %v4579 = vpop.trf.xlu0
    %v4580 = vpop.trf.xlu0
    %v4581 = vpop.trf.xlu0
    %v4582 = vpop.trf.xlu0
    %v4583 = vpop.trf.xlu0
    %v4584 = vpop.trf.xlu0
    %v4585 = vpop.trf.xlu0
    %4586 = vxpose.xlu0.b32.start [1/16] %v3977, 128
    %4587 = vxpose.xlu0.b32.cont [2/16] 0.0, 128
    %4588 = vxpose.xlu0.b32.cont [3/16] 0.0, 128
    %4589 = vxpose.xlu0.b32.cont [4/16] 0.0, 128
    %4590 = vxpose.xlu0.b32.cont [5/16] 0.0, 128
    %4591 = vxpose.xlu0.b32.cont [6/16] 0.0, 128
    %4592 = vxpose.xlu0.b32.cont [7/16] 0.0, 128
    %4593 = vxpose.xlu0.b32.cont [8/16] 0.0, 128
    %4594 = vxpose.xlu0.b32.cont [9/16] 0.0, 128
    %4595 = vxpose.xlu0.b32.cont [10/16] 0.0, 128
    %4596 = vxpose.xlu0.b32.cont [11/16] 0.0, 128
    %4597 = vxpose.xlu0.b32.cont [12/16] 0.0, 128
    %4598 = vxpose.xlu0.b32.cont [13/16] 0.0, 128
    %4599 = vxpose.xlu0.b32.cont [14/16] 0.0, 128
    %4600 = vxpose.xlu0.b32.cont [15/16] 0.0, 128
    %4601 = vxpose.xlu0.b32.end [16/16] 0.0, 128
    %v4602 = vpop.trf.xlu0
    %v4603 = vpop.trf.xlu0
    %v4604 = vpop.trf.xlu0
    %v4605 = vpop.trf.xlu0
    %v4606 = vpop.trf.xlu0
    %v4607 = vpop.trf.xlu0
    %v4608 = vpop.trf.xlu0
    %v4609 = vpop.trf.xlu0
    %v4610 = vpop.trf.xlu0
    %v4611 = vpop.trf.xlu0
    %v4612 = vpop.trf.xlu0
    %v4613 = vpop.trf.xlu0
    %v4614 = vpop.trf.xlu0
    %v4615 = vpop.trf.xlu0
    %v4616 = vpop.trf.xlu0
    %v4617 = vpop.trf.xlu0
    %4618 = vxpose.xlu0.b32.start [1/16] %v3996, 128
    %4619 = vxpose.xlu0.b32.cont [2/16] 0.0, 128
    %4620 = vxpose.xlu0.b32.cont [3/16] 0.0, 128
    %4621 = vxpose.xlu0.b32.cont [4/16] 0.0, 128
    %4622 = vxpose.xlu0.b32.cont [5/16] 0.0, 128
    %4623 = vxpose.xlu0.b32.cont [6/16] 0.0, 128
    %4624 = vxpose.xlu0.b32.cont [7/16] 0.0, 128
    %4625 = vxpose.xlu0.b32.cont [8/16] 0.0, 128
    %4626 = vxpose.xlu0.b32.cont [9/16] 0.0, 128
    %4627 = vxpose.xlu0.b32.cont [10/16] 0.0, 128
    %4628 = vxpose.xlu0.b32.cont [11/16] 0.0, 128
    %4629 = vxpose.xlu0.b32.cont [12/16] 0.0, 128
    %4630 = vxpose.xlu0.b32.cont [13/16] 0.0, 128
    %4631 = vxpose.xlu0.b32.cont [14/16] 0.0, 128
    %4632 = vxpose.xlu0.b32.cont [15/16] 0.0, 128
    %4633 = vxpose.xlu0.b32.end [16/16] 0.0, 128
    %v4634 = vpop.trf.xlu0
    %v4635 = vpop.trf.xlu0
    %v4636 = vpop.trf.xlu0
    %v4637 = vpop.trf.xlu0
    %v4638 = vpop.trf.xlu0
    %v4639 = vpop.trf.xlu0
    %v4640 = vpop.trf.xlu0
    %v4641 = vpop.trf.xlu0
    %v4642 = vpop.trf.xlu0
    %v4643 = vpop.trf.xlu0
    %v4644 = vpop.trf.xlu0
    %v4645 = vpop.trf.xlu0
    %v4646 = vpop.trf.xlu0
    %v4647 = vpop.trf.xlu0
    %v4648 = vpop.trf.xlu0
    %v4649 = vpop.trf.xlu0
    %4650 = vxpose.xlu0.b32.start [1/16] %v4015, 128
    %4651 = vxpose.xlu0.b32.cont [2/16] 0.0, 128
    %4652 = vxpose.xlu0.b32.cont [3/16] 0.0, 128
    %4653 = vxpose.xlu0.b32.cont [4/16] 0.0, 128
    %4654 = vxpose.xlu0.b32.cont [5/16] 0.0, 128
    %4655 = vxpose.xlu0.b32.cont [6/16] 0.0, 128
    %4656 = vxpose.xlu0.b32.cont [7/16] 0.0, 128
    %4657 = vxpose.xlu0.b32.cont [8/16] 0.0, 128
    %4658 = vxpose.xlu0.b32.cont [9/16] 0.0, 128
    %4659 = vxpose.xlu0.b32.cont [10/16] 0.0, 128
    %4660 = vxpose.xlu0.b32.cont [11/16] 0.0, 128
    %4661 = vxpose.xlu0.b32.cont [12/16] 0.0, 128
    %4662 = vxpose.xlu0.b32.cont [13/16] 0.0, 128
    %4663 = vxpose.xlu0.b32.cont [14/16] 0.0, 128
    %4664 = vxpose.xlu0.b32.cont [15/16] 0.0, 128
    %4665 = vxpose.xlu0.b32.end [16/16] 0.0, 128
    %v4666 = vpop.trf.xlu0
    %v4667 = vpop.trf.xlu0
    %v4668 = vpop.trf.xlu0
    %v4669 = vpop.trf.xlu0
    %v4670 = vpop.trf.xlu0
    %v4671 = vpop.trf.xlu0
    %v4672 = vpop.trf.xlu0
    %v4673 = vpop.trf.xlu0
    %v4674 = vpop.trf.xlu0
    %v4675 = vpop.trf.xlu0
    %v4676 = vpop.trf.xlu0
    %v4677 = vpop.trf.xlu0
    %v4678 = vpop.trf.xlu0
    %v4679 = vpop.trf.xlu0
    %v4680 = vpop.trf.xlu0
    %v4681 = vpop.trf.xlu0
    %4682 = vxpose.xlu0.b32.start [1/16] %v4034, 128
    %4683 = vxpose.xlu0.b32.cont [2/16] 0.0, 128
    %4684 = vxpose.xlu0.b32.cont [3/16] 0.0, 128
    %4685 = vxpose.xlu0.b32.cont [4/16] 0.0, 128
    %4686 = vxpose.xlu0.b32.cont [5/16] 0.0, 128
    %4687 = vxpose.xlu0.b32.cont [6/16] 0.0, 128
    %4688 = vxpose.xlu0.b32.cont [7/16] 0.0, 128
    %4689 = vxpose.xlu0.b32.cont [8/16] 0.0, 128
    %4690 = vxpose.xlu0.b32.cont [9/16] 0.0, 128
    %4691 = vxpose.xlu0.b32.cont [10/16] 0.0, 128
    %4692 = vxpose.xlu0.b32.cont [11/16] 0.0, 128
    %4693 = vxpose.xlu0.b32.cont [12/16] 0.0, 128
    %4694 = vxpose.xlu0.b32.cont [13/16] 0.0, 128
    %4695 = vxpose.xlu0.b32.cont [14/16] 0.0, 128
    %4696 = vxpose.xlu0.b32.cont [15/16] 0.0, 128
    %4697 = vxpose.xlu0.b32.end [16/16] 0.0, 128
    %v4698 = vpop.trf.xlu0
    %v4699 = vpop.trf.xlu0
    %v4700 = vpop.trf.xlu0
    %v4701 = vpop.trf.xlu0
    %v4702 = vpop.trf.xlu0
    %v4703 = vpop.trf.xlu0
    %v4704 = vpop.trf.xlu0
    %v4705 = vpop.trf.xlu0
    %v4706 = vpop.trf.xlu0
    %v4707 = vpop.trf.xlu0
    %v4708 = vpop.trf.xlu0
    %v4709 = vpop.trf.xlu0
    %v4710 = vpop.trf.xlu0
    %v4711 = vpop.trf.xlu0
    %v4712 = vpop.trf.xlu0
    %v4713 = vpop.trf.xlu0
    %4714 = vxpose.xlu0.b32.start [1/16] %v4053, 128
    %4715 = vxpose.xlu0.b32.cont [2/16] 0.0, 128
    %4716 = vxpose.xlu0.b32.cont [3/16] 0.0, 128
    %4717 = vxpose.xlu0.b32.cont [4/16] 0.0, 128
    %4718 = vxpose.xlu0.b32.cont [5/16] 0.0, 128
    %4719 = vxpose.xlu0.b32.cont [6/16] 0.0, 128
    %4720 = vxpose.xlu0.b32.cont [7/16] 0.0, 128
    %4721 = vxpose.xlu0.b32.cont [8/16] 0.0, 128
    %4722 = vxpose.xlu0.b32.cont [9/16] 0.0, 128
    %4723 = vxpose.xlu0.b32.cont [10/16] 0.0, 128
    %4724 = vxpose.xlu0.b32.cont [11/16] 0.0, 128
    %4725 = vxpose.xlu0.b32.cont [12/16] 0.0, 128
    %4726 = vxpose.xlu0.b32.cont [13/16] 0.0, 128
    %4727 = vxpose.xlu0.b32.cont [14/16] 0.0, 128
    %4728 = vxpose.xlu0.b32.cont [15/16] 0.0, 128
    %4729 = vxpose.xlu0.b32.end [16/16] 0.0, 128
    %v4730 = vpop.trf.xlu0
    %v4731 = vpop.trf.xlu0
    %v4732 = vpop.trf.xlu0
    %v4733 = vpop.trf.xlu0
    %v4734 = vpop.trf.xlu0
    %v4735 = vpop.trf.xlu0
    %v4736 = vpop.trf.xlu0
    %v4737 = vpop.trf.xlu0
    %v4738 = vpop.trf.xlu0
    %v4739 = vpop.trf.xlu0
    %v4740 = vpop.trf.xlu0
    %v4741 = vpop.trf.xlu0
    %v4742 = vpop.trf.xlu0
    %v4743 = vpop.trf.xlu0
    %v4744 = vpop.trf.xlu0
    %v4745 = vpop.trf.xlu0
    %4746 = vxpose.xlu0.b32.start [1/16] %v4072, 128
    %4747 = vxpose.xlu0.b32.cont [2/16] 0.0, 128
    %4748 = vxpose.xlu0.b32.cont [3/16] 0.0, 128
    %4749 = vxpose.xlu0.b32.cont [4/16] 0.0, 128
    %4750 = vxpose.xlu0.b32.cont [5/16] 0.0, 128
    %4751 = vxpose.xlu0.b32.cont [6/16] 0.0, 128
    %4752 = vxpose.xlu0.b32.cont [7/16] 0.0, 128
    %4753 = vxpose.xlu0.b32.cont [8/16] 0.0, 128
    %4754 = vxpose.xlu0.b32.cont [9/16] 0.0, 128
    %4755 = vxpose.xlu0.b32.cont [10/16] 0.0, 128
    %4756 = vxpose.xlu0.b32.cont [11/16] 0.0, 128
    %4757 = vxpose.xlu0.b32.cont [12/16] 0.0, 128
    %4758 = vxpose.xlu0.b32.cont [13/16] 0.0, 128
    %4759 = vxpose.xlu0.b32.cont [14/16] 0.0, 128
    %4760 = vxpose.xlu0.b32.cont [15/16] 0.0, 128
    %4761 = vxpose.xlu0.b32.end [16/16] 0.0, 128
    %v4762 = vpop.trf.xlu0
    %v4763 = vpop.trf.xlu0
    %v4764 = vpop.trf.xlu0
    %v4765 = vpop.trf.xlu0
    %v4766 = vpop.trf.xlu0
    %v4767 = vpop.trf.xlu0
    %v4768 = vpop.trf.xlu0
    %v4769 = vpop.trf.xlu0
    %v4770 = vpop.trf.xlu0
    %v4771 = vpop.trf.xlu0
    %v4772 = vpop.trf.xlu0
    %v4773 = vpop.trf.xlu0
    %v4774 = vpop.trf.xlu0
    %v4775 = vpop.trf.xlu0
    %v4776 = vpop.trf.xlu0
    %v4777 = vpop.trf.xlu0
    %4778 = vxpose.xlu0.b32.start [1/16] %v4091, 128
    %4779 = vxpose.xlu0.b32.cont [2/16] 0.0, 128
    %4780 = vxpose.xlu0.b32.cont [3/16] 0.0, 128
    %4781 = vxpose.xlu0.b32.cont [4/16] 0.0, 128
    %4782 = vxpose.xlu0.b32.cont [5/16] 0.0, 128
    %4783 = vxpose.xlu0.b32.cont [6/16] 0.0, 128
    %4784 = vxpose.xlu0.b32.cont [7/16] 0.0, 128
    %4785 = vxpose.xlu0.b32.cont [8/16] 0.0, 128
    %4786 = vxpose.xlu0.b32.cont [9/16] 0.0, 128
    %4787 = vxpose.xlu0.b32.cont [10/16] 0.0, 128
    %4788 = vxpose.xlu0.b32.cont [11/16] 0.0, 128
    %4789 = vxpose.xlu0.b32.cont [12/16] 0.0, 128
    %4790 = vxpose.xlu0.b32.cont [13/16] 0.0, 128
    %4791 = vxpose.xlu0.b32.cont [14/16] 0.0, 128
    %4792 = vxpose.xlu0.b32.cont [15/16] 0.0, 128
    %4793 = vxpose.xlu0.b32.end [16/16] 0.0, 128
    %v4794 = vpop.trf.xlu0
    %v4795 = vpop.trf.xlu0
    %v4796 = vpop.trf.xlu0
    %v4797 = vpop.trf.xlu0
    %v4798 = vpop.trf.xlu0
    %v4799 = vpop.trf.xlu0
    %v4800 = vpop.trf.xlu0
    %v4801 = vpop.trf.xlu0
    %v4802 = vpop.trf.xlu0
    %v4803 = vpop.trf.xlu0
    %v4804 = vpop.trf.xlu0
    %v4805 = vpop.trf.xlu0
    %v4806 = vpop.trf.xlu0
    %v4807 = vpop.trf.xlu0
    %v4808 = vpop.trf.xlu0
    %v4809 = vpop.trf.xlu0
    %4810 = vxpose.xlu0.b32.start [1/16] %v4110, 128
    %4811 = vxpose.xlu0.b32.cont [2/16] 0.0, 128
    %4812 = vxpose.xlu0.b32.cont [3/16] 0.0, 128
    %4813 = vxpose.xlu0.b32.cont [4/16] 0.0, 128
    %4814 = vxpose.xlu0.b32.cont [5/16] 0.0, 128
    %4815 = vxpose.xlu0.b32.cont [6/16] 0.0, 128
    %4816 = vxpose.xlu0.b32.cont [7/16] 0.0, 128
    %4817 = vxpose.xlu0.b32.cont [8/16] 0.0, 128
    %4818 = vxpose.xlu0.b32.cont [9/16] 0.0, 128
    %4819 = vxpose.xlu0.b32.cont [10/16] 0.0, 128
    %4820 = vxpose.xlu0.b32.cont [11/16] 0.0, 128
    %4821 = vxpose.xlu0.b32.cont [12/16] 0.0, 128
    %4822 = vxpose.xlu0.b32.cont [13/16] 0.0, 128
    %4823 = vxpose.xlu0.b32.cont [14/16] 0.0, 128
    %4824 = vxpose.xlu0.b32.cont [15/16] 0.0, 128
    %4825 = vxpose.xlu0.b32.end [16/16] 0.0, 128
    %v4826 = vpop.trf.xlu0
    %v4827 = vpop.trf.xlu0
    %v4828 = vpop.trf.xlu0
    %v4829 = vpop.trf.xlu0
    %v4830 = vpop.trf.xlu0
    %v4831 = vpop.trf.xlu0
    %v4832 = vpop.trf.xlu0
    %v4833 = vpop.trf.xlu0
    %v4834 = vpop.trf.xlu0
    %v4835 = vpop.trf.xlu0
    %v4836 = vpop.trf.xlu0
    %v4837 = vpop.trf.xlu0
    %v4838 = vpop.trf.xlu0
    %v4839 = vpop.trf.xlu0
    %v4840 = vpop.trf.xlu0
    %v4841 = vpop.trf.xlu0
    %4842 = vxpose.xlu0.b32.start [1/16] %v4129, 128
    %4843 = vxpose.xlu0.b32.cont [2/16] 0.0, 128
    %4844 = vxpose.xlu0.b32.cont [3/16] 0.0, 128
    %4845 = vxpose.xlu0.b32.cont [4/16] 0.0, 128
    %4846 = vxpose.xlu0.b32.cont [5/16] 0.0, 128
    %4847 = vxpose.xlu0.b32.cont [6/16] 0.0, 128
    %4848 = vxpose.xlu0.b32.cont [7/16] 0.0, 128
    %4849 = vxpose.xlu0.b32.cont [8/16] 0.0, 128
    %4850 = vxpose.xlu0.b32.cont [9/16] 0.0, 128
    %4851 = vxpose.xlu0.b32.cont [10/16] 0.0, 128
    %4852 = vxpose.xlu0.b32.cont [11/16] 0.0, 128
    %4853 = vxpose.xlu0.b32.cont [12/16] 0.0, 128
    %4854 = vxpose.xlu0.b32.cont [13/16] 0.0, 128
    %4855 = vxpose.xlu0.b32.cont [14/16] 0.0, 128
    %4856 = vxpose.xlu0.b32.cont [15/16] 0.0, 128
    %4857 = vxpose.xlu0.b32.end [16/16] 0.0, 128
    %v4858 = vpop.trf.xlu0
    %v4859 = vpop.trf.xlu0
    %v4860 = vpop.trf.xlu0
    %v4861 = vpop.trf.xlu0
    %v4862 = vpop.trf.xlu0
    %v4863 = vpop.trf.xlu0
    %v4864 = vpop.trf.xlu0
    %v4865 = vpop.trf.xlu0
    %v4866 = vpop.trf.xlu0
    %v4867 = vpop.trf.xlu0
    %v4868 = vpop.trf.xlu0
    %v4869 = vpop.trf.xlu0
    %v4870 = vpop.trf.xlu0
    %v4871 = vpop.trf.xlu0
    %v4872 = vpop.trf.xlu0
    %v4873 = vpop.trf.xlu0
    %4874 = vxpose.xlu0.b32.start [1/16] %v4148, 128
    %4875 = vxpose.xlu0.b32.cont [2/16] 0.0, 128
    %4876 = vxpose.xlu0.b32.cont [3/16] 0.0, 128
    %4877 = vxpose.xlu0.b32.cont [4/16] 0.0, 128
    %4878 = vxpose.xlu0.b32.cont [5/16] 0.0, 128
    %4879 = vxpose.xlu0.b32.cont [6/16] 0.0, 128
    %4880 = vxpose.xlu0.b32.cont [7/16] 0.0, 128
    %4881 = vxpose.xlu0.b32.cont [8/16] 0.0, 128
    %4882 = vxpose.xlu0.b32.cont [9/16] 0.0, 128
    %4883 = vxpose.xlu0.b32.cont [10/16] 0.0, 128
    %4884 = vxpose.xlu0.b32.cont [11/16] 0.0, 128
    %4885 = vxpose.xlu0.b32.cont [12/16] 0.0, 128
    %4886 = vxpose.xlu0.b32.cont [13/16] 0.0, 128
    %4887 = vxpose.xlu0.b32.cont [14/16] 0.0, 128
    %4888 = vxpose.xlu0.b32.cont [15/16] 0.0, 128
    %4889 = vxpose.xlu0.b32.end [16/16] 0.0, 128
    %v4890 = vpop.trf.xlu0
    %v4891 = vpop.trf.xlu0
    %v4892 = vpop.trf.xlu0
    %v4893 = vpop.trf.xlu0
    %v4894 = vpop.trf.xlu0
    %v4895 = vpop.trf.xlu0
    %v4896 = vpop.trf.xlu0
    %v4897 = vpop.trf.xlu0
    %v4898 = vpop.trf.xlu0
    %v4899 = vpop.trf.xlu0
    %v4900 = vpop.trf.xlu0
    %v4901 = vpop.trf.xlu0
    %v4902 = vpop.trf.xlu0
    %v4903 = vpop.trf.xlu0
    %v4904 = vpop.trf.xlu0
    %v4905 = vpop.trf.xlu0
    %4906 = vxpose.xlu0.b32.start [1/16] %v4167, 128
    %4907 = vxpose.xlu0.b32.cont [2/16] 0.0, 128
    %4908 = vxpose.xlu0.b32.cont [3/16] 0.0, 128
    %4909 = vxpose.xlu0.b32.cont [4/16] 0.0, 128
    %4910 = vxpose.xlu0.b32.cont [5/16] 0.0, 128
    %4911 = vxpose.xlu0.b32.cont [6/16] 0.0, 128
    %4912 = vxpose.xlu0.b32.cont [7/16] 0.0, 128
    %4913 = vxpose.xlu0.b32.cont [8/16] 0.0, 128
    %4914 = vxpose.xlu0.b32.cont [9/16] 0.0, 128
    %4915 = vxpose.xlu0.b32.cont [10/16] 0.0, 128
    %4916 = vxpose.xlu0.b32.cont [11/16] 0.0, 128
    %4917 = vxpose.xlu0.b32.cont [12/16] 0.0, 128
    %4918 = vxpose.xlu0.b32.cont [13/16] 0.0, 128
    %4919 = vxpose.xlu0.b32.cont [14/16] 0.0, 128
    %4920 = vxpose.xlu0.b32.cont [15/16] 0.0, 128
    %4921 = vxpose.xlu0.b32.end [16/16] 0.0, 128
    %v4922 = vpop.trf.xlu0
    %v4923 = vpop.trf.xlu0
    %v4924 = vpop.trf.xlu0
    %v4925 = vpop.trf.xlu0
    %v4926 = vpop.trf.xlu0
    %v4927 = vpop.trf.xlu0
    %v4928 = vpop.trf.xlu0
    %v4929 = vpop.trf.xlu0
    %v4930 = vpop.trf.xlu0
    %v4931 = vpop.trf.xlu0
    %v4932 = vpop.trf.xlu0
    %v4933 = vpop.trf.xlu0
    %v4934 = vpop.trf.xlu0
    %v4935 = vpop.trf.xlu0
    %v4936 = vpop.trf.xlu0
    %v4937 = vpop.trf.xlu0
    %4938 = vxpose.xlu0.b32.start [1/16] %v4186, 128
    %4939 = vxpose.xlu0.b32.cont [2/16] %v4218, 128
    %4940 = vxpose.xlu0.b32.cont [3/16] %v4250, 128
    %4941 = vxpose.xlu0.b32.cont [4/16] %v4282, 128
    %4942 = vxpose.xlu0.b32.cont [5/16] %v4314, 128
    %4943 = vxpose.xlu0.b32.cont [6/16] %v4346, 128
    %4944 = vxpose.xlu0.b32.cont [7/16] %v4378, 128
    %4945 = vxpose.xlu0.b32.cont [8/16] %v4410, 128
    %4946 = vxpose.xlu0.b32.cont [9/16] %v4442, 128
    %4947 = vxpose.xlu0.b32.cont [10/16] %v4474, 128
    %4948 = vxpose.xlu0.b32.cont [11/16] %v4506, 128
    %4949 = vxpose.xlu0.b32.cont [12/16] %v4538, 128
    %4950 = vxpose.xlu0.b32.cont [13/16] 0.0, 128
    %4951 = vxpose.xlu0.b32.cont [14/16] 0.0, 128
    %4952 = vxpose.xlu0.b32.cont [15/16] 0.0, 128
    %4953 = vxpose.xlu0.b32.end [16/16] 0.0, 128
    %v4954 = vpop.trf.xlu0
    %v4955 = vpop.trf.xlu0
    %v4956 = vpop.trf.xlu0
    %v4957 = vpop.trf.xlu0
    %v4958 = vpop.trf.xlu0
    %v4959 = vpop.trf.xlu0
    %v4960 = vpop.trf.xlu0
    %v4961 = vpop.trf.xlu0
    %v4962 = vpop.trf.xlu0
    %v4963 = vpop.trf.xlu0
    %v4964 = vpop.trf.xlu0
    %v4965 = vpop.trf.xlu0
    %v4966 = vpop.trf.xlu0
    %v4967 = vpop.trf.xlu0
    %v4968 = vpop.trf.xlu0
    %v4969 = vpop.trf.xlu0
    %4970 = vxpose.xlu0.b32.start [1/16] %v4570, 128
    %4971 = vxpose.xlu0.b32.cont [2/16] %v4602, 128
    %4972 = vxpose.xlu0.b32.cont [3/16] %v4634, 128
    %4973 = vxpose.xlu0.b32.cont [4/16] %v4666, 128
    %4974 = vxpose.xlu0.b32.cont [5/16] %v4698, 128
    %4975 = vxpose.xlu0.b32.cont [6/16] %v4730, 128
    %4976 = vxpose.xlu0.b32.cont [7/16] %v4762, 128
    %4977 = vxpose.xlu0.b32.cont [8/16] %v4794, 128
    %4978 = vxpose.xlu0.b32.cont [9/16] %v4826, 128
    %4979 = vxpose.xlu0.b32.cont [10/16] %v4858, 128
    %4980 = vxpose.xlu0.b32.cont [11/16] %v4890, 128
    %4981 = vxpose.xlu0.b32.cont [12/16] %v4922, 128
    %4982 = vxpose.xlu0.b32.cont [13/16] 0.0, 128
    %4983 = vxpose.xlu0.b32.cont [14/16] 0.0, 128
    %4984 = vxpose.xlu0.b32.cont [15/16] 0.0, 128
    %4985 = vxpose.xlu0.b32.end [16/16] 0.0, 128
    %v4986 = vpop.trf.xlu0
    %v4987 = vpop.trf.xlu0
    %v4988 = vpop.trf.xlu0
    %v4989 = vpop.trf.xlu0
    %v4990 = vpop.trf.xlu0
    %v4991 = vpop.trf.xlu0
    %v4992 = vpop.trf.xlu0
    %v4993 = vpop.trf.xlu0
    %v4994 = vpop.trf.xlu0
    %v4995 = vpop.trf.xlu0
    %v4996 = vpop.trf.xlu0
    %v4997 = vpop.trf.xlu0
    %v4998 = vpop.trf.xlu0
    %v4999 = vpop.trf.xlu0
    %v5000 = vpop.trf.xlu0
    %v5001 = vpop.trf.xlu0
    %v5002 = vpack.c.bf16 %v4986, %v4954
    %v5003 = vld [vmem:[#allocation10] sm:$0xf]
    %v5004 = vld [vmem:[#allocation10 + $0x4] sm:$0xf]
    %v5005 = vld [vmem:[#allocation10 + $0x8] sm:$0xf]
    %v5006 = vld [vmem:[#allocation10 + $0xc] sm:$0xf]
    %v5007 = vld [vmem:[#allocation10 + $0x10] sm:$0xf]
    %v5008 = vld [vmem:[#allocation10 + $0x14] sm:$0xf]
    %v5009 = vld [vmem:[#allocation10 + $0x18] sm:$0xf]
    %v5010 = vld [vmem:[#allocation10 + $0x1c] sm:$0xf]
    %v5011 = vld [vmem:[#allocation10 + $0x20] sm:$0xf]
    %v5012 = vld [vmem:[#allocation10 + $0x24] sm:$0xf]
    %v5013 = vld [vmem:[#allocation10 + $0x28] sm:$0xf]
    %v5014 = vld [vmem:[#allocation10 + $0x2c] sm:$0xf]
    %v5015 = vld [vmem:[%s6] sm:$0x1]
    %v5017 = vperm.slane %v5015, 0
    %v5031 = vunpack.c.l.b16 %v5003
    %v5032 = vunpack.c.l.b16 %v5004
    %v5033 = vunpack.c.l.b16 %v5005
    %v5034 = vunpack.c.l.b16 %v5006
    %v5035 = vunpack.c.l.b16 %v5007
    %v5036 = vunpack.c.l.b16 %v5008
    %v5037 = vunpack.c.l.b16 %v5009
    %v5038 = vunpack.c.l.b16 %v5010
    %v5039 = vunpack.c.l.b16 %v5011
    %v5040 = vunpack.c.l.b16 %v5012
    %v5041 = vunpack.c.l.b16 %v5013
    %v5042 = vunpack.c.l.b16 %v5014
    %v5043 = vpack.c.b16 %v5032, %v5031
    %v5044 = vpack.c.b16 %v5034, %v5033
    %v5045 = vpack.c.b16 %v5036, %v5035
    %v5046 = vpack.c.b16 %v5038, %v5037
    %v5047 = vpack.c.b16 %v5040, %v5039
    %v5048 = vpack.c.b16 %v5042, %v5041
    %v5056 = vsel %vm324, %v5002, 0
    %5058 = vmatpush.bf16.msra.mxu0 0
    %5059 = vmatpush.bf16.msra.mxu0 0
    %5060 = vmatpush.bf16.msra.mxu0 %v5048
    %5061 = vmatpush.bf16.msra.mxu0 %v5047
    %5062 = vmatpush.bf16.msra.mxu0 %v5046
    %5063 = vmatpush.bf16.msra.mxu0 %v5045
    %5064 = vmatpush.bf16.msra.mxu0 %v5044
    %5065 = vmatpush.bf16.msra.mxu0 %v5043
    %5066 = vmatmul.bf16.gmra.mxu0 %v5056
    %v5067 = vpop.f32.mrf.mxu0
    %v5068 = vadd.f32 %v5017, %v5067
    %v5069 = vpop.f32.mrf.mxu0
    %v5070 = vadd.f32 %v5017, %v5069
    %5071 = vdwg.mxu0
    %5074 = vrot.lane.b32.xlu0 %v5068, 96
    %v5075 = vpop.permute.xlu0 %5074
    %5076 = vrot.lane.b32.xlu0 %v5070, 96
    %v5077 = vpop.permute.xlu0 %5076
    %5080 = vst.msk [vmem:[#allocation17] sm:$0xff] %vm189, %v5075
    %5081 = vst.msk [vmem:[#allocation17 + $0x8] sm:$0xff] %vm189, %v5077
    %v5082 = vpack.c.bf16 %v5070, %v5068
    %v5083 = vld [vmem:[#allocation11] sm:$0xff]
    %v5084 = vld [vmem:[#allocation11 + $0x8] sm:$0xff]
    %v5085 = vld [vmem:[#allocation11 + $0x10] sm:$0xff]
    %v5086 = vld [vmem:[#allocation11 + $0x18] sm:$0xff]
    %v5087 = vld [vmem:[#allocation11 + $0x20] sm:$0xff]
    %v5088 = vld [vmem:[#allocation11 + $0x28] sm:$0xff]
    %v5089 = vld [vmem:[#allocation11 + $0x30] sm:$0xff]
    %v5090 = vld [vmem:[#allocation11 + $0x38] sm:$0xff]
    %v5091 = vld [vmem:[#allocation11 + $0x40] sm:$0xff]
    %v5092 = vld [vmem:[#allocation11 + $0x48] sm:$0xff]
    %v5093 = vld [vmem:[#allocation11 + $0x50] sm:$0xff]
    %v5094 = vld [vmem:[#allocation11 + $0x58] sm:$0xff]
    %v5095 = vld [vmem:[%s8] sm:$0x3]
    %v5097 = vperm.slane %v5095, 0
    %v5098 = vperm.slane %v5095, 1
    %v5113 = vunpack.c.l.b16 %v5083
    %v5114 = vunpack.c.h.b16 %v5083
    %v5115 = vunpack.c.l.b16 %v5084
    %v5116 = vunpack.c.h.b16 %v5084
    %v5117 = vunpack.c.l.b16 %v5085
    %v5118 = vunpack.c.h.b16 %v5085
    %v5119 = vunpack.c.l.b16 %v5086
    %v5120 = vunpack.c.h.b16 %v5086
    %v5121 = vunpack.c.l.b16 %v5087
    %v5122 = vunpack.c.h.b16 %v5087
    %v5123 = vunpack.c.l.b16 %v5088
    %v5124 = vunpack.c.h.b16 %v5088
    %v5125 = vunpack.c.l.b16 %v5089
    %v5126 = vunpack.c.h.b16 %v5089
    %v5127 = vunpack.c.l.b16 %v5090
    %v5128 = vunpack.c.h.b16 %v5090
    %v5129 = vunpack.c.l.b16 %v5091
    %v5130 = vunpack.c.h.b16 %v5091
    %v5131 = vunpack.c.l.b16 %v5092
    %v5132 = vunpack.c.h.b16 %v5092
    %v5133 = vunpack.c.l.b16 %v5093
    %v5134 = vunpack.c.h.b16 %v5093
    %v5135 = vunpack.c.l.b16 %v5094
    %v5136 = vunpack.c.h.b16 %v5094
    %v5137 = vpack.c.b16 %v5115, %v5113
    %v5138 = vpack.c.b16 %v5116, %v5114
    %v5139 = vpack.c.b16 %v5119, %v5117
    %v5140 = vpack.c.b16 %v5120, %v5118
    %v5141 = vpack.c.b16 %v5123, %v5121
    %v5142 = vpack.c.b16 %v5124, %v5122
    %v5143 = vpack.c.b16 %v5127, %v5125
    %v5144 = vpack.c.b16 %v5128, %v5126
    %v5145 = vpack.c.b16 %v5131, %v5129
    %v5146 = vpack.c.b16 %v5132, %v5130
    %v5147 = vpack.c.b16 %v5135, %v5133
    %v5148 = vpack.c.b16 %v5136, %v5134
    %v5162 = vsel %vm324, %v5082, 0
    %5164 = vmatpush.bf16.msra.mxu0 0
    %5165 = vmatpush.bf16.msra.mxu0 0
    %5166 = vmatpush.bf16.msra.mxu0 %v5147
    %5167 = vmatpush.bf16.msra.mxu0 %v5145
    %5168 = vmatpush.bf16.msra.mxu0 %v5143
    %5169 = vmatpush.bf16.msra.mxu0 %v5141
    %5170 = vmatpush.bf16.msra.mxu0 %v5139
    %5171 = vmatpush.bf16.msra.mxu0 %v5137
    %5172 = vmatmul.bf16.gmra.mxu0 %v5162
    %v5173 = vpop.f32.mrf.mxu0
    %v5174 = vadd.f32 %v5097, %v5173
    %v5175 = vpop.f32.mrf.mxu0
    %v5176 = vadd.f32 %v5097, %v5175
    %5177 = vdwg.mxu0
    %5178 = vmatpush.bf16.msra.mxu0 0
    %5179 = vmatpush.bf16.msra.mxu0 0
    %5180 = vmatpush.bf16.msra.mxu0 %v5148
    %5181 = vmatpush.bf16.msra.mxu0 %v5146
    %5182 = vmatpush.bf16.msra.mxu0 %v5144
    %5183 = vmatpush.bf16.msra.mxu0 %v5142
    %5184 = vmatpush.bf16.msra.mxu0 %v5140
    %5185 = vmatpush.bf16.msra.mxu0 %v5138
    %5186 = vmatmul.bf16.gmra.mxu0 %v5162
    %v5187 = vpop.f32.mrf.mxu0
    %v5188 = vadd.f32 %v5098, %v5187
    %v5189 = vpop.f32.mrf.mxu0
    %v5190 = vadd.f32 %v5098, %v5189
    %5191 = vdwg.mxu0
    %5192 = vxpose.xlu0.b32.start [1/16] %v5174, 128
    %5193 = vxpose.xlu0.b32.cont [2/16] 0.0, 128
    %5194 = vxpose.xlu0.b32.cont [3/16] 0.0, 128
    %5195 = vxpose.xlu0.b32.cont [4/16] 0.0, 128
    %5196 = vxpose.xlu0.b32.cont [5/16] 0.0, 128
    %5197 = vxpose.xlu0.b32.cont [6/16] 0.0, 128
    %5198 = vxpose.xlu0.b32.cont [7/16] 0.0, 128
    %5199 = vxpose.xlu0.b32.cont [8/16] 0.0, 128
    %5200 = vxpose.xlu0.b32.cont [9/16] 0.0, 128
    %5201 = vxpose.xlu0.b32.cont [10/16] 0.0, 128
    %5202 = vxpose.xlu0.b32.cont [11/16] 0.0, 128
    %5203 = vxpose.xlu0.b32.cont [12/16] 0.0, 128
    %5204 = vxpose.xlu0.b32.cont [13/16] 0.0, 128
    %5205 = vxpose.xlu0.b32.cont [14/16] 0.0, 128
    %5206 = vxpose.xlu0.b32.cont [15/16] 0.0, 128
    %5207 = vxpose.xlu0.b32.end [16/16] 0.0, 128
    %v5208 = vpop.trf.xlu0
    %v5209 = vpop.trf.xlu0
    %v5210 = vpop.trf.xlu0
    %v5211 = vpop.trf.xlu0
    %v5212 = vpop.trf.xlu0
    %v5213 = vpop.trf.xlu0
    %v5214 = vpop.trf.xlu0
    %v5215 = vpop.trf.xlu0
    %v5216 = vpop.trf.xlu0
    %v5217 = vpop.trf.xlu0
    %v5218 = vpop.trf.xlu0
    %v5219 = vpop.trf.xlu0
    %v5220 = vpop.trf.xlu0
    %v5221 = vpop.trf.xlu0
    %v5222 = vpop.trf.xlu0
    %v5223 = vpop.trf.xlu0
    %5224 = vxpose.xlu0.b32.start [1/16] %v5176, 128
    %5225 = vxpose.xlu0.b32.cont [2/16] 0.0, 128
    %5226 = vxpose.xlu0.b32.cont [3/16] 0.0, 128
    %5227 = vxpose.xlu0.b32.cont [4/16] 0.0, 128
    %5228 = vxpose.xlu0.b32.cont [5/16] 0.0, 128
    %5229 = vxpose.xlu0.b32.cont [6/16] 0.0, 128
    %5230 = vxpose.xlu0.b32.cont [7/16] 0.0, 128
    %5231 = vxpose.xlu0.b32.cont [8/16] 0.0, 128
    %5232 = vxpose.xlu0.b32.cont [9/16] 0.0, 128
    %5233 = vxpose.xlu0.b32.cont [10/16] 0.0, 128
    %5234 = vxpose.xlu0.b32.cont [11/16] 0.0, 128
    %5235 = vxpose.xlu0.b32.cont [12/16] 0.0, 128
    %5236 = vxpose.xlu0.b32.cont [13/16] 0.0, 128
    %5237 = vxpose.xlu0.b32.cont [14/16] 0.0, 128
    %5238 = vxpose.xlu0.b32.cont [15/16] 0.0, 128
    %5239 = vxpose.xlu0.b32.end [16/16] 0.0, 128
    %v5240 = vpop.trf.xlu0
    %v5241 = vpop.trf.xlu0
    %v5242 = vpop.trf.xlu0
    %v5243 = vpop.trf.xlu0
    %v5244 = vpop.trf.xlu0
    %v5245 = vpop.trf.xlu0
    %v5246 = vpop.trf.xlu0
    %v5247 = vpop.trf.xlu0
    %v5248 = vpop.trf.xlu0
    %v5249 = vpop.trf.xlu0
    %v5250 = vpop.trf.xlu0
    %v5251 = vpop.trf.xlu0
    %v5252 = vpop.trf.xlu0
    %v5253 = vpop.trf.xlu0
    %v5254 = vpop.trf.xlu0
    %v5255 = vpop.trf.xlu0
    %5256 = vxpose.xlu0.b32.start [1/16] %v5208, 128
    %5257 = vxpose.xlu0.b32.cont [2/16] 0.0, 128
    %5258 = vxpose.xlu0.b32.cont [3/16] 0.0, 128
    %5259 = vxpose.xlu0.b32.cont [4/16] 0.0, 128
    %5260 = vxpose.xlu0.b32.cont [5/16] 0.0, 128
    %5261 = vxpose.xlu0.b32.cont [6/16] 0.0, 128
    %5262 = vxpose.xlu0.b32.cont [7/16] 0.0, 128
    %5263 = vxpose.xlu0.b32.cont [8/16] 0.0, 128
    %5264 = vxpose.xlu0.b32.cont [9/16] 0.0, 128
    %5265 = vxpose.xlu0.b32.cont [10/16] 0.0, 128
    %5266 = vxpose.xlu0.b32.cont [11/16] 0.0, 128
    %5267 = vxpose.xlu0.b32.cont [12/16] 0.0, 128
    %5268 = vxpose.xlu0.b32.cont [13/16] 0.0, 128
    %5269 = vxpose.xlu0.b32.cont [14/16] 0.0, 128
    %5270 = vxpose.xlu0.b32.cont [15/16] 0.0, 128
    %5271 = vxpose.xlu0.b32.end [16/16] 0.0, 128
    %v5272 = vpop.trf.xlu0
    %v5273 = vpop.trf.xlu0
    %v5274 = vpop.trf.xlu0
    %v5275 = vpop.trf.xlu0
    %v5276 = vpop.trf.xlu0
    %v5277 = vpop.trf.xlu0
    %v5278 = vpop.trf.xlu0
    %v5279 = vpop.trf.xlu0
    %v5280 = vpop.trf.xlu0
    %v5281 = vpop.trf.xlu0
    %v5282 = vpop.trf.xlu0
    %v5283 = vpop.trf.xlu0
    %v5284 = vpop.trf.xlu0
    %v5285 = vpop.trf.xlu0
    %v5286 = vpop.trf.xlu0
    %v5287 = vpop.trf.xlu0
    %5288 = vxpose.xlu0.b32.start [1/16] %v5209, 128
    %5289 = vxpose.xlu0.b32.cont [2/16] 0.0, 128
    %5290 = vxpose.xlu0.b32.cont [3/16] 0.0, 128
    %5291 = vxpose.xlu0.b32.cont [4/16] 0.0, 128
    %5292 = vxpose.xlu0.b32.cont [5/16] 0.0, 128
    %5293 = vxpose.xlu0.b32.cont [6/16] 0.0, 128
    %5294 = vxpose.xlu0.b32.cont [7/16] 0.0, 128
    %5295 = vxpose.xlu0.b32.cont [8/16] 0.0, 128
    %5296 = vxpose.xlu0.b32.cont [9/16] 0.0, 128
    %5297 = vxpose.xlu0.b32.cont [10/16] 0.0, 128
    %5298 = vxpose.xlu0.b32.cont [11/16] 0.0, 128
    %5299 = vxpose.xlu0.b32.cont [12/16] 0.0, 128
    %5300 = vxpose.xlu0.b32.cont [13/16] 0.0, 128
    %5301 = vxpose.xlu0.b32.cont [14/16] 0.0, 128
    %5302 = vxpose.xlu0.b32.cont [15/16] 0.0, 128
    %5303 = vxpose.xlu0.b32.end [16/16] 0.0, 128
    %v5304 = vpop.trf.xlu0
    %v5305 = vpop.trf.xlu0
    %v5306 = vpop.trf.xlu0
    %v5307 = vpop.trf.xlu0
    %v5308 = vpop.trf.xlu0
    %v5309 = vpop.trf.xlu0
    %v5310 = vpop.trf.xlu0
    %v5311 = vpop.trf.xlu0
    %v5312 = vpop.trf.xlu0
    %v5313 = vpop.trf.xlu0
    %v5314 = vpop.trf.xlu0
    %v5315 = vpop.trf.xlu0
    %v5316 = vpop.trf.xlu0
    %v5317 = vpop.trf.xlu0
    %v5318 = vpop.trf.xlu0
    %v5319 = vpop.trf.xlu0
    %5320 = vxpose.xlu0.b32.start [1/16] %v5210, 128
    %5321 = vxpose.xlu0.b32.cont [2/16] 0.0, 128
    %5322 = vxpose.xlu0.b32.cont [3/16] 0.0, 128
    %5323 = vxpose.xlu0.b32.cont [4/16] 0.0, 128
    %5324 = vxpose.xlu0.b32.cont [5/16] 0.0, 128
    %5325 = vxpose.xlu0.b32.cont [6/16] 0.0, 128
    %5326 = vxpose.xlu0.b32.cont [7/16] 0.0, 128
    %5327 = vxpose.xlu0.b32.cont [8/16] 0.0, 128
    %5328 = vxpose.xlu0.b32.cont [9/16] 0.0, 128
    %5329 = vxpose.xlu0.b32.cont [10/16] 0.0, 128
    %5330 = vxpose.xlu0.b32.cont [11/16] 0.0, 128
    %5331 = vxpose.xlu0.b32.cont [12/16] 0.0, 128
    %5332 = vxpose.xlu0.b32.cont [13/16] 0.0, 128
    %5333 = vxpose.xlu0.b32.cont [14/16] 0.0, 128
    %5334 = vxpose.xlu0.b32.cont [15/16] 0.0, 128
    %5335 = vxpose.xlu0.b32.end [16/16] 0.0, 128
    %v5336 = vpop.trf.xlu0
    %v5337 = vpop.trf.xlu0
    %v5338 = vpop.trf.xlu0
    %v5339 = vpop.trf.xlu0
    %v5340 = vpop.trf.xlu0
    %v5341 = vpop.trf.xlu0
    %v5342 = vpop.trf.xlu0
    %v5343 = vpop.trf.xlu0
    %v5344 = vpop.trf.xlu0
    %v5345 = vpop.trf.xlu0
    %v5346 = vpop.trf.xlu0
    %v5347 = vpop.trf.xlu0
    %v5348 = vpop.trf.xlu0
    %v5349 = vpop.trf.xlu0
    %v5350 = vpop.trf.xlu0
    %v5351 = vpop.trf.xlu0
    %5352 = vxpose.xlu0.b32.start [1/16] %v5211, 128
    %5353 = vxpose.xlu0.b32.cont [2/16] 0.0, 128
    %5354 = vxpose.xlu0.b32.cont [3/16] 0.0, 128
    %5355 = vxpose.xlu0.b32.cont [4/16] 0.0, 128
    %5356 = vxpose.xlu0.b32.cont [5/16] 0.0, 128
    %5357 = vxpose.xlu0.b32.cont [6/16] 0.0, 128
    %5358 = vxpose.xlu0.b32.cont [7/16] 0.0, 128
    %5359 = vxpose.xlu0.b32.cont [8/16] 0.0, 128
    %5360 = vxpose.xlu0.b32.cont [9/16] 0.0, 128
    %5361 = vxpose.xlu0.b32.cont [10/16] 0.0, 128
    %5362 = vxpose.xlu0.b32.cont [11/16] 0.0, 128
    %5363 = vxpose.xlu0.b32.cont [12/16] 0.0, 128
    %5364 = vxpose.xlu0.b32.cont [13/16] 0.0, 128
    %5365 = vxpose.xlu0.b32.cont [14/16] 0.0, 128
    %5366 = vxpose.xlu0.b32.cont [15/16] 0.0, 128
    %5367 = vxpose.xlu0.b32.end [16/16] 0.0, 128
    %v5368 = vpop.trf.xlu0
    %v5369 = vpop.trf.xlu0
    %v5370 = vpop.trf.xlu0
    %v5371 = vpop.trf.xlu0
    %v5372 = vpop.trf.xlu0
    %v5373 = vpop.trf.xlu0
    %v5374 = vpop.trf.xlu0
    %v5375 = vpop.trf.xlu0
    %v5376 = vpop.trf.xlu0
    %v5377 = vpop.trf.xlu0
    %v5378 = vpop.trf.xlu0
    %v5379 = vpop.trf.xlu0
    %v5380 = vpop.trf.xlu0
    %v5381 = vpop.trf.xlu0
    %v5382 = vpop.trf.xlu0
    %v5383 = vpop.trf.xlu0
    %5384 = vxpose.xlu0.b32.start [1/16] %v5212, 128
    %5385 = vxpose.xlu0.b32.cont [2/16] 0.0, 128
    %5386 = vxpose.xlu0.b32.cont [3/16] 0.0, 128
    %5387 = vxpose.xlu0.b32.cont [4/16] 0.0, 128
    %5388 = vxpose.xlu0.b32.cont [5/16] 0.0, 128
    %5389 = vxpose.xlu0.b32.cont [6/16] 0.0, 128
    %5390 = vxpose.xlu0.b32.cont [7/16] 0.0, 128
    %5391 = vxpose.xlu0.b32.cont [8/16] 0.0, 128
    %5392 = vxpose.xlu0.b32.cont [9/16] 0.0, 128
    %5393 = vxpose.xlu0.b32.cont [10/16] 0.0, 128
    %5394 = vxpose.xlu0.b32.cont [11/16] 0.0, 128
    %5395 = vxpose.xlu0.b32.cont [12/16] 0.0, 128
    %5396 = vxpose.xlu0.b32.cont [13/16] 0.0, 128
    %5397 = vxpose.xlu0.b32.cont [14/16] 0.0, 128
    %5398 = vxpose.xlu0.b32.cont [15/16] 0.0, 128
    %5399 = vxpose.xlu0.b32.end [16/16] 0.0, 128
    %v5400 = vpop.trf.xlu0
    %v5401 = vpop.trf.xlu0
    %v5402 = vpop.trf.xlu0
    %v5403 = vpop.trf.xlu0
    %v5404 = vpop.trf.xlu0
    %v5405 = vpop.trf.xlu0
    %v5406 = vpop.trf.xlu0
    %v5407 = vpop.trf.xlu0
    %v5408 = vpop.trf.xlu0
    %v5409 = vpop.trf.xlu0
    %v5410 = vpop.trf.xlu0
    %v5411 = vpop.trf.xlu0
    %v5412 = vpop.trf.xlu0
    %v5413 = vpop.trf.xlu0
    %v5414 = vpop.trf.xlu0
    %v5415 = vpop.trf.xlu0
    %5416 = vxpose.xlu0.b32.start [1/16] %v5213, 128
    %5417 = vxpose.xlu0.b32.cont [2/16] 0.0, 128
    %5418 = vxpose.xlu0.b32.cont [3/16] 0.0, 128
    %5419 = vxpose.xlu0.b32.cont [4/16] 0.0, 128
    %5420 = vxpose.xlu0.b32.cont [5/16] 0.0, 128
    %5421 = vxpose.xlu0.b32.cont [6/16] 0.0, 128
    %5422 = vxpose.xlu0.b32.cont [7/16] 0.0, 128
    %5423 = vxpose.xlu0.b32.cont [8/16] 0.0, 128
    %5424 = vxpose.xlu0.b32.cont [9/16] 0.0, 128
    %5425 = vxpose.xlu0.b32.cont [10/16] 0.0, 128
    %5426 = vxpose.xlu0.b32.cont [11/16] 0.0, 128
    %5427 = vxpose.xlu0.b32.cont [12/16] 0.0, 128
    %5428 = vxpose.xlu0.b32.cont [13/16] 0.0, 128
    %5429 = vxpose.xlu0.b32.cont [14/16] 0.0, 128
    %5430 = vxpose.xlu0.b32.cont [15/16] 0.0, 128
    %5431 = vxpose.xlu0.b32.end [16/16] 0.0, 128
    %v5432 = vpop.trf.xlu0
    %v5433 = vpop.trf.xlu0
    %v5434 = vpop.trf.xlu0
    %v5435 = vpop.trf.xlu0
    %v5436 = vpop.trf.xlu0
    %v5437 = vpop.trf.xlu0
    %v5438 = vpop.trf.xlu0
    %v5439 = vpop.trf.xlu0
    %v5440 = vpop.trf.xlu0
    %v5441 = vpop.trf.xlu0
    %v5442 = vpop.trf.xlu0
    %v5443 = vpop.trf.xlu0
    %v5444 = vpop.trf.xlu0
    %v5445 = vpop.trf.xlu0
    %v5446 = vpop.trf.xlu0
    %v5447 = vpop.trf.xlu0
    %5448 = vxpose.xlu0.b32.start [1/16] %v5214, 128
    %5449 = vxpose.xlu0.b32.cont [2/16] 0.0, 128
    %5450 = vxpose.xlu0.b32.cont [3/16] 0.0, 128
    %5451 = vxpose.xlu0.b32.cont [4/16] 0.0, 128
    %5452 = vxpose.xlu0.b32.cont [5/16] 0.0, 128
    %5453 = vxpose.xlu0.b32.cont [6/16] 0.0, 128
    %5454 = vxpose.xlu0.b32.cont [7/16] 0.0, 128
    %5455 = vxpose.xlu0.b32.cont [8/16] 0.0, 128
    %5456 = vxpose.xlu0.b32.cont [9/16] 0.0, 128
    %5457 = vxpose.xlu0.b32.cont [10/16] 0.0, 128
    %5458 = vxpose.xlu0.b32.cont [11/16] 0.0, 128
    %5459 = vxpose.xlu0.b32.cont [12/16] 0.0, 128
    %5460 = vxpose.xlu0.b32.cont [13/16] 0.0, 128
    %5461 = vxpose.xlu0.b32.cont [14/16] 0.0, 128
    %5462 = vxpose.xlu0.b32.cont [15/16] 0.0, 128
    %5463 = vxpose.xlu0.b32.end [16/16] 0.0, 128
    %v5464 = vpop.trf.xlu0
    %v5465 = vpop.trf.xlu0
    %v5466 = vpop.trf.xlu0
    %v5467 = vpop.trf.xlu0
    %v5468 = vpop.trf.xlu0
    %v5469 = vpop.trf.xlu0
    %v5470 = vpop.trf.xlu0
    %v5471 = vpop.trf.xlu0
    %v5472 = vpop.trf.xlu0
    %v5473 = vpop.trf.xlu0
    %v5474 = vpop.trf.xlu0
    %v5475 = vpop.trf.xlu0
    %v5476 = vpop.trf.xlu0
    %v5477 = vpop.trf.xlu0
    %v5478 = vpop.trf.xlu0
    %v5479 = vpop.trf.xlu0
    %5480 = vxpose.xlu0.b32.start [1/16] %v5215, 128
    %5481 = vxpose.xlu0.b32.cont [2/16] 0.0, 128
    %5482 = vxpose.xlu0.b32.cont [3/16] 0.0, 128
    %5483 = vxpose.xlu0.b32.cont [4/16] 0.0, 128
    %5484 = vxpose.xlu0.b32.cont [5/16] 0.0, 128
    %5485 = vxpose.xlu0.b32.cont [6/16] 0.0, 128
    %5486 = vxpose.xlu0.b32.cont [7/16] 0.0, 128
    %5487 = vxpose.xlu0.b32.cont [8/16] 0.0, 128
    %5488 = vxpose.xlu0.b32.cont [9/16] 0.0, 128
    %5489 = vxpose.xlu0.b32.cont [10/16] 0.0, 128
    %5490 = vxpose.xlu0.b32.cont [11/16] 0.0, 128
    %5491 = vxpose.xlu0.b32.cont [12/16] 0.0, 128
    %5492 = vxpose.xlu0.b32.cont [13/16] 0.0, 128
    %5493 = vxpose.xlu0.b32.cont [14/16] 0.0, 128
    %5494 = vxpose.xlu0.b32.cont [15/16] 0.0, 128
    %5495 = vxpose.xlu0.b32.end [16/16] 0.0, 128
    %v5496 = vpop.trf.xlu0
    %v5497 = vpop.trf.xlu0
    %v5498 = vpop.trf.xlu0
    %v5499 = vpop.trf.xlu0
    %v5500 = vpop.trf.xlu0
    %v5501 = vpop.trf.xlu0
    %v5502 = vpop.trf.xlu0
    %v5503 = vpop.trf.xlu0
    %v5504 = vpop.trf.xlu0
    %v5505 = vpop.trf.xlu0
    %v5506 = vpop.trf.xlu0
    %v5507 = vpop.trf.xlu0
    %v5508 = vpop.trf.xlu0
    %v5509 = vpop.trf.xlu0
    %v5510 = vpop.trf.xlu0
    %v5511 = vpop.trf.xlu0
    %5512 = vxpose.xlu0.b32.start [1/16] %v5240, 128
    %5513 = vxpose.xlu0.b32.cont [2/16] 0.0, 128
    %5514 = vxpose.xlu0.b32.cont [3/16] 0.0, 128
    %5515 = vxpose.xlu0.b32.cont [4/16] 0.0, 128
    %5516 = vxpose.xlu0.b32.cont [5/16] 0.0, 128
    %5517 = vxpose.xlu0.b32.cont [6/16] 0.0, 128
    %5518 = vxpose.xlu0.b32.cont [7/16] 0.0, 128
    %5519 = vxpose.xlu0.b32.cont [8/16] 0.0, 128
    %5520 = vxpose.xlu0.b32.cont [9/16] 0.0, 128
    %5521 = vxpose.xlu0.b32.cont [10/16] 0.0, 128
    %5522 = vxpose.xlu0.b32.cont [11/16] 0.0, 128
    %5523 = vxpose.xlu0.b32.cont [12/16] 0.0, 128
    %5524 = vxpose.xlu0.b32.cont [13/16] 0.0, 128
    %5525 = vxpose.xlu0.b32.cont [14/16] 0.0, 128
    %5526 = vxpose.xlu0.b32.cont [15/16] 0.0, 128
    %5527 = vxpose.xlu0.b32.end [16/16] 0.0, 128
    %v5528 = vpop.trf.xlu0
    %v5529 = vpop.trf.xlu0
    %v5530 = vpop.trf.xlu0
    %v5531 = vpop.trf.xlu0
    %v5532 = vpop.trf.xlu0
    %v5533 = vpop.trf.xlu0
    %v5534 = vpop.trf.xlu0
    %v5535 = vpop.trf.xlu0
    %v5536 = vpop.trf.xlu0
    %v5537 = vpop.trf.xlu0
    %v5538 = vpop.trf.xlu0
    %v5539 = vpop.trf.xlu0
    %v5540 = vpop.trf.xlu0
    %v5541 = vpop.trf.xlu0
    %v5542 = vpop.trf.xlu0
    %v5543 = vpop.trf.xlu0
    %5544 = vxpose.xlu0.b32.start [1/16] %v5241, 128
    %5545 = vxpose.xlu0.b32.cont [2/16] 0.0, 128
    %5546 = vxpose.xlu0.b32.cont [3/16] 0.0, 128
    %5547 = vxpose.xlu0.b32.cont [4/16] 0.0, 128
    %5548 = vxpose.xlu0.b32.cont [5/16] 0.0, 128
    %5549 = vxpose.xlu0.b32.cont [6/16] 0.0, 128
    %5550 = vxpose.xlu0.b32.cont [7/16] 0.0, 128
    %5551 = vxpose.xlu0.b32.cont [8/16] 0.0, 128
    %5552 = vxpose.xlu0.b32.cont [9/16] 0.0, 128
    %5553 = vxpose.xlu0.b32.cont [10/16] 0.0, 128
    %5554 = vxpose.xlu0.b32.cont [11/16] 0.0, 128
    %5555 = vxpose.xlu0.b32.cont [12/16] 0.0, 128
    %5556 = vxpose.xlu0.b32.cont [13/16] 0.0, 128
    %5557 = vxpose.xlu0.b32.cont [14/16] 0.0, 128
    %5558 = vxpose.xlu0.b32.cont [15/16] 0.0, 128
    %5559 = vxpose.xlu0.b32.end [16/16] 0.0, 128
    %v5560 = vpop.trf.xlu0
    %v5561 = vpop.trf.xlu0
    %v5562 = vpop.trf.xlu0
    %v5563 = vpop.trf.xlu0
    %v5564 = vpop.trf.xlu0
    %v5565 = vpop.trf.xlu0
    %v5566 = vpop.trf.xlu0
    %v5567 = vpop.trf.xlu0
    %v5568 = vpop.trf.xlu0
    %v5569 = vpop.trf.xlu0
    %v5570 = vpop.trf.xlu0
    %v5571 = vpop.trf.xlu0
    %v5572 = vpop.trf.xlu0
    %v5573 = vpop.trf.xlu0
    %v5574 = vpop.trf.xlu0
    %v5575 = vpop.trf.xlu0
    %5576 = vxpose.xlu0.b32.start [1/16] %v5242, 128
    %5577 = vxpose.xlu0.b32.cont [2/16] 0.0, 128
    %5578 = vxpose.xlu0.b32.cont [3/16] 0.0, 128
    %5579 = vxpose.xlu0.b32.cont [4/16] 0.0, 128
    %5580 = vxpose.xlu0.b32.cont [5/16] 0.0, 128
    %5581 = vxpose.xlu0.b32.cont [6/16] 0.0, 128
    %5582 = vxpose.xlu0.b32.cont [7/16] 0.0, 128
    %5583 = vxpose.xlu0.b32.cont [8/16] 0.0, 128
    %5584 = vxpose.xlu0.b32.cont [9/16] 0.0, 128
    %5585 = vxpose.xlu0.b32.cont [10/16] 0.0, 128
    %5586 = vxpose.xlu0.b32.cont [11/16] 0.0, 128
    %5587 = vxpose.xlu0.b32.cont [12/16] 0.0, 128
    %5588 = vxpose.xlu0.b32.cont [13/16] 0.0, 128
    %5589 = vxpose.xlu0.b32.cont [14/16] 0.0, 128
    %5590 = vxpose.xlu0.b32.cont [15/16] 0.0, 128
    %5591 = vxpose.xlu0.b32.end [16/16] 0.0, 128
    %v5592 = vpop.trf.xlu0
    %v5593 = vpop.trf.xlu0
    %v5594 = vpop.trf.xlu0
    %v5595 = vpop.trf.xlu0
    %v5596 = vpop.trf.xlu0
    %v5597 = vpop.trf.xlu0
    %v5598 = vpop.trf.xlu0
    %v5599 = vpop.trf.xlu0
    %v5600 = vpop.trf.xlu0
    %v5601 = vpop.trf.xlu0
    %v5602 = vpop.trf.xlu0
    %v5603 = vpop.trf.xlu0
    %v5604 = vpop.trf.xlu0
    %v5605 = vpop.trf.xlu0
    %v5606 = vpop.trf.xlu0
    %v5607 = vpop.trf.xlu0
    %5608 = vxpose.xlu0.b32.start [1/16] %v5243, 128
    %5609 = vxpose.xlu0.b32.cont [2/16] 0.0, 128
    %5610 = vxpose.xlu0.b32.cont [3/16] 0.0, 128
    %5611 = vxpose.xlu0.b32.cont [4/16] 0.0, 128
    %5612 = vxpose.xlu0.b32.cont [5/16] 0.0, 128
    %5613 = vxpose.xlu0.b32.cont [6/16] 0.0, 128
    %5614 = vxpose.xlu0.b32.cont [7/16] 0.0, 128
    %5615 = vxpose.xlu0.b32.cont [8/16] 0.0, 128
    %5616 = vxpose.xlu0.b32.cont [9/16] 0.0, 128
    %5617 = vxpose.xlu0.b32.cont [10/16] 0.0, 128
    %5618 = vxpose.xlu0.b32.cont [11/16] 0.0, 128
    %5619 = vxpose.xlu0.b32.cont [12/16] 0.0, 128
    %5620 = vxpose.xlu0.b32.cont [13/16] 0.0, 128
    %5621 = vxpose.xlu0.b32.cont [14/16] 0.0, 128
    %5622 = vxpose.xlu0.b32.cont [15/16] 0.0, 128
    %5623 = vxpose.xlu0.b32.end [16/16] 0.0, 128
    %v5624 = vpop.trf.xlu0
    %v5625 = vpop.trf.xlu0
    %v5626 = vpop.trf.xlu0
    %v5627 = vpop.trf.xlu0
    %v5628 = vpop.trf.xlu0
    %v5629 = vpop.trf.xlu0
    %v5630 = vpop.trf.xlu0
    %v5631 = vpop.trf.xlu0
    %v5632 = vpop.trf.xlu0
    %v5633 = vpop.trf.xlu0
    %v5634 = vpop.trf.xlu0
    %v5635 = vpop.trf.xlu0
    %v5636 = vpop.trf.xlu0
    %v5637 = vpop.trf.xlu0
    %v5638 = vpop.trf.xlu0
    %v5639 = vpop.trf.xlu0
    %5640 = vxpose.xlu0.b32.start [1/16] %v5244, 128
    %5641 = vxpose.xlu0.b32.cont [2/16] 0.0, 128
    %5642 = vxpose.xlu0.b32.cont [3/16] 0.0, 128
    %5643 = vxpose.xlu0.b32.cont [4/16] 0.0, 128
    %5644 = vxpose.xlu0.b32.cont [5/16] 0.0, 128
    %5645 = vxpose.xlu0.b32.cont [6/16] 0.0, 128
    %5646 = vxpose.xlu0.b32.cont [7/16] 0.0, 128
    %5647 = vxpose.xlu0.b32.cont [8/16] 0.0, 128
    %5648 = vxpose.xlu0.b32.cont [9/16] 0.0, 128
    %5649 = vxpose.xlu0.b32.cont [10/16] 0.0, 128
    %5650 = vxpose.xlu0.b32.cont [11/16] 0.0, 128
    %5651 = vxpose.xlu0.b32.cont [12/16] 0.0, 128
    %5652 = vxpose.xlu0.b32.cont [13/16] 0.0, 128
    %5653 = vxpose.xlu0.b32.cont [14/16] 0.0, 128
    %5654 = vxpose.xlu0.b32.cont [15/16] 0.0, 128
    %5655 = vxpose.xlu0.b32.end [16/16] 0.0, 128
    %v5656 = vpop.trf.xlu0
    %v5657 = vpop.trf.xlu0
    %v5658 = vpop.trf.xlu0
    %v5659 = vpop.trf.xlu0
    %v5660 = vpop.trf.xlu0
    %v5661 = vpop.trf.xlu0
    %v5662 = vpop.trf.xlu0
    %v5663 = vpop.trf.xlu0
    %v5664 = vpop.trf.xlu0
    %v5665 = vpop.trf.xlu0
    %v5666 = vpop.trf.xlu0
    %v5667 = vpop.trf.xlu0
    %v5668 = vpop.trf.xlu0
    %v5669 = vpop.trf.xlu0
    %v5670 = vpop.trf.xlu0
    %v5671 = vpop.trf.xlu0
    %5672 = vxpose.xlu0.b32.start [1/16] %v5245, 128
    %5673 = vxpose.xlu0.b32.cont [2/16] 0.0, 128
    %5674 = vxpose.xlu0.b32.cont [3/16] 0.0, 128
    %5675 = vxpose.xlu0.b32.cont [4/16] 0.0, 128
    %5676 = vxpose.xlu0.b32.cont [5/16] 0.0, 128
    %5677 = vxpose.xlu0.b32.cont [6/16] 0.0, 128
    %5678 = vxpose.xlu0.b32.cont [7/16] 0.0, 128
    %5679 = vxpose.xlu0.b32.cont [8/16] 0.0, 128
    %5680 = vxpose.xlu0.b32.cont [9/16] 0.0, 128
    %5681 = vxpose.xlu0.b32.cont [10/16] 0.0, 128
    %5682 = vxpose.xlu0.b32.cont [11/16] 0.0, 128
    %5683 = vxpose.xlu0.b32.cont [12/16] 0.0, 128
    %5684 = vxpose.xlu0.b32.cont [13/16] 0.0, 128
    %5685 = vxpose.xlu0.b32.cont [14/16] 0.0, 128
    %5686 = vxpose.xlu0.b32.cont [15/16] 0.0, 128
    %5687 = vxpose.xlu0.b32.end [16/16] 0.0, 128
    %v5688 = vpop.trf.xlu0
    %v5689 = vpop.trf.xlu0
    %v5690 = vpop.trf.xlu0
    %v5691 = vpop.trf.xlu0
    %v5692 = vpop.trf.xlu0
    %v5693 = vpop.trf.xlu0
    %v5694 = vpop.trf.xlu0
    %v5695 = vpop.trf.xlu0
    %v5696 = vpop.trf.xlu0
    %v5697 = vpop.trf.xlu0
    %v5698 = vpop.trf.xlu0
    %v5699 = vpop.trf.xlu0
    %v5700 = vpop.trf.xlu0
    %v5701 = vpop.trf.xlu0
    %v5702 = vpop.trf.xlu0
    %v5703 = vpop.trf.xlu0
    %5704 = vxpose.xlu0.b32.start [1/16] %v5246, 128
    %5705 = vxpose.xlu0.b32.cont [2/16] 0.0, 128
    %5706 = vxpose.xlu0.b32.cont [3/16] 0.0, 128
    %5707 = vxpose.xlu0.b32.cont [4/16] 0.0, 128
    %5708 = vxpose.xlu0.b32.cont [5/16] 0.0, 128
    %5709 = vxpose.xlu0.b32.cont [6/16] 0.0, 128
    %5710 = vxpose.xlu0.b32.cont [7/16] 0.0, 128
    %5711 = vxpose.xlu0.b32.cont [8/16] 0.0, 128
    %5712 = vxpose.xlu0.b32.cont [9/16] 0.0, 128
    %5713 = vxpose.xlu0.b32.cont [10/16] 0.0, 128
    %5714 = vxpose.xlu0.b32.cont [11/16] 0.0, 128
    %5715 = vxpose.xlu0.b32.cont [12/16] 0.0, 128
    %5716 = vxpose.xlu0.b32.cont [13/16] 0.0, 128
    %5717 = vxpose.xlu0.b32.cont [14/16] 0.0, 128
    %5718 = vxpose.xlu0.b32.cont [15/16] 0.0, 128
    %5719 = vxpose.xlu0.b32.end [16/16] 0.0, 128
    %v5720 = vpop.trf.xlu0
    %v5721 = vpop.trf.xlu0
    %v5722 = vpop.trf.xlu0
    %v5723 = vpop.trf.xlu0
    %v5724 = vpop.trf.xlu0
    %v5725 = vpop.trf.xlu0
    %v5726 = vpop.trf.xlu0
    %v5727 = vpop.trf.xlu0
    %v5728 = vpop.trf.xlu0
    %v5729 = vpop.trf.xlu0
    %v5730 = vpop.trf.xlu0
    %v5731 = vpop.trf.xlu0
    %v5732 = vpop.trf.xlu0
    %v5733 = vpop.trf.xlu0
    %v5734 = vpop.trf.xlu0
    %v5735 = vpop.trf.xlu0
    %5736 = vxpose.xlu0.b32.start [1/16] %v5247, 128
    %5737 = vxpose.xlu0.b32.cont [2/16] 0.0, 128
    %5738 = vxpose.xlu0.b32.cont [3/16] 0.0, 128
    %5739 = vxpose.xlu0.b32.cont [4/16] 0.0, 128
    %5740 = vxpose.xlu0.b32.cont [5/16] 0.0, 128
    %5741 = vxpose.xlu0.b32.cont [6/16] 0.0, 128
    %5742 = vxpose.xlu0.b32.cont [7/16] 0.0, 128
    %5743 = vxpose.xlu0.b32.cont [8/16] 0.0, 128
    %5744 = vxpose.xlu0.b32.cont [9/16] 0.0, 128
    %5745 = vxpose.xlu0.b32.cont [10/16] 0.0, 128
    %5746 = vxpose.xlu0.b32.cont [11/16] 0.0, 128
    %5747 = vxpose.xlu0.b32.cont [12/16] 0.0, 128
    %5748 = vxpose.xlu0.b32.cont [13/16] 0.0, 128
    %5749 = vxpose.xlu0.b32.cont [14/16] 0.0, 128
    %5750 = vxpose.xlu0.b32.cont [15/16] 0.0, 128
    %5751 = vxpose.xlu0.b32.end [16/16] 0.0, 128
    %v5752 = vpop.trf.xlu0
    %v5753 = vpop.trf.xlu0
    %v5754 = vpop.trf.xlu0
    %v5755 = vpop.trf.xlu0
    %v5756 = vpop.trf.xlu0
    %v5757 = vpop.trf.xlu0
    %v5758 = vpop.trf.xlu0
    %v5759 = vpop.trf.xlu0
    %v5760 = vpop.trf.xlu0
    %v5761 = vpop.trf.xlu0
    %v5762 = vpop.trf.xlu0
    %v5763 = vpop.trf.xlu0
    %v5764 = vpop.trf.xlu0
    %v5765 = vpop.trf.xlu0
    %v5766 = vpop.trf.xlu0
    %v5767 = vpop.trf.xlu0
    %v5768 = vpack.c.bf16 %v5272, %v5272
    %v5769 = vpack.c.bf16 %v5304, %v5304
    %v5770 = vpack.c.bf16 %v5336, %v5336
    %v5771 = vpack.c.bf16 %v5368, %v5368
    %v5772 = vpack.c.bf16 %v5400, %v5400
    %v5773 = vpack.c.bf16 %v5432, %v5432
    %v5774 = vpack.c.bf16 %v5464, %v5464
    %v5775 = vpack.c.bf16 %v5496, %v5496
    %v5776 = vpack.c.bf16 %v5528, %v5528
    %v5777 = vpack.c.bf16 %v5560, %v5560
    %v5778 = vpack.c.bf16 %v5592, %v5592
    %v5779 = vpack.c.bf16 %v5624, %v5624
    %v5780 = vpack.c.bf16 %v5656, %v5656
    %v5781 = vpack.c.bf16 %v5688, %v5688
    %v5782 = vpack.c.bf16 %v5720, %v5720
    %v5783 = vpack.c.bf16 %v5752, %v5752
    %5786 = vrot.lane.b32.xlu0 %v5174, 64
    %v5787 = vpop.permute.xlu0 %5786
    %5788 = vrot.lane.b32.xlu0 %v5176, 64
    %v5789 = vpop.permute.xlu0 %5788
    %5792 = vxpose.xlu0.b32.start [1/16] %v5787, 128
    %5793 = vxpose.xlu0.b32.cont [2/16] 0.0, 128
    %5794 = vxpose.xlu0.b32.cont [3/16] 0.0, 128
    %5795 = vxpose.xlu0.b32.cont [4/16] 0.0, 128
    %5796 = vxpose.xlu0.b32.cont [5/16] 0.0, 128
    %5797 = vxpose.xlu0.b32.cont [6/16] 0.0, 128
    %5798 = vxpose.xlu0.b32.cont [7/16] 0.0, 128
    %5799 = vxpose.xlu0.b32.cont [8/16] 0.0, 128
    %5800 = vxpose.xlu0.b32.cont [9/16] 0.0, 128
    %5801 = vxpose.xlu0.b32.cont [10/16] 0.0, 128
    %5802 = vxpose.xlu0.b32.cont [11/16] 0.0, 128
    %5803 = vxpose.xlu0.b32.cont [12/16] 0.0, 128
    %5804 = vxpose.xlu0.b32.cont [13/16] 0.0, 128
    %5805 = vxpose.xlu0.b32.cont [14/16] 0.0, 128
    %5806 = vxpose.xlu0.b32.cont [15/16] 0.0, 128
    %5807 = vxpose.xlu0.b32.end [16/16] 0.0, 128
    %v5808 = vpop.trf.xlu0
    %v5809 = vpop.trf.xlu0
    %v5810 = vpop.trf.xlu0
    %v5811 = vpop.trf.xlu0
    %v5812 = vpop.trf.xlu0
    %v5813 = vpop.trf.xlu0
    %v5814 = vpop.trf.xlu0
    %v5815 = vpop.trf.xlu0
    %v5816 = vpop.trf.xlu0
    %v5817 = vpop.trf.xlu0
    %v5818 = vpop.trf.xlu0
    %v5819 = vpop.trf.xlu0
    %v5820 = vpop.trf.xlu0
    %v5821 = vpop.trf.xlu0
    %v5822 = vpop.trf.xlu0
    %v5823 = vpop.trf.xlu0
    %5824 = vxpose.xlu0.b32.start [1/16] %v5789, 128
    %5825 = vxpose.xlu0.b32.cont [2/16] 0.0, 128
    %5826 = vxpose.xlu0.b32.cont [3/16] 0.0, 128
    %5827 = vxpose.xlu0.b32.cont [4/16] 0.0, 128
    %5828 = vxpose.xlu0.b32.cont [5/16] 0.0, 128
    %5829 = vxpose.xlu0.b32.cont [6/16] 0.0, 128
    %5830 = vxpose.xlu0.b32.cont [7/16] 0.0, 128
    %5831 = vxpose.xlu0.b32.cont [8/16] 0.0, 128
    %5832 = vxpose.xlu0.b32.cont [9/16] 0.0, 128
    %5833 = vxpose.xlu0.b32.cont [10/16] 0.0, 128
    %5834 = vxpose.xlu0.b32.cont [11/16] 0.0, 128
    %5835 = vxpose.xlu0.b32.cont [12/16] 0.0, 128
    %5836 = vxpose.xlu0.b32.cont [13/16] 0.0, 128
    %5837 = vxpose.xlu0.b32.cont [14/16] 0.0, 128
    %5838 = vxpose.xlu0.b32.cont [15/16] 0.0, 128
    %5839 = vxpose.xlu0.b32.end [16/16] 0.0, 128
    %v5840 = vpop.trf.xlu0
    %v5841 = vpop.trf.xlu0
    %v5842 = vpop.trf.xlu0
    %v5843 = vpop.trf.xlu0
    %v5844 = vpop.trf.xlu0
    %v5845 = vpop.trf.xlu0
    %v5846 = vpop.trf.xlu0
    %v5847 = vpop.trf.xlu0
    %v5848 = vpop.trf.xlu0
    %v5849 = vpop.trf.xlu0
    %v5850 = vpop.trf.xlu0
    %v5851 = vpop.trf.xlu0
    %v5852 = vpop.trf.xlu0
    %v5853 = vpop.trf.xlu0
    %v5854 = vpop.trf.xlu0
    %v5855 = vpop.trf.xlu0
    %5856 = vxpose.xlu0.b32.start [1/16] %v5808, 128
    %5857 = vxpose.xlu0.b32.cont [2/16] 0.0, 128
    %5858 = vxpose.xlu0.b32.cont [3/16] 0.0, 128
    %5859 = vxpose.xlu0.b32.cont [4/16] 0.0, 128
    %5860 = vxpose.xlu0.b32.cont [5/16] 0.0, 128
    %5861 = vxpose.xlu0.b32.cont [6/16] 0.0, 128
    %5862 = vxpose.xlu0.b32.cont [7/16] 0.0, 128
    %5863 = vxpose.xlu0.b32.cont [8/16] 0.0, 128
    %5864 = vxpose.xlu0.b32.cont [9/16] 0.0, 128
    %5865 = vxpose.xlu0.b32.cont [10/16] 0.0, 128
    %5866 = vxpose.xlu0.b32.cont [11/16] 0.0, 128
    %5867 = vxpose.xlu0.b32.cont [12/16] 0.0, 128
    %5868 = vxpose.xlu0.b32.cont [13/16] 0.0, 128
    %5869 = vxpose.xlu0.b32.cont [14/16] 0.0, 128
    %5870 = vxpose.xlu0.b32.cont [15/16] 0.0, 128
    %5871 = vxpose.xlu0.b32.end [16/16] 0.0, 128
    %v5872 = vpop.trf.xlu0
    %v5873 = vpop.trf.xlu0
    %v5874 = vpop.trf.xlu0
    %v5875 = vpop.trf.xlu0
    %v5876 = vpop.trf.xlu0
    %v5877 = vpop.trf.xlu0
    %v5878 = vpop.trf.xlu0
    %v5879 = vpop.trf.xlu0
    %v5880 = vpop.trf.xlu0
    %v5881 = vpop.trf.xlu0
    %v5882 = vpop.trf.xlu0
    %v5883 = vpop.trf.xlu0
    %v5884 = vpop.trf.xlu0
    %v5885 = vpop.trf.xlu0
    %v5886 = vpop.trf.xlu0
    %v5887 = vpop.trf.xlu0
    %5888 = vxpose.xlu0.b32.start [1/16] %v5809, 128
    %5889 = vxpose.xlu0.b32.cont [2/16] 0.0, 128
    %5890 = vxpose.xlu0.b32.cont [3/16] 0.0, 128
    %5891 = vxpose.xlu0.b32.cont [4/16] 0.0, 128
    %5892 = vxpose.xlu0.b32.cont [5/16] 0.0, 128
    %5893 = vxpose.xlu0.b32.cont [6/16] 0.0, 128
    %5894 = vxpose.xlu0.b32.cont [7/16] 0.0, 128
    %5895 = vxpose.xlu0.b32.cont [8/16] 0.0, 128
    %5896 = vxpose.xlu0.b32.cont [9/16] 0.0, 128
    %5897 = vxpose.xlu0.b32.cont [10/16] 0.0, 128
    %5898 = vxpose.xlu0.b32.cont [11/16] 0.0, 128
    %5899 = vxpose.xlu0.b32.cont [12/16] 0.0, 128
    %5900 = vxpose.xlu0.b32.cont [13/16] 0.0, 128
    %5901 = vxpose.xlu0.b32.cont [14/16] 0.0, 128
    %5902 = vxpose.xlu0.b32.cont [15/16] 0.0, 128
    %5903 = vxpose.xlu0.b32.end [16/16] 0.0, 128
    %v5904 = vpop.trf.xlu0
    %v5905 = vpop.trf.xlu0
    %v5906 = vpop.trf.xlu0
    %v5907 = vpop.trf.xlu0
    %v5908 = vpop.trf.xlu0
    %v5909 = vpop.trf.xlu0
    %v5910 = vpop.trf.xlu0
    %v5911 = vpop.trf.xlu0
    %v5912 = vpop.trf.xlu0
    %v5913 = vpop.trf.xlu0
    %v5914 = vpop.trf.xlu0
    %v5915 = vpop.trf.xlu0
    %v5916 = vpop.trf.xlu0
    %v5917 = vpop.trf.xlu0
    %v5918 = vpop.trf.xlu0
    %v5919 = vpop.trf.xlu0
    %5920 = vxpose.xlu0.b32.start [1/16] %v5810, 128
    %5921 = vxpose.xlu0.b32.cont [2/16] 0.0, 128
    %5922 = vxpose.xlu0.b32.cont [3/16] 0.0, 128
    %5923 = vxpose.xlu0.b32.cont [4/16] 0.0, 128
    %5924 = vxpose.xlu0.b32.cont [5/16] 0.0, 128
    %5925 = vxpose.xlu0.b32.cont [6/16] 0.0, 128
    %5926 = vxpose.xlu0.b32.cont [7/16] 0.0, 128
    %5927 = vxpose.xlu0.b32.cont [8/16] 0.0, 128
    %5928 = vxpose.xlu0.b32.cont [9/16] 0.0, 128
    %5929 = vxpose.xlu0.b32.cont [10/16] 0.0, 128
    %5930 = vxpose.xlu0.b32.cont [11/16] 0.0, 128
    %5931 = vxpose.xlu0.b32.cont [12/16] 0.0, 128
    %5932 = vxpose.xlu0.b32.cont [13/16] 0.0, 128
    %5933 = vxpose.xlu0.b32.cont [14/16] 0.0, 128
    %5934 = vxpose.xlu0.b32.cont [15/16] 0.0, 128
    %5935 = vxpose.xlu0.b32.end [16/16] 0.0, 128
    %v5936 = vpop.trf.xlu0
    %v5937 = vpop.trf.xlu0
    %v5938 = vpop.trf.xlu0
    %v5939 = vpop.trf.xlu0
    %v5940 = vpop.trf.xlu0
    %v5941 = vpop.trf.xlu0
    %v5942 = vpop.trf.xlu0
    %v5943 = vpop.trf.xlu0
    %v5944 = vpop.trf.xlu0
    %v5945 = vpop.trf.xlu0
    %v5946 = vpop.trf.xlu0
    %v5947 = vpop.trf.xlu0
    %v5948 = vpop.trf.xlu0
    %v5949 = vpop.trf.xlu0
    %v5950 = vpop.trf.xlu0
    %v5951 = vpop.trf.xlu0
    %5952 = vxpose.xlu0.b32.start [1/16] %v5811, 128
    %5953 = vxpose.xlu0.b32.cont [2/16] 0.0, 128
    %5954 = vxpose.xlu0.b32.cont [3/16] 0.0, 128
    %5955 = vxpose.xlu0.b32.cont [4/16] 0.0, 128
    %5956 = vxpose.xlu0.b32.cont [5/16] 0.0, 128
    %5957 = vxpose.xlu0.b32.cont [6/16] 0.0, 128
    %5958 = vxpose.xlu0.b32.cont [7/16] 0.0, 128
    %5959 = vxpose.xlu0.b32.cont [8/16] 0.0, 128
    %5960 = vxpose.xlu0.b32.cont [9/16] 0.0, 128
    %5961 = vxpose.xlu0.b32.cont [10/16] 0.0, 128
    %5962 = vxpose.xlu0.b32.cont [11/16] 0.0, 128
    %5963 = vxpose.xlu0.b32.cont [12/16] 0.0, 128
    %5964 = vxpose.xlu0.b32.cont [13/16] 0.0, 128
    %5965 = vxpose.xlu0.b32.cont [14/16] 0.0, 128
    %5966 = vxpose.xlu0.b32.cont [15/16] 0.0, 128
    %5967 = vxpose.xlu0.b32.end [16/16] 0.0, 128
    %v5968 = vpop.trf.xlu0
    %v5969 = vpop.trf.xlu0
    %v5970 = vpop.trf.xlu0
    %v5971 = vpop.trf.xlu0
    %v5972 = vpop.trf.xlu0
    %v5973 = vpop.trf.xlu0
    %v5974 = vpop.trf.xlu0
    %v5975 = vpop.trf.xlu0
    %v5976 = vpop.trf.xlu0
    %v5977 = vpop.trf.xlu0
    %v5978 = vpop.trf.xlu0
    %v5979 = vpop.trf.xlu0
    %v5980 = vpop.trf.xlu0
    %v5981 = vpop.trf.xlu0
    %v5982 = vpop.trf.xlu0
    %v5983 = vpop.trf.xlu0
    %5984 = vxpose.xlu0.b32.start [1/16] %v5812, 128
    %5985 = vxpose.xlu0.b32.cont [2/16] 0.0, 128
    %5986 = vxpose.xlu0.b32.cont [3/16] 0.0, 128
    %5987 = vxpose.xlu0.b32.cont [4/16] 0.0, 128
    %5988 = vxpose.xlu0.b32.cont [5/16] 0.0, 128
    %5989 = vxpose.xlu0.b32.cont [6/16] 0.0, 128
    %5990 = vxpose.xlu0.b32.cont [7/16] 0.0, 128
    %5991 = vxpose.xlu0.b32.cont [8/16] 0.0, 128
    %5992 = vxpose.xlu0.b32.cont [9/16] 0.0, 128
    %5993 = vxpose.xlu0.b32.cont [10/16] 0.0, 128
    %5994 = vxpose.xlu0.b32.cont [11/16] 0.0, 128
    %5995 = vxpose.xlu0.b32.cont [12/16] 0.0, 128
    %5996 = vxpose.xlu0.b32.cont [13/16] 0.0, 128
    %5997 = vxpose.xlu0.b32.cont [14/16] 0.0, 128
    %5998 = vxpose.xlu0.b32.cont [15/16] 0.0, 128
    %5999 = vxpose.xlu0.b32.end [16/16] 0.0, 128
    %v6000 = vpop.trf.xlu0
    %v6001 = vpop.trf.xlu0
    %v6002 = vpop.trf.xlu0
    %v6003 = vpop.trf.xlu0
    %v6004 = vpop.trf.xlu0
    %v6005 = vpop.trf.xlu0
    %v6006 = vpop.trf.xlu0
    %v6007 = vpop.trf.xlu0
    %v6008 = vpop.trf.xlu0
    %v6009 = vpop.trf.xlu0
    %v6010 = vpop.trf.xlu0
    %v6011 = vpop.trf.xlu0
    %v6012 = vpop.trf.xlu0
    %v6013 = vpop.trf.xlu0
    %v6014 = vpop.trf.xlu0
    %v6015 = vpop.trf.xlu0
    %6016 = vxpose.xlu0.b32.start [1/16] %v5813, 128
    %6017 = vxpose.xlu0.b32.cont [2/16] 0.0, 128
    %6018 = vxpose.xlu0.b32.cont [3/16] 0.0, 128
    %6019 = vxpose.xlu0.b32.cont [4/16] 0.0, 128
    %6020 = vxpose.xlu0.b32.cont [5/16] 0.0, 128
    %6021 = vxpose.xlu0.b32.cont [6/16] 0.0, 128
    %6022 = vxpose.xlu0.b32.cont [7/16] 0.0, 128
    %6023 = vxpose.xlu0.b32.cont [8/16] 0.0, 128
    %6024 = vxpose.xlu0.b32.cont [9/16] 0.0, 128
    %6025 = vxpose.xlu0.b32.cont [10/16] 0.0, 128
    %6026 = vxpose.xlu0.b32.cont [11/16] 0.0, 128
    %6027 = vxpose.xlu0.b32.cont [12/16] 0.0, 128
    %6028 = vxpose.xlu0.b32.cont [13/16] 0.0, 128
    %6029 = vxpose.xlu0.b32.cont [14/16] 0.0, 128
    %6030 = vxpose.xlu0.b32.cont [15/16] 0.0, 128
    %6031 = vxpose.xlu0.b32.end [16/16] 0.0, 128
    %v6032 = vpop.trf.xlu0
    %v6033 = vpop.trf.xlu0
    %v6034 = vpop.trf.xlu0
    %v6035 = vpop.trf.xlu0
    %v6036 = vpop.trf.xlu0
    %v6037 = vpop.trf.xlu0
    %v6038 = vpop.trf.xlu0
    %v6039 = vpop.trf.xlu0
    %v6040 = vpop.trf.xlu0
    %v6041 = vpop.trf.xlu0
    %v6042 = vpop.trf.xlu0
    %v6043 = vpop.trf.xlu0
    %v6044 = vpop.trf.xlu0
    %v6045 = vpop.trf.xlu0
    %v6046 = vpop.trf.xlu0
    %v6047 = vpop.trf.xlu0
    %6048 = vxpose.xlu0.b32.start [1/16] %v5814, 128
    %6049 = vxpose.xlu0.b32.cont [2/16] 0.0, 128
    %6050 = vxpose.xlu0.b32.cont [3/16] 0.0, 128
    %6051 = vxpose.xlu0.b32.cont [4/16] 0.0, 128
    %6052 = vxpose.xlu0.b32.cont [5/16] 0.0, 128
    %6053 = vxpose.xlu0.b32.cont [6/16] 0.0, 128
    %6054 = vxpose.xlu0.b32.cont [7/16] 0.0, 128
    %6055 = vxpose.xlu0.b32.cont [8/16] 0.0, 128
    %6056 = vxpose.xlu0.b32.cont [9/16] 0.0, 128
    %6057 = vxpose.xlu0.b32.cont [10/16] 0.0, 128
    %6058 = vxpose.xlu0.b32.cont [11/16] 0.0, 128
    %6059 = vxpose.xlu0.b32.cont [12/16] 0.0, 128
    %6060 = vxpose.xlu0.b32.cont [13/16] 0.0, 128
    %6061 = vxpose.xlu0.b32.cont [14/16] 0.0, 128
    %6062 = vxpose.xlu0.b32.cont [15/16] 0.0, 128
    %6063 = vxpose.xlu0.b32.end [16/16] 0.0, 128
    %v6064 = vpop.trf.xlu0
    %v6065 = vpop.trf.xlu0
    %v6066 = vpop.trf.xlu0
    %v6067 = vpop.trf.xlu0
    %v6068 = vpop.trf.xlu0
    %v6069 = vpop.trf.xlu0
    %v6070 = vpop.trf.xlu0
    %v6071 = vpop.trf.xlu0
    %v6072 = vpop.trf.xlu0
    %v6073 = vpop.trf.xlu0
    %v6074 = vpop.trf.xlu0
    %v6075 = vpop.trf.xlu0
    %v6076 = vpop.trf.xlu0
    %v6077 = vpop.trf.xlu0
    %v6078 = vpop.trf.xlu0
    %v6079 = vpop.trf.xlu0
    %6080 = vxpose.xlu0.b32.start [1/16] %v5815, 128
    %6081 = vxpose.xlu0.b32.cont [2/16] 0.0, 128
    %6082 = vxpose.xlu0.b32.cont [3/16] 0.0, 128
    %6083 = vxpose.xlu0.b32.cont [4/16] 0.0, 128
    %6084 = vxpose.xlu0.b32.cont [5/16] 0.0, 128
    %6085 = vxpose.xlu0.b32.cont [6/16] 0.0, 128
    %6086 = vxpose.xlu0.b32.cont [7/16] 0.0, 128
    %6087 = vxpose.xlu0.b32.cont [8/16] 0.0, 128
    %6088 = vxpose.xlu0.b32.cont [9/16] 0.0, 128
    %6089 = vxpose.xlu0.b32.cont [10/16] 0.0, 128
    %6090 = vxpose.xlu0.b32.cont [11/16] 0.0, 128
    %6091 = vxpose.xlu0.b32.cont [12/16] 0.0, 128
    %6092 = vxpose.xlu0.b32.cont [13/16] 0.0, 128
    %6093 = vxpose.xlu0.b32.cont [14/16] 0.0, 128
    %6094 = vxpose.xlu0.b32.cont [15/16] 0.0, 128
    %6095 = vxpose.xlu0.b32.end [16/16] 0.0, 128
    %v6096 = vpop.trf.xlu0
    %v6097 = vpop.trf.xlu0
    %v6098 = vpop.trf.xlu0
    %v6099 = vpop.trf.xlu0
    %v6100 = vpop.trf.xlu0
    %v6101 = vpop.trf.xlu0
    %v6102 = vpop.trf.xlu0
    %v6103 = vpop.trf.xlu0
    %v6104 = vpop.trf.xlu0
    %v6105 = vpop.trf.xlu0
    %v6106 = vpop.trf.xlu0
    %v6107 = vpop.trf.xlu0
    %v6108 = vpop.trf.xlu0
    %v6109 = vpop.trf.xlu0
    %v6110 = vpop.trf.xlu0
    %v6111 = vpop.trf.xlu0
    %6112 = vxpose.xlu0.b32.start [1/16] %v5840, 128
    %6113 = vxpose.xlu0.b32.cont [2/16] 0.0, 128
    %6114 = vxpose.xlu0.b32.cont [3/16] 0.0, 128
    %6115 = vxpose.xlu0.b32.cont [4/16] 0.0, 128
    %6116 = vxpose.xlu0.b32.cont [5/16] 0.0, 128
    %6117 = vxpose.xlu0.b32.cont [6/16] 0.0, 128
    %6118 = vxpose.xlu0.b32.cont [7/16] 0.0, 128
    %6119 = vxpose.xlu0.b32.cont [8/16] 0.0, 128
    %6120 = vxpose.xlu0.b32.cont [9/16] 0.0, 128
    %6121 = vxpose.xlu0.b32.cont [10/16] 0.0, 128
    %6122 = vxpose.xlu0.b32.cont [11/16] 0.0, 128
    %6123 = vxpose.xlu0.b32.cont [12/16] 0.0, 128
    %6124 = vxpose.xlu0.b32.cont [13/16] 0.0, 128
    %6125 = vxpose.xlu0.b32.cont [14/16] 0.0, 128
    %6126 = vxpose.xlu0.b32.cont [15/16] 0.0, 128
    %6127 = vxpose.xlu0.b32.end [16/16] 0.0, 128
    %v6128 = vpop.trf.xlu0
    %v6129 = vpop.trf.xlu0
    %v6130 = vpop.trf.xlu0
    %v6131 = vpop.trf.xlu0
    %v6132 = vpop.trf.xlu0
    %v6133 = vpop.trf.xlu0
    %v6134 = vpop.trf.xlu0
    %v6135 = vpop.trf.xlu0
    %v6136 = vpop.trf.xlu0
    %v6137 = vpop.trf.xlu0
    %v6138 = vpop.trf.xlu0
    %v6139 = vpop.trf.xlu0
    %v6140 = vpop.trf.xlu0
    %v6141 = vpop.trf.xlu0
    %v6142 = vpop.trf.xlu0
    %v6143 = vpop.trf.xlu0
    %6144 = vxpose.xlu0.b32.start [1/16] %v5841, 128
    %6145 = vxpose.xlu0.b32.cont [2/16] 0.0, 128
    %6146 = vxpose.xlu0.b32.cont [3/16] 0.0, 128
    %6147 = vxpose.xlu0.b32.cont [4/16] 0.0, 128
    %6148 = vxpose.xlu0.b32.cont [5/16] 0.0, 128
    %6149 = vxpose.xlu0.b32.cont [6/16] 0.0, 128
    %6150 = vxpose.xlu0.b32.cont [7/16] 0.0, 128
    %6151 = vxpose.xlu0.b32.cont [8/16] 0.0, 128
    %6152 = vxpose.xlu0.b32.cont [9/16] 0.0, 128
    %6153 = vxpose.xlu0.b32.cont [10/16] 0.0, 128
    %6154 = vxpose.xlu0.b32.cont [11/16] 0.0, 128
    %6155 = vxpose.xlu0.b32.cont [12/16] 0.0, 128
    %6156 = vxpose.xlu0.b32.cont [13/16] 0.0, 128
    %6157 = vxpose.xlu0.b32.cont [14/16] 0.0, 128
    %6158 = vxpose.xlu0.b32.cont [15/16] 0.0, 128
    %6159 = vxpose.xlu0.b32.end [16/16] 0.0, 128
    %v6160 = vpop.trf.xlu0
    %v6161 = vpop.trf.xlu0
    %v6162 = vpop.trf.xlu0
    %v6163 = vpop.trf.xlu0
    %v6164 = vpop.trf.xlu0
    %v6165 = vpop.trf.xlu0
    %v6166 = vpop.trf.xlu0
    %v6167 = vpop.trf.xlu0
    %v6168 = vpop.trf.xlu0
    %v6169 = vpop.trf.xlu0
    %v6170 = vpop.trf.xlu0
    %v6171 = vpop.trf.xlu0
    %v6172 = vpop.trf.xlu0
    %v6173 = vpop.trf.xlu0
    %v6174 = vpop.trf.xlu0
    %v6175 = vpop.trf.xlu0
    %6176 = vxpose.xlu0.b32.start [1/16] %v5842, 128
    %6177 = vxpose.xlu0.b32.cont [2/16] 0.0, 128
    %6178 = vxpose.xlu0.b32.cont [3/16] 0.0, 128
    %6179 = vxpose.xlu0.b32.cont [4/16] 0.0, 128
    %6180 = vxpose.xlu0.b32.cont [5/16] 0.0, 128
    %6181 = vxpose.xlu0.b32.cont [6/16] 0.0, 128
    %6182 = vxpose.xlu0.b32.cont [7/16] 0.0, 128
    %6183 = vxpose.xlu0.b32.cont [8/16] 0.0, 128
    %6184 = vxpose.xlu0.b32.cont [9/16] 0.0, 128
    %6185 = vxpose.xlu0.b32.cont [10/16] 0.0, 128
    %6186 = vxpose.xlu0.b32.cont [11/16] 0.0, 128
    %6187 = vxpose.xlu0.b32.cont [12/16] 0.0, 128
    %6188 = vxpose.xlu0.b32.cont [13/16] 0.0, 128
    %6189 = vxpose.xlu0.b32.cont [14/16] 0.0, 128
    %6190 = vxpose.xlu0.b32.cont [15/16] 0.0, 128
    %6191 = vxpose.xlu0.b32.end [16/16] 0.0, 128
    %v6192 = vpop.trf.xlu0
    %v6193 = vpop.trf.xlu0
    %v6194 = vpop.trf.xlu0
    %v6195 = vpop.trf.xlu0
    %v6196 = vpop.trf.xlu0
    %v6197 = vpop.trf.xlu0
    %v6198 = vpop.trf.xlu0
    %v6199 = vpop.trf.xlu0
    %v6200 = vpop.trf.xlu0
    %v6201 = vpop.trf.xlu0
    %v6202 = vpop.trf.xlu0
    %v6203 = vpop.trf.xlu0
    %v6204 = vpop.trf.xlu0
    %v6205 = vpop.trf.xlu0
    %v6206 = vpop.trf.xlu0
    %v6207 = vpop.trf.xlu0
    %6208 = vxpose.xlu0.b32.start [1/16] %v5843, 128
    %6209 = vxpose.xlu0.b32.cont [2/16] 0.0, 128
    %6210 = vxpose.xlu0.b32.cont [3/16] 0.0, 128
    %6211 = vxpose.xlu0.b32.cont [4/16] 0.0, 128
    %6212 = vxpose.xlu0.b32.cont [5/16] 0.0, 128
    %6213 = vxpose.xlu0.b32.cont [6/16] 0.0, 128
    %6214 = vxpose.xlu0.b32.cont [7/16] 0.0, 128
    %6215 = vxpose.xlu0.b32.cont [8/16] 0.0, 128
    %6216 = vxpose.xlu0.b32.cont [9/16] 0.0, 128
    %6217 = vxpose.xlu0.b32.cont [10/16] 0.0, 128
    %6218 = vxpose.xlu0.b32.cont [11/16] 0.0, 128
    %6219 = vxpose.xlu0.b32.cont [12/16] 0.0, 128
    %6220 = vxpose.xlu0.b32.cont [13/16] 0.0, 128
    %6221 = vxpose.xlu0.b32.cont [14/16] 0.0, 128
    %6222 = vxpose.xlu0.b32.cont [15/16] 0.0, 128
    %6223 = vxpose.xlu0.b32.end [16/16] 0.0, 128
    %v6224 = vpop.trf.xlu0
    %v6225 = vpop.trf.xlu0
    %v6226 = vpop.trf.xlu0
    %v6227 = vpop.trf.xlu0
    %v6228 = vpop.trf.xlu0
    %v6229 = vpop.trf.xlu0
    %v6230 = vpop.trf.xlu0
    %v6231 = vpop.trf.xlu0
    %v6232 = vpop.trf.xlu0
    %v6233 = vpop.trf.xlu0
    %v6234 = vpop.trf.xlu0
    %v6235 = vpop.trf.xlu0
    %v6236 = vpop.trf.xlu0
    %v6237 = vpop.trf.xlu0
    %v6238 = vpop.trf.xlu0
    %v6239 = vpop.trf.xlu0
    %6240 = vxpose.xlu0.b32.start [1/16] %v5844, 128
    %6241 = vxpose.xlu0.b32.cont [2/16] 0.0, 128
    %6242 = vxpose.xlu0.b32.cont [3/16] 0.0, 128
    %6243 = vxpose.xlu0.b32.cont [4/16] 0.0, 128
    %6244 = vxpose.xlu0.b32.cont [5/16] 0.0, 128
    %6245 = vxpose.xlu0.b32.cont [6/16] 0.0, 128
    %6246 = vxpose.xlu0.b32.cont [7/16] 0.0, 128
    %6247 = vxpose.xlu0.b32.cont [8/16] 0.0, 128
    %6248 = vxpose.xlu0.b32.cont [9/16] 0.0, 128
    %6249 = vxpose.xlu0.b32.cont [10/16] 0.0, 128
    %6250 = vxpose.xlu0.b32.cont [11/16] 0.0, 128
    %6251 = vxpose.xlu0.b32.cont [12/16] 0.0, 128
    %6252 = vxpose.xlu0.b32.cont [13/16] 0.0, 128
    %6253 = vxpose.xlu0.b32.cont [14/16] 0.0, 128
    %6254 = vxpose.xlu0.b32.cont [15/16] 0.0, 128
    %6255 = vxpose.xlu0.b32.end [16/16] 0.0, 128
    %v6256 = vpop.trf.xlu0
    %v6257 = vpop.trf.xlu0
    %v6258 = vpop.trf.xlu0
    %v6259 = vpop.trf.xlu0
    %v6260 = vpop.trf.xlu0
    %v6261 = vpop.trf.xlu0
    %v6262 = vpop.trf.xlu0
    %v6263 = vpop.trf.xlu0
    %v6264 = vpop.trf.xlu0
    %v6265 = vpop.trf.xlu0
    %v6266 = vpop.trf.xlu0
    %v6267 = vpop.trf.xlu0
    %v6268 = vpop.trf.xlu0
    %v6269 = vpop.trf.xlu0
    %v6270 = vpop.trf.xlu0
    %v6271 = vpop.trf.xlu0
    %6272 = vxpose.xlu0.b32.start [1/16] %v5845, 128
    %6273 = vxpose.xlu0.b32.cont [2/16] 0.0, 128
    %6274 = vxpose.xlu0.b32.cont [3/16] 0.0, 128
    %6275 = vxpose.xlu0.b32.cont [4/16] 0.0, 128
    %6276 = vxpose.xlu0.b32.cont [5/16] 0.0, 128
    %6277 = vxpose.xlu0.b32.cont [6/16] 0.0, 128
    %6278 = vxpose.xlu0.b32.cont [7/16] 0.0, 128
    %6279 = vxpose.xlu0.b32.cont [8/16] 0.0, 128
    %6280 = vxpose.xlu0.b32.cont [9/16] 0.0, 128
    %6281 = vxpose.xlu0.b32.cont [10/16] 0.0, 128
    %6282 = vxpose.xlu0.b32.cont [11/16] 0.0, 128
    %6283 = vxpose.xlu0.b32.cont [12/16] 0.0, 128
    %6284 = vxpose.xlu0.b32.cont [13/16] 0.0, 128
    %6285 = vxpose.xlu0.b32.cont [14/16] 0.0, 128
    %6286 = vxpose.xlu0.b32.cont [15/16] 0.0, 128
    %6287 = vxpose.xlu0.b32.end [16/16] 0.0, 128
    %v6288 = vpop.trf.xlu0
    %v6289 = vpop.trf.xlu0
    %v6290 = vpop.trf.xlu0
    %v6291 = vpop.trf.xlu0
    %v6292 = vpop.trf.xlu0
    %v6293 = vpop.trf.xlu0
    %v6294 = vpop.trf.xlu0
    %v6295 = vpop.trf.xlu0
    %v6296 = vpop.trf.xlu0
    %v6297 = vpop.trf.xlu0
    %v6298 = vpop.trf.xlu0
    %v6299 = vpop.trf.xlu0
    %v6300 = vpop.trf.xlu0
    %v6301 = vpop.trf.xlu0
    %v6302 = vpop.trf.xlu0
    %v6303 = vpop.trf.xlu0
    %6304 = vxpose.xlu0.b32.start [1/16] %v5846, 128
    %6305 = vxpose.xlu0.b32.cont [2/16] 0.0, 128
    %6306 = vxpose.xlu0.b32.cont [3/16] 0.0, 128
    %6307 = vxpose.xlu0.b32.cont [4/16] 0.0, 128
    %6308 = vxpose.xlu0.b32.cont [5/16] 0.0, 128
    %6309 = vxpose.xlu0.b32.cont [6/16] 0.0, 128
    %6310 = vxpose.xlu0.b32.cont [7/16] 0.0, 128
    %6311 = vxpose.xlu0.b32.cont [8/16] 0.0, 128
    %6312 = vxpose.xlu0.b32.cont [9/16] 0.0, 128
    %6313 = vxpose.xlu0.b32.cont [10/16] 0.0, 128
    %6314 = vxpose.xlu0.b32.cont [11/16] 0.0, 128
    %6315 = vxpose.xlu0.b32.cont [12/16] 0.0, 128
    %6316 = vxpose.xlu0.b32.cont [13/16] 0.0, 128
    %6317 = vxpose.xlu0.b32.cont [14/16] 0.0, 128
    %6318 = vxpose.xlu0.b32.cont [15/16] 0.0, 128
    %6319 = vxpose.xlu0.b32.end [16/16] 0.0, 128
    %v6320 = vpop.trf.xlu0
    %v6321 = vpop.trf.xlu0
    %v6322 = vpop.trf.xlu0
    %v6323 = vpop.trf.xlu0
    %v6324 = vpop.trf.xlu0
    %v6325 = vpop.trf.xlu0
    %v6326 = vpop.trf.xlu0
    %v6327 = vpop.trf.xlu0
    %v6328 = vpop.trf.xlu0
    %v6329 = vpop.trf.xlu0
    %v6330 = vpop.trf.xlu0
    %v6331 = vpop.trf.xlu0
    %v6332 = vpop.trf.xlu0
    %v6333 = vpop.trf.xlu0
    %v6334 = vpop.trf.xlu0
    %v6335 = vpop.trf.xlu0
    %6336 = vxpose.xlu0.b32.start [1/16] %v5847, 128
    %6337 = vxpose.xlu0.b32.cont [2/16] 0.0, 128
    %6338 = vxpose.xlu0.b32.cont [3/16] 0.0, 128
    %6339 = vxpose.xlu0.b32.cont [4/16] 0.0, 128
    %6340 = vxpose.xlu0.b32.cont [5/16] 0.0, 128
    %6341 = vxpose.xlu0.b32.cont [6/16] 0.0, 128
    %6342 = vxpose.xlu0.b32.cont [7/16] 0.0, 128
    %6343 = vxpose.xlu0.b32.cont [8/16] 0.0, 128
    %6344 = vxpose.xlu0.b32.cont [9/16] 0.0, 128
    %6345 = vxpose.xlu0.b32.cont [10/16] 0.0, 128
    %6346 = vxpose.xlu0.b32.cont [11/16] 0.0, 128
    %6347 = vxpose.xlu0.b32.cont [12/16] 0.0, 128
    %6348 = vxpose.xlu0.b32.cont [13/16] 0.0, 128
    %6349 = vxpose.xlu0.b32.cont [14/16] 0.0, 128
    %6350 = vxpose.xlu0.b32.cont [15/16] 0.0, 128
    %6351 = vxpose.xlu0.b32.end [16/16] 0.0, 128
    %v6352 = vpop.trf.xlu0
    %v6353 = vpop.trf.xlu0
    %v6354 = vpop.trf.xlu0
    %v6355 = vpop.trf.xlu0
    %v6356 = vpop.trf.xlu0
    %v6357 = vpop.trf.xlu0
    %v6358 = vpop.trf.xlu0
    %v6359 = vpop.trf.xlu0
    %v6360 = vpop.trf.xlu0
    %v6361 = vpop.trf.xlu0
    %v6362 = vpop.trf.xlu0
    %v6363 = vpop.trf.xlu0
    %v6364 = vpop.trf.xlu0
    %v6365 = vpop.trf.xlu0
    %v6366 = vpop.trf.xlu0
    %v6367 = vpop.trf.xlu0
    %v6368 = vpack.c.bf16 %v5872, %v5872
    %v6369 = vpack.c.bf16 %v5904, %v5904
    %v6370 = vpack.c.bf16 %v5936, %v5936
    %v6371 = vpack.c.bf16 %v5968, %v5968
    %v6372 = vpack.c.bf16 %v6000, %v6000
    %v6373 = vpack.c.bf16 %v6032, %v6032
    %v6374 = vpack.c.bf16 %v6064, %v6064
    %v6375 = vpack.c.bf16 %v6096, %v6096
    %v6376 = vpack.c.bf16 %v6128, %v6128
    %v6377 = vpack.c.bf16 %v6160, %v6160
    %v6378 = vpack.c.bf16 %v6192, %v6192
    %v6379 = vpack.c.bf16 %v6224, %v6224
    %v6380 = vpack.c.bf16 %v6256, %v6256
    %v6381 = vpack.c.bf16 %v6288, %v6288
    %v6382 = vpack.c.bf16 %v6320, %v6320
    %v6383 = vpack.c.bf16 %v6352, %v6352
    %6384 = vxpose.xlu0.b32.start [1/16] %v5188, 128
    %6385 = vxpose.xlu0.b32.cont [2/16] 0.0, 128
    %6386 = vxpose.xlu0.b32.cont [3/16] 0.0, 128
    %6387 = vxpose.xlu0.b32.cont [4/16] 0.0, 128
    %6388 = vxpose.xlu0.b32.cont [5/16] 0.0, 128
    %6389 = vxpose.xlu0.b32.cont [6/16] 0.0, 128
    %6390 = vxpose.xlu0.b32.cont [7/16] 0.0, 128
    %6391 = vxpose.xlu0.b32.cont [8/16] 0.0, 128
    %6392 = vxpose.xlu0.b32.cont [9/16] 0.0, 128
    %6393 = vxpose.xlu0.b32.cont [10/16] 0.0, 128
    %6394 = vxpose.xlu0.b32.cont [11/16] 0.0, 128
    %6395 = vxpose.xlu0.b32.cont [12/16] 0.0, 128
    %6396 = vxpose.xlu0.b32.cont [13/16] 0.0, 128
    %6397 = vxpose.xlu0.b32.cont [14/16] 0.0, 128
    %6398 = vxpose.xlu0.b32.cont [15/16] 0.0, 128
    %6399 = vxpose.xlu0.b32.end [16/16] 0.0, 128
    %v6400 = vpop.trf.xlu0
    %v6401 = vpop.trf.xlu0
    %v6402 = vpop.trf.xlu0
    %v6403 = vpop.trf.xlu0
    %v6404 = vpop.trf.xlu0
    %v6405 = vpop.trf.xlu0
    %v6406 = vpop.trf.xlu0
    %v6407 = vpop.trf.xlu0
    %v6408 = vpop.trf.xlu0
    %v6409 = vpop.trf.xlu0
    %v6410 = vpop.trf.xlu0
    %v6411 = vpop.trf.xlu0
    %v6412 = vpop.trf.xlu0
    %v6413 = vpop.trf.xlu0
    %v6414 = vpop.trf.xlu0
    %v6415 = vpop.trf.xlu0
    %6416 = vxpose.xlu0.b32.start [1/16] %v5190, 128
    %6417 = vxpose.xlu0.b32.cont [2/16] 0.0, 128
    %6418 = vxpose.xlu0.b32.cont [3/16] 0.0, 128
    %6419 = vxpose.xlu0.b32.cont [4/16] 0.0, 128
    %6420 = vxpose.xlu0.b32.cont [5/16] 0.0, 128
    %6421 = vxpose.xlu0.b32.cont [6/16] 0.0, 128
    %6422 = vxpose.xlu0.b32.cont [7/16] 0.0, 128
    %6423 = vxpose.xlu0.b32.cont [8/16] 0.0, 128
    %6424 = vxpose.xlu0.b32.cont [9/16] 0.0, 128
    %6425 = vxpose.xlu0.b32.cont [10/16] 0.0, 128
    %6426 = vxpose.xlu0.b32.cont [11/16] 0.0, 128
    %6427 = vxpose.xlu0.b32.cont [12/16] 0.0, 128
    %6428 = vxpose.xlu0.b32.cont [13/16] 0.0, 128
    %6429 = vxpose.xlu0.b32.cont [14/16] 0.0, 128
    %6430 = vxpose.xlu0.b32.cont [15/16] 0.0, 128
    %6431 = vxpose.xlu0.b32.end [16/16] 0.0, 128
    %v6432 = vpop.trf.xlu0
    %v6433 = vpop.trf.xlu0
    %v6434 = vpop.trf.xlu0
    %v6435 = vpop.trf.xlu0
    %v6436 = vpop.trf.xlu0
    %v6437 = vpop.trf.xlu0
    %v6438 = vpop.trf.xlu0
    %v6439 = vpop.trf.xlu0
    %v6440 = vpop.trf.xlu0
    %v6441 = vpop.trf.xlu0
    %v6442 = vpop.trf.xlu0
    %v6443 = vpop.trf.xlu0
    %v6444 = vpop.trf.xlu0
    %v6445 = vpop.trf.xlu0
    %v6446 = vpop.trf.xlu0
    %v6447 = vpop.trf.xlu0
    %6448 = vxpose.xlu0.b32.start [1/16] %v6400, 128
    %6449 = vxpose.xlu0.b32.cont [2/16] 0.0, 128
    %6450 = vxpose.xlu0.b32.cont [3/16] 0.0, 128
    %6451 = vxpose.xlu0.b32.cont [4/16] 0.0, 128
    %6452 = vxpose.xlu0.b32.cont [5/16] 0.0, 128
    %6453 = vxpose.xlu0.b32.cont [6/16] 0.0, 128
    %6454 = vxpose.xlu0.b32.cont [7/16] 0.0, 128
    %6455 = vxpose.xlu0.b32.cont [8/16] 0.0, 128
    %6456 = vxpose.xlu0.b32.cont [9/16] 0.0, 128
    %6457 = vxpose.xlu0.b32.cont [10/16] 0.0, 128
    %6458 = vxpose.xlu0.b32.cont [11/16] 0.0, 128
    %6459 = vxpose.xlu0.b32.cont [12/16] 0.0, 128
    %6460 = vxpose.xlu0.b32.cont [13/16] 0.0, 128
    %6461 = vxpose.xlu0.b32.cont [14/16] 0.0, 128
    %6462 = vxpose.xlu0.b32.cont [15/16] 0.0, 128
    %6463 = vxpose.xlu0.b32.end [16/16] 0.0, 128
    %v6464 = vpop.trf.xlu0
    %v6465 = vpop.trf.xlu0
    %v6466 = vpop.trf.xlu0
    %v6467 = vpop.trf.xlu0
    %v6468 = vpop.trf.xlu0
    %v6469 = vpop.trf.xlu0
    %v6470 = vpop.trf.xlu0
    %v6471 = vpop.trf.xlu0
    %v6472 = vpop.trf.xlu0
    %v6473 = vpop.trf.xlu0
    %v6474 = vpop.trf.xlu0
    %v6475 = vpop.trf.xlu0
    %v6476 = vpop.trf.xlu0
    %v6477 = vpop.trf.xlu0
    %v6478 = vpop.trf.xlu0
    %v6479 = vpop.trf.xlu0
    %6480 = vxpose.xlu0.b32.start [1/16] %v6401, 128
    %6481 = vxpose.xlu0.b32.cont [2/16] 0.0, 128
    %6482 = vxpose.xlu0.b32.cont [3/16] 0.0, 128
    %6483 = vxpose.xlu0.b32.cont [4/16] 0.0, 128
    %6484 = vxpose.xlu0.b32.cont [5/16] 0.0, 128
    %6485 = vxpose.xlu0.b32.cont [6/16] 0.0, 128
    %6486 = vxpose.xlu0.b32.cont [7/16] 0.0, 128
    %6487 = vxpose.xlu0.b32.cont [8/16] 0.0, 128
    %6488 = vxpose.xlu0.b32.cont [9/16] 0.0, 128
    %6489 = vxpose.xlu0.b32.cont [10/16] 0.0, 128
    %6490 = vxpose.xlu0.b32.cont [11/16] 0.0, 128
    %6491 = vxpose.xlu0.b32.cont [12/16] 0.0, 128
    %6492 = vxpose.xlu0.b32.cont [13/16] 0.0, 128
    %6493 = vxpose.xlu0.b32.cont [14/16] 0.0, 128
    %6494 = vxpose.xlu0.b32.cont [15/16] 0.0, 128
    %6495 = vxpose.xlu0.b32.end [16/16] 0.0, 128
    %v6496 = vpop.trf.xlu0
    %v6497 = vpop.trf.xlu0
    %v6498 = vpop.trf.xlu0
    %v6499 = vpop.trf.xlu0
    %v6500 = vpop.trf.xlu0
    %v6501 = vpop.trf.xlu0
    %v6502 = vpop.trf.xlu0
    %v6503 = vpop.trf.xlu0
    %v6504 = vpop.trf.xlu0
    %v6505 = vpop.trf.xlu0
    %v6506 = vpop.trf.xlu0
    %v6507 = vpop.trf.xlu0
    %v6508 = vpop.trf.xlu0
    %v6509 = vpop.trf.xlu0
    %v6510 = vpop.trf.xlu0
    %v6511 = vpop.trf.xlu0
    %6512 = vxpose.xlu0.b32.start [1/16] %v6402, 128
    %6513 = vxpose.xlu0.b32.cont [2/16] 0.0, 128
    %6514 = vxpose.xlu0.b32.cont [3/16] 0.0, 128
    %6515 = vxpose.xlu0.b32.cont [4/16] 0.0, 128
    %6516 = vxpose.xlu0.b32.cont [5/16] 0.0, 128
    %6517 = vxpose.xlu0.b32.cont [6/16] 0.0, 128
    %6518 = vxpose.xlu0.b32.cont [7/16] 0.0, 128
    %6519 = vxpose.xlu0.b32.cont [8/16] 0.0, 128
    %6520 = vxpose.xlu0.b32.cont [9/16] 0.0, 128
    %6521 = vxpose.xlu0.b32.cont [10/16] 0.0, 128
    %6522 = vxpose.xlu0.b32.cont [11/16] 0.0, 128
    %6523 = vxpose.xlu0.b32.cont [12/16] 0.0, 128
    %6524 = vxpose.xlu0.b32.cont [13/16] 0.0, 128
    %6525 = vxpose.xlu0.b32.cont [14/16] 0.0, 128
    %6526 = vxpose.xlu0.b32.cont [15/16] 0.0, 128
    %6527 = vxpose.xlu0.b32.end [16/16] 0.0, 128
    %v6528 = vpop.trf.xlu0
    %v6529 = vpop.trf.xlu0
    %v6530 = vpop.trf.xlu0
    %v6531 = vpop.trf.xlu0
    %v6532 = vpop.trf.xlu0
    %v6533 = vpop.trf.xlu0
    %v6534 = vpop.trf.xlu0
    %v6535 = vpop.trf.xlu0
    %v6536 = vpop.trf.xlu0
    %v6537 = vpop.trf.xlu0
    %v6538 = vpop.trf.xlu0
    %v6539 = vpop.trf.xlu0
    %v6540 = vpop.trf.xlu0
    %v6541 = vpop.trf.xlu0
    %v6542 = vpop.trf.xlu0
    %v6543 = vpop.trf.xlu0
    %6544 = vxpose.xlu0.b32.start [1/16] %v6403, 128
    %6545 = vxpose.xlu0.b32.cont [2/16] 0.0, 128
    %6546 = vxpose.xlu0.b32.cont [3/16] 0.0, 128
    %6547 = vxpose.xlu0.b32.cont [4/16] 0.0, 128
    %6548 = vxpose.xlu0.b32.cont [5/16] 0.0, 128
    %6549 = vxpose.xlu0.b32.cont [6/16] 0.0, 128
    %6550 = vxpose.xlu0.b32.cont [7/16] 0.0, 128
    %6551 = vxpose.xlu0.b32.cont [8/16] 0.0, 128
    %6552 = vxpose.xlu0.b32.cont [9/16] 0.0, 128
    %6553 = vxpose.xlu0.b32.cont [10/16] 0.0, 128
    %6554 = vxpose.xlu0.b32.cont [11/16] 0.0, 128
    %6555 = vxpose.xlu0.b32.cont [12/16] 0.0, 128
    %6556 = vxpose.xlu0.b32.cont [13/16] 0.0, 128
    %6557 = vxpose.xlu0.b32.cont [14/16] 0.0, 128
    %6558 = vxpose.xlu0.b32.cont [15/16] 0.0, 128
    %6559 = vxpose.xlu0.b32.end [16/16] 0.0, 128
    %v6560 = vpop.trf.xlu0
    %v6561 = vpop.trf.xlu0
    %v6562 = vpop.trf.xlu0
    %v6563 = vpop.trf.xlu0
    %v6564 = vpop.trf.xlu0
    %v6565 = vpop.trf.xlu0
    %v6566 = vpop.trf.xlu0
    %v6567 = vpop.trf.xlu0
    %v6568 = vpop.trf.xlu0
    %v6569 = vpop.trf.xlu0
    %v6570 = vpop.trf.xlu0
    %v6571 = vpop.trf.xlu0
    %v6572 = vpop.trf.xlu0
    %v6573 = vpop.trf.xlu0
    %v6574 = vpop.trf.xlu0
    %v6575 = vpop.trf.xlu0
    %6576 = vxpose.xlu0.b32.start [1/16] %v6404, 128
    %6577 = vxpose.xlu0.b32.cont [2/16] 0.0, 128
    %6578 = vxpose.xlu0.b32.cont [3/16] 0.0, 128
    %6579 = vxpose.xlu0.b32.cont [4/16] 0.0, 128
    %6580 = vxpose.xlu0.b32.cont [5/16] 0.0, 128
    %6581 = vxpose.xlu0.b32.cont [6/16] 0.0, 128
    %6582 = vxpose.xlu0.b32.cont [7/16] 0.0, 128
    %6583 = vxpose.xlu0.b32.cont [8/16] 0.0, 128
    %6584 = vxpose.xlu0.b32.cont [9/16] 0.0, 128
    %6585 = vxpose.xlu0.b32.cont [10/16] 0.0, 128
    %6586 = vxpose.xlu0.b32.cont [11/16] 0.0, 128
    %6587 = vxpose.xlu0.b32.cont [12/16] 0.0, 128
    %6588 = vxpose.xlu0.b32.cont [13/16] 0.0, 128
    %6589 = vxpose.xlu0.b32.cont [14/16] 0.0, 128
    %6590 = vxpose.xlu0.b32.cont [15/16] 0.0, 128
    %6591 = vxpose.xlu0.b32.end [16/16] 0.0, 128
    %v6592 = vpop.trf.xlu0
    %v6593 = vpop.trf.xlu0
    %v6594 = vpop.trf.xlu0
    %v6595 = vpop.trf.xlu0
    %v6596 = vpop.trf.xlu0
    %v6597 = vpop.trf.xlu0
    %v6598 = vpop.trf.xlu0
    %v6599 = vpop.trf.xlu0
    %v6600 = vpop.trf.xlu0
    %v6601 = vpop.trf.xlu0
    %v6602 = vpop.trf.xlu0
    %v6603 = vpop.trf.xlu0
    %v6604 = vpop.trf.xlu0
    %v6605 = vpop.trf.xlu0
    %v6606 = vpop.trf.xlu0
    %v6607 = vpop.trf.xlu0
    %6608 = vxpose.xlu0.b32.start [1/16] %v6405, 128
    %6609 = vxpose.xlu0.b32.cont [2/16] 0.0, 128
    %6610 = vxpose.xlu0.b32.cont [3/16] 0.0, 128
    %6611 = vxpose.xlu0.b32.cont [4/16] 0.0, 128
    %6612 = vxpose.xlu0.b32.cont [5/16] 0.0, 128
    %6613 = vxpose.xlu0.b32.cont [6/16] 0.0, 128
    %6614 = vxpose.xlu0.b32.cont [7/16] 0.0, 128
    %6615 = vxpose.xlu0.b32.cont [8/16] 0.0, 128
    %6616 = vxpose.xlu0.b32.cont [9/16] 0.0, 128
    %6617 = vxpose.xlu0.b32.cont [10/16] 0.0, 128
    %6618 = vxpose.xlu0.b32.cont [11/16] 0.0, 128
    %6619 = vxpose.xlu0.b32.cont [12/16] 0.0, 128
    %6620 = vxpose.xlu0.b32.cont [13/16] 0.0, 128
    %6621 = vxpose.xlu0.b32.cont [14/16] 0.0, 128
    %6622 = vxpose.xlu0.b32.cont [15/16] 0.0, 128
    %6623 = vxpose.xlu0.b32.end [16/16] 0.0, 128
    %v6624 = vpop.trf.xlu0
    %v6625 = vpop.trf.xlu0
    %v6626 = vpop.trf.xlu0
    %v6627 = vpop.trf.xlu0
    %v6628 = vpop.trf.xlu0
    %v6629 = vpop.trf.xlu0
    %v6630 = vpop.trf.xlu0
    %v6631 = vpop.trf.xlu0
    %v6632 = vpop.trf.xlu0
    %v6633 = vpop.trf.xlu0
    %v6634 = vpop.trf.xlu0
    %v6635 = vpop.trf.xlu0
    %v6636 = vpop.trf.xlu0
    %v6637 = vpop.trf.xlu0
    %v6638 = vpop.trf.xlu0
    %v6639 = vpop.trf.xlu0
    %6640 = vxpose.xlu0.b32.start [1/16] %v6406, 128
    %6641 = vxpose.xlu0.b32.cont [2/16] 0.0, 128
    %6642 = vxpose.xlu0.b32.cont [3/16] 0.0, 128
    %6643 = vxpose.xlu0.b32.cont [4/16] 0.0, 128
    %6644 = vxpose.xlu0.b32.cont [5/16] 0.0, 128
    %6645 = vxpose.xlu0.b32.cont [6/16] 0.0, 128
    %6646 = vxpose.xlu0.b32.cont [7/16] 0.0, 128
    %6647 = vxpose.xlu0.b32.cont [8/16] 0.0, 128
    %6648 = vxpose.xlu0.b32.cont [9/16] 0.0, 128
    %6649 = vxpose.xlu0.b32.cont [10/16] 0.0, 128
    %6650 = vxpose.xlu0.b32.cont [11/16] 0.0, 128
    %6651 = vxpose.xlu0.b32.cont [12/16] 0.0, 128
    %6652 = vxpose.xlu0.b32.cont [13/16] 0.0, 128
    %6653 = vxpose.xlu0.b32.cont [14/16] 0.0, 128
    %6654 = vxpose.xlu0.b32.cont [15/16] 0.0, 128
    %6655 = vxpose.xlu0.b32.end [16/16] 0.0, 128
    %v6656 = vpop.trf.xlu0
    %v6657 = vpop.trf.xlu0
    %v6658 = vpop.trf.xlu0
    %v6659 = vpop.trf.xlu0
    %v6660 = vpop.trf.xlu0
    %v6661 = vpop.trf.xlu0
    %v6662 = vpop.trf.xlu0
    %v6663 = vpop.trf.xlu0
    %v6664 = vpop.trf.xlu0
    %v6665 = vpop.trf.xlu0
    %v6666 = vpop.trf.xlu0
    %v6667 = vpop.trf.xlu0
    %v6668 = vpop.trf.xlu0
    %v6669 = vpop.trf.xlu0
    %v6670 = vpop.trf.xlu0
    %v6671 = vpop.trf.xlu0
    %6672 = vxpose.xlu0.b32.start [1/16] %v6407, 128
    %6673 = vxpose.xlu0.b32.cont [2/16] 0.0, 128
    %6674 = vxpose.xlu0.b32.cont [3/16] 0.0, 128
    %6675 = vxpose.xlu0.b32.cont [4/16] 0.0, 128
    %6676 = vxpose.xlu0.b32.cont [5/16] 0.0, 128
    %6677 = vxpose.xlu0.b32.cont [6/16] 0.0, 128
    %6678 = vxpose.xlu0.b32.cont [7/16] 0.0, 128
    %6679 = vxpose.xlu0.b32.cont [8/16] 0.0, 128
    %6680 = vxpose.xlu0.b32.cont [9/16] 0.0, 128
    %6681 = vxpose.xlu0.b32.cont [10/16] 0.0, 128
    %6682 = vxpose.xlu0.b32.cont [11/16] 0.0, 128
    %6683 = vxpose.xlu0.b32.cont [12/16] 0.0, 128
    %6684 = vxpose.xlu0.b32.cont [13/16] 0.0, 128
    %6685 = vxpose.xlu0.b32.cont [14/16] 0.0, 128
    %6686 = vxpose.xlu0.b32.cont [15/16] 0.0, 128
    %6687 = vxpose.xlu0.b32.end [16/16] 0.0, 128
    %v6688 = vpop.trf.xlu0
    %v6689 = vpop.trf.xlu0
    %v6690 = vpop.trf.xlu0
    %v6691 = vpop.trf.xlu0
    %v6692 = vpop.trf.xlu0
    %v6693 = vpop.trf.xlu0
    %v6694 = vpop.trf.xlu0
    %v6695 = vpop.trf.xlu0
    %v6696 = vpop.trf.xlu0
    %v6697 = vpop.trf.xlu0
    %v6698 = vpop.trf.xlu0
    %v6699 = vpop.trf.xlu0
    %v6700 = vpop.trf.xlu0
    %v6701 = vpop.trf.xlu0
    %v6702 = vpop.trf.xlu0
    %v6703 = vpop.trf.xlu0
    %6704 = vxpose.xlu0.b32.start [1/16] %v6432, 128
    %6705 = vxpose.xlu0.b32.cont [2/16] 0.0, 128
    %6706 = vxpose.xlu0.b32.cont [3/16] 0.0, 128
    %6707 = vxpose.xlu0.b32.cont [4/16] 0.0, 128
    %6708 = vxpose.xlu0.b32.cont [5/16] 0.0, 128
    %6709 = vxpose.xlu0.b32.cont [6/16] 0.0, 128
    %6710 = vxpose.xlu0.b32.cont [7/16] 0.0, 128
    %6711 = vxpose.xlu0.b32.cont [8/16] 0.0, 128
    %6712 = vxpose.xlu0.b32.cont [9/16] 0.0, 128
    %6713 = vxpose.xlu0.b32.cont [10/16] 0.0, 128
    %6714 = vxpose.xlu0.b32.cont [11/16] 0.0, 128
    %6715 = vxpose.xlu0.b32.cont [12/16] 0.0, 128
    %6716 = vxpose.xlu0.b32.cont [13/16] 0.0, 128
    %6717 = vxpose.xlu0.b32.cont [14/16] 0.0, 128
    %6718 = vxpose.xlu0.b32.cont [15/16] 0.0, 128
    %6719 = vxpose.xlu0.b32.end [16/16] 0.0, 128
    %v6720 = vpop.trf.xlu0
    %v6721 = vpop.trf.xlu0
    %v6722 = vpop.trf.xlu0
    %v6723 = vpop.trf.xlu0
    %v6724 = vpop.trf.xlu0
    %v6725 = vpop.trf.xlu0
    %v6726 = vpop.trf.xlu0
    %v6727 = vpop.trf.xlu0
    %v6728 = vpop.trf.xlu0
    %v6729 = vpop.trf.xlu0
    %v6730 = vpop.trf.xlu0
    %v6731 = vpop.trf.xlu0
    %v6732 = vpop.trf.xlu0
    %v6733 = vpop.trf.xlu0
    %v6734 = vpop.trf.xlu0
    %v6735 = vpop.trf.xlu0
    %6736 = vxpose.xlu0.b32.start [1/16] %v6433, 128
    %6737 = vxpose.xlu0.b32.cont [2/16] 0.0, 128
    %6738 = vxpose.xlu0.b32.cont [3/16] 0.0, 128
    %6739 = vxpose.xlu0.b32.cont [4/16] 0.0, 128
    %6740 = vxpose.xlu0.b32.cont [5/16] 0.0, 128
    %6741 = vxpose.xlu0.b32.cont [6/16] 0.0, 128
    %6742 = vxpose.xlu0.b32.cont [7/16] 0.0, 128
    %6743 = vxpose.xlu0.b32.cont [8/16] 0.0, 128
    %6744 = vxpose.xlu0.b32.cont [9/16] 0.0, 128
    %6745 = vxpose.xlu0.b32.cont [10/16] 0.0, 128
    %6746 = vxpose.xlu0.b32.cont [11/16] 0.0, 128
    %6747 = vxpose.xlu0.b32.cont [12/16] 0.0, 128
    %6748 = vxpose.xlu0.b32.cont [13/16] 0.0, 128
    %6749 = vxpose.xlu0.b32.cont [14/16] 0.0, 128
    %6750 = vxpose.xlu0.b32.cont [15/16] 0.0, 128
    %6751 = vxpose.xlu0.b32.end [16/16] 0.0, 128
    %v6752 = vpop.trf.xlu0
    %v6753 = vpop.trf.xlu0
    %v6754 = vpop.trf.xlu0
    %v6755 = vpop.trf.xlu0
    %v6756 = vpop.trf.xlu0
    %v6757 = vpop.trf.xlu0
    %v6758 = vpop.trf.xlu0
    %v6759 = vpop.trf.xlu0
    %v6760 = vpop.trf.xlu0
    %v6761 = vpop.trf.xlu0
    %v6762 = vpop.trf.xlu0
    %v6763 = vpop.trf.xlu0
    %v6764 = vpop.trf.xlu0
    %v6765 = vpop.trf.xlu0
    %v6766 = vpop.trf.xlu0
    %v6767 = vpop.trf.xlu0
    %6768 = vxpose.xlu0.b32.start [1/16] %v6434, 128
    %6769 = vxpose.xlu0.b32.cont [2/16] 0.0, 128
    %6770 = vxpose.xlu0.b32.cont [3/16] 0.0, 128
    %6771 = vxpose.xlu0.b32.cont [4/16] 0.0, 128
    %6772 = vxpose.xlu0.b32.cont [5/16] 0.0, 128
    %6773 = vxpose.xlu0.b32.cont [6/16] 0.0, 128
    %6774 = vxpose.xlu0.b32.cont [7/16] 0.0, 128
    %6775 = vxpose.xlu0.b32.cont [8/16] 0.0, 128
    %6776 = vxpose.xlu0.b32.cont [9/16] 0.0, 128
    %6777 = vxpose.xlu0.b32.cont [10/16] 0.0, 128
    %6778 = vxpose.xlu0.b32.cont [11/16] 0.0, 128
    %6779 = vxpose.xlu0.b32.cont [12/16] 0.0, 128
    %6780 = vxpose.xlu0.b32.cont [13/16] 0.0, 128
    %6781 = vxpose.xlu0.b32.cont [14/16] 0.0, 128
    %6782 = vxpose.xlu0.b32.cont [15/16] 0.0, 128
    %6783 = vxpose.xlu0.b32.end [16/16] 0.0, 128
    %v6784 = vpop.trf.xlu0
    %v6785 = vpop.trf.xlu0
    %v6786 = vpop.trf.xlu0
    %v6787 = vpop.trf.xlu0
    %v6788 = vpop.trf.xlu0
    %v6789 = vpop.trf.xlu0
    %v6790 = vpop.trf.xlu0
    %v6791 = vpop.trf.xlu0
    %v6792 = vpop.trf.xlu0
    %v6793 = vpop.trf.xlu0
    %v6794 = vpop.trf.xlu0
    %v6795 = vpop.trf.xlu0
    %v6796 = vpop.trf.xlu0
    %v6797 = vpop.trf.xlu0
    %v6798 = vpop.trf.xlu0
    %v6799 = vpop.trf.xlu0
    %6800 = vxpose.xlu0.b32.start [1/16] %v6435, 128
    %6801 = vxpose.xlu0.b32.cont [2/16] 0.0, 128
    %6802 = vxpose.xlu0.b32.cont [3/16] 0.0, 128
    %6803 = vxpose.xlu0.b32.cont [4/16] 0.0, 128
    %6804 = vxpose.xlu0.b32.cont [5/16] 0.0, 128
    %6805 = vxpose.xlu0.b32.cont [6/16] 0.0, 128
    %6806 = vxpose.xlu0.b32.cont [7/16] 0.0, 128
    %6807 = vxpose.xlu0.b32.cont [8/16] 0.0, 128
    %6808 = vxpose.xlu0.b32.cont [9/16] 0.0, 128
    %6809 = vxpose.xlu0.b32.cont [10/16] 0.0, 128
    %6810 = vxpose.xlu0.b32.cont [11/16] 0.0, 128
    %6811 = vxpose.xlu0.b32.cont [12/16] 0.0, 128
    %6812 = vxpose.xlu0.b32.cont [13/16] 0.0, 128
    %6813 = vxpose.xlu0.b32.cont [14/16] 0.0, 128
    %6814 = vxpose.xlu0.b32.cont [15/16] 0.0, 128
    %6815 = vxpose.xlu0.b32.end [16/16] 0.0, 128
    %v6816 = vpop.trf.xlu0
    %v6817 = vpop.trf.xlu0
    %v6818 = vpop.trf.xlu0
    %v6819 = vpop.trf.xlu0
    %v6820 = vpop.trf.xlu0
    %v6821 = vpop.trf.xlu0
    %v6822 = vpop.trf.xlu0
    %v6823 = vpop.trf.xlu0
    %v6824 = vpop.trf.xlu0
    %v6825 = vpop.trf.xlu0
    %v6826 = vpop.trf.xlu0
    %v6827 = vpop.trf.xlu0
    %v6828 = vpop.trf.xlu0
    %v6829 = vpop.trf.xlu0
    %v6830 = vpop.trf.xlu0
    %v6831 = vpop.trf.xlu0
    %6832 = vxpose.xlu0.b32.start [1/16] %v6436, 128
    %6833 = vxpose.xlu0.b32.cont [2/16] 0.0, 128
    %6834 = vxpose.xlu0.b32.cont [3/16] 0.0, 128
    %6835 = vxpose.xlu0.b32.cont [4/16] 0.0, 128
    %6836 = vxpose.xlu0.b32.cont [5/16] 0.0, 128
    %6837 = vxpose.xlu0.b32.cont [6/16] 0.0, 128
    %6838 = vxpose.xlu0.b32.cont [7/16] 0.0, 128
    %6839 = vxpose.xlu0.b32.cont [8/16] 0.0, 128
    %6840 = vxpose.xlu0.b32.cont [9/16] 0.0, 128
    %6841 = vxpose.xlu0.b32.cont [10/16] 0.0, 128
    %6842 = vxpose.xlu0.b32.cont [11/16] 0.0, 128
    %6843 = vxpose.xlu0.b32.cont [12/16] 0.0, 128
    %6844 = vxpose.xlu0.b32.cont [13/16] 0.0, 128
    %6845 = vxpose.xlu0.b32.cont [14/16] 0.0, 128
    %6846 = vxpose.xlu0.b32.cont [15/16] 0.0, 128
    %6847 = vxpose.xlu0.b32.end [16/16] 0.0, 128
    %v6848 = vpop.trf.xlu0
    %v6849 = vpop.trf.xlu0
    %v6850 = vpop.trf.xlu0
    %v6851 = vpop.trf.xlu0
    %v6852 = vpop.trf.xlu0
    %v6853 = vpop.trf.xlu0
    %v6854 = vpop.trf.xlu0
    %v6855 = vpop.trf.xlu0
    %v6856 = vpop.trf.xlu0
    %v6857 = vpop.trf.xlu0
    %v6858 = vpop.trf.xlu0
    %v6859 = vpop.trf.xlu0
    %v6860 = vpop.trf.xlu0
    %v6861 = vpop.trf.xlu0
    %v6862 = vpop.trf.xlu0
    %v6863 = vpop.trf.xlu0
    %6864 = vxpose.xlu0.b32.start [1/16] %v6437, 128
    %6865 = vxpose.xlu0.b32.cont [2/16] 0.0, 128
    %6866 = vxpose.xlu0.b32.cont [3/16] 0.0, 128
    %6867 = vxpose.xlu0.b32.cont [4/16] 0.0, 128
    %6868 = vxpose.xlu0.b32.cont [5/16] 0.0, 128
    %6869 = vxpose.xlu0.b32.cont [6/16] 0.0, 128
    %6870 = vxpose.xlu0.b32.cont [7/16] 0.0, 128
    %6871 = vxpose.xlu0.b32.cont [8/16] 0.0, 128
    %6872 = vxpose.xlu0.b32.cont [9/16] 0.0, 128
    %6873 = vxpose.xlu0.b32.cont [10/16] 0.0, 128
    %6874 = vxpose.xlu0.b32.cont [11/16] 0.0, 128
    %6875 = vxpose.xlu0.b32.cont [12/16] 0.0, 128
    %6876 = vxpose.xlu0.b32.cont [13/16] 0.0, 128
    %6877 = vxpose.xlu0.b32.cont [14/16] 0.0, 128
    %6878 = vxpose.xlu0.b32.cont [15/16] 0.0, 128
    %6879 = vxpose.xlu0.b32.end [16/16] 0.0, 128
    %v6880 = vpop.trf.xlu0
    %v6881 = vpop.trf.xlu0
    %v6882 = vpop.trf.xlu0
    %v6883 = vpop.trf.xlu0
    %v6884 = vpop.trf.xlu0
    %v6885 = vpop.trf.xlu0
    %v6886 = vpop.trf.xlu0
    %v6887 = vpop.trf.xlu0
    %v6888 = vpop.trf.xlu0
    %v6889 = vpop.trf.xlu0
    %v6890 = vpop.trf.xlu0
    %v6891 = vpop.trf.xlu0
    %v6892 = vpop.trf.xlu0
    %v6893 = vpop.trf.xlu0
    %v6894 = vpop.trf.xlu0
    %v6895 = vpop.trf.xlu0
    %6896 = vxpose.xlu0.b32.start [1/16] %v6438, 128
    %6897 = vxpose.xlu0.b32.cont [2/16] 0.0, 128
    %6898 = vxpose.xlu0.b32.cont [3/16] 0.0, 128
    %6899 = vxpose.xlu0.b32.cont [4/16] 0.0, 128
    %6900 = vxpose.xlu0.b32.cont [5/16] 0.0, 128
    %6901 = vxpose.xlu0.b32.cont [6/16] 0.0, 128
    %6902 = vxpose.xlu0.b32.cont [7/16] 0.0, 128
    %6903 = vxpose.xlu0.b32.cont [8/16] 0.0, 128
    %6904 = vxpose.xlu0.b32.cont [9/16] 0.0, 128
    %6905 = vxpose.xlu0.b32.cont [10/16] 0.0, 128
    %6906 = vxpose.xlu0.b32.cont [11/16] 0.0, 128
    %6907 = vxpose.xlu0.b32.cont [12/16] 0.0, 128
    %6908 = vxpose.xlu0.b32.cont [13/16] 0.0, 128
    %6909 = vxpose.xlu0.b32.cont [14/16] 0.0, 128
    %6910 = vxpose.xlu0.b32.cont [15/16] 0.0, 128
    %6911 = vxpose.xlu0.b32.end [16/16] 0.0, 128
    %v6912 = vpop.trf.xlu0
    %v6913 = vpop.trf.xlu0
    %v6914 = vpop.trf.xlu0
    %v6915 = vpop.trf.xlu0
    %v6916 = vpop.trf.xlu0
    %v6917 = vpop.trf.xlu0
    %v6918 = vpop.trf.xlu0
    %v6919 = vpop.trf.xlu0
    %v6920 = vpop.trf.xlu0
    %v6921 = vpop.trf.xlu0
    %v6922 = vpop.trf.xlu0
    %v6923 = vpop.trf.xlu0
    %v6924 = vpop.trf.xlu0
    %v6925 = vpop.trf.xlu0
    %v6926 = vpop.trf.xlu0
    %v6927 = vpop.trf.xlu0
    %6928 = vxpose.xlu0.b32.start [1/16] %v6439, 128
    %6929 = vxpose.xlu0.b32.cont [2/16] 0.0, 128
    %6930 = vxpose.xlu0.b32.cont [3/16] 0.0, 128
    %6931 = vxpose.xlu0.b32.cont [4/16] 0.0, 128
    %6932 = vxpose.xlu0.b32.cont [5/16] 0.0, 128
    %6933 = vxpose.xlu0.b32.cont [6/16] 0.0, 128
    %6934 = vxpose.xlu0.b32.cont [7/16] 0.0, 128
    %6935 = vxpose.xlu0.b32.cont [8/16] 0.0, 128
    %6936 = vxpose.xlu0.b32.cont [9/16] 0.0, 128
    %6937 = vxpose.xlu0.b32.cont [10/16] 0.0, 128
    %6938 = vxpose.xlu0.b32.cont [11/16] 0.0, 128
    %6939 = vxpose.xlu0.b32.cont [12/16] 0.0, 128
    %6940 = vxpose.xlu0.b32.cont [13/16] 0.0, 128
    %6941 = vxpose.xlu0.b32.cont [14/16] 0.0, 128
    %6942 = vxpose.xlu0.b32.cont [15/16] 0.0, 128
    %6943 = vxpose.xlu0.b32.end [16/16] 0.0, 128
    %v6944 = vpop.trf.xlu0
    %v6945 = vpop.trf.xlu0
    %v6946 = vpop.trf.xlu0
    %v6947 = vpop.trf.xlu0
    %v6948 = vpop.trf.xlu0
    %v6949 = vpop.trf.xlu0
    %v6950 = vpop.trf.xlu0
    %v6951 = vpop.trf.xlu0
    %v6952 = vpop.trf.xlu0
    %v6953 = vpop.trf.xlu0
    %v6954 = vpop.trf.xlu0
    %v6955 = vpop.trf.xlu0
    %v6956 = vpop.trf.xlu0
    %v6957 = vpop.trf.xlu0
    %v6958 = vpop.trf.xlu0
    %v6959 = vpop.trf.xlu0
    %v6960 = vpack.c.bf16 %v6464, %v6464
    %v6961 = vpack.c.bf16 %v6496, %v6496
    %v6962 = vpack.c.bf16 %v6528, %v6528
    %v6963 = vpack.c.bf16 %v6560, %v6560
    %v6964 = vpack.c.bf16 %v6592, %v6592
    %v6965 = vpack.c.bf16 %v6624, %v6624
    %v6966 = vpack.c.bf16 %v6656, %v6656
    %v6967 = vpack.c.bf16 %v6688, %v6688
    %v6968 = vpack.c.bf16 %v6720, %v6720
    %v6969 = vpack.c.bf16 %v6752, %v6752
    %v6970 = vpack.c.bf16 %v6784, %v6784
    %v6971 = vpack.c.bf16 %v6816, %v6816
    %v6972 = vpack.c.bf16 %v6848, %v6848
    %v6973 = vpack.c.bf16 %v6880, %v6880
    %v6974 = vpack.c.bf16 %v6912, %v6912
    %v6975 = vpack.c.bf16 %v6944, %v6944
    %v6977 = vsel %vm2968, %v5768, 0
    %v6980 = vsel %vm2968, %v6368, 0
    %6982 = vmatpush.bf16.xpose.msra.mxu0 0
    %6983 = vmatpush.bf16.xpose.msra.mxu0 0
    %6984 = vmatpush.bf16.xpose.msra.mxu0 0
    %6985 = vmatpush.bf16.xpose.msra.mxu0 0
    %6986 = vmatpush.bf16.xpose.msra.mxu0 0
    %6987 = vmatpush.bf16.xpose.msra.mxu0 0
    %6988 = vmatpush.bf16.xpose.msra.mxu0 0
    %6989 = vmatpush.bf16.xpose.msra.mxu0 %v6980
    %6990 = vmatmul.bf16.gmra.mxu0 %v6977
    %v6991 = vpop.f32.mrf.mxu0
    %v6992 = vadd.f32 0.0, %v6991
    %v6993 = vpop.f32.mrf.mxu0
    %6994 = vdwg.mxu0
    %v6996 = vsel %vm2968, %v5769, 0
    %v6999 = vsel %vm2968, %v6369, 0
    %7001 = vmatpush.bf16.xpose.msra.mxu0 0
    %7002 = vmatpush.bf16.xpose.msra.mxu0 0
    %7003 = vmatpush.bf16.xpose.msra.mxu0 0
    %7004 = vmatpush.bf16.xpose.msra.mxu0 0
    %7005 = vmatpush.bf16.xpose.msra.mxu0 0
    %7006 = vmatpush.bf16.xpose.msra.mxu0 0
    %7007 = vmatpush.bf16.xpose.msra.mxu0 0
    %7008 = vmatpush.bf16.xpose.msra.mxu0 %v6999
    %7009 = vmatmul.bf16.gmra.mxu0 %v6996
    %v7010 = vpop.f32.mrf.mxu0
    %v7011 = vadd.f32 0.0, %v7010
    %v7012 = vpop.f32.mrf.mxu0
    %7013 = vdwg.mxu0
    %v7015 = vsel %vm2968, %v5770, 0
    %v7018 = vsel %vm2968, %v6370, 0
    %7020 = vmatpush.bf16.xpose.msra.mxu0 0
    %7021 = vmatpush.bf16.xpose.msra.mxu0 0
    %7022 = vmatpush.bf16.xpose.msra.mxu0 0
    %7023 = vmatpush.bf16.xpose.msra.mxu0 0
    %7024 = vmatpush.bf16.xpose.msra.mxu0 0
    %7025 = vmatpush.bf16.xpose.msra.mxu0 0
    %7026 = vmatpush.bf16.xpose.msra.mxu0 0
    %7027 = vmatpush.bf16.xpose.msra.mxu0 %v7018
    %7028 = vmatmul.bf16.gmra.mxu0 %v7015
    %v7029 = vpop.f32.mrf.mxu0
    %v7030 = vadd.f32 0.0, %v7029
    %v7031 = vpop.f32.mrf.mxu0
    %7032 = vdwg.mxu0
    %v7034 = vsel %vm2968, %v5771, 0
    %v7037 = vsel %vm2968, %v6371, 0
    %7039 = vmatpush.bf16.xpose.msra.mxu0 0
    %7040 = vmatpush.bf16.xpose.msra.mxu0 0
    %7041 = vmatpush.bf16.xpose.msra.mxu0 0
    %7042 = vmatpush.bf16.xpose.msra.mxu0 0
    %7043 = vmatpush.bf16.xpose.msra.mxu0 0
    %7044 = vmatpush.bf16.xpose.msra.mxu0 0
    %7045 = vmatpush.bf16.xpose.msra.mxu0 0
    %7046 = vmatpush.bf16.xpose.msra.mxu0 %v7037
    %7047 = vmatmul.bf16.gmra.mxu0 %v7034
    %v7048 = vpop.f32.mrf.mxu0
    %v7049 = vadd.f32 0.0, %v7048
    %v7050 = vpop.f32.mrf.mxu0
    %7051 = vdwg.mxu0
    %v7053 = vsel %vm2968, %v5772, 0
    %v7056 = vsel %vm2968, %v6372, 0
    %7058 = vmatpush.bf16.xpose.msra.mxu0 0
    %7059 = vmatpush.bf16.xpose.msra.mxu0 0
    %7060 = vmatpush.bf16.xpose.msra.mxu0 0
    %7061 = vmatpush.bf16.xpose.msra.mxu0 0
    %7062 = vmatpush.bf16.xpose.msra.mxu0 0
    %7063 = vmatpush.bf16.xpose.msra.mxu0 0
    %7064 = vmatpush.bf16.xpose.msra.mxu0 0
    %7065 = vmatpush.bf16.xpose.msra.mxu0 %v7056
    %7066 = vmatmul.bf16.gmra.mxu0 %v7053
    %v7067 = vpop.f32.mrf.mxu0
    %v7068 = vadd.f32 0.0, %v7067
    %v7069 = vpop.f32.mrf.mxu0
    %7070 = vdwg.mxu0
    %v7072 = vsel %vm2968, %v5773, 0
    %v7075 = vsel %vm2968, %v6373, 0
    %7077 = vmatpush.bf16.xpose.msra.mxu0 0
    %7078 = vmatpush.bf16.xpose.msra.mxu0 0
    %7079 = vmatpush.bf16.xpose.msra.mxu0 0
    %7080 = vmatpush.bf16.xpose.msra.mxu0 0
    %7081 = vmatpush.bf16.xpose.msra.mxu0 0
    %7082 = vmatpush.bf16.xpose.msra.mxu0 0
    %7083 = vmatpush.bf16.xpose.msra.mxu0 0
    %7084 = vmatpush.bf16.xpose.msra.mxu0 %v7075
    %7085 = vmatmul.bf16.gmra.mxu0 %v7072
    %v7086 = vpop.f32.mrf.mxu0
    %v7087 = vadd.f32 0.0, %v7086
    %v7088 = vpop.f32.mrf.mxu0
    %7089 = vdwg.mxu0
    %v7091 = vsel %vm2968, %v5774, 0
    %v7094 = vsel %vm2968, %v6374, 0
    %7096 = vmatpush.bf16.xpose.msra.mxu0 0
    %7097 = vmatpush.bf16.xpose.msra.mxu0 0
    %7098 = vmatpush.bf16.xpose.msra.mxu0 0
    %7099 = vmatpush.bf16.xpose.msra.mxu0 0
    %7100 = vmatpush.bf16.xpose.msra.mxu0 0
    %7101 = vmatpush.bf16.xpose.msra.mxu0 0
    %7102 = vmatpush.bf16.xpose.msra.mxu0 0
    %7103 = vmatpush.bf16.xpose.msra.mxu0 %v7094
    %7104 = vmatmul.bf16.gmra.mxu0 %v7091
    %v7105 = vpop.f32.mrf.mxu0
    %v7106 = vadd.f32 0.0, %v7105
    %v7107 = vpop.f32.mrf.mxu0
    %7108 = vdwg.mxu0
    %v7110 = vsel %vm2968, %v5775, 0
    %v7113 = vsel %vm2968, %v6375, 0
    %7115 = vmatpush.bf16.xpose.msra.mxu0 0
    %7116 = vmatpush.bf16.xpose.msra.mxu0 0
    %7117 = vmatpush.bf16.xpose.msra.mxu0 0
    %7118 = vmatpush.bf16.xpose.msra.mxu0 0
    %7119 = vmatpush.bf16.xpose.msra.mxu0 0
    %7120 = vmatpush.bf16.xpose.msra.mxu0 0
    %7121 = vmatpush.bf16.xpose.msra.mxu0 0
    %7122 = vmatpush.bf16.xpose.msra.mxu0 %v7113
    %7123 = vmatmul.bf16.gmra.mxu0 %v7110
    %v7124 = vpop.f32.mrf.mxu0
    %v7125 = vadd.f32 0.0, %v7124
    %v7126 = vpop.f32.mrf.mxu0
    %7127 = vdwg.mxu0
    %v7129 = vsel %vm2968, %v5776, 0
    %v7132 = vsel %vm2968, %v6376, 0
    %7134 = vmatpush.bf16.xpose.msra.mxu0 0
    %7135 = vmatpush.bf16.xpose.msra.mxu0 0
    %7136 = vmatpush.bf16.xpose.msra.mxu0 0
    %7137 = vmatpush.bf16.xpose.msra.mxu0 0
    %7138 = vmatpush.bf16.xpose.msra.mxu0 0
    %7139 = vmatpush.bf16.xpose.msra.mxu0 0
    %7140 = vmatpush.bf16.xpose.msra.mxu0 0
    %7141 = vmatpush.bf16.xpose.msra.mxu0 %v7132
    %7142 = vmatmul.bf16.gmra.mxu0 %v7129
    %v7143 = vpop.f32.mrf.mxu0
    %v7144 = vadd.f32 0.0, %v7143
    %v7145 = vpop.f32.mrf.mxu0
    %7146 = vdwg.mxu0
    %v7148 = vsel %vm2968, %v5777, 0
    %v7151 = vsel %vm2968, %v6377, 0
    %7153 = vmatpush.bf16.xpose.msra.mxu0 0
    %7154 = vmatpush.bf16.xpose.msra.mxu0 0
    %7155 = vmatpush.bf16.xpose.msra.mxu0 0
    %7156 = vmatpush.bf16.xpose.msra.mxu0 0
    %7157 = vmatpush.bf16.xpose.msra.mxu0 0
    %7158 = vmatpush.bf16.xpose.msra.mxu0 0
    %7159 = vmatpush.bf16.xpose.msra.mxu0 0
    %7160 = vmatpush.bf16.xpose.msra.mxu0 %v7151
    %7161 = vmatmul.bf16.gmra.mxu0 %v7148
    %v7162 = vpop.f32.mrf.mxu0
    %v7163 = vadd.f32 0.0, %v7162
    %v7164 = vpop.f32.mrf.mxu0
    %7165 = vdwg.mxu0
    %v7167 = vsel %vm2968, %v5778, 0
    %v7170 = vsel %vm2968, %v6378, 0
    %7172 = vmatpush.bf16.xpose.msra.mxu0 0
    %7173 = vmatpush.bf16.xpose.msra.mxu0 0
    %7174 = vmatpush.bf16.xpose.msra.mxu0 0
    %7175 = vmatpush.bf16.xpose.msra.mxu0 0
    %7176 = vmatpush.bf16.xpose.msra.mxu0 0
    %7177 = vmatpush.bf16.xpose.msra.mxu0 0
    %7178 = vmatpush.bf16.xpose.msra.mxu0 0
    %7179 = vmatpush.bf16.xpose.msra.mxu0 %v7170
    %7180 = vmatmul.bf16.gmra.mxu0 %v7167
    %v7181 = vpop.f32.mrf.mxu0
    %v7182 = vadd.f32 0.0, %v7181
    %v7183 = vpop.f32.mrf.mxu0
    %7184 = vdwg.mxu0
    %v7186 = vsel %vm2968, %v5779, 0
    %v7189 = vsel %vm2968, %v6379, 0
    %7191 = vmatpush.bf16.xpose.msra.mxu0 0
    %7192 = vmatpush.bf16.xpose.msra.mxu0 0
    %7193 = vmatpush.bf16.xpose.msra.mxu0 0
    %7194 = vmatpush.bf16.xpose.msra.mxu0 0
    %7195 = vmatpush.bf16.xpose.msra.mxu0 0
    %7196 = vmatpush.bf16.xpose.msra.mxu0 0
    %7197 = vmatpush.bf16.xpose.msra.mxu0 0
    %7198 = vmatpush.bf16.xpose.msra.mxu0 %v7189
    %7199 = vmatmul.bf16.gmra.mxu0 %v7186
    %v7200 = vpop.f32.mrf.mxu0
    %v7201 = vadd.f32 0.0, %v7200
    %v7202 = vpop.f32.mrf.mxu0
    %7203 = vdwg.mxu0
    %v7205 = vsel %vm2968, %v5780, 0
    %v7208 = vsel %vm2968, %v6380, 0
    %7210 = vmatpush.bf16.xpose.msra.mxu0 0
    %7211 = vmatpush.bf16.xpose.msra.mxu0 0
    %7212 = vmatpush.bf16.xpose.msra.mxu0 0
    %7213 = vmatpush.bf16.xpose.msra.mxu0 0
    %7214 = vmatpush.bf16.xpose.msra.mxu0 0
    %7215 = vmatpush.bf16.xpose.msra.mxu0 0
    %7216 = vmatpush.bf16.xpose.msra.mxu0 0
    %7217 = vmatpush.bf16.xpose.msra.mxu0 %v7208
    %7218 = vmatmul.bf16.gmra.mxu0 %v7205
    %v7219 = vpop.f32.mrf.mxu0
    %v7220 = vadd.f32 0.0, %v7219
    %v7221 = vpop.f32.mrf.mxu0
    %7222 = vdwg.mxu0
    %v7224 = vsel %vm2968, %v5781, 0
    %v7227 = vsel %vm2968, %v6381, 0
    %7229 = vmatpush.bf16.xpose.msra.mxu0 0
    %7230 = vmatpush.bf16.xpose.msra.mxu0 0
    %7231 = vmatpush.bf16.xpose.msra.mxu0 0
    %7232 = vmatpush.bf16.xpose.msra.mxu0 0
    %7233 = vmatpush.bf16.xpose.msra.mxu0 0
    %7234 = vmatpush.bf16.xpose.msra.mxu0 0
    %7235 = vmatpush.bf16.xpose.msra.mxu0 0
    %7236 = vmatpush.bf16.xpose.msra.mxu0 %v7227
    %7237 = vmatmul.bf16.gmra.mxu0 %v7224
    %v7238 = vpop.f32.mrf.mxu0
    %v7239 = vadd.f32 0.0, %v7238
    %v7240 = vpop.f32.mrf.mxu0
    %7241 = vdwg.mxu0
    %v7243 = vsel %vm2968, %v5782, 0
    %v7246 = vsel %vm2968, %v6382, 0
    %7248 = vmatpush.bf16.xpose.msra.mxu0 0
    %7249 = vmatpush.bf16.xpose.msra.mxu0 0
    %7250 = vmatpush.bf16.xpose.msra.mxu0 0
    %7251 = vmatpush.bf16.xpose.msra.mxu0 0
    %7252 = vmatpush.bf16.xpose.msra.mxu0 0
    %7253 = vmatpush.bf16.xpose.msra.mxu0 0
    %7254 = vmatpush.bf16.xpose.msra.mxu0 0
    %7255 = vmatpush.bf16.xpose.msra.mxu0 %v7246
    %7256 = vmatmul.bf16.gmra.mxu0 %v7243
    %v7257 = vpop.f32.mrf.mxu0
    %v7258 = vadd.f32 0.0, %v7257
    %v7259 = vpop.f32.mrf.mxu0
    %7260 = vdwg.mxu0
    %v7262 = vsel %vm2968, %v5783, 0
    %v7265 = vsel %vm2968, %v6383, 0
    %7267 = vmatpush.bf16.xpose.msra.mxu0 0
    %7268 = vmatpush.bf16.xpose.msra.mxu0 0
    %7269 = vmatpush.bf16.xpose.msra.mxu0 0
    %7270 = vmatpush.bf16.xpose.msra.mxu0 0
    %7271 = vmatpush.bf16.xpose.msra.mxu0 0
    %7272 = vmatpush.bf16.xpose.msra.mxu0 0
    %7273 = vmatpush.bf16.xpose.msra.mxu0 0
    %7274 = vmatpush.bf16.xpose.msra.mxu0 %v7265
    %7275 = vmatmul.bf16.gmra.mxu0 %v7262
    %v7276 = vpop.f32.mrf.mxu0
    %v7277 = vadd.f32 0.0, %v7276
    %v7278 = vpop.f32.mrf.mxu0
    %7279 = vdwg.mxu0
    %v7280 = vsel %vm2968, %v6992, -inf
    %7281 = vmax.xlane.f32.xlu0 %v7280
    %v7282 = vpop.xlane.xlu0 %7281
    %v7283 = vsel %vm2968, %v7011, -inf
    %7284 = vmax.xlane.f32.xlu0 %v7283
    %v7285 = vpop.xlane.xlu0 %7284
    %v7286 = vsel %vm2968, %v7030, -inf
    %7287 = vmax.xlane.f32.xlu0 %v7286
    %v7288 = vpop.xlane.xlu0 %7287
    %v7289 = vsel %vm2968, %v7049, -inf
    %7290 = vmax.xlane.f32.xlu0 %v7289
    %v7291 = vpop.xlane.xlu0 %7290
    %v7292 = vsel %vm2968, %v7068, -inf
    %7293 = vmax.xlane.f32.xlu0 %v7292
    %v7294 = vpop.xlane.xlu0 %7293
    %v7295 = vsel %vm2968, %v7087, -inf
    %7296 = vmax.xlane.f32.xlu0 %v7295
    %v7297 = vpop.xlane.xlu0 %7296
    %v7298 = vsel %vm2968, %v7106, -inf
    %7299 = vmax.xlane.f32.xlu0 %v7298
    %v7300 = vpop.xlane.xlu0 %7299
    %v7301 = vsel %vm2968, %v7125, -inf
    %7302 = vmax.xlane.f32.xlu0 %v7301
    %v7303 = vpop.xlane.xlu0 %7302
    %v7304 = vsel %vm2968, %v7144, -inf
    %7305 = vmax.xlane.f32.xlu0 %v7304
    %v7306 = vpop.xlane.xlu0 %7305
    %v7307 = vsel %vm2968, %v7163, -inf
    %7308 = vmax.xlane.f32.xlu0 %v7307
    %v7309 = vpop.xlane.xlu0 %7308
    %v7310 = vsel %vm2968, %v7182, -inf
    %7311 = vmax.xlane.f32.xlu0 %v7310
    %v7312 = vpop.xlane.xlu0 %7311
    %v7313 = vsel %vm2968, %v7201, -inf
    %7314 = vmax.xlane.f32.xlu0 %v7313
    %v7315 = vpop.xlane.xlu0 %7314
    %v7316 = vsel %vm2968, %v7220, -inf
    %7317 = vmax.xlane.f32.xlu0 %v7316
    %v7318 = vpop.xlane.xlu0 %7317
    %v7319 = vsel %vm2968, %v7239, -inf
    %7320 = vmax.xlane.f32.xlu0 %v7319
    %v7321 = vpop.xlane.xlu0 %7320
    %v7322 = vsel %vm2968, %v7258, -inf
    %7323 = vmax.xlane.f32.xlu0 %v7322
    %v7324 = vpop.xlane.xlu0 %7323
    %v7325 = vsel %vm2968, %v7277, -inf
    %7326 = vmax.xlane.f32.xlu0 %v7325
    %v7327 = vpop.xlane.xlu0 %7326
    %v7328 = vsub.f32 %v6992, %v7282
    %v7329 = vsub.f32 %v7011, %v7285
    %v7330 = vsub.f32 %v7030, %v7288
    %v7331 = vsub.f32 %v7049, %v7291
    %v7332 = vsub.f32 %v7068, %v7294
    %v7333 = vsub.f32 %v7087, %v7297
    %v7334 = vsub.f32 %v7106, %v7300
    %v7335 = vsub.f32 %v7125, %v7303
    %v7336 = vsub.f32 %v7144, %v7306
    %v7337 = vsub.f32 %v7163, %v7309
    %v7338 = vsub.f32 %v7182, %v7312
    %v7339 = vsub.f32 %v7201, %v7315
    %v7340 = vsub.f32 %v7220, %v7318
    %v7341 = vsub.f32 %v7239, %v7321
    %v7342 = vsub.f32 %v7258, %v7324
    %v7343 = vsub.f32 %v7277, %v7327
    %v7344 = vmul.f32 %v7328, 1.442695
    %v7345 = vpow.pop %v7344
    %v7346 = vmul.f32 %v7329, 1.442695
    %v7347 = vpow.pop %v7346
    %v7348 = vmul.f32 %v7330, 1.442695
    %v7349 = vpow.pop %v7348
    %v7350 = vmul.f32 %v7331, 1.442695
    %v7351 = vpow.pop %v7350
    %v7352 = vmul.f32 %v7332, 1.442695
    %v7353 = vpow.pop %v7352
    %v7354 = vmul.f32 %v7333, 1.442695
    %v7355 = vpow.pop %v7354
    %v7356 = vmul.f32 %v7334, 1.442695
    %v7357 = vpow.pop %v7356
    %v7358 = vmul.f32 %v7335, 1.442695
    %v7359 = vpow.pop %v7358
    %v7360 = vmul.f32 %v7336, 1.442695
    %v7361 = vpow.pop %v7360
    %v7362 = vmul.f32 %v7337, 1.442695
    %v7363 = vpow.pop %v7362
    %v7364 = vmul.f32 %v7338, 1.442695
    %v7365 = vpow.pop %v7364
    %v7366 = vmul.f32 %v7339, 1.442695
    %v7367 = vpow.pop %v7366
    %v7368 = vmul.f32 %v7340, 1.442695
    %v7369 = vpow.pop %v7368
    %v7370 = vmul.f32 %v7341, 1.442695
    %v7371 = vpow.pop %v7370
    %v7372 = vmul.f32 %v7342, 1.442695
    %v7373 = vpow.pop %v7372
    %v7374 = vmul.f32 %v7343, 1.442695
    %v7375 = vpow.pop %v7374
    %v7376 = vsel %vm2968, %v7345, 0.0
    %7377 = vadd.xlane.f32.xlu0 %v7376
    %v7378 = vpop.xlane.xlu0 %7377
    %v7379 = vsel %vm2968, %v7347, 0.0
    %7380 = vadd.xlane.f32.xlu0 %v7379
    %v7381 = vpop.xlane.xlu0 %7380
    %v7382 = vsel %vm2968, %v7349, 0.0
    %7383 = vadd.xlane.f32.xlu0 %v7382
    %v7384 = vpop.xlane.xlu0 %7383
    %v7385 = vsel %vm2968, %v7351, 0.0
    %7386 = vadd.xlane.f32.xlu0 %v7385
    %v7387 = vpop.xlane.xlu0 %7386
    %v7388 = vsel %vm2968, %v7353, 0.0
    %7389 = vadd.xlane.f32.xlu0 %v7388
    %v7390 = vpop.xlane.xlu0 %7389
    %v7391 = vsel %vm2968, %v7355, 0.0
    %7392 = vadd.xlane.f32.xlu0 %v7391
    %v7393 = vpop.xlane.xlu0 %7392
    %v7394 = vsel %vm2968, %v7357, 0.0
    %7395 = vadd.xlane.f32.xlu0 %v7394
    %v7396 = vpop.xlane.xlu0 %7395
    %v7397 = vsel %vm2968, %v7359, 0.0
    %7398 = vadd.xlane.f32.xlu0 %v7397
    %v7399 = vpop.xlane.xlu0 %7398
    %v7400 = vsel %vm2968, %v7361, 0.0
    %7401 = vadd.xlane.f32.xlu0 %v7400
    %v7402 = vpop.xlane.xlu0 %7401
    %v7403 = vsel %vm2968, %v7363, 0.0
    %7404 = vadd.xlane.f32.xlu0 %v7403
    %v7405 = vpop.xlane.xlu0 %7404
    %v7406 = vsel %vm2968, %v7365, 0.0
    %7407 = vadd.xlane.f32.xlu0 %v7406
    %v7408 = vpop.xlane.xlu0 %7407
    %v7409 = vsel %vm2968, %v7367, 0.0
    %7410 = vadd.xlane.f32.xlu0 %v7409
    %v7411 = vpop.xlane.xlu0 %7410
    %v7412 = vsel %vm2968, %v7369, 0.0
    %7413 = vadd.xlane.f32.xlu0 %v7412
    %v7414 = vpop.xlane.xlu0 %7413
    %v7415 = vsel %vm2968, %v7371, 0.0
    %7416 = vadd.xlane.f32.xlu0 %v7415
    %v7417 = vpop.xlane.xlu0 %7416
    %v7418 = vsel %vm2968, %v7373, 0.0
    %7419 = vadd.xlane.f32.xlu0 %v7418
    %v7420 = vpop.xlane.xlu0 %7419
    %v7421 = vsel %vm2968, %v7375, 0.0
    %7422 = vadd.xlane.f32.xlu0 %v7421
    %v7423 = vpop.xlane.xlu0 %7422
    %v7424 = vrcp.pop %v7378
    %v7425 = vrcp.pop %v7381
    %v7426 = vrcp.pop %v7384
    %v7427 = vrcp.pop %v7387
    %v7428 = vrcp.pop %v7390
    %v7429 = vrcp.pop %v7393
    %v7430 = vrcp.pop %v7396
    %v7431 = vrcp.pop %v7399
    %v7432 = vrcp.pop %v7402
    %v7433 = vrcp.pop %v7405
    %v7434 = vrcp.pop %v7408
    %v7435 = vrcp.pop %v7411
    %v7436 = vrcp.pop %v7414
    %v7437 = vrcp.pop %v7417
    %v7438 = vrcp.pop %v7420
    %v7439 = vrcp.pop %v7423
    %v7440 = vmul.f32 %v7345, %v7424
    %v7441 = vmul.f32 %v7347, %v7425
    %v7442 = vmul.f32 %v7349, %v7426
    %v7443 = vmul.f32 %v7351, %v7427
    %v7444 = vmul.f32 %v7353, %v7428
    %v7445 = vmul.f32 %v7355, %v7429
    %v7446 = vmul.f32 %v7357, %v7430
    %v7447 = vmul.f32 %v7359, %v7431
    %v7448 = vmul.f32 %v7361, %v7432
    %v7449 = vmul.f32 %v7363, %v7433
    %v7450 = vmul.f32 %v7365, %v7434
    %v7451 = vmul.f32 %v7367, %v7435
    %v7452 = vmul.f32 %v7369, %v7436
    %v7453 = vmul.f32 %v7371, %v7437
    %v7454 = vmul.f32 %v7373, %v7438
    %v7455 = vmul.f32 %v7375, %v7439
    %v7456 = vpack.c.bf16 %v7440, %v7440
    %v7457 = vpack.c.bf16 %v7441, %v7441
    %v7458 = vpack.c.bf16 %v7442, %v7442
    %v7459 = vpack.c.bf16 %v7443, %v7443
    %v7460 = vpack.c.bf16 %v7444, %v7444
    %v7461 = vpack.c.bf16 %v7445, %v7445
    %v7462 = vpack.c.bf16 %v7446, %v7446
    %v7463 = vpack.c.bf16 %v7447, %v7447
    %v7464 = vpack.c.bf16 %v7448, %v7448
    %v7465 = vpack.c.bf16 %v7449, %v7449
    %v7466 = vpack.c.bf16 %v7450, %v7450
    %v7467 = vpack.c.bf16 %v7451, %v7451
    %v7468 = vpack.c.bf16 %v7452, %v7452
    %v7469 = vpack.c.bf16 %v7453, %v7453
    %v7470 = vpack.c.bf16 %v7454, %v7454
    %v7471 = vpack.c.bf16 %v7455, %v7455
    %v7473 = vsel %vm2968, %v7456, 0
    %v7476 = vsel %vm3716, %v6960, 0
    %7478 = vmatpush.bf16.msra.mxu0 0
    %7479 = vmatpush.bf16.msra.mxu0 0
    %7480 = vmatpush.bf16.msra.mxu0 0
    %7481 = vmatpush.bf16.msra.mxu0 0
    %7482 = vmatpush.bf16.msra.mxu0 0
    %7483 = vmatpush.bf16.msra.mxu0 0
    %7484 = vmatpush.bf16.msra.mxu0 0
    %7485 = vmatpush.bf16.msra.mxu0 %v7476
    %7486 = vmatmul.bf16.gmra.mxu0 %v7473
    %v7487 = vpop.f32.mrf.mxu0
    %v7488 = vadd.f32 0.0, %v7487
    %v7489 = vpop.f32.mrf.mxu0
    %7490 = vdwg.mxu0
    %v7492 = vsel %vm2968, %v7457, 0
    %v7495 = vsel %vm3716, %v6961, 0
    %7497 = vmatpush.bf16.msra.mxu0 0
    %7498 = vmatpush.bf16.msra.mxu0 0
    %7499 = vmatpush.bf16.msra.mxu0 0
    %7500 = vmatpush.bf16.msra.mxu0 0
    %7501 = vmatpush.bf16.msra.mxu0 0
    %7502 = vmatpush.bf16.msra.mxu0 0
    %7503 = vmatpush.bf16.msra.mxu0 0
    %7504 = vmatpush.bf16.msra.mxu0 %v7495
    %7505 = vmatmul.bf16.gmra.mxu0 %v7492
    %v7506 = vpop.f32.mrf.mxu0
    %v7507 = vadd.f32 0.0, %v7506
    %v7508 = vpop.f32.mrf.mxu0
    %7509 = vdwg.mxu0
    %v7511 = vsel %vm2968, %v7458, 0
    %v7514 = vsel %vm3716, %v6962, 0
    %7516 = vmatpush.bf16.msra.mxu0 0
    %7517 = vmatpush.bf16.msra.mxu0 0
    %7518 = vmatpush.bf16.msra.mxu0 0
    %7519 = vmatpush.bf16.msra.mxu0 0
    %7520 = vmatpush.bf16.msra.mxu0 0
    %7521 = vmatpush.bf16.msra.mxu0 0
    %7522 = vmatpush.bf16.msra.mxu0 0
    %7523 = vmatpush.bf16.msra.mxu0 %v7514
    %7524 = vmatmul.bf16.gmra.mxu0 %v7511
    %v7525 = vpop.f32.mrf.mxu0
    %v7526 = vadd.f32 0.0, %v7525
    %v7527 = vpop.f32.mrf.mxu0
    %7528 = vdwg.mxu0
    %v7530 = vsel %vm2968, %v7459, 0
    %v7533 = vsel %vm3716, %v6963, 0
    %7535 = vmatpush.bf16.msra.mxu0 0
    %7536 = vmatpush.bf16.msra.mxu0 0
    %7537 = vmatpush.bf16.msra.mxu0 0
    %7538 = vmatpush.bf16.msra.mxu0 0
    %7539 = vmatpush.bf16.msra.mxu0 0
    %7540 = vmatpush.bf16.msra.mxu0 0
    %7541 = vmatpush.bf16.msra.mxu0 0
    %7542 = vmatpush.bf16.msra.mxu0 %v7533
    %7543 = vmatmul.bf16.gmra.mxu0 %v7530
    %v7544 = vpop.f32.mrf.mxu0
    %v7545 = vadd.f32 0.0, %v7544
    %v7546 = vpop.f32.mrf.mxu0
    %7547 = vdwg.mxu0
    %v7549 = vsel %vm2968, %v7460, 0
    %v7552 = vsel %vm3716, %v6964, 0
    %7554 = vmatpush.bf16.msra.mxu0 0
    %7555 = vmatpush.bf16.msra.mxu0 0
    %7556 = vmatpush.bf16.msra.mxu0 0
    %7557 = vmatpush.bf16.msra.mxu0 0
    %7558 = vmatpush.bf16.msra.mxu0 0
    %7559 = vmatpush.bf16.msra.mxu0 0
    %7560 = vmatpush.bf16.msra.mxu0 0
    %7561 = vmatpush.bf16.msra.mxu0 %v7552
    %7562 = vmatmul.bf16.gmra.mxu0 %v7549
    %v7563 = vpop.f32.mrf.mxu0
    %v7564 = vadd.f32 0.0, %v7563
    %v7565 = vpop.f32.mrf.mxu0
    %7566 = vdwg.mxu0
    %v7568 = vsel %vm2968, %v7461, 0
    %v7571 = vsel %vm3716, %v6965, 0
    %7573 = vmatpush.bf16.msra.mxu0 0
    %7574 = vmatpush.bf16.msra.mxu0 0
    %7575 = vmatpush.bf16.msra.mxu0 0
    %7576 = vmatpush.bf16.msra.mxu0 0
    %7577 = vmatpush.bf16.msra.mxu0 0
    %7578 = vmatpush.bf16.msra.mxu0 0
    %7579 = vmatpush.bf16.msra.mxu0 0
    %7580 = vmatpush.bf16.msra.mxu0 %v7571
    %7581 = vmatmul.bf16.gmra.mxu0 %v7568
    %v7582 = vpop.f32.mrf.mxu0
    %v7583 = vadd.f32 0.0, %v7582
    %v7584 = vpop.f32.mrf.mxu0
    %7585 = vdwg.mxu0
    %v7587 = vsel %vm2968, %v7462, 0
    %v7590 = vsel %vm3716, %v6966, 0
    %7592 = vmatpush.bf16.msra.mxu0 0
    %7593 = vmatpush.bf16.msra.mxu0 0
    %7594 = vmatpush.bf16.msra.mxu0 0
    %7595 = vmatpush.bf16.msra.mxu0 0
    %7596 = vmatpush.bf16.msra.mxu0 0
    %7597 = vmatpush.bf16.msra.mxu0 0
    %7598 = vmatpush.bf16.msra.mxu0 0
    %7599 = vmatpush.bf16.msra.mxu0 %v7590
    %7600 = vmatmul.bf16.gmra.mxu0 %v7587
    %v7601 = vpop.f32.mrf.mxu0
    %v7602 = vadd.f32 0.0, %v7601
    %v7603 = vpop.f32.mrf.mxu0
    %7604 = vdwg.mxu0
    %v7606 = vsel %vm2968, %v7463, 0
    %v7609 = vsel %vm3716, %v6967, 0
    %7611 = vmatpush.bf16.msra.mxu0 0
    %7612 = vmatpush.bf16.msra.mxu0 0
    %7613 = vmatpush.bf16.msra.mxu0 0
    %7614 = vmatpush.bf16.msra.mxu0 0
    %7615 = vmatpush.bf16.msra.mxu0 0
    %7616 = vmatpush.bf16.msra.mxu0 0
    %7617 = vmatpush.bf16.msra.mxu0 0
    %7618 = vmatpush.bf16.msra.mxu0 %v7609
    %7619 = vmatmul.bf16.gmra.mxu0 %v7606
    %v7620 = vpop.f32.mrf.mxu0
    %v7621 = vadd.f32 0.0, %v7620
    %v7622 = vpop.f32.mrf.mxu0
    %7623 = vdwg.mxu0
    %v7625 = vsel %vm2968, %v7464, 0
    %v7628 = vsel %vm3716, %v6968, 0
    %7630 = vmatpush.bf16.msra.mxu0 0
    %7631 = vmatpush.bf16.msra.mxu0 0
    %7632 = vmatpush.bf16.msra.mxu0 0
    %7633 = vmatpush.bf16.msra.mxu0 0
    %7634 = vmatpush.bf16.msra.mxu0 0
    %7635 = vmatpush.bf16.msra.mxu0 0
    %7636 = vmatpush.bf16.msra.mxu0 0
    %7637 = vmatpush.bf16.msra.mxu0 %v7628
    %7638 = vmatmul.bf16.gmra.mxu0 %v7625
    %v7639 = vpop.f32.mrf.mxu0
    %v7640 = vadd.f32 0.0, %v7639
    %v7641 = vpop.f32.mrf.mxu0
    %7642 = vdwg.mxu0
    %v7644 = vsel %vm2968, %v7465, 0
    %v7647 = vsel %vm3716, %v6969, 0
    %7649 = vmatpush.bf16.msra.mxu0 0
    %7650 = vmatpush.bf16.msra.mxu0 0
    %7651 = vmatpush.bf16.msra.mxu0 0
    %7652 = vmatpush.bf16.msra.mxu0 0
    %7653 = vmatpush.bf16.msra.mxu0 0
    %7654 = vmatpush.bf16.msra.mxu0 0
    %7655 = vmatpush.bf16.msra.mxu0 0
    %7656 = vmatpush.bf16.msra.mxu0 %v7647
    %7657 = vmatmul.bf16.gmra.mxu0 %v7644
    %v7658 = vpop.f32.mrf.mxu0
    %v7659 = vadd.f32 0.0, %v7658
    %v7660 = vpop.f32.mrf.mxu0
    %7661 = vdwg.mxu0
    %v7663 = vsel %vm2968, %v7466, 0
    %v7666 = vsel %vm3716, %v6970, 0
    %7668 = vmatpush.bf16.msra.mxu0 0
    %7669 = vmatpush.bf16.msra.mxu0 0
    %7670 = vmatpush.bf16.msra.mxu0 0
    %7671 = vmatpush.bf16.msra.mxu0 0
    %7672 = vmatpush.bf16.msra.mxu0 0
    %7673 = vmatpush.bf16.msra.mxu0 0
    %7674 = vmatpush.bf16.msra.mxu0 0
    %7675 = vmatpush.bf16.msra.mxu0 %v7666
    %7676 = vmatmul.bf16.gmra.mxu0 %v7663
    %v7677 = vpop.f32.mrf.mxu0
    %v7678 = vadd.f32 0.0, %v7677
    %v7679 = vpop.f32.mrf.mxu0
    %7680 = vdwg.mxu0
    %v7682 = vsel %vm2968, %v7467, 0
    %v7685 = vsel %vm3716, %v6971, 0
    %7687 = vmatpush.bf16.msra.mxu0 0
    %7688 = vmatpush.bf16.msra.mxu0 0
    %7689 = vmatpush.bf16.msra.mxu0 0
    %7690 = vmatpush.bf16.msra.mxu0 0
    %7691 = vmatpush.bf16.msra.mxu0 0
    %7692 = vmatpush.bf16.msra.mxu0 0
    %7693 = vmatpush.bf16.msra.mxu0 0
    %7694 = vmatpush.bf16.msra.mxu0 %v7685
    %7695 = vmatmul.bf16.gmra.mxu0 %v7682
    %v7696 = vpop.f32.mrf.mxu0
    %v7697 = vadd.f32 0.0, %v7696
    %v7698 = vpop.f32.mrf.mxu0
    %7699 = vdwg.mxu0
    %v7701 = vsel %vm2968, %v7468, 0
    %v7704 = vsel %vm3716, %v6972, 0
    %7706 = vmatpush.bf16.msra.mxu0 0
    %7707 = vmatpush.bf16.msra.mxu0 0
    %7708 = vmatpush.bf16.msra.mxu0 0
    %7709 = vmatpush.bf16.msra.mxu0 0
    %7710 = vmatpush.bf16.msra.mxu0 0
    %7711 = vmatpush.bf16.msra.mxu0 0
    %7712 = vmatpush.bf16.msra.mxu0 0
    %7713 = vmatpush.bf16.msra.mxu0 %v7704
    %7714 = vmatmul.bf16.gmra.mxu0 %v7701
    %v7715 = vpop.f32.mrf.mxu0
    %v7716 = vadd.f32 0.0, %v7715
    %v7717 = vpop.f32.mrf.mxu0
    %7718 = vdwg.mxu0
    %v7720 = vsel %vm2968, %v7469, 0
    %v7723 = vsel %vm3716, %v6973, 0
    %7725 = vmatpush.bf16.msra.mxu0 0
    %7726 = vmatpush.bf16.msra.mxu0 0
    %7727 = vmatpush.bf16.msra.mxu0 0
    %7728 = vmatpush.bf16.msra.mxu0 0
    %7729 = vmatpush.bf16.msra.mxu0 0
    %7730 = vmatpush.bf16.msra.mxu0 0
    %7731 = vmatpush.bf16.msra.mxu0 0
    %7732 = vmatpush.bf16.msra.mxu0 %v7723
    %7733 = vmatmul.bf16.gmra.mxu0 %v7720
    %v7734 = vpop.f32.mrf.mxu0
    %v7735 = vadd.f32 0.0, %v7734
    %v7736 = vpop.f32.mrf.mxu0
    %7737 = vdwg.mxu0
    %v7739 = vsel %vm2968, %v7470, 0
    %v7742 = vsel %vm3716, %v6974, 0
    %7744 = vmatpush.bf16.msra.mxu0 0
    %7745 = vmatpush.bf16.msra.mxu0 0
    %7746 = vmatpush.bf16.msra.mxu0 0
    %7747 = vmatpush.bf16.msra.mxu0 0
    %7748 = vmatpush.bf16.msra.mxu0 0
    %7749 = vmatpush.bf16.msra.mxu0 0
    %7750 = vmatpush.bf16.msra.mxu0 0
    %7751 = vmatpush.bf16.msra.mxu0 %v7742
    %7752 = vmatmul.bf16.gmra.mxu0 %v7739
    %v7753 = vpop.f32.mrf.mxu0
    %v7754 = vadd.f32 0.0, %v7753
    %v7755 = vpop.f32.mrf.mxu0
    %7756 = vdwg.mxu0
    %v7758 = vsel %vm2968, %v7471, 0
    %v7761 = vsel %vm3716, %v6975, 0
    %7763 = vmatpush.bf16.msra.mxu0 0
    %7764 = vmatpush.bf16.msra.mxu0 0
    %7765 = vmatpush.bf16.msra.mxu0 0
    %7766 = vmatpush.bf16.msra.mxu0 0
    %7767 = vmatpush.bf16.msra.mxu0 0
    %7768 = vmatpush.bf16.msra.mxu0 0
    %7769 = vmatpush.bf16.msra.mxu0 0
    %7770 = vmatpush.bf16.msra.mxu0 %v7761
    %7771 = vmatmul.bf16.gmra.mxu0 %v7758
    %v7772 = vpop.f32.mrf.mxu0
    %v7773 = vadd.f32 0.0, %v7772
    %v7774 = vpop.f32.mrf.mxu0
    %7775 = vdwg.mxu0
    %7776 = vxpose.xlu0.b32.start [1/16] %v7488, 128
    %7777 = vxpose.xlu0.b32.cont [2/16] 0.0, 128
    %7778 = vxpose.xlu0.b32.cont [3/16] 0.0, 128
    %7779 = vxpose.xlu0.b32.cont [4/16] 0.0, 128
    %7780 = vxpose.xlu0.b32.cont [5/16] 0.0, 128
    %7781 = vxpose.xlu0.b32.cont [6/16] 0.0, 128
    %7782 = vxpose.xlu0.b32.cont [7/16] 0.0, 128
    %7783 = vxpose.xlu0.b32.cont [8/16] 0.0, 128
    %7784 = vxpose.xlu0.b32.cont [9/16] 0.0, 128
    %7785 = vxpose.xlu0.b32.cont [10/16] 0.0, 128
    %7786 = vxpose.xlu0.b32.cont [11/16] 0.0, 128
    %7787 = vxpose.xlu0.b32.cont [12/16] 0.0, 128
    %7788 = vxpose.xlu0.b32.cont [13/16] 0.0, 128
    %7789 = vxpose.xlu0.b32.cont [14/16] 0.0, 128
    %7790 = vxpose.xlu0.b32.cont [15/16] 0.0, 128
    %7791 = vxpose.xlu0.b32.end [16/16] 0.0, 128
    %v7792 = vpop.trf.xlu0
    %v7793 = vpop.trf.xlu0
    %v7794 = vpop.trf.xlu0
    %v7795 = vpop.trf.xlu0
    %v7796 = vpop.trf.xlu0
    %v7797 = vpop.trf.xlu0
    %v7798 = vpop.trf.xlu0
    %v7799 = vpop.trf.xlu0
    %v7800 = vpop.trf.xlu0
    %v7801 = vpop.trf.xlu0
    %v7802 = vpop.trf.xlu0
    %v7803 = vpop.trf.xlu0
    %v7804 = vpop.trf.xlu0
    %v7805 = vpop.trf.xlu0
    %v7806 = vpop.trf.xlu0
    %v7807 = vpop.trf.xlu0
    %7808 = vxpose.xlu0.b32.start [1/16] %v7507, 128
    %7809 = vxpose.xlu0.b32.cont [2/16] 0.0, 128
    %7810 = vxpose.xlu0.b32.cont [3/16] 0.0, 128
    %7811 = vxpose.xlu0.b32.cont [4/16] 0.0, 128
    %7812 = vxpose.xlu0.b32.cont [5/16] 0.0, 128
    %7813 = vxpose.xlu0.b32.cont [6/16] 0.0, 128
    %7814 = vxpose.xlu0.b32.cont [7/16] 0.0, 128
    %7815 = vxpose.xlu0.b32.cont [8/16] 0.0, 128
    %7816 = vxpose.xlu0.b32.cont [9/16] 0.0, 128
    %7817 = vxpose.xlu0.b32.cont [10/16] 0.0, 128
    %7818 = vxpose.xlu0.b32.cont [11/16] 0.0, 128
    %7819 = vxpose.xlu0.b32.cont [12/16] 0.0, 128
    %7820 = vxpose.xlu0.b32.cont [13/16] 0.0, 128
    %7821 = vxpose.xlu0.b32.cont [14/16] 0.0, 128
    %7822 = vxpose.xlu0.b32.cont [15/16] 0.0, 128
    %7823 = vxpose.xlu0.b32.end [16/16] 0.0, 128
    %v7824 = vpop.trf.xlu0
    %v7825 = vpop.trf.xlu0
    %v7826 = vpop.trf.xlu0
    %v7827 = vpop.trf.xlu0
    %v7828 = vpop.trf.xlu0
    %v7829 = vpop.trf.xlu0
    %v7830 = vpop.trf.xlu0
    %v7831 = vpop.trf.xlu0
    %v7832 = vpop.trf.xlu0
    %v7833 = vpop.trf.xlu0
    %v7834 = vpop.trf.xlu0
    %v7835 = vpop.trf.xlu0
    %v7836 = vpop.trf.xlu0
    %v7837 = vpop.trf.xlu0
    %v7838 = vpop.trf.xlu0
    %v7839 = vpop.trf.xlu0
    %7840 = vxpose.xlu0.b32.start [1/16] %v7526, 128
    %7841 = vxpose.xlu0.b32.cont [2/16] 0.0, 128
    %7842 = vxpose.xlu0.b32.cont [3/16] 0.0, 128
    %7843 = vxpose.xlu0.b32.cont [4/16] 0.0, 128
    %7844 = vxpose.xlu0.b32.cont [5/16] 0.0, 128
    %7845 = vxpose.xlu0.b32.cont [6/16] 0.0, 128
    %7846 = vxpose.xlu0.b32.cont [7/16] 0.0, 128
    %7847 = vxpose.xlu0.b32.cont [8/16] 0.0, 128
    %7848 = vxpose.xlu0.b32.cont [9/16] 0.0, 128
    %7849 = vxpose.xlu0.b32.cont [10/16] 0.0, 128
    %7850 = vxpose.xlu0.b32.cont [11/16] 0.0, 128
    %7851 = vxpose.xlu0.b32.cont [12/16] 0.0, 128
    %7852 = vxpose.xlu0.b32.cont [13/16] 0.0, 128
    %7853 = vxpose.xlu0.b32.cont [14/16] 0.0, 128
    %7854 = vxpose.xlu0.b32.cont [15/16] 0.0, 128
    %7855 = vxpose.xlu0.b32.end [16/16] 0.0, 128
    %v7856 = vpop.trf.xlu0
    %v7857 = vpop.trf.xlu0
    %v7858 = vpop.trf.xlu0
    %v7859 = vpop.trf.xlu0
    %v7860 = vpop.trf.xlu0
    %v7861 = vpop.trf.xlu0
    %v7862 = vpop.trf.xlu0
    %v7863 = vpop.trf.xlu0
    %v7864 = vpop.trf.xlu0
    %v7865 = vpop.trf.xlu0
    %v7866 = vpop.trf.xlu0
    %v7867 = vpop.trf.xlu0
    %v7868 = vpop.trf.xlu0
    %v7869 = vpop.trf.xlu0
    %v7870 = vpop.trf.xlu0
    %v7871 = vpop.trf.xlu0
    %7872 = vxpose.xlu0.b32.start [1/16] %v7545, 128
    %7873 = vxpose.xlu0.b32.cont [2/16] 0.0, 128
    %7874 = vxpose.xlu0.b32.cont [3/16] 0.0, 128
    %7875 = vxpose.xlu0.b32.cont [4/16] 0.0, 128
    %7876 = vxpose.xlu0.b32.cont [5/16] 0.0, 128
    %7877 = vxpose.xlu0.b32.cont [6/16] 0.0, 128
    %7878 = vxpose.xlu0.b32.cont [7/16] 0.0, 128
    %7879 = vxpose.xlu0.b32.cont [8/16] 0.0, 128
    %7880 = vxpose.xlu0.b32.cont [9/16] 0.0, 128
    %7881 = vxpose.xlu0.b32.cont [10/16] 0.0, 128
    %7882 = vxpose.xlu0.b32.cont [11/16] 0.0, 128
    %7883 = vxpose.xlu0.b32.cont [12/16] 0.0, 128
    %7884 = vxpose.xlu0.b32.cont [13/16] 0.0, 128
    %7885 = vxpose.xlu0.b32.cont [14/16] 0.0, 128
    %7886 = vxpose.xlu0.b32.cont [15/16] 0.0, 128
    %7887 = vxpose.xlu0.b32.end [16/16] 0.0, 128
    %v7888 = vpop.trf.xlu0
    %v7889 = vpop.trf.xlu0
    %v7890 = vpop.trf.xlu0
    %v7891 = vpop.trf.xlu0
    %v7892 = vpop.trf.xlu0
    %v7893 = vpop.trf.xlu0
    %v7894 = vpop.trf.xlu0
    %v7895 = vpop.trf.xlu0
    %v7896 = vpop.trf.xlu0
    %v7897 = vpop.trf.xlu0
    %v7898 = vpop.trf.xlu0
    %v7899 = vpop.trf.xlu0
    %v7900 = vpop.trf.xlu0
    %v7901 = vpop.trf.xlu0
    %v7902 = vpop.trf.xlu0
    %v7903 = vpop.trf.xlu0
    %7904 = vxpose.xlu0.b32.start [1/16] %v7564, 128
    %7905 = vxpose.xlu0.b32.cont [2/16] 0.0, 128
    %7906 = vxpose.xlu0.b32.cont [3/16] 0.0, 128
    %7907 = vxpose.xlu0.b32.cont [4/16] 0.0, 128
    %7908 = vxpose.xlu0.b32.cont [5/16] 0.0, 128
    %7909 = vxpose.xlu0.b32.cont [6/16] 0.0, 128
    %7910 = vxpose.xlu0.b32.cont [7/16] 0.0, 128
    %7911 = vxpose.xlu0.b32.cont [8/16] 0.0, 128
    %7912 = vxpose.xlu0.b32.cont [9/16] 0.0, 128
    %7913 = vxpose.xlu0.b32.cont [10/16] 0.0, 128
    %7914 = vxpose.xlu0.b32.cont [11/16] 0.0, 128
    %7915 = vxpose.xlu0.b32.cont [12/16] 0.0, 128
    %7916 = vxpose.xlu0.b32.cont [13/16] 0.0, 128
    %7917 = vxpose.xlu0.b32.cont [14/16] 0.0, 128
    %7918 = vxpose.xlu0.b32.cont [15/16] 0.0, 128
    %7919 = vxpose.xlu0.b32.end [16/16] 0.0, 128
    %v7920 = vpop.trf.xlu0
    %v7921 = vpop.trf.xlu0
    %v7922 = vpop.trf.xlu0
    %v7923 = vpop.trf.xlu0
    %v7924 = vpop.trf.xlu0
    %v7925 = vpop.trf.xlu0
    %v7926 = vpop.trf.xlu0
    %v7927 = vpop.trf.xlu0
    %v7928 = vpop.trf.xlu0
    %v7929 = vpop.trf.xlu0
    %v7930 = vpop.trf.xlu0
    %v7931 = vpop.trf.xlu0
    %v7932 = vpop.trf.xlu0
    %v7933 = vpop.trf.xlu0
    %v7934 = vpop.trf.xlu0
    %v7935 = vpop.trf.xlu0
    %7936 = vxpose.xlu0.b32.start [1/16] %v7583, 128
    %7937 = vxpose.xlu0.b32.cont [2/16] 0.0, 128
    %7938 = vxpose.xlu0.b32.cont [3/16] 0.0, 128
    %7939 = vxpose.xlu0.b32.cont [4/16] 0.0, 128
    %7940 = vxpose.xlu0.b32.cont [5/16] 0.0, 128
    %7941 = vxpose.xlu0.b32.cont [6/16] 0.0, 128
    %7942 = vxpose.xlu0.b32.cont [7/16] 0.0, 128
    %7943 = vxpose.xlu0.b32.cont [8/16] 0.0, 128
    %7944 = vxpose.xlu0.b32.cont [9/16] 0.0, 128
    %7945 = vxpose.xlu0.b32.cont [10/16] 0.0, 128
    %7946 = vxpose.xlu0.b32.cont [11/16] 0.0, 128
    %7947 = vxpose.xlu0.b32.cont [12/16] 0.0, 128
    %7948 = vxpose.xlu0.b32.cont [13/16] 0.0, 128
    %7949 = vxpose.xlu0.b32.cont [14/16] 0.0, 128
    %7950 = vxpose.xlu0.b32.cont [15/16] 0.0, 128
    %7951 = vxpose.xlu0.b32.end [16/16] 0.0, 128
    %v7952 = vpop.trf.xlu0
    %v7953 = vpop.trf.xlu0
    %v7954 = vpop.trf.xlu0
    %v7955 = vpop.trf.xlu0
    %v7956 = vpop.trf.xlu0
    %v7957 = vpop.trf.xlu0
    %v7958 = vpop.trf.xlu0
    %v7959 = vpop.trf.xlu0
    %v7960 = vpop.trf.xlu0
    %v7961 = vpop.trf.xlu0
    %v7962 = vpop.trf.xlu0
    %v7963 = vpop.trf.xlu0
    %v7964 = vpop.trf.xlu0
    %v7965 = vpop.trf.xlu0
    %v7966 = vpop.trf.xlu0
    %v7967 = vpop.trf.xlu0
    %7968 = vxpose.xlu0.b32.start [1/16] %v7602, 128
    %7969 = vxpose.xlu0.b32.cont [2/16] 0.0, 128
    %7970 = vxpose.xlu0.b32.cont [3/16] 0.0, 128
    %7971 = vxpose.xlu0.b32.cont [4/16] 0.0, 128
    %7972 = vxpose.xlu0.b32.cont [5/16] 0.0, 128
    %7973 = vxpose.xlu0.b32.cont [6/16] 0.0, 128
    %7974 = vxpose.xlu0.b32.cont [7/16] 0.0, 128
    %7975 = vxpose.xlu0.b32.cont [8/16] 0.0, 128
    %7976 = vxpose.xlu0.b32.cont [9/16] 0.0, 128
    %7977 = vxpose.xlu0.b32.cont [10/16] 0.0, 128
    %7978 = vxpose.xlu0.b32.cont [11/16] 0.0, 128
    %7979 = vxpose.xlu0.b32.cont [12/16] 0.0, 128
    %7980 = vxpose.xlu0.b32.cont [13/16] 0.0, 128
    %7981 = vxpose.xlu0.b32.cont [14/16] 0.0, 128
    %7982 = vxpose.xlu0.b32.cont [15/16] 0.0, 128
    %7983 = vxpose.xlu0.b32.end [16/16] 0.0, 128
    %v7984 = vpop.trf.xlu0
    %v7985 = vpop.trf.xlu0
    %v7986 = vpop.trf.xlu0
    %v7987 = vpop.trf.xlu0
    %v7988 = vpop.trf.xlu0
    %v7989 = vpop.trf.xlu0
    %v7990 = vpop.trf.xlu0
    %v7991 = vpop.trf.xlu0
    %v7992 = vpop.trf.xlu0
    %v7993 = vpop.trf.xlu0
    %v7994 = vpop.trf.xlu0
    %v7995 = vpop.trf.xlu0
    %v7996 = vpop.trf.xlu0
    %v7997 = vpop.trf.xlu0
    %v7998 = vpop.trf.xlu0
    %v7999 = vpop.trf.xlu0
    %8000 = vxpose.xlu0.b32.start [1/16] %v7621, 128
    %8001 = vxpose.xlu0.b32.cont [2/16] 0.0, 128
    %8002 = vxpose.xlu0.b32.cont [3/16] 0.0, 128
    %8003 = vxpose.xlu0.b32.cont [4/16] 0.0, 128
    %8004 = vxpose.xlu0.b32.cont [5/16] 0.0, 128
    %8005 = vxpose.xlu0.b32.cont [6/16] 0.0, 128
    %8006 = vxpose.xlu0.b32.cont [7/16] 0.0, 128
    %8007 = vxpose.xlu0.b32.cont [8/16] 0.0, 128
    %8008 = vxpose.xlu0.b32.cont [9/16] 0.0, 128
    %8009 = vxpose.xlu0.b32.cont [10/16] 0.0, 128
    %8010 = vxpose.xlu0.b32.cont [11/16] 0.0, 128
    %8011 = vxpose.xlu0.b32.cont [12/16] 0.0, 128
    %8012 = vxpose.xlu0.b32.cont [13/16] 0.0, 128
    %8013 = vxpose.xlu0.b32.cont [14/16] 0.0, 128
    %8014 = vxpose.xlu0.b32.cont [15/16] 0.0, 128
    %8015 = vxpose.xlu0.b32.end [16/16] 0.0, 128
    %v8016 = vpop.trf.xlu0
    %v8017 = vpop.trf.xlu0
    %v8018 = vpop.trf.xlu0
    %v8019 = vpop.trf.xlu0
    %v8020 = vpop.trf.xlu0
    %v8021 = vpop.trf.xlu0
    %v8022 = vpop.trf.xlu0
    %v8023 = vpop.trf.xlu0
    %v8024 = vpop.trf.xlu0
    %v8025 = vpop.trf.xlu0
    %v8026 = vpop.trf.xlu0
    %v8027 = vpop.trf.xlu0
    %v8028 = vpop.trf.xlu0
    %v8029 = vpop.trf.xlu0
    %v8030 = vpop.trf.xlu0
    %v8031 = vpop.trf.xlu0
    %8032 = vxpose.xlu0.b32.start [1/16] %v7640, 128
    %8033 = vxpose.xlu0.b32.cont [2/16] 0.0, 128
    %8034 = vxpose.xlu0.b32.cont [3/16] 0.0, 128
    %8035 = vxpose.xlu0.b32.cont [4/16] 0.0, 128
    %8036 = vxpose.xlu0.b32.cont [5/16] 0.0, 128
    %8037 = vxpose.xlu0.b32.cont [6/16] 0.0, 128
    %8038 = vxpose.xlu0.b32.cont [7/16] 0.0, 128
    %8039 = vxpose.xlu0.b32.cont [8/16] 0.0, 128
    %8040 = vxpose.xlu0.b32.cont [9/16] 0.0, 128
    %8041 = vxpose.xlu0.b32.cont [10/16] 0.0, 128
    %8042 = vxpose.xlu0.b32.cont [11/16] 0.0, 128
    %8043 = vxpose.xlu0.b32.cont [12/16] 0.0, 128
    %8044 = vxpose.xlu0.b32.cont [13/16] 0.0, 128
    %8045 = vxpose.xlu0.b32.cont [14/16] 0.0, 128
    %8046 = vxpose.xlu0.b32.cont [15/16] 0.0, 128
    %8047 = vxpose.xlu0.b32.end [16/16] 0.0, 128
    %v8048 = vpop.trf.xlu0
    %v8049 = vpop.trf.xlu0
    %v8050 = vpop.trf.xlu0
    %v8051 = vpop.trf.xlu0
    %v8052 = vpop.trf.xlu0
    %v8053 = vpop.trf.xlu0
    %v8054 = vpop.trf.xlu0
    %v8055 = vpop.trf.xlu0
    %v8056 = vpop.trf.xlu0
    %v8057 = vpop.trf.xlu0
    %v8058 = vpop.trf.xlu0
    %v8059 = vpop.trf.xlu0
    %v8060 = vpop.trf.xlu0
    %v8061 = vpop.trf.xlu0
    %v8062 = vpop.trf.xlu0
    %v8063 = vpop.trf.xlu0
    %8064 = vxpose.xlu0.b32.start [1/16] %v7659, 128
    %8065 = vxpose.xlu0.b32.cont [2/16] 0.0, 128
    %8066 = vxpose.xlu0.b32.cont [3/16] 0.0, 128
    %8067 = vxpose.xlu0.b32.cont [4/16] 0.0, 128
    %8068 = vxpose.xlu0.b32.cont [5/16] 0.0, 128
    %8069 = vxpose.xlu0.b32.cont [6/16] 0.0, 128
    %8070 = vxpose.xlu0.b32.cont [7/16] 0.0, 128
    %8071 = vxpose.xlu0.b32.cont [8/16] 0.0, 128
    %8072 = vxpose.xlu0.b32.cont [9/16] 0.0, 128
    %8073 = vxpose.xlu0.b32.cont [10/16] 0.0, 128
    %8074 = vxpose.xlu0.b32.cont [11/16] 0.0, 128
    %8075 = vxpose.xlu0.b32.cont [12/16] 0.0, 128
    %8076 = vxpose.xlu0.b32.cont [13/16] 0.0, 128
    %8077 = vxpose.xlu0.b32.cont [14/16] 0.0, 128
    %8078 = vxpose.xlu0.b32.cont [15/16] 0.0, 128
    %8079 = vxpose.xlu0.b32.end [16/16] 0.0, 128
    %v8080 = vpop.trf.xlu0
    %v8081 = vpop.trf.xlu0
    %v8082 = vpop.trf.xlu0
    %v8083 = vpop.trf.xlu0
    %v8084 = vpop.trf.xlu0
    %v8085 = vpop.trf.xlu0
    %v8086 = vpop.trf.xlu0
    %v8087 = vpop.trf.xlu0
    %v8088 = vpop.trf.xlu0
    %v8089 = vpop.trf.xlu0
    %v8090 = vpop.trf.xlu0
    %v8091 = vpop.trf.xlu0
    %v8092 = vpop.trf.xlu0
    %v8093 = vpop.trf.xlu0
    %v8094 = vpop.trf.xlu0
    %v8095 = vpop.trf.xlu0
    %8096 = vxpose.xlu0.b32.start [1/16] %v7678, 128
    %8097 = vxpose.xlu0.b32.cont [2/16] 0.0, 128
    %8098 = vxpose.xlu0.b32.cont [3/16] 0.0, 128
    %8099 = vxpose.xlu0.b32.cont [4/16] 0.0, 128
    %8100 = vxpose.xlu0.b32.cont [5/16] 0.0, 128
    %8101 = vxpose.xlu0.b32.cont [6/16] 0.0, 128
    %8102 = vxpose.xlu0.b32.cont [7/16] 0.0, 128
    %8103 = vxpose.xlu0.b32.cont [8/16] 0.0, 128
    %8104 = vxpose.xlu0.b32.cont [9/16] 0.0, 128
    %8105 = vxpose.xlu0.b32.cont [10/16] 0.0, 128
    %8106 = vxpose.xlu0.b32.cont [11/16] 0.0, 128
    %8107 = vxpose.xlu0.b32.cont [12/16] 0.0, 128
    %8108 = vxpose.xlu0.b32.cont [13/16] 0.0, 128
    %8109 = vxpose.xlu0.b32.cont [14/16] 0.0, 128
    %8110 = vxpose.xlu0.b32.cont [15/16] 0.0, 128
    %8111 = vxpose.xlu0.b32.end [16/16] 0.0, 128
    %v8112 = vpop.trf.xlu0
    %v8113 = vpop.trf.xlu0
    %v8114 = vpop.trf.xlu0
    %v8115 = vpop.trf.xlu0
    %v8116 = vpop.trf.xlu0
    %v8117 = vpop.trf.xlu0
    %v8118 = vpop.trf.xlu0
    %v8119 = vpop.trf.xlu0
    %v8120 = vpop.trf.xlu0
    %v8121 = vpop.trf.xlu0
    %v8122 = vpop.trf.xlu0
    %v8123 = vpop.trf.xlu0
    %v8124 = vpop.trf.xlu0
    %v8125 = vpop.trf.xlu0
    %v8126 = vpop.trf.xlu0
    %v8127 = vpop.trf.xlu0
    %8128 = vxpose.xlu0.b32.start [1/16] %v7697, 128
    %8129 = vxpose.xlu0.b32.cont [2/16] 0.0, 128
    %8130 = vxpose.xlu0.b32.cont [3/16] 0.0, 128
    %8131 = vxpose.xlu0.b32.cont [4/16] 0.0, 128
    %8132 = vxpose.xlu0.b32.cont [5/16] 0.0, 128
    %8133 = vxpose.xlu0.b32.cont [6/16] 0.0, 128
    %8134 = vxpose.xlu0.b32.cont [7/16] 0.0, 128
    %8135 = vxpose.xlu0.b32.cont [8/16] 0.0, 128
    %8136 = vxpose.xlu0.b32.cont [9/16] 0.0, 128
    %8137 = vxpose.xlu0.b32.cont [10/16] 0.0, 128
    %8138 = vxpose.xlu0.b32.cont [11/16] 0.0, 128
    %8139 = vxpose.xlu0.b32.cont [12/16] 0.0, 128
    %8140 = vxpose.xlu0.b32.cont [13/16] 0.0, 128
    %8141 = vxpose.xlu0.b32.cont [14/16] 0.0, 128
    %8142 = vxpose.xlu0.b32.cont [15/16] 0.0, 128
    %8143 = vxpose.xlu0.b32.end [16/16] 0.0, 128
    %v8144 = vpop.trf.xlu0
    %v8145 = vpop.trf.xlu0
    %v8146 = vpop.trf.xlu0
    %v8147 = vpop.trf.xlu0
    %v8148 = vpop.trf.xlu0
    %v8149 = vpop.trf.xlu0
    %v8150 = vpop.trf.xlu0
    %v8151 = vpop.trf.xlu0
    %v8152 = vpop.trf.xlu0
    %v8153 = vpop.trf.xlu0
    %v8154 = vpop.trf.xlu0
    %v8155 = vpop.trf.xlu0
    %v8156 = vpop.trf.xlu0
    %v8157 = vpop.trf.xlu0
    %v8158 = vpop.trf.xlu0
    %v8159 = vpop.trf.xlu0
    %8160 = vxpose.xlu0.b32.start [1/16] %v7716, 128
    %8161 = vxpose.xlu0.b32.cont [2/16] 0.0, 128
    %8162 = vxpose.xlu0.b32.cont [3/16] 0.0, 128
    %8163 = vxpose.xlu0.b32.cont [4/16] 0.0, 128
    %8164 = vxpose.xlu0.b32.cont [5/16] 0.0, 128
    %8165 = vxpose.xlu0.b32.cont [6/16] 0.0, 128
    %8166 = vxpose.xlu0.b32.cont [7/16] 0.0, 128
    %8167 = vxpose.xlu0.b32.cont [8/16] 0.0, 128
    %8168 = vxpose.xlu0.b32.cont [9/16] 0.0, 128
    %8169 = vxpose.xlu0.b32.cont [10/16] 0.0, 128
    %8170 = vxpose.xlu0.b32.cont [11/16] 0.0, 128
    %8171 = vxpose.xlu0.b32.cont [12/16] 0.0, 128
    %8172 = vxpose.xlu0.b32.cont [13/16] 0.0, 128
    %8173 = vxpose.xlu0.b32.cont [14/16] 0.0, 128
    %8174 = vxpose.xlu0.b32.cont [15/16] 0.0, 128
    %8175 = vxpose.xlu0.b32.end [16/16] 0.0, 128
    %v8176 = vpop.trf.xlu0
    %v8177 = vpop.trf.xlu0
    %v8178 = vpop.trf.xlu0
    %v8179 = vpop.trf.xlu0
    %v8180 = vpop.trf.xlu0
    %v8181 = vpop.trf.xlu0
    %v8182 = vpop.trf.xlu0
    %v8183 = vpop.trf.xlu0
    %v8184 = vpop.trf.xlu0
    %v8185 = vpop.trf.xlu0
    %v8186 = vpop.trf.xlu0
    %v8187 = vpop.trf.xlu0
    %v8188 = vpop.trf.xlu0
    %v8189 = vpop.trf.xlu0
    %v8190 = vpop.trf.xlu0
    %v8191 = vpop.trf.xlu0
    %8192 = vxpose.xlu0.b32.start [1/16] %v7735, 128
    %8193 = vxpose.xlu0.b32.cont [2/16] 0.0, 128
    %8194 = vxpose.xlu0.b32.cont [3/16] 0.0, 128
    %8195 = vxpose.xlu0.b32.cont [4/16] 0.0, 128
    %8196 = vxpose.xlu0.b32.cont [5/16] 0.0, 128
    %8197 = vxpose.xlu0.b32.cont [6/16] 0.0, 128
    %8198 = vxpose.xlu0.b32.cont [7/16] 0.0, 128
    %8199 = vxpose.xlu0.b32.cont [8/16] 0.0, 128
    %8200 = vxpose.xlu0.b32.cont [9/16] 0.0, 128
    %8201 = vxpose.xlu0.b32.cont [10/16] 0.0, 128
    %8202 = vxpose.xlu0.b32.cont [11/16] 0.0, 128
    %8203 = vxpose.xlu0.b32.cont [12/16] 0.0, 128
    %8204 = vxpose.xlu0.b32.cont [13/16] 0.0, 128
    %8205 = vxpose.xlu0.b32.cont [14/16] 0.0, 128
    %8206 = vxpose.xlu0.b32.cont [15/16] 0.0, 128
    %8207 = vxpose.xlu0.b32.end [16/16] 0.0, 128
    %v8208 = vpop.trf.xlu0
    %v8209 = vpop.trf.xlu0
    %v8210 = vpop.trf.xlu0
    %v8211 = vpop.trf.xlu0
    %v8212 = vpop.trf.xlu0
    %v8213 = vpop.trf.xlu0
    %v8214 = vpop.trf.xlu0
    %v8215 = vpop.trf.xlu0
    %v8216 = vpop.trf.xlu0
    %v8217 = vpop.trf.xlu0
    %v8218 = vpop.trf.xlu0
    %v8219 = vpop.trf.xlu0
    %v8220 = vpop.trf.xlu0
    %v8221 = vpop.trf.xlu0
    %v8222 = vpop.trf.xlu0
    %v8223 = vpop.trf.xlu0
    %8224 = vxpose.xlu0.b32.start [1/16] %v7754, 128
    %8225 = vxpose.xlu0.b32.cont [2/16] 0.0, 128
    %8226 = vxpose.xlu0.b32.cont [3/16] 0.0, 128
    %8227 = vxpose.xlu0.b32.cont [4/16] 0.0, 128
    %8228 = vxpose.xlu0.b32.cont [5/16] 0.0, 128
    %8229 = vxpose.xlu0.b32.cont [6/16] 0.0, 128
    %8230 = vxpose.xlu0.b32.cont [7/16] 0.0, 128
    %8231 = vxpose.xlu0.b32.cont [8/16] 0.0, 128
    %8232 = vxpose.xlu0.b32.cont [9/16] 0.0, 128
    %8233 = vxpose.xlu0.b32.cont [10/16] 0.0, 128
    %8234 = vxpose.xlu0.b32.cont [11/16] 0.0, 128
    %8235 = vxpose.xlu0.b32.cont [12/16] 0.0, 128
    %8236 = vxpose.xlu0.b32.cont [13/16] 0.0, 128
    %8237 = vxpose.xlu0.b32.cont [14/16] 0.0, 128
    %8238 = vxpose.xlu0.b32.cont [15/16] 0.0, 128
    %8239 = vxpose.xlu0.b32.end [16/16] 0.0, 128
    %v8240 = vpop.trf.xlu0
    %v8241 = vpop.trf.xlu0
    %v8242 = vpop.trf.xlu0
    %v8243 = vpop.trf.xlu0
    %v8244 = vpop.trf.xlu0
    %v8245 = vpop.trf.xlu0
    %v8246 = vpop.trf.xlu0
    %v8247 = vpop.trf.xlu0
    %v8248 = vpop.trf.xlu0
    %v8249 = vpop.trf.xlu0
    %v8250 = vpop.trf.xlu0
    %v8251 = vpop.trf.xlu0
    %v8252 = vpop.trf.xlu0
    %v8253 = vpop.trf.xlu0
    %v8254 = vpop.trf.xlu0
    %v8255 = vpop.trf.xlu0
    %8256 = vxpose.xlu0.b32.start [1/16] %v7773, 128
    %8257 = vxpose.xlu0.b32.cont [2/16] 0.0, 128
    %8258 = vxpose.xlu0.b32.cont [3/16] 0.0, 128
    %8259 = vxpose.xlu0.b32.cont [4/16] 0.0, 128
    %8260 = vxpose.xlu0.b32.cont [5/16] 0.0, 128
    %8261 = vxpose.xlu0.b32.cont [6/16] 0.0, 128
    %8262 = vxpose.xlu0.b32.cont [7/16] 0.0, 128
    %8263 = vxpose.xlu0.b32.cont [8/16] 0.0, 128
    %8264 = vxpose.xlu0.b32.cont [9/16] 0.0, 128
    %8265 = vxpose.xlu0.b32.cont [10/16] 0.0, 128
    %8266 = vxpose.xlu0.b32.cont [11/16] 0.0, 128
    %8267 = vxpose.xlu0.b32.cont [12/16] 0.0, 128
    %8268 = vxpose.xlu0.b32.cont [13/16] 0.0, 128
    %8269 = vxpose.xlu0.b32.cont [14/16] 0.0, 128
    %8270 = vxpose.xlu0.b32.cont [15/16] 0.0, 128
    %8271 = vxpose.xlu0.b32.end [16/16] 0.0, 128
    %v8272 = vpop.trf.xlu0
    %v8273 = vpop.trf.xlu0
    %v8274 = vpop.trf.xlu0
    %v8275 = vpop.trf.xlu0
    %v8276 = vpop.trf.xlu0
    %v8277 = vpop.trf.xlu0
    %v8278 = vpop.trf.xlu0
    %v8279 = vpop.trf.xlu0
    %v8280 = vpop.trf.xlu0
    %v8281 = vpop.trf.xlu0
    %v8282 = vpop.trf.xlu0
    %v8283 = vpop.trf.xlu0
    %v8284 = vpop.trf.xlu0
    %v8285 = vpop.trf.xlu0
    %v8286 = vpop.trf.xlu0
    %v8287 = vpop.trf.xlu0
    %8288 = vxpose.xlu0.b32.start [1/16] %v7792, 128
    %8289 = vxpose.xlu0.b32.cont [2/16] %v7824, 128
    %8290 = vxpose.xlu0.b32.cont [3/16] %v7856, 128
    %8291 = vxpose.xlu0.b32.cont [4/16] %v7888, 128
    %8292 = vxpose.xlu0.b32.cont [5/16] %v7920, 128
    %8293 = vxpose.xlu0.b32.cont [6/16] %v7952, 128
    %8294 = vxpose.xlu0.b32.cont [7/16] %v7984, 128
    %8295 = vxpose.xlu0.b32.cont [8/16] %v8016, 128
    %8296 = vxpose.xlu0.b32.cont [9/16] 0.0, 128
    %8297 = vxpose.xlu0.b32.cont [10/16] 0.0, 128
    %8298 = vxpose.xlu0.b32.cont [11/16] 0.0, 128
    %8299 = vxpose.xlu0.b32.cont [12/16] 0.0, 128
    %8300 = vxpose.xlu0.b32.cont [13/16] 0.0, 128
    %8301 = vxpose.xlu0.b32.cont [14/16] 0.0, 128
    %8302 = vxpose.xlu0.b32.cont [15/16] 0.0, 128
    %8303 = vxpose.xlu0.b32.end [16/16] 0.0, 128
    %v8304 = vpop.trf.xlu0
    %v8305 = vpop.trf.xlu0
    %v8306 = vpop.trf.xlu0
    %v8307 = vpop.trf.xlu0
    %v8308 = vpop.trf.xlu0
    %v8309 = vpop.trf.xlu0
    %v8310 = vpop.trf.xlu0
    %v8311 = vpop.trf.xlu0
    %v8312 = vpop.trf.xlu0
    %v8313 = vpop.trf.xlu0
    %v8314 = vpop.trf.xlu0
    %v8315 = vpop.trf.xlu0
    %v8316 = vpop.trf.xlu0
    %v8317 = vpop.trf.xlu0
    %v8318 = vpop.trf.xlu0
    %v8319 = vpop.trf.xlu0
    %8320 = vxpose.xlu0.b32.start [1/16] %v8048, 128
    %8321 = vxpose.xlu0.b32.cont [2/16] %v8080, 128
    %8322 = vxpose.xlu0.b32.cont [3/16] %v8112, 128
    %8323 = vxpose.xlu0.b32.cont [4/16] %v8144, 128
    %8324 = vxpose.xlu0.b32.cont [5/16] %v8176, 128
    %8325 = vxpose.xlu0.b32.cont [6/16] %v8208, 128
    %8326 = vxpose.xlu0.b32.cont [7/16] %v8240, 128
    %8327 = vxpose.xlu0.b32.cont [8/16] %v8272, 128
    %8328 = vxpose.xlu0.b32.cont [9/16] 0.0, 128
    %8329 = vxpose.xlu0.b32.cont [10/16] 0.0, 128
    %8330 = vxpose.xlu0.b32.cont [11/16] 0.0, 128
    %8331 = vxpose.xlu0.b32.cont [12/16] 0.0, 128
    %8332 = vxpose.xlu0.b32.cont [13/16] 0.0, 128
    %8333 = vxpose.xlu0.b32.cont [14/16] 0.0, 128
    %8334 = vxpose.xlu0.b32.cont [15/16] 0.0, 128
    %8335 = vxpose.xlu0.b32.end [16/16] 0.0, 128
    %v8336 = vpop.trf.xlu0
    %v8337 = vpop.trf.xlu0
    %v8338 = vpop.trf.xlu0
    %v8339 = vpop.trf.xlu0
    %v8340 = vpop.trf.xlu0
    %v8341 = vpop.trf.xlu0
    %v8342 = vpop.trf.xlu0
    %v8343 = vpop.trf.xlu0
    %v8344 = vpop.trf.xlu0
    %v8345 = vpop.trf.xlu0
    %v8346 = vpop.trf.xlu0
    %v8347 = vpop.trf.xlu0
    %v8348 = vpop.trf.xlu0
    %v8349 = vpop.trf.xlu0
    %v8350 = vpop.trf.xlu0
    %v8351 = vpop.trf.xlu0
    %v8352 = vpack.c.bf16 %v8336, %v8304
    %v8353 = vld [vmem:[#allocation13] sm:$0xf]
    %v8354 = vld [vmem:[#allocation13 + $0x4] sm:$0xf]
    %v8355 = vld [vmem:[#allocation13 + $0x8] sm:$0xf]
    %v8356 = vld [vmem:[#allocation13 + $0xc] sm:$0xf]
    %v8357 = vld [vmem:[#allocation13 + $0x10] sm:$0xf]
    %v8358 = vld [vmem:[#allocation13 + $0x14] sm:$0xf]
    %v8359 = vld [vmem:[#allocation13 + $0x18] sm:$0xf]
    %v8360 = vld [vmem:[#allocation13 + $0x1c] sm:$0xf]
    %v8361 = vld [vmem:[#allocation14] sm:$0x1]
    %v8363 = vperm.slane %v8361, 0
    %v8373 = vunpack.c.l.b16 %v8353
    %v8374 = vunpack.c.l.b16 %v8354
    %v8375 = vunpack.c.l.b16 %v8355
    %v8376 = vunpack.c.l.b16 %v8356
    %v8377 = vunpack.c.l.b16 %v8357
    %v8378 = vunpack.c.l.b16 %v8358
    %v8379 = vunpack.c.l.b16 %v8359
    %v8380 = vunpack.c.l.b16 %v8360
    %v8381 = vpack.c.b16 %v8374, %v8373
    %v8382 = vpack.c.b16 %v8376, %v8375
    %v8383 = vpack.c.b16 %v8378, %v8377
    %v8384 = vpack.c.b16 %v8380, %v8379
    %v8390 = vsel %vm192, %v8352, 0
    %8392 = vmatpush.bf16.msra.mxu0 0
    %8393 = vmatpush.bf16.msra.mxu0 0
    %8394 = vmatpush.bf16.msra.mxu0 0
    %8395 = vmatpush.bf16.msra.mxu0 0
    %8396 = vmatpush.bf16.msra.mxu0 %v8384
    %8397 = vmatpush.bf16.msra.mxu0 %v8383
    %8398 = vmatpush.bf16.msra.mxu0 %v8382
    %8399 = vmatpush.bf16.msra.mxu0 %v8381
    %8400 = vmatmul.bf16.gmra.mxu0 %v8390
    %v8401 = vpop.f32.mrf.mxu0
    %v8402 = vadd.f32 %v8363, %v8401
    %v8403 = vpop.f32.mrf.mxu0
    %v8404 = vadd.f32 %v8363, %v8403
    %8405 = vdwg.mxu0
    %8406 = vst.msk [vmem:[#allocation16] sm:$0xff] %vm189, %v8402
    %8407 = vst.msk [vmem:[#allocation16 + $0x8] sm:$0xff] %vm189, %v8404
    %8410 = vrot.lane.b32.xlu0 %v8402, 96
    %v8411 = vpop.permute.xlu0 %8410
    %8412 = vrot.lane.b32.xlu0 %v8404, 96
    %v8413 = vpop.permute.xlu0 %8412
    %8416 = vst.msk [vmem:[#allocation19] sm:$0xff] %vm189, %v8411
    %8417 = vst.msk [vmem:[#allocation19 + $0x8] sm:$0xff] %vm189, %v8413
    // Predicated region
    $region78: #{block_forward.1} parent=1 // pred_check
      _
    $region79: #{block_forward.1} parent=1 // pred_check_branch
      %8419 = sbr.rel (0) target = $region81
    $region80: #{block_forward.1} parent=1 // pred_region
      %8421 = vsyncadd [#allocation4], 0
      %s8422 = sshll.u32 [#allocation16], 4
      %s8423 = int_to_ptr.vmem [resolvable:$true] %s8422
      %s8424 = sshll.u32 %s11, 4
      %s8425 = int_to_ptr.hbm [resolvable:$true] %s8424
      %8430 = dma.vmem_to_hbm [thread:$0]  %s8423, 256, %s8425, [#allocation4], 128, 128, 8
    $region81: #{block_forward.1} parent=1 // pred_fallthru
      _
    // Predicated region
    $region82: #{block_forward.1} parent=1 // pred_check
      _
    $region83: #{block_forward.1} parent=1 // pred_check_branch
      %8432 = sbr.rel (0) target = $region85
    $region84: #{block_forward.1} parent=1 // pred_region
      %8434 = vsyncadd [#allocation18], 0
      %s8435 = sshll.u32 [#allocation17], 4
      %s8436 = int_to_ptr.vmem [resolvable:$true] %s8435
      %s8437 = sshll.u32 %s12, 4
      %s8438 = int_to_ptr.hbm [resolvable:$true] %s8437
      %8443 = dma.vmem_to_hbm [thread:$0]  %s8436, 256, %s8438, [#allocation18], 128, 128, 8
    $region85: #{block_forward.1} parent=1 // pred_fallthru
      _
    // Predicated region
    $region86: #{block_forward.1} parent=1 // pred_check
      _
    $region87: #{block_forward.1} parent=1 // pred_check_branch
      %8445 = sbr.rel (0) target = $region89
    $region88: #{block_forward.1} parent=1 // pred_region
      %8447 = vsyncadd [#allocation18], 0
      %s8448 = sshll.u32 [#allocation19], 4
      %s8449 = int_to_ptr.vmem [resolvable:$true] %s8448
      %s8450 = sshll.u32 %s13, 4
      %s8451 = int_to_ptr.hbm [resolvable:$true] %s8450
      %8456 = dma.vmem_to_hbm [thread:$0]  %s8449, 256, %s8451, [#allocation18], 128, 128, 8
    $region89: #{block_forward.1} parent=1 // pred_fallthru
      _
    // Predicated region
    $region90: #{block_forward.1} parent=1 // pred_check
      _
    $region91: #{block_forward.1} parent=1 // pred_check_branch
      %8458 = sbr.rel (0) target = $region93
    $region92: #{block_forward.1} parent=1 // pred_region
      %8460 = dma.done [#allocation4], 256
    $region93: #{block_forward.1} parent=1 // pred_fallthru
      _
    // Predicated region
    $region94: #{block_forward.1} parent=1 // pred_check
      _
    $region95: #{block_forward.1} parent=1 // pred_check_branch
      %8462 = sbr.rel (0) target = $region97
    $region96: #{block_forward.1} parent=1 // pred_region
      %8464 = dma.done [#allocation18], 256
    $region97: #{block_forward.1} parent=1 // pred_fallthru
      _
    // Predicated region
    $region98: #{block_forward.1} parent=1 // pred_check
      _
    $region99: #{block_forward.1} parent=1 // pred_check_branch
      %8466 = sbr.rel (0) target = $region101
    $region100: #{block_forward.1} parent=1 // pred_region
      %8468 = dma.done [#allocation18], 256
    $region101: #{block_forward.1} parent=1 // pred_fallthru
      _
    %8469 = vsyncpa [#allocation3], 1
    %8470 = vsyncpa [#allocation6], 1
    %8471 = vsyncpa [#allocation9], 1
    %8472 = vsyncpa [#allocation12], 1
    %8473 = vsyncpa [#allocation15], 1
    %8474 = vsyncpa [#allocation4], 1
    %8475 = vsyncpa [#allocation18], 1

</llo_original>
